<compile_context>
chip_gen: v7x
topology: tpu7x:2x2x1
jax: 0.10.0
libtpu: 0.0.40
codegen_flags: <defaults>
</compile_context>

<pallas_src>
import functools

import jax
import jax.numpy as jnp
from jax.experimental import pallas as pl
from jax.experimental.pallas import tpu as pltpu


# ----------------------------------------------------------------------------
# Fused  (x @ w + b) -> LayerNorm  kernel   (bf16 MXU operands, f32 epilogue)
# ----------------------------------------------------------------------------
def _linear_ln_kernel(eps, x_ref, w_ref, b_ref, g_ref, be_ref, o_ref):
    y = jnp.dot(x_ref[...], w_ref[...], preferred_element_type=jnp.float32)
    y = y + b_ref[...]
    mu = jnp.mean(y, axis=-1, keepdims=True)
    yc = y - mu
    var = jnp.mean(yc * yc, axis=-1, keepdims=True)
    inv = jax.lax.rsqrt(var + eps)
    o_ref[...] = ((yc * inv) * g_ref[...] + be_ref[...]).astype(o_ref.dtype)


def linear_layernorm(x, w, b, gamma, beta, eps=1e-5, block_rows=512):
    """LayerNorm((x @ w) + b) fused in one Pallas kernel.  x:(M,K)  w:(K,N)."""
    M, K = x.shape
    K2, N = w.shape
    assert K == K2
    xb = x.astype(jnp.bfloat16)
    wb = w.astype(jnp.bfloat16)
    b2 = b.reshape(1, N).astype(jnp.float32)
    g2 = gamma.reshape(1, N).astype(jnp.float32)
    be2 = beta.reshape(1, N).astype(jnp.float32)

    bm = M                                   # fallback: single full block
    for cand in (block_rows, 256, 128, 64, 32, 16, 8):
        if cand <= M and M % cand == 0:
            bm = cand
            break

    return pl.pallas_call(
        functools.partial(_linear_ln_kernel, eps),
        out_shape=jax.ShapeDtypeStruct((M, N), jnp.float32),
        grid=(M // bm,),
        in_specs=[
            pl.BlockSpec((bm, K), lambda i: (i, 0)),
            pl.BlockSpec((K, N), lambda i: (0, 0)),
            pl.BlockSpec((1, N), lambda i: (0, 0)),
            pl.BlockSpec((1, N), lambda i: (0, 0)),
            pl.BlockSpec((1, N), lambda i: (0, 0)),
        ],
        out_specs=pl.BlockSpec((bm, N), lambda i: (i, 0)),
        compiler_params=pltpu.CompilerParams(dimension_semantics=("parallel",)),
    )(xb, wb, b2, g2, be2)


# ----------------------------------------------------------------------------
# Fused (AvgPool + MaxPool) * 0.5 kernel  (f32 VPU work; no MXU)
# ----------------------------------------------------------------------------
def _pool_kernel(kh, kw, sh, Ho, Wo, H, W, ph, pw, *refs):
    # refs: sh row-phase inputs (bc, Lp, Wp) ... , output (bc, Ho, Wo)
    o_ref = refs[sh]
    bc = o_ref.shape[0]
    NEG = jnp.float32(-3.0e38)               # stand-in for -inf max-pool padding
    row_h = jax.lax.broadcasted_iota(jnp.int32, (bc, Ho, Wo), 1)
    col_w = jax.lax.broadcasted_iota(jnp.int32, (bc, Ho, Wo), 2)

    acc_sum = jnp.zeros((bc, Ho, Wo), jnp.float32)
    acc_max = jnp.full((bc, Ho, Wo), NEG, jnp.float32)
    for i in range(kh):
        p = i % sh                           # row phase
        r0 = i // sh                         # row offset inside the phase
        r_pad = row_h * sh + i               # padded-row index of this tap
        row_ok = jnp.logical_and(r_pad >= ph, r_pad < ph + H)
        for j in range(kw):
            c_pad = col_w + j                # padded-col index (sw == 1)
            ok = jnp.logical_and(
                row_ok, jnp.logical_and(c_pad >= pw, c_pad < pw + W))
            sl = refs[p][:, r0:r0 + Ho, j:j + Wo]          # contiguous slice
            acc_sum = acc_sum + sl                          # zero-padded sum
            acc_max = jnp.maximum(acc_max, jnp.where(ok, sl, NEG))
    # AvgPool2d(count_include_pad=True) divides by the full kernel area.
    o_ref[...] = (acc_sum * (1.0 / (kh * kw)) + acc_max) * 0.5


def avgmax_pool(x_nchw, kh=3, kw=5, sh=2, sw=1, ph=1, pw=2):
    """(AvgPool2d + MaxPool2d) * 0.5 with PyTorch semantics.  Returns NCHW."""
    assert sw == 1, "module default stride=[2,1]"
    B, C, H, W = x_nchw.shape
    Ho = (H + 2 * ph - kh) // sh + 1
    Wo = (W + 2 * pw - kw) // sw + 1
    BC = B * C
    xp = jnp.pad(x_nchw.astype(jnp.float32).reshape(BC, H, W),
                 ((0, 0), (ph, ph), (pw, pw)))
    # Phase-split padded rows so the stride-sh window becomes contiguous slices.
    phases = [xp[:, p::sh, :] for p in range(sh)]

    bc_blk = BC
    for cand in (64, 32, 16, 8):
        if cand <= BC and BC % cand == 0:
            bc_blk = cand
            break

    in_specs = [pl.BlockSpec((bc_blk,) + arr.shape[1:], lambda g: (g, 0, 0))
                for arr in phases]
    out = pl.pallas_call(
        functools.partial(_pool_kernel, kh, kw, sh, Ho, Wo, H, W, ph, pw),
        out_shape=jax.ShapeDtypeStruct((BC, Ho, Wo), jnp.float32),
        grid=(BC // bc_blk,),
        in_specs=in_specs,
        out_specs=pl.BlockSpec((bc_blk, Ho, Wo), lambda g: (g, 0, 0)),
        compiler_params=pltpu.CompilerParams(dimension_semantics=("parallel",)),
    )(*phases)
    return out.reshape(B, C, Ho, Wo), Ho, Wo


# ----------------------------------------------------------------------------
# Glue: im2col (emitted directly in bf16)
# ----------------------------------------------------------------------------
def im2col(x_nchw, kh, kw, sh, sw, ph, pw):
    """NCHW -> (B*Ho*Wo, C*kh*kw) bf16 patches, torch conv-weight column order."""
    B, C, H, W = x_nchw.shape
    xp = jnp.pad(x_nchw, ((0, 0), (0, 0), (ph, ph), (pw, pw)))
    Ho = (H + 2 * ph - kh) // sh + 1
    Wo = (W + 2 * pw - kw) // sw + 1
    cols = []
    for i in range(kh):
        for j in range(kw):
            cols.append(xp[:, :, i:i + sh * (Ho - 1) + 1:sh,
                              j:j + sw * (Wo - 1) + 1:sw])
    p = jnp.stack(cols, axis=2)                      # (B, C, kh*kw, Ho, Wo)
    p = p.transpose(0, 3, 4, 1, 2).reshape(B * Ho * Wo, C * kh * kw)
    return p.astype(jnp.bfloat16), Ho, Wo


# ----------------------------------------------------------------------------
# SubSample forward (eval mode; act defaults to None -> identity)
# ----------------------------------------------------------------------------
def subsample_forward(params, x, types="Pool", stride=(2, 1)):
    B, Cin, H, W = x.shape
    if types == "Pool":
        pooled, Ho, Wo = avgmax_pool(x, 3, 5, stride[0], stride[1], 1, 2)
        # flatten(2).transpose(1,2): sequence index = h*Wo + w, channel last
        rows = pooled.transpose(0, 2, 3, 1).reshape(B * Ho * Wo, Cin)
        Cout = params["proj_w"].shape[0]
        out = linear_layernorm(rows, params["proj_w"].T, params["proj_b"],
                               params["ln_g"], params["ln_b"])
    else:  # 'Conv'
        patches, Ho, Wo = im2col(x, 3, 3, stride[0], stride[1], 1, 1)
        Cout = params["conv_w"].shape[0]
        wm = params["conv_w"].reshape(Cout, -1).T
        out = linear_layernorm(patches, wm, params["conv_b"],
                               params["ln_g"], params["ln_b"])
    return out.reshape(B, Ho * Wo, Cout)


# ----------------------------------------------------------------------------
# Pure-JAX references (independent: reduce_window / conv_general_dilated)
# ----------------------------------------------------------------------------
def _ref_linear_ln(rows, w, b, g, be, eps=1e-5):
    y = jnp.dot(rows.astype(jnp.bfloat16), w.astype(jnp.bfloat16),
                preferred_element_type=jnp.float32) + b
    mu = jnp.mean(y, -1, keepdims=True)
    yc = y - mu
    var = jnp.mean(yc * yc, -1, keepdims=True)
    return yc * jax.lax.rsqrt(var + eps) * g + be


def ref_forward_pool(params, x, stride=(2, 1)):
    pads = ((0, 0), (0, 0), (1, 1), (2, 2))
    win = (1, 1, 3, 5)
    strd = (1, 1, stride[0], stride[1])
    s = jax.lax.reduce_window(x, 0.0, jax.lax.add, win, strd, pads)
    mx = jax.lax.reduce_window(x, -jnp.inf, jax.lax.max, win, strd, pads)
    pooled = (s / 15.0 + mx) * 0.5
    B, C, Ho, Wo = pooled.shape
    rows = pooled.transpose(0, 2, 3, 1).reshape(B * Ho * Wo, C)
    out = _ref_linear_ln(rows, params["proj_w"].T, params["proj_b"],
                         params["ln_g"], params["ln_b"])
    return pooled, out.reshape(B, Ho * Wo, -1)


def ref_forward_conv(params, x, stride=(2, 1)):
    xb = x.astype(jnp.bfloat16).astype(jnp.float32)
    wb = params["conv_w"].astype(jnp.bfloat16).astype(jnp.float32)
    y = jax.lax.conv_general_dilated(
        xb, wb, window_strides=stride, padding=((1, 1), (1, 1)),
        dimension_numbers=("NCHW", "OIHW", "NCHW"))
    y = y + params["conv_b"][None, :, None, None]
    B, Cout, Ho, Wo = y.shape
    rows = y.transpose(0, 2, 3, 1).reshape(B * Ho * Wo, Cout)
    mu = jnp.mean(rows, -1, keepdims=True)
    yc = rows - mu
    var = jnp.mean(yc * yc, -1, keepdims=True)
    out = yc * jax.lax.rsqrt(var + 1e-5) * params["ln_g"] + params["ln_b"]
    return out.reshape(B, Ho * Wo, Cout)


# ----------------------------------------------------------------------------
if __name__ == "__main__":
    key = jax.random.PRNGKey(0)
    kx, kcw, kcb, kpw, kpb, kg, kb = jax.random.split(key, 7)

    B, Cin, H, W = 2, 64, 16, 32
    Cout = 128                                  # lane-dense output width

    x = jax.random.normal(kx, (B, Cin, H, W), jnp.float32)
    params = dict(
        conv_w=jax.random.normal(kcw, (Cout, Cin, 3, 3), jnp.float32)
               * (2.0 / (Cin * 9)) ** 0.5,      # kaiming-style scale
        conv_b=jax.random.normal(kcb, (Cout,), jnp.float32) * 0.02,
        proj_w=jax.random.normal(kpw, (Cout, Cin), jnp.float32) * Cin ** -0.5,
        proj_b=jax.random.normal(kpb, (Cout,), jnp.float32) * 0.02,
        ln_g=1.0 + 0.1 * jax.random.normal(kg, (Cout,), jnp.float32),
        ln_b=0.1 * jax.random.normal(kb, (Cout,), jnp.float32),
    )

    fwd_pool = jax.jit(functools.partial(subsample_forward, types="Pool"))
    fwd_conv = jax.jit(functools.partial(subsample_forward, types="Conv"))

    out_pool = jax.block_until_ready(fwd_pool(params, x))
    out_conv = jax.block_until_ready(fwd_conv(params, x))

    N = (H // 2) * W                            # stride (2,1): Ho=H//2, Wo=W
    assert out_pool.shape == (B, N, Cout)
    assert out_conv.shape == (B, N, Cout)
    assert bool(jnp.all(jnp.isfinite(out_pool)))
    assert bool(jnp.all(jnp.isfinite(out_conv)))

    # Correctness checks against independent pure-JAX references.
    pooled_kernel, _, _ = None, None, None
    pooled_pallas, Ho_, Wo_ = avgmax_pool(x)
    pooled_ref, ref_pool_out = ref_forward_pool(params, x)
    ref_conv_out = ref_forward_conv(params, x)

    assert bool(jnp.allclose(pooled_pallas, pooled_ref, atol=1e-5, rtol=1e-5))
    assert bool(jnp.allclose(out_pool, ref_pool_out, atol=5e-3, rtol=5e-3))
    assert bool(jnp.allclose(out_conv, ref_conv_out, atol=5e-3, rtol=5e-3))

    print("KERNEL_OK")
</pallas_src>

<mosaic_0001>
module attributes {stable_mosaic.version = 11 : i64} {
  func.func @_pool_kernel(%arg0: i32, %arg1: memref<64x9x36xf32, #tpu.memory_space<vmem>>, %arg2: memref<64x9x36xf32, #tpu.memory_space<vmem>>, %arg3: memref<64x8x32xf32, #tpu.memory_space<vmem>>) attributes {dimension_semantics = [#tpu.dimension_semantics<parallel>], iteration_bounds = array<i64: 2>, scalar_prefetch = 0 : i64, scratch_operands = 0 : i64, tpu.core_type = #tpu.core_type<tc>, window_params = [{transform_indices = @transform_0, window_bounds = array<i64: 64, 9, 36>}, {transform_indices = @transform_1, window_bounds = array<i64: 64, 9, 36>}, {transform_indices = @transform_2, window_bounds = array<i64: 64, 8, 32>}]} {
    %0 = tpu.iota {dimensions = array<i32: 1>} : vector<64x8x32xi32>
    %1 = tpu.iota {dimensions = array<i32: 2>} : vector<64x8x32xi32>
    %cst = arith.constant 0.000000e+00 : f32
    %2 = vector.broadcast %cst : f32 to vector<64x8x32xf32>
    %cst_0 = arith.constant -3.000000e+38 : f32
    %3 = vector.broadcast %cst_0 : f32 to vector<64x8x32xf32>
    %c2_i32 = arith.constant 2 : i32
    %4 = vector.broadcast %c2_i32 : i32 to vector<64x8x32xi32>
    %5 = arith.muli %0, %4 : vector<64x8x32xi32>
    %c0_i32 = arith.constant 0 : i32
    %6 = vector.broadcast %c0_i32 : i32 to vector<64x8x32xi32>
    %7 = arith.addi %5, %6 : vector<64x8x32xi32>
    %c1_i32 = arith.constant 1 : i32
    %8 = vector.broadcast %c1_i32 : i32 to vector<64x8x32xi32>
    %9 = arith.cmpi sge, %7, %8 : vector<64x8x32xi32>
    %c17_i32 = arith.constant 17 : i32
    %10 = vector.broadcast %c17_i32 : i32 to vector<64x8x32xi32>
    %11 = arith.cmpi slt, %7, %10 : vector<64x8x32xi32>
    %12 = arith.andi %9, %11 : vector<64x8x32xi1>
    %c0_i32_1 = arith.constant 0 : i32
    %13 = vector.broadcast %c0_i32_1 : i32 to vector<64x8x32xi32>
    %14 = arith.addi %1, %13 : vector<64x8x32xi32>
    %c2_i32_2 = arith.constant 2 : i32
    %15 = vector.broadcast %c2_i32_2 : i32 to vector<64x8x32xi32>
    %16 = arith.cmpi sge, %14, %15 : vector<64x8x32xi32>
    %c34_i32 = arith.constant 34 : i32
    %17 = vector.broadcast %c34_i32 : i32 to vector<64x8x32xi32>
    %18 = arith.cmpi slt, %14, %17 : vector<64x8x32xi32>
    %19 = arith.andi %16, %18 : vector<64x8x32xi1>
    %20 = arith.andi %12, %19 : vector<64x8x32xi1>
    %c0 = arith.constant 0 : index
    %c0_3 = arith.constant 0 : index
    %c0_4 = arith.constant 0 : index
    %21 = vector.load %arg1[%c0, %c0_3, %c0_4] : memref<64x9x36xf32, #tpu.memory_space<vmem>>, vector<64x8x32xf32>
    %22 = arith.addf %2, %21 : vector<64x8x32xf32>
    %cst_5 = arith.constant -3.000000e+38 : f32
    %23 = vector.broadcast %cst_5 : f32 to vector<64x8x32xf32>
    %24 = arith.select %20, %21, %23 : vector<64x8x32xi1>, vector<64x8x32xf32>
    %25 = arith.maximumf %3, %24 : vector<64x8x32xf32>
    %c1_i32_6 = arith.constant 1 : i32
    %26 = vector.broadcast %c1_i32_6 : i32 to vector<64x8x32xi32>
    %27 = arith.addi %1, %26 : vector<64x8x32xi32>
    %c2_i32_7 = arith.constant 2 : i32
    %28 = vector.broadcast %c2_i32_7 : i32 to vector<64x8x32xi32>
    %29 = arith.cmpi sge, %27, %28 : vector<64x8x32xi32>
    %c34_i32_8 = arith.constant 34 : i32
    %30 = vector.broadcast %c34_i32_8 : i32 to vector<64x8x32xi32>
    %31 = arith.cmpi slt, %27, %30 : vector<64x8x32xi32>
    %32 = arith.andi %29, %31 : vector<64x8x32xi1>
    %33 = arith.andi %12, %32 : vector<64x8x32xi1>
    %c0_9 = arith.constant 0 : index
    %c0_10 = arith.constant 0 : index
    %c1 = arith.constant 1 : index
    %34 = vector.load %arg1[%c0_9, %c0_10, %c1] : memref<64x9x36xf32, #tpu.memory_space<vmem>>, vector<64x8x32xf32>
    %35 = arith.addf %22, %34 : vector<64x8x32xf32>
    %cst_11 = arith.constant -3.000000e+38 : f32
    %36 = vector.broadcast %cst_11 : f32 to vector<64x8x32xf32>
    %37 = arith.select %33, %34, %36 : vector<64x8x32xi1>, vector<64x8x32xf32>
    %38 = arith.maximumf %25, %37 : vector<64x8x32xf32>
    %c2_i32_12 = arith.constant 2 : i32
    %39 = vector.broadcast %c2_i32_12 : i32 to vector<64x8x32xi32>
    %40 = arith.addi %1, %39 : vector<64x8x32xi32>
    %c2_i32_13 = arith.constant 2 : i32
    %41 = vector.broadcast %c2_i32_13 : i32 to vector<64x8x32xi32>
    %42 = arith.cmpi sge, %40, %41 : vector<64x8x32xi32>
    %c34_i32_14 = arith.constant 34 : i32
    %43 = vector.broadcast %c34_i32_14 : i32 to vector<64x8x32xi32>
    %44 = arith.cmpi slt, %40, %43 : vector<64x8x32xi32>
    %45 = arith.andi %42, %44 : vector<64x8x32xi1>
    %46 = arith.andi %12, %45 : vector<64x8x32xi1>
    %c0_15 = arith.constant 0 : index
    %c0_16 = arith.constant 0 : index
    %c2 = arith.constant 2 : index
    %47 = vector.load %arg1[%c0_15, %c0_16, %c2] : memref<64x9x36xf32, #tpu.memory_space<vmem>>, vector<64x8x32xf32>
    %48 = arith.addf %35, %47 : vector<64x8x32xf32>
    %cst_17 = arith.constant -3.000000e+38 : f32
    %49 = vector.broadcast %cst_17 : f32 to vector<64x8x32xf32>
    %50 = arith.select %46, %47, %49 : vector<64x8x32xi1>, vector<64x8x32xf32>
    %51 = arith.maximumf %38, %50 : vector<64x8x32xf32>
    %c3_i32 = arith.constant 3 : i32
    %52 = vector.broadcast %c3_i32 : i32 to vector<64x8x32xi32>
    %53 = arith.addi %1, %52 : vector<64x8x32xi32>
    %c2_i32_18 = arith.constant 2 : i32
    %54 = vector.broadcast %c2_i32_18 : i32 to vector<64x8x32xi32>
    %55 = arith.cmpi sge, %53, %54 : vector<64x8x32xi32>
    %c34_i32_19 = arith.constant 34 : i32
    %56 = vector.broadcast %c34_i32_19 : i32 to vector<64x8x32xi32>
    %57 = arith.cmpi slt, %53, %56 : vector<64x8x32xi32>
    %58 = arith.andi %55, %57 : vector<64x8x32xi1>
    %59 = arith.andi %12, %58 : vector<64x8x32xi1>
    %c0_20 = arith.constant 0 : index
    %c0_21 = arith.constant 0 : index
    %c3 = arith.constant 3 : index
    %60 = vector.load %arg1[%c0_20, %c0_21, %c3] : memref<64x9x36xf32, #tpu.memory_space<vmem>>, vector<64x8x32xf32>
    %61 = arith.addf %48, %60 : vector<64x8x32xf32>
    %cst_22 = arith.constant -3.000000e+38 : f32
    %62 = vector.broadcast %cst_22 : f32 to vector<64x8x32xf32>
    %63 = arith.select %59, %60, %62 : vector<64x8x32xi1>, vector<64x8x32xf32>
    %64 = arith.maximumf %51, %63 : vector<64x8x32xf32>
    %c4_i32 = arith.constant 4 : i32
    %65 = vector.broadcast %c4_i32 : i32 to vector<64x8x32xi32>
    %66 = arith.addi %1, %65 : vector<64x8x32xi32>
    %c2_i32_23 = arith.constant 2 : i32
    %67 = vector.broadcast %c2_i32_23 : i32 to vector<64x8x32xi32>
    %68 = arith.cmpi sge, %66, %67 : vector<64x8x32xi32>
    %c34_i32_24 = arith.constant 34 : i32
    %69 = vector.broadcast %c34_i32_24 : i32 to vector<64x8x32xi32>
    %70 = arith.cmpi slt, %66, %69 : vector<64x8x32xi32>
    %71 = arith.andi %68, %70 : vector<64x8x32xi1>
    %72 = arith.andi %12, %71 : vector<64x8x32xi1>
    %c0_25 = arith.constant 0 : index
    %c0_26 = arith.constant 0 : index
    %c4 = arith.constant 4 : index
    %73 = vector.load %arg1[%c0_25, %c0_26, %c4] : memref<64x9x36xf32, #tpu.memory_space<vmem>>, vector<64x8x32xf32>
    %74 = arith.addf %61, %73 : vector<64x8x32xf32>
    %cst_27 = arith.constant -3.000000e+38 : f32
    %75 = vector.broadcast %cst_27 : f32 to vector<64x8x32xf32>
    %76 = arith.select %72, %73, %75 : vector<64x8x32xi1>, vector<64x8x32xf32>
    %77 = arith.maximumf %64, %76 : vector<64x8x32xf32>
    %c2_i32_28 = arith.constant 2 : i32
    %78 = vector.broadcast %c2_i32_28 : i32 to vector<64x8x32xi32>
    %79 = arith.muli %0, %78 : vector<64x8x32xi32>
    %c1_i32_29 = arith.constant 1 : i32
    %80 = vector.broadcast %c1_i32_29 : i32 to vector<64x8x32xi32>
    %81 = arith.addi %79, %80 : vector<64x8x32xi32>
    %c1_i32_30 = arith.constant 1 : i32
    %82 = vector.broadcast %c1_i32_30 : i32 to vector<64x8x32xi32>
    %83 = arith.cmpi sge, %81, %82 : vector<64x8x32xi32>
    %c17_i32_31 = arith.constant 17 : i32
    %84 = vector.broadcast %c17_i32_31 : i32 to vector<64x8x32xi32>
    %85 = arith.cmpi slt, %81, %84 : vector<64x8x32xi32>
    %86 = arith.andi %83, %85 : vector<64x8x32xi1>
    %c0_i32_32 = arith.constant 0 : i32
    %87 = vector.broadcast %c0_i32_32 : i32 to vector<64x8x32xi32>
    %88 = arith.addi %1, %87 : vector<64x8x32xi32>
    %c2_i32_33 = arith.constant 2 : i32
    %89 = vector.broadcast %c2_i32_33 : i32 to vector<64x8x32xi32>
    %90 = arith.cmpi sge, %88, %89 : vector<64x8x32xi32>
    %c34_i32_34 = arith.constant 34 : i32
    %91 = vector.broadcast %c34_i32_34 : i32 to vector<64x8x32xi32>
    %92 = arith.cmpi slt, %88, %91 : vector<64x8x32xi32>
    %93 = arith.andi %90, %92 : vector<64x8x32xi1>
    %94 = arith.andi %86, %93 : vector<64x8x32xi1>
    %c0_35 = arith.constant 0 : index
    %c0_36 = arith.constant 0 : index
    %c0_37 = arith.constant 0 : index
    %95 = vector.load %arg2[%c0_35, %c0_36, %c0_37] : memref<64x9x36xf32, #tpu.memory_space<vmem>>, vector<64x8x32xf32>
    %96 = arith.addf %74, %95 : vector<64x8x32xf32>
    %cst_38 = arith.constant -3.000000e+38 : f32
    %97 = vector.broadcast %cst_38 : f32 to vector<64x8x32xf32>
    %98 = arith.select %94, %95, %97 : vector<64x8x32xi1>, vector<64x8x32xf32>
    %99 = arith.maximumf %77, %98 : vector<64x8x32xf32>
    %c1_i32_39 = arith.constant 1 : i32
    %100 = vector.broadcast %c1_i32_39 : i32 to vector<64x8x32xi32>
    %101 = arith.addi %1, %100 : vector<64x8x32xi32>
    %c2_i32_40 = arith.constant 2 : i32
    %102 = vector.broadcast %c2_i32_40 : i32 to vector<64x8x32xi32>
    %103 = arith.cmpi sge, %101, %102 : vector<64x8x32xi32>
    %c34_i32_41 = arith.constant 34 : i32
    %104 = vector.broadcast %c34_i32_41 : i32 to vector<64x8x32xi32>
    %105 = arith.cmpi slt, %101, %104 : vector<64x8x32xi32>
    %106 = arith.andi %103, %105 : vector<64x8x32xi1>
    %107 = arith.andi %86, %106 : vector<64x8x32xi1>
    %c0_42 = arith.constant 0 : index
    %c0_43 = arith.constant 0 : index
    %c1_44 = arith.constant 1 : index
    %108 = vector.load %arg2[%c0_42, %c0_43, %c1_44] : memref<64x9x36xf32, #tpu.memory_space<vmem>>, vector<64x8x32xf32>
    %109 = arith.addf %96, %108 : vector<64x8x32xf32>
    %cst_45 = arith.constant -3.000000e+38 : f32
    %110 = vector.broadcast %cst_45 : f32 to vector<64x8x32xf32>
    %111 = arith.select %107, %108, %110 : vector<64x8x32xi1>, vector<64x8x32xf32>
    %112 = arith.maximumf %99, %111 : vector<64x8x32xf32>
    %c2_i32_46 = arith.constant 2 : i32
    %113 = vector.broadcast %c2_i32_46 : i32 to vector<64x8x32xi32>
    %114 = arith.addi %1, %113 : vector<64x8x32xi32>
    %c2_i32_47 = arith.constant 2 : i32
    %115 = vector.broadcast %c2_i32_47 : i32 to vector<64x8x32xi32>
    %116 = arith.cmpi sge, %114, %115 : vector<64x8x32xi32>
    %c34_i32_48 = arith.constant 34 : i32
    %117 = vector.broadcast %c34_i32_48 : i32 to vector<64x8x32xi32>
    %118 = arith.cmpi slt, %114, %117 : vector<64x8x32xi32>
    %119 = arith.andi %116, %118 : vector<64x8x32xi1>
    %120 = arith.andi %86, %119 : vector<64x8x32xi1>
    %c0_49 = arith.constant 0 : index
    %c0_50 = arith.constant 0 : index
    %c2_51 = arith.constant 2 : index
    %121 = vector.load %arg2[%c0_49, %c0_50, %c2_51] : memref<64x9x36xf32, #tpu.memory_space<vmem>>, vector<64x8x32xf32>
    %122 = arith.addf %109, %121 : vector<64x8x32xf32>
    %cst_52 = arith.constant -3.000000e+38 : f32
    %123 = vector.broadcast %cst_52 : f32 to vector<64x8x32xf32>
    %124 = arith.select %120, %121, %123 : vector<64x8x32xi1>, vector<64x8x32xf32>
    %125 = arith.maximumf %112, %124 : vector<64x8x32xf32>
    %c3_i32_53 = arith.constant 3 : i32
    %126 = vector.broadcast %c3_i32_53 : i32 to vector<64x8x32xi32>
    %127 = arith.addi %1, %126 : vector<64x8x32xi32>
    %c2_i32_54 = arith.constant 2 : i32
    %128 = vector.broadcast %c2_i32_54 : i32 to vector<64x8x32xi32>
    %129 = arith.cmpi sge, %127, %128 : vector<64x8x32xi32>
    %c34_i32_55 = arith.constant 34 : i32
    %130 = vector.broadcast %c34_i32_55 : i32 to vector<64x8x32xi32>
    %131 = arith.cmpi slt, %127, %130 : vector<64x8x32xi32>
    %132 = arith.andi %129, %131 : vector<64x8x32xi1>
    %133 = arith.andi %86, %132 : vector<64x8x32xi1>
    %c0_56 = arith.constant 0 : index
    %c0_57 = arith.constant 0 : index
    %c3_58 = arith.constant 3 : index
    %134 = vector.load %arg2[%c0_56, %c0_57, %c3_58] : memref<64x9x36xf32, #tpu.memory_space<vmem>>, vector<64x8x32xf32>
    %135 = arith.addf %122, %134 : vector<64x8x32xf32>
    %cst_59 = arith.constant -3.000000e+38 : f32
    %136 = vector.broadcast %cst_59 : f32 to vector<64x8x32xf32>
    %137 = arith.select %133, %134, %136 : vector<64x8x32xi1>, vector<64x8x32xf32>
    %138 = arith.maximumf %125, %137 : vector<64x8x32xf32>
    %c4_i32_60 = arith.constant 4 : i32
    %139 = vector.broadcast %c4_i32_60 : i32 to vector<64x8x32xi32>
    %140 = arith.addi %1, %139 : vector<64x8x32xi32>
    %c2_i32_61 = arith.constant 2 : i32
    %141 = vector.broadcast %c2_i32_61 : i32 to vector<64x8x32xi32>
    %142 = arith.cmpi sge, %140, %141 : vector<64x8x32xi32>
    %c34_i32_62 = arith.constant 34 : i32
    %143 = vector.broadcast %c34_i32_62 : i32 to vector<64x8x32xi32>
    %144 = arith.cmpi slt, %140, %143 : vector<64x8x32xi32>
    %145 = arith.andi %142, %144 : vector<64x8x32xi1>
    %146 = arith.andi %86, %145 : vector<64x8x32xi1>
    %c0_63 = arith.constant 0 : index
    %c0_64 = arith.constant 0 : index
    %c4_65 = arith.constant 4 : index
    %147 = vector.load %arg2[%c0_63, %c0_64, %c4_65] : memref<64x9x36xf32, #tpu.memory_space<vmem>>, vector<64x8x32xf32>
    %148 = arith.addf %135, %147 : vector<64x8x32xf32>
    %cst_66 = arith.constant -3.000000e+38 : f32
    %149 = vector.broadcast %cst_66 : f32 to vector<64x8x32xf32>
    %150 = arith.select %146, %147, %149 : vector<64x8x32xi1>, vector<64x8x32xf32>
    %151 = arith.maximumf %138, %150 : vector<64x8x32xf32>
    %c2_i32_67 = arith.constant 2 : i32
    %152 = vector.broadcast %c2_i32_67 : i32 to vector<64x8x32xi32>
    %153 = arith.muli %0, %152 : vector<64x8x32xi32>
    %c2_i32_68 = arith.constant 2 : i32
    %154 = vector.broadcast %c2_i32_68 : i32 to vector<64x8x32xi32>
    %155 = arith.addi %153, %154 : vector<64x8x32xi32>
    %c1_i32_69 = arith.constant 1 : i32
    %156 = vector.broadcast %c1_i32_69 : i32 to vector<64x8x32xi32>
    %157 = arith.cmpi sge, %155, %156 : vector<64x8x32xi32>
    %c17_i32_70 = arith.constant 17 : i32
    %158 = vector.broadcast %c17_i32_70 : i32 to vector<64x8x32xi32>
    %159 = arith.cmpi slt, %155, %158 : vector<64x8x32xi32>
    %160 = arith.andi %157, %159 : vector<64x8x32xi1>
    %c0_i32_71 = arith.constant 0 : i32
    %161 = vector.broadcast %c0_i32_71 : i32 to vector<64x8x32xi32>
    %162 = arith.addi %1, %161 : vector<64x8x32xi32>
    %c2_i32_72 = arith.constant 2 : i32
    %163 = vector.broadcast %c2_i32_72 : i32 to vector<64x8x32xi32>
    %164 = arith.cmpi sge, %162, %163 : vector<64x8x32xi32>
    %c34_i32_73 = arith.constant 34 : i32
    %165 = vector.broadcast %c34_i32_73 : i32 to vector<64x8x32xi32>
    %166 = arith.cmpi slt, %162, %165 : vector<64x8x32xi32>
    %167 = arith.andi %164, %166 : vector<64x8x32xi1>
    %168 = arith.andi %160, %167 : vector<64x8x32xi1>
    %c0_74 = arith.constant 0 : index
    %c1_75 = arith.constant 1 : index
    %c0_76 = arith.constant 0 : index
    %169 = vector.load %arg1[%c0_74, %c1_75, %c0_76] : memref<64x9x36xf32, #tpu.memory_space<vmem>>, vector<64x8x32xf32>
    %170 = arith.addf %148, %169 : vector<64x8x32xf32>
    %cst_77 = arith.constant -3.000000e+38 : f32
    %171 = vector.broadcast %cst_77 : f32 to vector<64x8x32xf32>
    %172 = arith.select %168, %169, %171 : vector<64x8x32xi1>, vector<64x8x32xf32>
    %173 = arith.maximumf %151, %172 : vector<64x8x32xf32>
    %c1_i32_78 = arith.constant 1 : i32
    %174 = vector.broadcast %c1_i32_78 : i32 to vector<64x8x32xi32>
    %175 = arith.addi %1, %174 : vector<64x8x32xi32>
    %c2_i32_79 = arith.constant 2 : i32
    %176 = vector.broadcast %c2_i32_79 : i32 to vector<64x8x32xi32>
    %177 = arith.cmpi sge, %175, %176 : vector<64x8x32xi32>
    %c34_i32_80 = arith.constant 34 : i32
    %178 = vector.broadcast %c34_i32_80 : i32 to vector<64x8x32xi32>
    %179 = arith.cmpi slt, %175, %178 : vector<64x8x32xi32>
    %180 = arith.andi %177, %179 : vector<64x8x32xi1>
    %181 = arith.andi %160, %180 : vector<64x8x32xi1>
    %c0_81 = arith.constant 0 : index
    %c1_82 = arith.constant 1 : index
    %c1_83 = arith.constant 1 : index
    %182 = vector.load %arg1[%c0_81, %c1_82, %c1_83] : memref<64x9x36xf32, #tpu.memory_space<vmem>>, vector<64x8x32xf32>
    %183 = arith.addf %170, %182 : vector<64x8x32xf32>
    %cst_84 = arith.constant -3.000000e+38 : f32
    %184 = vector.broadcast %cst_84 : f32 to vector<64x8x32xf32>
    %185 = arith.select %181, %182, %184 : vector<64x8x32xi1>, vector<64x8x32xf32>
    %186 = arith.maximumf %173, %185 : vector<64x8x32xf32>
    %c2_i32_85 = arith.constant 2 : i32
    %187 = vector.broadcast %c2_i32_85 : i32 to vector<64x8x32xi32>
    %188 = arith.addi %1, %187 : vector<64x8x32xi32>
    %c2_i32_86 = arith.constant 2 : i32
    %189 = vector.broadcast %c2_i32_86 : i32 to vector<64x8x32xi32>
    %190 = arith.cmpi sge, %188, %189 : vector<64x8x32xi32>
    %c34_i32_87 = arith.constant 34 : i32
    %191 = vector.broadcast %c34_i32_87 : i32 to vector<64x8x32xi32>
    %192 = arith.cmpi slt, %188, %191 : vector<64x8x32xi32>
    %193 = arith.andi %190, %192 : vector<64x8x32xi1>
    %194 = arith.andi %160, %193 : vector<64x8x32xi1>
    %c0_88 = arith.constant 0 : index
    %c1_89 = arith.constant 1 : index
    %c2_90 = arith.constant 2 : index
    %195 = vector.load %arg1[%c0_88, %c1_89, %c2_90] : memref<64x9x36xf32, #tpu.memory_space<vmem>>, vector<64x8x32xf32>
    %196 = arith.addf %183, %195 : vector<64x8x32xf32>
    %cst_91 = arith.constant -3.000000e+38 : f32
    %197 = vector.broadcast %cst_91 : f32 to vector<64x8x32xf32>
    %198 = arith.select %194, %195, %197 : vector<64x8x32xi1>, vector<64x8x32xf32>
    %199 = arith.maximumf %186, %198 : vector<64x8x32xf32>
    %c3_i32_92 = arith.constant 3 : i32
    %200 = vector.broadcast %c3_i32_92 : i32 to vector<64x8x32xi32>
    %201 = arith.addi %1, %200 : vector<64x8x32xi32>
    %c2_i32_93 = arith.constant 2 : i32
    %202 = vector.broadcast %c2_i32_93 : i32 to vector<64x8x32xi32>
    %203 = arith.cmpi sge, %201, %202 : vector<64x8x32xi32>
    %c34_i32_94 = arith.constant 34 : i32
    %204 = vector.broadcast %c34_i32_94 : i32 to vector<64x8x32xi32>
    %205 = arith.cmpi slt, %201, %204 : vector<64x8x32xi32>
    %206 = arith.andi %203, %205 : vector<64x8x32xi1>
    %207 = arith.andi %160, %206 : vector<64x8x32xi1>
    %c0_95 = arith.constant 0 : index
    %c1_96 = arith.constant 1 : index
    %c3_97 = arith.constant 3 : index
    %208 = vector.load %arg1[%c0_95, %c1_96, %c3_97] : memref<64x9x36xf32, #tpu.memory_space<vmem>>, vector<64x8x32xf32>
    %209 = arith.addf %196, %208 : vector<64x8x32xf32>
    %cst_98 = arith.constant -3.000000e+38 : f32
    %210 = vector.broadcast %cst_98 : f32 to vector<64x8x32xf32>
    %211 = arith.select %207, %208, %210 : vector<64x8x32xi1>, vector<64x8x32xf32>
    %212 = arith.maximumf %199, %211 : vector<64x8x32xf32>
    %c4_i32_99 = arith.constant 4 : i32
    %213 = vector.broadcast %c4_i32_99 : i32 to vector<64x8x32xi32>
    %214 = arith.addi %1, %213 : vector<64x8x32xi32>
    %c2_i32_100 = arith.constant 2 : i32
    %215 = vector.broadcast %c2_i32_100 : i32 to vector<64x8x32xi32>
    %216 = arith.cmpi sge, %214, %215 : vector<64x8x32xi32>
    %c34_i32_101 = arith.constant 34 : i32
    %217 = vector.broadcast %c34_i32_101 : i32 to vector<64x8x32xi32>
    %218 = arith.cmpi slt, %214, %217 : vector<64x8x32xi32>
    %219 = arith.andi %216, %218 : vector<64x8x32xi1>
    %220 = arith.andi %160, %219 : vector<64x8x32xi1>
    %c0_102 = arith.constant 0 : index
    %c1_103 = arith.constant 1 : index
    %c4_104 = arith.constant 4 : index
    %221 = vector.load %arg1[%c0_102, %c1_103, %c4_104] : memref<64x9x36xf32, #tpu.memory_space<vmem>>, vector<64x8x32xf32>
    %222 = arith.addf %209, %221 : vector<64x8x32xf32>
    %cst_105 = arith.constant -3.000000e+38 : f32
    %223 = vector.broadcast %cst_105 : f32 to vector<64x8x32xf32>
    %224 = arith.select %220, %221, %223 : vector<64x8x32xi1>, vector<64x8x32xf32>
    %225 = arith.maximumf %212, %224 : vector<64x8x32xf32>
    %cst_106 = arith.constant 0.0666666701 : f32
    %226 = vector.broadcast %cst_106 : f32 to vector<64x8x32xf32>
    %227 = arith.mulf %222, %226 : vector<64x8x32xf32>
    %228 = arith.addf %227, %225 : vector<64x8x32xf32>
    %cst_107 = arith.constant 5.000000e-01 : f32
    %229 = vector.broadcast %cst_107 : f32 to vector<64x8x32xf32>
    %230 = arith.mulf %228, %229 : vector<64x8x32xf32>
    %c0_108 = arith.constant 0 : index
    %c0_109 = arith.constant 0 : index
    %c0_110 = arith.constant 0 : index
    %231 = vector.load %arg3[%c0_108, %c0_109, %c0_110] : memref<64x8x32xf32, #tpu.memory_space<vmem>>, vector<64x8x32xf32>
    tpu.vector_store %arg3[%c0_108, %c0_109, %c0_110], %230 {strides = array<i32>} : memref<64x8x32xf32, #tpu.memory_space<vmem>>, vector<64x8x32xf32>,
    return
  }
  func.func @transform_0(%arg0: i32) -> (i32, i32, i32) {
    %c0_i32 = arith.constant 0 : i32
    %c0_i32_0 = arith.constant 0 : i32
    %c0_i32_1 = arith.constant 0 : i32
    return %arg0, %c0_i32, %c0_i32_0 : i32, i32, i32
  }
  func.func @transform_1(%arg0: i32) -> (i32, i32, i32) {
    %c0_i32 = arith.constant 0 : i32
    %c0_i32_0 = arith.constant 0 : i32
    %c0_i32_1 = arith.constant 0 : i32
    return %arg0, %c0_i32, %c0_i32_0 : i32, i32, i32
  }
  func.func @transform_2(%arg0: i32) -> (i32, i32, i32) {
    %c0_i32 = arith.constant 0 : i32
    %c0_i32_0 = arith.constant 0 : i32
    %c0_i32_1 = arith.constant 0 : i32
    return %arg0, %c0_i32, %c0_i32_0 : i32, i32, i32
  }
}

module attributes {stable_mosaic.version = 11 : i64} {
  func.func @_linear_ln_kernel(%arg0: i32, %arg1: memref<512x64xbf16, #tpu.memory_space<vmem>>, %arg2: memref<64x128xbf16, #tpu.memory_space<vmem>>, %arg3: memref<1x128xf32, #tpu.memory_space<vmem>>, %arg4: memref<1x128xf32, #tpu.memory_space<vmem>>, %arg5: memref<1x128xf32, #tpu.memory_space<vmem>>, %arg6: memref<512x128xf32, #tpu.memory_space<vmem>>) attributes {dimension_semantics = [#tpu.dimension_semantics<parallel>], iteration_bounds = array<i64: 1>, scalar_prefetch = 0 : i64, scratch_operands = 0 : i64, tpu.core_type = #tpu.core_type<tc>, window_params = [{transform_indices = @transform_0, window_bounds = array<i64: 512, 64>}, {pipeline_mode = #tpu.pipeline_mode<synchronous>, transform_indices = @transform_1, window_bounds = array<i64: 64, 128>}, {pipeline_mode = #tpu.pipeline_mode<synchronous>, transform_indices = @transform_2, window_bounds = array<i64: 1, 128>}, {pipeline_mode = #tpu.pipeline_mode<synchronous>, transform_indices = @transform_3, window_bounds = array<i64: 1, 128>}, {pipeline_mode = #tpu.pipeline_mode<synchronous>, transform_indices = @transform_4, window_bounds = array<i64: 1, 128>}, {transform_indices = @transform_5, window_bounds = array<i64: 512, 128>}]} {
    %c0 = arith.constant 0 : index
    %c0_0 = arith.constant 0 : index
    %0 = vector.load %arg1[%c0, %c0_0] : memref<512x64xbf16, #tpu.memory_space<vmem>>, vector<512x64xbf16>
    %c0_1 = arith.constant 0 : index
    %c0_2 = arith.constant 0 : index
    %1 = vector.load %arg2[%c0_1, %c0_2] : memref<64x128xbf16, #tpu.memory_space<vmem>>, vector<64x128xbf16>
    %cst = arith.constant dense<0.000000e+00> : vector<512x128xf32>
    %2 = tpu.matmul %0, %1, %cst {dimension_numbers = #tpu.dot_dimension_numbers<[1], [0], [0], [1], [0, 0, 1, 1], [], []>} : vector<512x64xbf16>, vector<64x128xbf16>, vector<512x128xf32> -> vector<512x128xf32>
    %c0_3 = arith.constant 0 : index
    %c0_4 = arith.constant 0 : index
    %3 = vector.load %arg3[%c0_3, %c0_4] : memref<1x128xf32, #tpu.memory_space<vmem>>, vector<1x128xf32>
    %4 = vector.broadcast %3 : vector<1x128xf32> to vector<512x128xf32>
    %5 = arith.addf %2, %4 : vector<512x128xf32>
    %cst_5 = arith.constant dense<0.000000e+00> : vector<512xf32>
    %6 = vector.multi_reduction <add>, %5, %cst_5 [1] : vector<512x128xf32> to vector<512xf32>
    %7 = vector.shape_cast %6 : vector<512xf32> to vector<512x1xf32>
    %cst_6 = arith.constant 1.280000e+02 : f32
    %8 = vector.broadcast %cst_6 : f32 to vector<512x1xf32>
    %9 = arith.divf %7, %8 : vector<512x1xf32>
    %10 = vector.broadcast %9 : vector<512x1xf32> to vector<512x128xf32>
    %11 = arith.subf %5, %10 : vector<512x128xf32>
    %12 = arith.mulf %11, %11 : vector<512x128xf32>
    %cst_7 = arith.constant dense<0.000000e+00> : vector<512xf32>
    %13 = vector.multi_reduction <add>, %12, %cst_7 [1] : vector<512x128xf32> to vector<512xf32>
    %14 = vector.shape_cast %13 : vector<512xf32> to vector<512x1xf32>
    %cst_8 = arith.constant 1.280000e+02 : f32
    %15 = vector.broadcast %cst_8 : f32 to vector<512x1xf32>
    %16 = arith.divf %14, %15 : vector<512x1xf32>
    %cst_9 = arith.constant 9.99999974E-6 : f32
    %17 = vector.broadcast %cst_9 : f32 to vector<512x1xf32>
    %18 = arith.addf %16, %17 : vector<512x1xf32>
    %19 = math.rsqrt %18 : vector<512x1xf32>
    %20 = vector.broadcast %19 : vector<512x1xf32> to vector<512x128xf32>
    %21 = arith.mulf %11, %20 : vector<512x128xf32>
    %c0_10 = arith.constant 0 : index
    %c0_11 = arith.constant 0 : index
    %22 = vector.load %arg4[%c0_10, %c0_11] : memref<1x128xf32, #tpu.memory_space<vmem>>, vector<1x128xf32>
    %23 = vector.broadcast %22 : vector<1x128xf32> to vector<512x128xf32>
    %24 = arith.mulf %21, %23 : vector<512x128xf32>
    %c0_12 = arith.constant 0 : index
    %c0_13 = arith.constant 0 : index
    %25 = vector.load %arg5[%c0_12, %c0_13] : memref<1x128xf32, #tpu.memory_space<vmem>>, vector<1x128xf32>
    %26 = vector.broadcast %25 : vector<1x128xf32> to vector<512x128xf32>
    %27 = arith.addf %24, %26 : vector<512x128xf32>
    %c0_14 = arith.constant 0 : index
    %c0_15 = arith.constant 0 : index
    %28 = vector.load %arg6[%c0_14, %c0_15] : memref<512x128xf32, #tpu.memory_space<vmem>>, vector<512x128xf32>
    tpu.vector_store %arg6[%c0_14, %c0_15], %27 {strides = array<i32>} : memref<512x128xf32, #tpu.memory_space<vmem>>, vector<512x128xf32>,
    return
  }
  func.func @transform_0(%arg0: i32) -> (i32, i32) {
    %c0_i32 = arith.constant 0 : i32
    %c0_i32_0 = arith.constant 0 : i32
    return %arg0, %c0_i32 : i32, i32
  }
  func.func @transform_1(%arg0: i32) -> (i32, i32) {
    %c0_i32 = arith.constant 0 : i32
    %c0_i32_0 = arith.constant 0 : i32
    %c0_i32_1 = arith.constant 0 : i32
    return %c0_i32, %c0_i32_0 : i32, i32
  }
  func.func @transform_2(%arg0: i32) -> (i32, i32) {
    %c0_i32 = arith.constant 0 : i32
    %c0_i32_0 = arith.constant 0 : i32
    %c0_i32_1 = arith.constant 0 : i32
    return %c0_i32, %c0_i32_0 : i32, i32
  }
  func.func @transform_3(%arg0: i32) -> (i32, i32) {
    %c0_i32 = arith.constant 0 : i32
    %c0_i32_0 = arith.constant 0 : i32
    %c0_i32_1 = arith.constant 0 : i32
    return %c0_i32, %c0_i32_0 : i32, i32
  }
  func.func @transform_4(%arg0: i32) -> (i32, i32) {
    %c0_i32 = arith.constant 0 : i32
    %c0_i32_0 = arith.constant 0 : i32
    %c0_i32_1 = arith.constant 0 : i32
    return %c0_i32, %c0_i32_0 : i32, i32
  }
  func.func @transform_5(%arg0: i32) -> (i32, i32) {
    %c0_i32 = arith.constant 0 : i32
    %c0_i32_0 = arith.constant 0 : i32
    return %arg0, %c0_i32 : i32, i32
  }
}

</mosaic_0001>

<llo_original>
// kernel: subsample_forward.3
$region0: #{subsample_forward.3}
  #allocation0 [shape = 'u32[]', space=smem, size = 0x4, offset = 0x4, fixed_abs, tag = 'smem constant byte address 0x4 - core index']
  #allocation1 [shape = 'u32[144,128]{1,0:T(1,128)}', space=vmem, size = 0x12000, scoped, tag = 'internal scratch']
  %s0 = inlined_call_operand.vmem [shape: bf16[512,64], index: 0, kind: input, shape index: {}]
  %s1 = inlined_call_operand.vmem [shape: bf16[64,128], index: 1, kind: input, shape index: {}]
  %s2 = inlined_call_operand.vmem [shape: f32[1,128], index: 2, kind: input, shape index: {}]
  %s3 = inlined_call_operand.vmem [shape: f32[1,128], index: 3, kind: input, shape index: {}]
  %s4 = inlined_call_operand.vmem [shape: f32[1,128], index: 4, kind: input, shape index: {}]
  %s5 = inlined_call_operand.hbm [shape: f32[512,128], index: 5, kind: output, shape index: {}]
  %s6 = sld [smem:[#allocation0]]
  $region30: #{subsample_forward.3} parent=0
    _
  %s8 = ssub.s32 1, %s6
  %s9 = scalar_select 0, %s8, %s6
  $region1: #{subsample_forward.3} parent=0
    #allocation2 [shape = 'u8[262144]{0}', space=vmem, size = 0x40000, scoped, tag = 'output window, operand 0, single buffered']
    #allocation3 [shape = 's32[1]{0}', space=sflag, size = 0x4, scoped, tag = 'scoped memory for subsample_forward.3']
    %10 = vsyncpa [#allocation3], 0
    // Predicated region
    $region2: #{subsample_forward.3} parent=1 // pred_check
      _
    $region3: #{subsample_forward.3} parent=1 // pred_check_branch
      %12 = sbr.rel (0) target = $region5
    $region4: #{subsample_forward.3} parent=1 // pred_region
      _
    $region5: #{subsample_forward.3} parent=1 // pred_fallthru
      _
    // Predicated region
    $region6: #{subsample_forward.3} parent=1 // pred_check
      _
    $region7: #{subsample_forward.3} parent=1 // pred_check_branch
      %14 = sbr.rel (0) target = $region9
    $region8: #{subsample_forward.3} parent=1 // pred_region
      _
    $region9: #{subsample_forward.3} parent=1 // pred_fallthru
      _
    // Predicated region
    $region10: #{subsample_forward.3} parent=1 // pred_check
      _
    $region11: #{subsample_forward.3} parent=1 // pred_check_branch
      %16 = sbr.rel (0) target = $region13
    $region12: #{subsample_forward.3} parent=1 // pred_region
      _
    $region13: #{subsample_forward.3} parent=1 // pred_fallthru
      _
    // Predicated region
    $region14: #{subsample_forward.3} parent=1 // pred_check
      _
    $region15: #{subsample_forward.3} parent=1 // pred_check_branch
      %18 = sbr.rel (0) target = $region17
    $region16: #{subsample_forward.3} parent=1 // pred_region
      _
    $region17: #{subsample_forward.3} parent=1 // pred_fallthru
      _
    // Predicated region
    $region18: #{subsample_forward.3} parent=1 // pred_check
      _
    $region19: #{subsample_forward.3} parent=1 // pred_check_branch
      %20 = sbr.rel (0) target = $region21
    $region20: #{subsample_forward.3} parent=1 // pred_region
      _
    $region21: #{subsample_forward.3} parent=1 // pred_fallthru
      _
    %v22 = vld [vmem:[%s0] sm:$0xf]
    %v23 = vld [vmem:[%s0 + $0x4] sm:$0xf]
    %v24 = vld [vmem:[%s0 + $0x8] sm:$0xf]
    %v25 = vld [vmem:[%s0 + $0xc] sm:$0xf]
    %v26 = vld [vmem:[%s0 + $0x10] sm:$0xf]
    %v27 = vld [vmem:[%s0 + $0x14] sm:$0xf]
    %v28 = vld [vmem:[%s0 + $0x18] sm:$0xf]
    %v29 = vld [vmem:[%s0 + $0x1c] sm:$0xf]
    %v30 = vld [vmem:[%s0 + $0x20] sm:$0xf]
    %v31 = vld [vmem:[%s0 + $0x24] sm:$0xf]
    %v32 = vld [vmem:[%s0 + $0x28] sm:$0xf]
    %v33 = vld [vmem:[%s0 + $0x2c] sm:$0xf]
    %v34 = vld [vmem:[%s0 + $0x30] sm:$0xf]
    %v35 = vld [vmem:[%s0 + $0x34] sm:$0xf]
    %v36 = vld [vmem:[%s0 + $0x38] sm:$0xf]
    %v37 = vld [vmem:[%s0 + $0x3c] sm:$0xf]
    %v38 = vld [vmem:[%s0 + $0x40] sm:$0xf]
    %v39 = vld [vmem:[%s0 + $0x44] sm:$0xf]
    %v40 = vld [vmem:[%s0 + $0x48] sm:$0xf]
    %v41 = vld [vmem:[%s0 + $0x4c] sm:$0xf]
    %v42 = vld [vmem:[%s0 + $0x50] sm:$0xf]
    %v43 = vld [vmem:[%s0 + $0x54] sm:$0xf]
    %v44 = vld [vmem:[%s0 + $0x58] sm:$0xf]
    %v45 = vld [vmem:[%s0 + $0x5c] sm:$0xf]
    %v46 = vld [vmem:[%s0 + $0x60] sm:$0xf]
    %v47 = vld [vmem:[%s0 + $0x64] sm:$0xf]
    %v48 = vld [vmem:[%s0 + $0x68] sm:$0xf]
    %v49 = vld [vmem:[%s0 + $0x6c] sm:$0xf]
    %v50 = vld [vmem:[%s0 + $0x70] sm:$0xf]
    %v51 = vld [vmem:[%s0 + $0x74] sm:$0xf]
    %v52 = vld [vmem:[%s0 + $0x78] sm:$0xf]
    %v53 = vld [vmem:[%s0 + $0x7c] sm:$0xf]
    %v54 = vld [vmem:[%s0 + $0x80] sm:$0xf]
    %v55 = vld [vmem:[%s0 + $0x84] sm:$0xf]
    %v56 = vld [vmem:[%s0 + $0x88] sm:$0xf]
    %v57 = vld [vmem:[%s0 + $0x8c] sm:$0xf]
    %v58 = vld [vmem:[%s0 + $0x90] sm:$0xf]
    %v59 = vld [vmem:[%s0 + $0x94] sm:$0xf]
    %v60 = vld [vmem:[%s0 + $0x98] sm:$0xf]
    %v61 = vld [vmem:[%s0 + $0x9c] sm:$0xf]
    %v62 = vld [vmem:[%s0 + $0xa0] sm:$0xf]
    %v63 = vld [vmem:[%s0 + $0xa4] sm:$0xf]
    %v64 = vld [vmem:[%s0 + $0xa8] sm:$0xf]
    %v65 = vld [vmem:[%s0 + $0xac] sm:$0xf]
    %v66 = vld [vmem:[%s0 + $0xb0] sm:$0xf]
    %v67 = vld [vmem:[%s0 + $0xb4] sm:$0xf]
    %v68 = vld [vmem:[%s0 + $0xb8] sm:$0xf]
    %v69 = vld [vmem:[%s0 + $0xbc] sm:$0xf]
    %v70 = vld [vmem:[%s0 + $0xc0] sm:$0xf]
    %v71 = vld [vmem:[%s0 + $0xc4] sm:$0xf]
    %v72 = vld [vmem:[%s0 + $0xc8] sm:$0xf]
    %v73 = vld [vmem:[%s0 + $0xcc] sm:$0xf]
    %v74 = vld [vmem:[%s0 + $0xd0] sm:$0xf]
    %v75 = vld [vmem:[%s0 + $0xd4] sm:$0xf]
    %v76 = vld [vmem:[%s0 + $0xd8] sm:$0xf]
    %v77 = vld [vmem:[%s0 + $0xdc] sm:$0xf]
    %v78 = vld [vmem:[%s0 + $0xe0] sm:$0xf]
    %v79 = vld [vmem:[%s0 + $0xe4] sm:$0xf]
    %v80 = vld [vmem:[%s0 + $0xe8] sm:$0xf]
    %v81 = vld [vmem:[%s0 + $0xec] sm:$0xf]
    %v82 = vld [vmem:[%s0 + $0xf0] sm:$0xf]
    %v83 = vld [vmem:[%s0 + $0xf4] sm:$0xf]
    %v84 = vld [vmem:[%s0 + $0xf8] sm:$0xf]
    %v85 = vld [vmem:[%s0 + $0xfc] sm:$0xf]
    %v86 = vld [vmem:[%s1] sm:$0xf]
    %v87 = vld [vmem:[%s1 + $0x4] sm:$0xf]
    %v88 = vld [vmem:[%s1 + $0x8] sm:$0xf]
    %v89 = vld [vmem:[%s1 + $0xc] sm:$0xf]
    %v90 = vld [vmem:[%s1 + $0x10] sm:$0xf]
    %v91 = vld [vmem:[%s1 + $0x14] sm:$0xf]
    %v92 = vld [vmem:[%s1 + $0x18] sm:$0xf]
    %v93 = vld [vmem:[%s1 + $0x1c] sm:$0xf]
    %v94 = vld [vmem:[%s2] sm:$0x1]
    %v96 = vlaneseq
    %v97 = vshrl.u32 %v96, 7
    %v98 = vsub.s32 0, %v97
    %v99 = vrot.slane %v94, %v98
    %v165 = vunpack.c.l.b16 %v22
    %v166 = vunpack.c.l.b16 %v23
    %v167 = vunpack.c.l.b16 %v24
    %v168 = vunpack.c.l.b16 %v25
    %v169 = vunpack.c.l.b16 %v26
    %v170 = vunpack.c.l.b16 %v27
    %v171 = vunpack.c.l.b16 %v28
    %v172 = vunpack.c.l.b16 %v29
    %v173 = vunpack.c.l.b16 %v30
    %v174 = vunpack.c.l.b16 %v31
    %v175 = vunpack.c.l.b16 %v32
    %v176 = vunpack.c.l.b16 %v33
    %v177 = vunpack.c.l.b16 %v34
    %v178 = vunpack.c.l.b16 %v35
    %v179 = vunpack.c.l.b16 %v36
    %v180 = vunpack.c.l.b16 %v37
    %v181 = vunpack.c.l.b16 %v38
    %v182 = vunpack.c.l.b16 %v39
    %v183 = vunpack.c.l.b16 %v40
    %v184 = vunpack.c.l.b16 %v41
    %v185 = vunpack.c.l.b16 %v42
    %v186 = vunpack.c.l.b16 %v43
    %v187 = vunpack.c.l.b16 %v44
    %v188 = vunpack.c.l.b16 %v45
    %v189 = vunpack.c.l.b16 %v46
    %v190 = vunpack.c.l.b16 %v47
    %v191 = vunpack.c.l.b16 %v48
    %v192 = vunpack.c.l.b16 %v49
    %v193 = vunpack.c.l.b16 %v50
    %v194 = vunpack.c.l.b16 %v51
    %v195 = vunpack.c.l.b16 %v52
    %v196 = vunpack.c.l.b16 %v53
    %v197 = vunpack.c.l.b16 %v54
    %v198 = vunpack.c.l.b16 %v55
    %v199 = vunpack.c.l.b16 %v56
    %v200 = vunpack.c.l.b16 %v57
    %v201 = vunpack.c.l.b16 %v58
    %v202 = vunpack.c.l.b16 %v59
    %v203 = vunpack.c.l.b16 %v60
    %v204 = vunpack.c.l.b16 %v61
    %v205 = vunpack.c.l.b16 %v62
    %v206 = vunpack.c.l.b16 %v63
    %v207 = vunpack.c.l.b16 %v64
    %v208 = vunpack.c.l.b16 %v65
    %v209 = vunpack.c.l.b16 %v66
    %v210 = vunpack.c.l.b16 %v67
    %v211 = vunpack.c.l.b16 %v68
    %v212 = vunpack.c.l.b16 %v69
    %v213 = vunpack.c.l.b16 %v70
    %v214 = vunpack.c.l.b16 %v71
    %v215 = vunpack.c.l.b16 %v72
    %v216 = vunpack.c.l.b16 %v73
    %v217 = vunpack.c.l.b16 %v74
    %v218 = vunpack.c.l.b16 %v75
    %v219 = vunpack.c.l.b16 %v76
    %v220 = vunpack.c.l.b16 %v77
    %v221 = vunpack.c.l.b16 %v78
    %v222 = vunpack.c.l.b16 %v79
    %v223 = vunpack.c.l.b16 %v80
    %v224 = vunpack.c.l.b16 %v81
    %v225 = vunpack.c.l.b16 %v82
    %v226 = vunpack.c.l.b16 %v83
    %v227 = vunpack.c.l.b16 %v84
    %v228 = vunpack.c.l.b16 %v85
    %v229 = vpack.c.b16 %v166, %v165
    %v230 = vpack.c.b16 %v168, %v167
    %v231 = vpack.c.b16 %v170, %v169
    %v232 = vpack.c.b16 %v172, %v171
    %v233 = vpack.c.b16 %v174, %v173
    %v234 = vpack.c.b16 %v176, %v175
    %v235 = vpack.c.b16 %v178, %v177
    %v236 = vpack.c.b16 %v180, %v179
    %v237 = vpack.c.b16 %v182, %v181
    %v238 = vpack.c.b16 %v184, %v183
    %v239 = vpack.c.b16 %v186, %v185
    %v240 = vpack.c.b16 %v188, %v187
    %v241 = vpack.c.b16 %v190, %v189
    %v242 = vpack.c.b16 %v192, %v191
    %v243 = vpack.c.b16 %v194, %v193
    %v244 = vpack.c.b16 %v196, %v195
    %v245 = vpack.c.b16 %v198, %v197
    %v246 = vpack.c.b16 %v200, %v199
    %v247 = vpack.c.b16 %v202, %v201
    %v248 = vpack.c.b16 %v204, %v203
    %v249 = vpack.c.b16 %v206, %v205
    %v250 = vpack.c.b16 %v208, %v207
    %v251 = vpack.c.b16 %v210, %v209
    %v252 = vpack.c.b16 %v212, %v211
    %v253 = vpack.c.b16 %v214, %v213
    %v254 = vpack.c.b16 %v216, %v215
    %v255 = vpack.c.b16 %v218, %v217
    %v256 = vpack.c.b16 %v220, %v219
    %v257 = vpack.c.b16 %v222, %v221
    %v258 = vpack.c.b16 %v224, %v223
    %v259 = vpack.c.b16 %v226, %v225
    %v260 = vpack.c.b16 %v228, %v227
    %v269 = vunpack.c.l.b16 %v86
    %v270 = vunpack.c.l.b16 %v87
    %v271 = vunpack.c.l.b16 %v88
    %v272 = vunpack.c.l.b16 %v89
    %v273 = vunpack.c.l.b16 %v90
    %v274 = vunpack.c.l.b16 %v91
    %v275 = vunpack.c.l.b16 %v92
    %v276 = vunpack.c.l.b16 %v93
    %v277 = vpack.c.b16 %v270, %v269
    %v278 = vpack.c.b16 %v272, %v271
    %v279 = vpack.c.b16 %v274, %v273
    %v280 = vpack.c.b16 %v276, %v275
    %vm285 = vcmask 523264
    %v287 = vsel %vm285, %v229, 0
    %v290 = vsel %vm285, %v230, 0
    %v293 = vsel %vm285, %v231, 0
    %v296 = vsel %vm285, %v232, 0
    %v299 = vsel %vm285, %v233, 0
    %v302 = vsel %vm285, %v234, 0
    %v305 = vsel %vm285, %v235, 0
    %v308 = vsel %vm285, %v236, 0
    %v311 = vsel %vm285, %v237, 0
    %v314 = vsel %vm285, %v238, 0
    %v317 = vsel %vm285, %v239, 0
    %v320 = vsel %vm285, %v240, 0
    %v323 = vsel %vm285, %v241, 0
    %v326 = vsel %vm285, %v242, 0
    %v329 = vsel %vm285, %v243, 0
    %v332 = vsel %vm285, %v244, 0
    %v335 = vsel %vm285, %v245, 0
    %v338 = vsel %vm285, %v246, 0
    %v341 = vsel %vm285, %v247, 0
    %v344 = vsel %vm285, %v248, 0
    %v347 = vsel %vm285, %v249, 0
    %v350 = vsel %vm285, %v250, 0
    %v353 = vsel %vm285, %v251, 0
    %v356 = vsel %vm285, %v252, 0
    %v359 = vsel %vm285, %v253, 0
    %v362 = vsel %vm285, %v254, 0
    %v365 = vsel %vm285, %v255, 0
    %v368 = vsel %vm285, %v256, 0
    %v371 = vsel %vm285, %v257, 0
    %v374 = vsel %vm285, %v258, 0
    %v377 = vsel %vm285, %v259, 0
    %v380 = vsel %vm285, %v260, 0
    %382 = vmatprep.subr.bf16.mxu0 0
    %383 = vmatpush1.bf16.msra.mxu0 %v277
    %384 = vmatprep.subr.bf16.mxu0 0
    %385 = vmatpush1.bf16.msra.mxu0 %v278
    %386 = vmatprep.subr.bf16.mxu0 0
    %387 = vmatpush1.bf16.msra.mxu0 %v279
    %388 = vmatprep.subr.bf16.mxu0 0
    %389 = vmatpush1.bf16.msra.mxu0 %v280
    %390 = vmatprep.subr.bf16.mxu0 0
    %391 = vmatpush1.bf16.msra.mxu0 0
    %392 = vmatprep.subr.bf16.mxu0 0
    %393 = vmatpush1.bf16.msra.mxu0 0
    %394 = vmatprep.subr.bf16.mxu0 0
    %395 = vmatpush1.bf16.msra.mxu0 0
    %396 = vmatprep.subr.bf16.mxu0 0
    %397 = vmatpush1.bf16.msra.mxu0 0
    %398 = vmatprep.subr.bf16.mxu0 0
    %399 = vmatpush1.bf16.msra.mxu0 0
    %400 = vmatprep.subr.bf16.mxu0 0
    %401 = vmatpush1.bf16.msra.mxu0 0
    %402 = vmatprep.subr.bf16.mxu0 0
    %403 = vmatpush1.bf16.msra.mxu0 0
    %404 = vmatprep.subr.bf16.mxu0 0
    %405 = vmatpush1.bf16.msra.mxu0 0
    %406 = vmatprep.subr.bf16.mxu0 0
    %407 = vmatpush1.bf16.msra.mxu0 0
    %408 = vmatprep.subr.bf16.mxu0 0
    %409 = vmatpush1.bf16.msra.mxu0 0
    %410 = vmatprep.subr.bf16.mxu0 0
    %411 = vmatpush1.bf16.msra.mxu0 0
    %412 = vmatprep.subr.bf16.mxu0 0
    %413 = vmatpush1.bf16.msra.mxu0 0
    %414 = vmatprep.mubr.bf16.mxu0 0
    %415 = vmatmul.mubr.bf16.gmra.mrb[0].mxu0 %v287
    %v416 = vpop.f32.mrb[0].mxu0
    %v417 = vadd.f32 %v99, %v416
    %v418 = vpop.f32.mrb[0].mxu0
    %v419 = vpop.f32.mrb[0].mxu0
    %v420 = vadd.f32 %v99, %v419
    %v421 = vpop.f32.mrb[0].mxu0
    %422 = vmatprep.mubr.bf16.mxu0 0
    %423 = vmatmul.mubr.bf16.gmra.mrb[0].mxu0 %v290
    %v424 = vpop.f32.mrb[0].mxu0
    %v425 = vadd.f32 %v99, %v424
    %v426 = vpop.f32.mrb[0].mxu0
    %v427 = vpop.f32.mrb[0].mxu0
    %v428 = vadd.f32 %v99, %v427
    %v429 = vpop.f32.mrb[0].mxu0
    %430 = vmatprep.mubr.bf16.mxu0 0
    %431 = vmatmul.mubr.bf16.gmra.mrb[0].mxu0 %v293
    %v432 = vpop.f32.mrb[0].mxu0
    %v433 = vadd.f32 %v99, %v432
    %v434 = vpop.f32.mrb[0].mxu0
    %v435 = vpop.f32.mrb[0].mxu0
    %v436 = vadd.f32 %v99, %v435
    %v437 = vpop.f32.mrb[0].mxu0
    %438 = vmatprep.mubr.bf16.mxu0 0
    %439 = vmatmul.mubr.bf16.gmra.mrb[0].mxu0 %v296
    %v440 = vpop.f32.mrb[0].mxu0
    %v441 = vadd.f32 %v99, %v440
    %v442 = vpop.f32.mrb[0].mxu0
    %v443 = vpop.f32.mrb[0].mxu0
    %v444 = vadd.f32 %v99, %v443
    %v445 = vpop.f32.mrb[0].mxu0
    %446 = vmatprep.mubr.bf16.mxu0 0
    %447 = vmatmul.mubr.bf16.gmra.mrb[0].mxu0 %v299
    %v448 = vpop.f32.mrb[0].mxu0
    %v449 = vadd.f32 %v99, %v448
    %v450 = vpop.f32.mrb[0].mxu0
    %v451 = vpop.f32.mrb[0].mxu0
    %v452 = vadd.f32 %v99, %v451
    %v453 = vpop.f32.mrb[0].mxu0
    %454 = vmatprep.mubr.bf16.mxu0 0
    %455 = vmatmul.mubr.bf16.gmra.mrb[0].mxu0 %v302
    %v456 = vpop.f32.mrb[0].mxu0
    %v457 = vadd.f32 %v99, %v456
    %v458 = vpop.f32.mrb[0].mxu0
    %v459 = vpop.f32.mrb[0].mxu0
    %v460 = vadd.f32 %v99, %v459
    %v461 = vpop.f32.mrb[0].mxu0
    %462 = vmatprep.mubr.bf16.mxu0 0
    %463 = vmatmul.mubr.bf16.gmra.mrb[0].mxu0 %v305
    %v464 = vpop.f32.mrb[0].mxu0
    %v465 = vadd.f32 %v99, %v464
    %v466 = vpop.f32.mrb[0].mxu0
    %v467 = vpop.f32.mrb[0].mxu0
    %v468 = vadd.f32 %v99, %v467
    %v469 = vpop.f32.mrb[0].mxu0
    %470 = vmatprep.mubr.bf16.mxu0 0
    %471 = vmatmul.mubr.bf16.gmra.mrb[0].mxu0 %v308
    %v472 = vpop.f32.mrb[0].mxu0
    %v473 = vadd.f32 %v99, %v472
    %v474 = vpop.f32.mrb[0].mxu0
    %v475 = vpop.f32.mrb[0].mxu0
    %v476 = vadd.f32 %v99, %v475
    %v477 = vpop.f32.mrb[0].mxu0
    %478 = vmatprep.mubr.bf16.mxu0 0
    %479 = vmatmul.mubr.bf16.gmra.mrb[0].mxu0 %v311
    %v480 = vpop.f32.mrb[0].mxu0
    %v481 = vadd.f32 %v99, %v480
    %v482 = vpop.f32.mrb[0].mxu0
    %v483 = vpop.f32.mrb[0].mxu0
    %v484 = vadd.f32 %v99, %v483
    %v485 = vpop.f32.mrb[0].mxu0
    %486 = vmatprep.mubr.bf16.mxu0 0
    %487 = vmatmul.mubr.bf16.gmra.mrb[0].mxu0 %v314
    %v488 = vpop.f32.mrb[0].mxu0
    %v489 = vadd.f32 %v99, %v488
    %v490 = vpop.f32.mrb[0].mxu0
    %v491 = vpop.f32.mrb[0].mxu0
    %v492 = vadd.f32 %v99, %v491
    %v493 = vpop.f32.mrb[0].mxu0
    %494 = vmatprep.mubr.bf16.mxu0 0
    %495 = vmatmul.mubr.bf16.gmra.mrb[0].mxu0 %v317
    %v496 = vpop.f32.mrb[0].mxu0
    %v497 = vadd.f32 %v99, %v496
    %v498 = vpop.f32.mrb[0].mxu0
    %v499 = vpop.f32.mrb[0].mxu0
    %v500 = vadd.f32 %v99, %v499
    %v501 = vpop.f32.mrb[0].mxu0
    %502 = vmatprep.mubr.bf16.mxu0 0
    %503 = vmatmul.mubr.bf16.gmra.mrb[0].mxu0 %v320
    %v504 = vpop.f32.mrb[0].mxu0
    %v505 = vadd.f32 %v99, %v504
    %v506 = vpop.f32.mrb[0].mxu0
    %v507 = vpop.f32.mrb[0].mxu0
    %v508 = vadd.f32 %v99, %v507
    %v509 = vpop.f32.mrb[0].mxu0
    %510 = vmatprep.mubr.bf16.mxu0 0
    %511 = vmatmul.mubr.bf16.gmra.mrb[0].mxu0 %v323
    %v512 = vpop.f32.mrb[0].mxu0
    %v513 = vadd.f32 %v99, %v512
    %v514 = vpop.f32.mrb[0].mxu0
    %v515 = vpop.f32.mrb[0].mxu0
    %v516 = vadd.f32 %v99, %v515
    %v517 = vpop.f32.mrb[0].mxu0
    %518 = vmatprep.mubr.bf16.mxu0 0
    %519 = vmatmul.mubr.bf16.gmra.mrb[0].mxu0 %v326
    %v520 = vpop.f32.mrb[0].mxu0
    %v521 = vadd.f32 %v99, %v520
    %v522 = vpop.f32.mrb[0].mxu0
    %v523 = vpop.f32.mrb[0].mxu0
    %v524 = vadd.f32 %v99, %v523
    %v525 = vpop.f32.mrb[0].mxu0
    %526 = vmatprep.mubr.bf16.mxu0 0
    %527 = vmatmul.mubr.bf16.gmra.mrb[0].mxu0 %v329
    %v528 = vpop.f32.mrb[0].mxu0
    %v529 = vadd.f32 %v99, %v528
    %v530 = vpop.f32.mrb[0].mxu0
    %v531 = vpop.f32.mrb[0].mxu0
    %v532 = vadd.f32 %v99, %v531
    %v533 = vpop.f32.mrb[0].mxu0
    %534 = vmatprep.mubr.bf16.mxu0 0
    %535 = vmatmul.mubr.bf16.gmra.mrb[0].mxu0 %v332
    %v536 = vpop.f32.mrb[0].mxu0
    %v537 = vadd.f32 %v99, %v536
    %v538 = vpop.f32.mrb[0].mxu0
    %v539 = vpop.f32.mrb[0].mxu0
    %v540 = vadd.f32 %v99, %v539
    %v541 = vpop.f32.mrb[0].mxu0
    %542 = vmatprep.mubr.bf16.mxu0 0
    %543 = vmatmul.mubr.bf16.gmra.mrb[0].mxu0 %v335
    %v544 = vpop.f32.mrb[0].mxu0
    %v545 = vadd.f32 %v99, %v544
    %v546 = vpop.f32.mrb[0].mxu0
    %v547 = vpop.f32.mrb[0].mxu0
    %v548 = vadd.f32 %v99, %v547
    %v549 = vpop.f32.mrb[0].mxu0
    %550 = vmatprep.mubr.bf16.mxu0 0
    %551 = vmatmul.mubr.bf16.gmra.mrb[0].mxu0 %v338
    %v552 = vpop.f32.mrb[0].mxu0
    %v553 = vadd.f32 %v99, %v552
    %v554 = vpop.f32.mrb[0].mxu0
    %v555 = vpop.f32.mrb[0].mxu0
    %v556 = vadd.f32 %v99, %v555
    %v557 = vpop.f32.mrb[0].mxu0
    %558 = vmatprep.mubr.bf16.mxu0 0
    %559 = vmatmul.mubr.bf16.gmra.mrb[0].mxu0 %v341
    %v560 = vpop.f32.mrb[0].mxu0
    %v561 = vadd.f32 %v99, %v560
    %v562 = vpop.f32.mrb[0].mxu0
    %v563 = vpop.f32.mrb[0].mxu0
    %v564 = vadd.f32 %v99, %v563
    %v565 = vpop.f32.mrb[0].mxu0
    %566 = vmatprep.mubr.bf16.mxu0 0
    %567 = vmatmul.mubr.bf16.gmra.mrb[0].mxu0 %v344
    %v568 = vpop.f32.mrb[0].mxu0
    %v569 = vadd.f32 %v99, %v568
    %v570 = vpop.f32.mrb[0].mxu0
    %v571 = vpop.f32.mrb[0].mxu0
    %v572 = vadd.f32 %v99, %v571
    %v573 = vpop.f32.mrb[0].mxu0
    %574 = vmatprep.mubr.bf16.mxu0 0
    %575 = vmatmul.mubr.bf16.gmra.mrb[0].mxu0 %v347
    %v576 = vpop.f32.mrb[0].mxu0
    %v577 = vadd.f32 %v99, %v576
    %v578 = vpop.f32.mrb[0].mxu0
    %v579 = vpop.f32.mrb[0].mxu0
    %v580 = vadd.f32 %v99, %v579
    %v581 = vpop.f32.mrb[0].mxu0
    %582 = vmatprep.mubr.bf16.mxu0 0
    %583 = vmatmul.mubr.bf16.gmra.mrb[0].mxu0 %v350
    %v584 = vpop.f32.mrb[0].mxu0
    %v585 = vadd.f32 %v99, %v584
    %v586 = vpop.f32.mrb[0].mxu0
    %v587 = vpop.f32.mrb[0].mxu0
    %v588 = vadd.f32 %v99, %v587
    %v589 = vpop.f32.mrb[0].mxu0
    %590 = vmatprep.mubr.bf16.mxu0 0
    %591 = vmatmul.mubr.bf16.gmra.mrb[0].mxu0 %v353
    %v592 = vpop.f32.mrb[0].mxu0
    %v593 = vadd.f32 %v99, %v592
    %v594 = vpop.f32.mrb[0].mxu0
    %v595 = vpop.f32.mrb[0].mxu0
    %v596 = vadd.f32 %v99, %v595
    %v597 = vpop.f32.mrb[0].mxu0
    %598 = vmatprep.mubr.bf16.mxu0 0
    %599 = vmatmul.mubr.bf16.gmra.mrb[0].mxu0 %v356
    %v600 = vpop.f32.mrb[0].mxu0
    %v601 = vadd.f32 %v99, %v600
    %v602 = vpop.f32.mrb[0].mxu0
    %v603 = vpop.f32.mrb[0].mxu0
    %v604 = vadd.f32 %v99, %v603
    %v605 = vpop.f32.mrb[0].mxu0
    %606 = vmatprep.mubr.bf16.mxu0 0
    %607 = vmatmul.mubr.bf16.gmra.mrb[0].mxu0 %v359
    %v608 = vpop.f32.mrb[0].mxu0
    %v609 = vadd.f32 %v99, %v608
    %v610 = vpop.f32.mrb[0].mxu0
    %v611 = vpop.f32.mrb[0].mxu0
    %v612 = vadd.f32 %v99, %v611
    %v613 = vpop.f32.mrb[0].mxu0
    %614 = vmatprep.mubr.bf16.mxu0 0
    %615 = vmatmul.mubr.bf16.gmra.mrb[0].mxu0 %v362
    %v616 = vpop.f32.mrb[0].mxu0
    %v617 = vadd.f32 %v99, %v616
    %v618 = vpop.f32.mrb[0].mxu0
    %v619 = vpop.f32.mrb[0].mxu0
    %v620 = vadd.f32 %v99, %v619
    %v621 = vpop.f32.mrb[0].mxu0
    %622 = vmatprep.mubr.bf16.mxu0 0
    %623 = vmatmul.mubr.bf16.gmra.mrb[0].mxu0 %v365
    %v624 = vpop.f32.mrb[0].mxu0
    %v625 = vadd.f32 %v99, %v624
    %v626 = vpop.f32.mrb[0].mxu0
    %v627 = vpop.f32.mrb[0].mxu0
    %v628 = vadd.f32 %v99, %v627
    %v629 = vpop.f32.mrb[0].mxu0
    %630 = vmatprep.mubr.bf16.mxu0 0
    %631 = vmatmul.mubr.bf16.gmra.mrb[0].mxu0 %v368
    %v632 = vpop.f32.mrb[0].mxu0
    %v633 = vadd.f32 %v99, %v632
    %v634 = vpop.f32.mrb[0].mxu0
    %v635 = vpop.f32.mrb[0].mxu0
    %v636 = vadd.f32 %v99, %v635
    %v637 = vpop.f32.mrb[0].mxu0
    %638 = vmatprep.mubr.bf16.mxu0 0
    %639 = vmatmul.mubr.bf16.gmra.mrb[0].mxu0 %v371
    %v640 = vpop.f32.mrb[0].mxu0
    %v641 = vadd.f32 %v99, %v640
    %v642 = vpop.f32.mrb[0].mxu0
    %v643 = vpop.f32.mrb[0].mxu0
    %v644 = vadd.f32 %v99, %v643
    %v645 = vpop.f32.mrb[0].mxu0
    %646 = vmatprep.mubr.bf16.mxu0 0
    %647 = vmatmul.mubr.bf16.gmra.mrb[0].mxu0 %v374
    %v648 = vpop.f32.mrb[0].mxu0
    %v649 = vadd.f32 %v99, %v648
    %v650 = vpop.f32.mrb[0].mxu0
    %v651 = vpop.f32.mrb[0].mxu0
    %v652 = vadd.f32 %v99, %v651
    %v653 = vpop.f32.mrb[0].mxu0
    %654 = vmatprep.mubr.bf16.mxu0 0
    %655 = vmatmul.mubr.bf16.gmra.mrb[0].mxu0 %v377
    %v656 = vpop.f32.mrb[0].mxu0
    %v657 = vadd.f32 %v99, %v656
    %v658 = vpop.f32.mrb[0].mxu0
    %v659 = vpop.f32.mrb[0].mxu0
    %v660 = vadd.f32 %v99, %v659
    %v661 = vpop.f32.mrb[0].mxu0
    %662 = vmatprep.mubr.bf16.mxu0 0
    %663 = vmatmul.mubr.bf16.gmra.mrb[0].mxu0 %v380
    %v664 = vpop.f32.mrb[0].mxu0
    %v665 = vadd.f32 %v99, %v664
    %v666 = vpop.f32.mrb[0].mxu0
    %v667 = vpop.f32.mrb[0].mxu0
    %v668 = vadd.f32 %v99, %v667
    %v669 = vpop.f32.mrb[0].mxu0
    %670 = vdwg.mxu0
    %671 = vadd.xlane.f32.xlu0 %v417
    %v672 = vpop.xlane.xlu0 %671
    %673 = vadd.xlane.f32.xlu0 %v420
    %v674 = vpop.xlane.xlu0 %673
    %675 = vadd.xlane.f32.xlu0 %v425
    %v676 = vpop.xlane.xlu0 %675
    %677 = vadd.xlane.f32.xlu0 %v428
    %v678 = vpop.xlane.xlu0 %677
    %679 = vadd.xlane.f32.xlu0 %v433
    %v680 = vpop.xlane.xlu0 %679
    %681 = vadd.xlane.f32.xlu0 %v436
    %v682 = vpop.xlane.xlu0 %681
    %683 = vadd.xlane.f32.xlu0 %v441
    %v684 = vpop.xlane.xlu0 %683
    %685 = vadd.xlane.f32.xlu0 %v444
    %v686 = vpop.xlane.xlu0 %685
    %687 = vadd.xlane.f32.xlu0 %v449
    %v688 = vpop.xlane.xlu0 %687
    %689 = vadd.xlane.f32.xlu0 %v452
    %v690 = vpop.xlane.xlu0 %689
    %691 = vadd.xlane.f32.xlu0 %v457
    %v692 = vpop.xlane.xlu0 %691
    %693 = vadd.xlane.f32.xlu0 %v460
    %v694 = vpop.xlane.xlu0 %693
    %695 = vadd.xlane.f32.xlu0 %v465
    %v696 = vpop.xlane.xlu0 %695
    %697 = vadd.xlane.f32.xlu0 %v468
    %v698 = vpop.xlane.xlu0 %697
    %699 = vadd.xlane.f32.xlu0 %v473
    %v700 = vpop.xlane.xlu0 %699
    %701 = vadd.xlane.f32.xlu0 %v476
    %v702 = vpop.xlane.xlu0 %701
    %703 = vadd.xlane.f32.xlu0 %v481
    %v704 = vpop.xlane.xlu0 %703
    %705 = vadd.xlane.f32.xlu0 %v484
    %v706 = vpop.xlane.xlu0 %705
    %707 = vadd.xlane.f32.xlu0 %v489
    %v708 = vpop.xlane.xlu0 %707
    %709 = vadd.xlane.f32.xlu0 %v492
    %v710 = vpop.xlane.xlu0 %709
    %711 = vadd.xlane.f32.xlu0 %v497
    %v712 = vpop.xlane.xlu0 %711
    %713 = vadd.xlane.f32.xlu0 %v500
    %v714 = vpop.xlane.xlu0 %713
    %715 = vadd.xlane.f32.xlu0 %v505
    %v716 = vpop.xlane.xlu0 %715
    %717 = vadd.xlane.f32.xlu0 %v508
    %v718 = vpop.xlane.xlu0 %717
    %719 = vadd.xlane.f32.xlu0 %v513
    %v720 = vpop.xlane.xlu0 %719
    %721 = vadd.xlane.f32.xlu0 %v516
    %v722 = vpop.xlane.xlu0 %721
    %723 = vadd.xlane.f32.xlu0 %v521
    %v724 = vpop.xlane.xlu0 %723
    %725 = vadd.xlane.f32.xlu0 %v524
    %v726 = vpop.xlane.xlu0 %725
    %727 = vadd.xlane.f32.xlu0 %v529
    %v728 = vpop.xlane.xlu0 %727
    %729 = vadd.xlane.f32.xlu0 %v532
    %v730 = vpop.xlane.xlu0 %729
    %731 = vadd.xlane.f32.xlu0 %v537
    %v732 = vpop.xlane.xlu0 %731
    %733 = vadd.xlane.f32.xlu0 %v540
    %v734 = vpop.xlane.xlu0 %733
    %735 = vadd.xlane.f32.xlu0 %v545
    %v736 = vpop.xlane.xlu0 %735
    %737 = vadd.xlane.f32.xlu0 %v548
    %v738 = vpop.xlane.xlu0 %737
    %739 = vadd.xlane.f32.xlu0 %v553
    %v740 = vpop.xlane.xlu0 %739
    %741 = vadd.xlane.f32.xlu0 %v556
    %v742 = vpop.xlane.xlu0 %741
    %743 = vadd.xlane.f32.xlu0 %v561
    %v744 = vpop.xlane.xlu0 %743
    %745 = vadd.xlane.f32.xlu0 %v564
    %v746 = vpop.xlane.xlu0 %745
    %747 = vadd.xlane.f32.xlu0 %v569
    %v748 = vpop.xlane.xlu0 %747
    %749 = vadd.xlane.f32.xlu0 %v572
    %v750 = vpop.xlane.xlu0 %749
    %751 = vadd.xlane.f32.xlu0 %v577
    %v752 = vpop.xlane.xlu0 %751
    %753 = vadd.xlane.f32.xlu0 %v580
    %v754 = vpop.xlane.xlu0 %753
    %755 = vadd.xlane.f32.xlu0 %v585
    %v756 = vpop.xlane.xlu0 %755
    %757 = vadd.xlane.f32.xlu0 %v588
    %v758 = vpop.xlane.xlu0 %757
    %759 = vadd.xlane.f32.xlu0 %v593
    %v760 = vpop.xlane.xlu0 %759
    %761 = vadd.xlane.f32.xlu0 %v596
    %v762 = vpop.xlane.xlu0 %761
    %763 = vadd.xlane.f32.xlu0 %v601
    %v764 = vpop.xlane.xlu0 %763
    %765 = vadd.xlane.f32.xlu0 %v604
    %v766 = vpop.xlane.xlu0 %765
    %767 = vadd.xlane.f32.xlu0 %v609
    %v768 = vpop.xlane.xlu0 %767
    %769 = vadd.xlane.f32.xlu0 %v612
    %v770 = vpop.xlane.xlu0 %769
    %771 = vadd.xlane.f32.xlu0 %v617
    %v772 = vpop.xlane.xlu0 %771
    %773 = vadd.xlane.f32.xlu0 %v620
    %v774 = vpop.xlane.xlu0 %773
    %775 = vadd.xlane.f32.xlu0 %v625
    %v776 = vpop.xlane.xlu0 %775
    %777 = vadd.xlane.f32.xlu0 %v628
    %v778 = vpop.xlane.xlu0 %777
    %779 = vadd.xlane.f32.xlu0 %v633
    %v780 = vpop.xlane.xlu0 %779
    %781 = vadd.xlane.f32.xlu0 %v636
    %v782 = vpop.xlane.xlu0 %781
    %783 = vadd.xlane.f32.xlu0 %v641
    %v784 = vpop.xlane.xlu0 %783
    %785 = vadd.xlane.f32.xlu0 %v644
    %v786 = vpop.xlane.xlu0 %785
    %787 = vadd.xlane.f32.xlu0 %v649
    %v788 = vpop.xlane.xlu0 %787
    %789 = vadd.xlane.f32.xlu0 %v652
    %v790 = vpop.xlane.xlu0 %789
    %791 = vadd.xlane.f32.xlu0 %v657
    %v792 = vpop.xlane.xlu0 %791
    %793 = vadd.xlane.f32.xlu0 %v660
    %v794 = vpop.xlane.xlu0 %793
    %795 = vadd.xlane.f32.xlu0 %v665
    %v796 = vpop.xlane.xlu0 %795
    %797 = vadd.xlane.f32.xlu0 %v668
    %v798 = vpop.xlane.xlu0 %797
    %v799 = vrcp.pop 128.0
    %v800 = vmul.f32 %v672, %v799
    %v801 = vmul.f32 %v674, %v799
    %v802 = vmul.f32 %v676, %v799
    %v803 = vmul.f32 %v678, %v799
    %v804 = vmul.f32 %v680, %v799
    %v805 = vmul.f32 %v682, %v799
    %v806 = vmul.f32 %v684, %v799
    %v807 = vmul.f32 %v686, %v799
    %v808 = vmul.f32 %v688, %v799
    %v809 = vmul.f32 %v690, %v799
    %v810 = vmul.f32 %v692, %v799
    %v811 = vmul.f32 %v694, %v799
    %v812 = vmul.f32 %v696, %v799
    %v813 = vmul.f32 %v698, %v799
    %v814 = vmul.f32 %v700, %v799
    %v815 = vmul.f32 %v702, %v799
    %v816 = vmul.f32 %v704, %v799
    %v817 = vmul.f32 %v706, %v799
    %v818 = vmul.f32 %v708, %v799
    %v819 = vmul.f32 %v710, %v799
    %v820 = vmul.f32 %v712, %v799
    %v821 = vmul.f32 %v714, %v799
    %v822 = vmul.f32 %v716, %v799
    %v823 = vmul.f32 %v718, %v799
    %v824 = vmul.f32 %v720, %v799
    %v825 = vmul.f32 %v722, %v799
    %v826 = vmul.f32 %v724, %v799
    %v827 = vmul.f32 %v726, %v799
    %v828 = vmul.f32 %v728, %v799
    %v829 = vmul.f32 %v730, %v799
    %v830 = vmul.f32 %v732, %v799
    %v831 = vmul.f32 %v734, %v799
    %v832 = vmul.f32 %v736, %v799
    %v833 = vmul.f32 %v738, %v799
    %v834 = vmul.f32 %v740, %v799
    %v835 = vmul.f32 %v742, %v799
    %v836 = vmul.f32 %v744, %v799
    %v837 = vmul.f32 %v746, %v799
    %v838 = vmul.f32 %v748, %v799
    %v839 = vmul.f32 %v750, %v799
    %v840 = vmul.f32 %v752, %v799
    %v841 = vmul.f32 %v754, %v799
    %v842 = vmul.f32 %v756, %v799
    %v843 = vmul.f32 %v758, %v799
    %v844 = vmul.f32 %v760, %v799
    %v845 = vmul.f32 %v762, %v799
    %v846 = vmul.f32 %v764, %v799
    %v847 = vmul.f32 %v766, %v799
    %v848 = vmul.f32 %v768, %v799
    %v849 = vmul.f32 %v770, %v799
    %v850 = vmul.f32 %v772, %v799
    %v851 = vmul.f32 %v774, %v799
    %v852 = vmul.f32 %v776, %v799
    %v853 = vmul.f32 %v778, %v799
    %v854 = vmul.f32 %v780, %v799
    %v855 = vmul.f32 %v782, %v799
    %v856 = vmul.f32 %v784, %v799
    %v857 = vmul.f32 %v786, %v799
    %v858 = vmul.f32 %v788, %v799
    %v859 = vmul.f32 %v790, %v799
    %v860 = vmul.f32 %v792, %v799
    %v861 = vmul.f32 %v794, %v799
    %v862 = vmul.f32 %v796, %v799
    %v863 = vmul.f32 %v798, %v799
    %v864 = vsub.f32 %v417, %v800
    %v865 = vsub.f32 %v420, %v801
    %v866 = vsub.f32 %v425, %v802
    %v867 = vsub.f32 %v428, %v803
    %v868 = vsub.f32 %v433, %v804
    %v869 = vsub.f32 %v436, %v805
    %v870 = vsub.f32 %v441, %v806
    %v871 = vsub.f32 %v444, %v807
    %v872 = vsub.f32 %v449, %v808
    %v873 = vsub.f32 %v452, %v809
    %v874 = vsub.f32 %v457, %v810
    %v875 = vsub.f32 %v460, %v811
    %v876 = vsub.f32 %v465, %v812
    %v877 = vsub.f32 %v468, %v813
    %v878 = vsub.f32 %v473, %v814
    %v879 = vsub.f32 %v476, %v815
    %v880 = vsub.f32 %v481, %v816
    %v881 = vsub.f32 %v484, %v817
    %v882 = vsub.f32 %v489, %v818
    %v883 = vsub.f32 %v492, %v819
    %v884 = vsub.f32 %v497, %v820
    %v885 = vsub.f32 %v500, %v821
    %v886 = vsub.f32 %v505, %v822
    %v887 = vsub.f32 %v508, %v823
    %v888 = vsub.f32 %v513, %v824
    %v889 = vsub.f32 %v516, %v825
    %v890 = vsub.f32 %v521, %v826
    %v891 = vsub.f32 %v524, %v827
    %v892 = vsub.f32 %v529, %v828
    %v893 = vsub.f32 %v532, %v829
    %v894 = vsub.f32 %v537, %v830
    %v895 = vsub.f32 %v540, %v831
    %v896 = vsub.f32 %v545, %v832
    %v897 = vsub.f32 %v548, %v833
    %v898 = vsub.f32 %v553, %v834
    %v899 = vsub.f32 %v556, %v835
    %v900 = vsub.f32 %v561, %v836
    %v901 = vsub.f32 %v564, %v837
    %v902 = vsub.f32 %v569, %v838
    %v903 = vsub.f32 %v572, %v839
    %v904 = vsub.f32 %v577, %v840
    %v905 = vsub.f32 %v580, %v841
    %v906 = vsub.f32 %v585, %v842
    %v907 = vsub.f32 %v588, %v843
    %v908 = vsub.f32 %v593, %v844
    %v909 = vsub.f32 %v596, %v845
    %v910 = vsub.f32 %v601, %v846
    %v911 = vsub.f32 %v604, %v847
    %v912 = vsub.f32 %v609, %v848
    %v913 = vsub.f32 %v612, %v849
    %v914 = vsub.f32 %v617, %v850
    %v915 = vsub.f32 %v620, %v851
    %v916 = vsub.f32 %v625, %v852
    %v917 = vsub.f32 %v628, %v853
    %v918 = vsub.f32 %v633, %v854
    %v919 = vsub.f32 %v636, %v855
    %v920 = vsub.f32 %v641, %v856
    %v921 = vsub.f32 %v644, %v857
    %v922 = vsub.f32 %v649, %v858
    %v923 = vsub.f32 %v652, %v859
    %v924 = vsub.f32 %v657, %v860
    %v925 = vsub.f32 %v660, %v861
    %v926 = vsub.f32 %v665, %v862
    %v927 = vsub.f32 %v668, %v863
    %v928 = vmul.f32 %v864, %v864
    %v929 = vmul.f32 %v865, %v865
    %v930 = vmul.f32 %v866, %v866
    %v931 = vmul.f32 %v867, %v867
    %v932 = vmul.f32 %v868, %v868
    %v933 = vmul.f32 %v869, %v869
    %v934 = vmul.f32 %v870, %v870
    %v935 = vmul.f32 %v871, %v871
    %v936 = vmul.f32 %v872, %v872
    %v937 = vmul.f32 %v873, %v873
    %v938 = vmul.f32 %v874, %v874
    %v939 = vmul.f32 %v875, %v875
    %v940 = vmul.f32 %v876, %v876
    %v941 = vmul.f32 %v877, %v877
    %v942 = vmul.f32 %v878, %v878
    %v943 = vmul.f32 %v879, %v879
    %v944 = vmul.f32 %v880, %v880
    %v945 = vmul.f32 %v881, %v881
    %v946 = vmul.f32 %v882, %v882
    %v947 = vmul.f32 %v883, %v883
    %v948 = vmul.f32 %v884, %v884
    %v949 = vmul.f32 %v885, %v885
    %v950 = vmul.f32 %v886, %v886
    %v951 = vmul.f32 %v887, %v887
    %v952 = vmul.f32 %v888, %v888
    %v953 = vmul.f32 %v889, %v889
    %v954 = vmul.f32 %v890, %v890
    %v955 = vmul.f32 %v891, %v891
    %v956 = vmul.f32 %v892, %v892
    %v957 = vmul.f32 %v893, %v893
    %v958 = vmul.f32 %v894, %v894
    %v959 = vmul.f32 %v895, %v895
    %v960 = vmul.f32 %v896, %v896
    %v961 = vmul.f32 %v897, %v897
    %v962 = vmul.f32 %v898, %v898
    %v963 = vmul.f32 %v899, %v899
    %v964 = vmul.f32 %v900, %v900
    %v965 = vmul.f32 %v901, %v901
    %v966 = vmul.f32 %v902, %v902
    %v967 = vmul.f32 %v903, %v903
    %v968 = vmul.f32 %v904, %v904
    %v969 = vmul.f32 %v905, %v905
    %v970 = vmul.f32 %v906, %v906
    %v971 = vmul.f32 %v907, %v907
    %v972 = vmul.f32 %v908, %v908
    %v973 = vmul.f32 %v909, %v909
    %v974 = vmul.f32 %v910, %v910
    %v975 = vmul.f32 %v911, %v911
    %v976 = vmul.f32 %v912, %v912
    %v977 = vmul.f32 %v913, %v913
    %v978 = vmul.f32 %v914, %v914
    %v979 = vmul.f32 %v915, %v915
    %v980 = vmul.f32 %v916, %v916
    %v981 = vmul.f32 %v917, %v917
    %v982 = vmul.f32 %v918, %v918
    %v983 = vmul.f32 %v919, %v919
    %v984 = vmul.f32 %v920, %v920
    %v985 = vmul.f32 %v921, %v921
    %v986 = vmul.f32 %v922, %v922
    %v987 = vmul.f32 %v923, %v923
    %v988 = vmul.f32 %v924, %v924
    %v989 = vmul.f32 %v925, %v925
    %v990 = vmul.f32 %v926, %v926
    %v991 = vmul.f32 %v927, %v927
    %992 = vadd.xlane.f32.xlu0 %v928
    %v993 = vpop.xlane.xlu0 %992
    %994 = vadd.xlane.f32.xlu0 %v929
    %v995 = vpop.xlane.xlu0 %994
    %996 = vadd.xlane.f32.xlu0 %v930
    %v997 = vpop.xlane.xlu0 %996
    %998 = vadd.xlane.f32.xlu0 %v931
    %v999 = vpop.xlane.xlu0 %998
    %1000 = vadd.xlane.f32.xlu0 %v932
    %v1001 = vpop.xlane.xlu0 %1000
    %1002 = vadd.xlane.f32.xlu0 %v933
    %v1003 = vpop.xlane.xlu0 %1002
    %1004 = vadd.xlane.f32.xlu0 %v934
    %v1005 = vpop.xlane.xlu0 %1004
    %1006 = vadd.xlane.f32.xlu0 %v935
    %v1007 = vpop.xlane.xlu0 %1006
    %1008 = vadd.xlane.f32.xlu0 %v936
    %v1009 = vpop.xlane.xlu0 %1008
    %1010 = vadd.xlane.f32.xlu0 %v937
    %v1011 = vpop.xlane.xlu0 %1010
    %1012 = vadd.xlane.f32.xlu0 %v938
    %v1013 = vpop.xlane.xlu0 %1012
    %1014 = vadd.xlane.f32.xlu0 %v939
    %v1015 = vpop.xlane.xlu0 %1014
    %1016 = vadd.xlane.f32.xlu0 %v940
    %v1017 = vpop.xlane.xlu0 %1016
    %1018 = vadd.xlane.f32.xlu0 %v941
    %v1019 = vpop.xlane.xlu0 %1018
    %1020 = vadd.xlane.f32.xlu0 %v942
    %v1021 = vpop.xlane.xlu0 %1020
    %1022 = vadd.xlane.f32.xlu0 %v943
    %v1023 = vpop.xlane.xlu0 %1022
    %1024 = vadd.xlane.f32.xlu0 %v944
    %v1025 = vpop.xlane.xlu0 %1024
    %1026 = vadd.xlane.f32.xlu0 %v945
    %v1027 = vpop.xlane.xlu0 %1026
    %1028 = vadd.xlane.f32.xlu0 %v946
    %v1029 = vpop.xlane.xlu0 %1028
    %1030 = vadd.xlane.f32.xlu0 %v947
    %v1031 = vpop.xlane.xlu0 %1030
    %1032 = vadd.xlane.f32.xlu0 %v948
    %v1033 = vpop.xlane.xlu0 %1032
    %1034 = vadd.xlane.f32.xlu0 %v949
    %v1035 = vpop.xlane.xlu0 %1034
    %1036 = vadd.xlane.f32.xlu0 %v950
    %v1037 = vpop.xlane.xlu0 %1036
    %1038 = vadd.xlane.f32.xlu0 %v951
    %v1039 = vpop.xlane.xlu0 %1038
    %1040 = vadd.xlane.f32.xlu0 %v952
    %v1041 = vpop.xlane.xlu0 %1040
    %1042 = vadd.xlane.f32.xlu0 %v953
    %v1043 = vpop.xlane.xlu0 %1042
    %1044 = vadd.xlane.f32.xlu0 %v954
    %v1045 = vpop.xlane.xlu0 %1044
    %1046 = vadd.xlane.f32.xlu0 %v955
    %v1047 = vpop.xlane.xlu0 %1046
    %1048 = vadd.xlane.f32.xlu0 %v956
    %v1049 = vpop.xlane.xlu0 %1048
    %1050 = vadd.xlane.f32.xlu0 %v957
    %v1051 = vpop.xlane.xlu0 %1050
    %1052 = vadd.xlane.f32.xlu0 %v958
    %v1053 = vpop.xlane.xlu0 %1052
    %1054 = vadd.xlane.f32.xlu0 %v959
    %v1055 = vpop.xlane.xlu0 %1054
    %1056 = vadd.xlane.f32.xlu0 %v960
    %v1057 = vpop.xlane.xlu0 %1056
    %1058 = vadd.xlane.f32.xlu0 %v961
    %v1059 = vpop.xlane.xlu0 %1058
    %1060 = vadd.xlane.f32.xlu0 %v962
    %v1061 = vpop.xlane.xlu0 %1060
    %1062 = vadd.xlane.f32.xlu0 %v963
    %v1063 = vpop.xlane.xlu0 %1062
    %1064 = vadd.xlane.f32.xlu0 %v964
    %v1065 = vpop.xlane.xlu0 %1064
    %1066 = vadd.xlane.f32.xlu0 %v965
    %v1067 = vpop.xlane.xlu0 %1066
    %1068 = vadd.xlane.f32.xlu0 %v966
    %v1069 = vpop.xlane.xlu0 %1068
    %1070 = vadd.xlane.f32.xlu0 %v967
    %v1071 = vpop.xlane.xlu0 %1070
    %1072 = vadd.xlane.f32.xlu0 %v968
    %v1073 = vpop.xlane.xlu0 %1072
    %1074 = vadd.xlane.f32.xlu0 %v969
    %v1075 = vpop.xlane.xlu0 %1074
    %1076 = vadd.xlane.f32.xlu0 %v970
    %v1077 = vpop.xlane.xlu0 %1076
    %1078 = vadd.xlane.f32.xlu0 %v971
    %v1079 = vpop.xlane.xlu0 %1078
    %1080 = vadd.xlane.f32.xlu0 %v972
    %v1081 = vpop.xlane.xlu0 %1080
    %1082 = vadd.xlane.f32.xlu0 %v973
    %v1083 = vpop.xlane.xlu0 %1082
    %1084 = vadd.xlane.f32.xlu0 %v974
    %v1085 = vpop.xlane.xlu0 %1084
    %1086 = vadd.xlane.f32.xlu0 %v975
    %v1087 = vpop.xlane.xlu0 %1086
    %1088 = vadd.xlane.f32.xlu0 %v976
    %v1089 = vpop.xlane.xlu0 %1088
    %1090 = vadd.xlane.f32.xlu0 %v977
    %v1091 = vpop.xlane.xlu0 %1090
    %1092 = vadd.xlane.f32.xlu0 %v978
    %v1093 = vpop.xlane.xlu0 %1092
    %1094 = vadd.xlane.f32.xlu0 %v979
    %v1095 = vpop.xlane.xlu0 %1094
    %1096 = vadd.xlane.f32.xlu0 %v980
    %v1097 = vpop.xlane.xlu0 %1096
    %1098 = vadd.xlane.f32.xlu0 %v981
    %v1099 = vpop.xlane.xlu0 %1098
    %1100 = vadd.xlane.f32.xlu0 %v982
    %v1101 = vpop.xlane.xlu0 %1100
    %1102 = vadd.xlane.f32.xlu0 %v983
    %v1103 = vpop.xlane.xlu0 %1102
    %1104 = vadd.xlane.f32.xlu0 %v984
    %v1105 = vpop.xlane.xlu0 %1104
    %1106 = vadd.xlane.f32.xlu0 %v985
    %v1107 = vpop.xlane.xlu0 %1106
    %1108 = vadd.xlane.f32.xlu0 %v986
    %v1109 = vpop.xlane.xlu0 %1108
    %1110 = vadd.xlane.f32.xlu0 %v987
    %v1111 = vpop.xlane.xlu0 %1110
    %1112 = vadd.xlane.f32.xlu0 %v988
    %v1113 = vpop.xlane.xlu0 %1112
    %1114 = vadd.xlane.f32.xlu0 %v989
    %v1115 = vpop.xlane.xlu0 %1114
    %1116 = vadd.xlane.f32.xlu0 %v990
    %v1117 = vpop.xlane.xlu0 %1116
    %1118 = vadd.xlane.f32.xlu0 %v991
    %v1119 = vpop.xlane.xlu0 %1118
    %v1120 = vmul.f32 %v993, %v799
    %v1121 = vmul.f32 %v995, %v799
    %v1122 = vmul.f32 %v997, %v799
    %v1123 = vmul.f32 %v999, %v799
    %v1124 = vmul.f32 %v1001, %v799
    %v1125 = vmul.f32 %v1003, %v799
    %v1126 = vmul.f32 %v1005, %v799
    %v1127 = vmul.f32 %v1007, %v799
    %v1128 = vmul.f32 %v1009, %v799
    %v1129 = vmul.f32 %v1011, %v799
    %v1130 = vmul.f32 %v1013, %v799
    %v1131 = vmul.f32 %v1015, %v799
    %v1132 = vmul.f32 %v1017, %v799
    %v1133 = vmul.f32 %v1019, %v799
    %v1134 = vmul.f32 %v1021, %v799
    %v1135 = vmul.f32 %v1023, %v799
    %v1136 = vmul.f32 %v1025, %v799
    %v1137 = vmul.f32 %v1027, %v799
    %v1138 = vmul.f32 %v1029, %v799
    %v1139 = vmul.f32 %v1031, %v799
    %v1140 = vmul.f32 %v1033, %v799
    %v1141 = vmul.f32 %v1035, %v799
    %v1142 = vmul.f32 %v1037, %v799
    %v1143 = vmul.f32 %v1039, %v799
    %v1144 = vmul.f32 %v1041, %v799
    %v1145 = vmul.f32 %v1043, %v799
    %v1146 = vmul.f32 %v1045, %v799
    %v1147 = vmul.f32 %v1047, %v799
    %v1148 = vmul.f32 %v1049, %v799
    %v1149 = vmul.f32 %v1051, %v799
    %v1150 = vmul.f32 %v1053, %v799
    %v1151 = vmul.f32 %v1055, %v799
    %v1152 = vmul.f32 %v1057, %v799
    %v1153 = vmul.f32 %v1059, %v799
    %v1154 = vmul.f32 %v1061, %v799
    %v1155 = vmul.f32 %v1063, %v799
    %v1156 = vmul.f32 %v1065, %v799
    %v1157 = vmul.f32 %v1067, %v799
    %v1158 = vmul.f32 %v1069, %v799
    %v1159 = vmul.f32 %v1071, %v799
    %v1160 = vmul.f32 %v1073, %v799
    %v1161 = vmul.f32 %v1075, %v799
    %v1162 = vmul.f32 %v1077, %v799
    %v1163 = vmul.f32 %v1079, %v799
    %v1164 = vmul.f32 %v1081, %v799
    %v1165 = vmul.f32 %v1083, %v799
    %v1166 = vmul.f32 %v1085, %v799
    %v1167 = vmul.f32 %v1087, %v799
    %v1168 = vmul.f32 %v1089, %v799
    %v1169 = vmul.f32 %v1091, %v799
    %v1170 = vmul.f32 %v1093, %v799
    %v1171 = vmul.f32 %v1095, %v799
    %v1172 = vmul.f32 %v1097, %v799
    %v1173 = vmul.f32 %v1099, %v799
    %v1174 = vmul.f32 %v1101, %v799
    %v1175 = vmul.f32 %v1103, %v799
    %v1176 = vmul.f32 %v1105, %v799
    %v1177 = vmul.f32 %v1107, %v799
    %v1178 = vmul.f32 %v1109, %v799
    %v1179 = vmul.f32 %v1111, %v799
    %v1180 = vmul.f32 %v1113, %v799
    %v1181 = vmul.f32 %v1115, %v799
    %v1182 = vmul.f32 %v1117, %v799
    %v1183 = vmul.f32 %v1119, %v799
    %v1184 = vadd.f32 %v1120, 1e-05
    %v1185 = vadd.f32 %v1121, 1e-05
    %v1186 = vadd.f32 %v1122, 1e-05
    %v1187 = vadd.f32 %v1123, 1e-05
    %v1188 = vadd.f32 %v1124, 1e-05
    %v1189 = vadd.f32 %v1125, 1e-05
    %v1190 = vadd.f32 %v1126, 1e-05
    %v1191 = vadd.f32 %v1127, 1e-05
    %v1192 = vadd.f32 %v1128, 1e-05
    %v1193 = vadd.f32 %v1129, 1e-05
    %v1194 = vadd.f32 %v1130, 1e-05
    %v1195 = vadd.f32 %v1131, 1e-05
    %v1196 = vadd.f32 %v1132, 1e-05
    %v1197 = vadd.f32 %v1133, 1e-05
    %v1198 = vadd.f32 %v1134, 1e-05
    %v1199 = vadd.f32 %v1135, 1e-05
    %v1200 = vadd.f32 %v1136, 1e-05
    %v1201 = vadd.f32 %v1137, 1e-05
    %v1202 = vadd.f32 %v1138, 1e-05
    %v1203 = vadd.f32 %v1139, 1e-05
    %v1204 = vadd.f32 %v1140, 1e-05
    %v1205 = vadd.f32 %v1141, 1e-05
    %v1206 = vadd.f32 %v1142, 1e-05
    %v1207 = vadd.f32 %v1143, 1e-05
    %v1208 = vadd.f32 %v1144, 1e-05
    %v1209 = vadd.f32 %v1145, 1e-05
    %v1210 = vadd.f32 %v1146, 1e-05
    %v1211 = vadd.f32 %v1147, 1e-05
    %v1212 = vadd.f32 %v1148, 1e-05
    %v1213 = vadd.f32 %v1149, 1e-05
    %v1214 = vadd.f32 %v1150, 1e-05
    %v1215 = vadd.f32 %v1151, 1e-05
    %v1216 = vadd.f32 %v1152, 1e-05
    %v1217 = vadd.f32 %v1153, 1e-05
    %v1218 = vadd.f32 %v1154, 1e-05
    %v1219 = vadd.f32 %v1155, 1e-05
    %v1220 = vadd.f32 %v1156, 1e-05
    %v1221 = vadd.f32 %v1157, 1e-05
    %v1222 = vadd.f32 %v1158, 1e-05
    %v1223 = vadd.f32 %v1159, 1e-05
    %v1224 = vadd.f32 %v1160, 1e-05
    %v1225 = vadd.f32 %v1161, 1e-05
    %v1226 = vadd.f32 %v1162, 1e-05
    %v1227 = vadd.f32 %v1163, 1e-05
    %v1228 = vadd.f32 %v1164, 1e-05
    %v1229 = vadd.f32 %v1165, 1e-05
    %v1230 = vadd.f32 %v1166, 1e-05
    %v1231 = vadd.f32 %v1167, 1e-05
    %v1232 = vadd.f32 %v1168, 1e-05
    %v1233 = vadd.f32 %v1169, 1e-05
    %v1234 = vadd.f32 %v1170, 1e-05
    %v1235 = vadd.f32 %v1171, 1e-05
    %v1236 = vadd.f32 %v1172, 1e-05
    %v1237 = vadd.f32 %v1173, 1e-05
    %v1238 = vadd.f32 %v1174, 1e-05
    %v1239 = vadd.f32 %v1175, 1e-05
    %v1240 = vadd.f32 %v1176, 1e-05
    %v1241 = vadd.f32 %v1177, 1e-05
    %v1242 = vadd.f32 %v1178, 1e-05
    %v1243 = vadd.f32 %v1179, 1e-05
    %v1244 = vadd.f32 %v1180, 1e-05
    %v1245 = vadd.f32 %v1181, 1e-05
    %v1246 = vadd.f32 %v1182, 1e-05
    %v1247 = vadd.f32 %v1183, 1e-05
    %v1248 = vrsqrt.pop %v1184
    %v1249 = vrsqrt.pop %v1185
    %v1250 = vrsqrt.pop %v1186
    %v1251 = vrsqrt.pop %v1187
    %v1252 = vrsqrt.pop %v1188
    %v1253 = vrsqrt.pop %v1189
    %v1254 = vrsqrt.pop %v1190
    %v1255 = vrsqrt.pop %v1191
    %v1256 = vrsqrt.pop %v1192
    %v1257 = vrsqrt.pop %v1193
    %v1258 = vrsqrt.pop %v1194
    %v1259 = vrsqrt.pop %v1195
    %v1260 = vrsqrt.pop %v1196
    %v1261 = vrsqrt.pop %v1197
    %v1262 = vrsqrt.pop %v1198
    %v1263 = vrsqrt.pop %v1199
    %v1264 = vrsqrt.pop %v1200
    %v1265 = vrsqrt.pop %v1201
    %v1266 = vrsqrt.pop %v1202
    %v1267 = vrsqrt.pop %v1203
    %v1268 = vrsqrt.pop %v1204
    %v1269 = vrsqrt.pop %v1205
    %v1270 = vrsqrt.pop %v1206
    %v1271 = vrsqrt.pop %v1207
    %v1272 = vrsqrt.pop %v1208
    %v1273 = vrsqrt.pop %v1209
    %v1274 = vrsqrt.pop %v1210
    %v1275 = vrsqrt.pop %v1211
    %v1276 = vrsqrt.pop %v1212
    %v1277 = vrsqrt.pop %v1213
    %v1278 = vrsqrt.pop %v1214
    %v1279 = vrsqrt.pop %v1215
    %v1280 = vrsqrt.pop %v1216
    %v1281 = vrsqrt.pop %v1217
    %v1282 = vrsqrt.pop %v1218
    %v1283 = vrsqrt.pop %v1219
    %v1284 = vrsqrt.pop %v1220
    %v1285 = vrsqrt.pop %v1221
    %v1286 = vrsqrt.pop %v1222
    %v1287 = vrsqrt.pop %v1223
    %v1288 = vrsqrt.pop %v1224
    %v1289 = vrsqrt.pop %v1225
    %v1290 = vrsqrt.pop %v1226
    %v1291 = vrsqrt.pop %v1227
    %v1292 = vrsqrt.pop %v1228
    %v1293 = vrsqrt.pop %v1229
    %v1294 = vrsqrt.pop %v1230
    %v1295 = vrsqrt.pop %v1231
    %v1296 = vrsqrt.pop %v1232
    %v1297 = vrsqrt.pop %v1233
    %v1298 = vrsqrt.pop %v1234
    %v1299 = vrsqrt.pop %v1235
    %v1300 = vrsqrt.pop %v1236
    %v1301 = vrsqrt.pop %v1237
    %v1302 = vrsqrt.pop %v1238
    %v1303 = vrsqrt.pop %v1239
    %v1304 = vrsqrt.pop %v1240
    %v1305 = vrsqrt.pop %v1241
    %v1306 = vrsqrt.pop %v1242
    %v1307 = vrsqrt.pop %v1243
    %v1308 = vrsqrt.pop %v1244
    %v1309 = vrsqrt.pop %v1245
    %v1310 = vrsqrt.pop %v1246
    %v1311 = vrsqrt.pop %v1247
    %v1312 = vmul.f32 %v864, %v1248
    %v1313 = vmul.f32 %v865, %v1249
    %v1314 = vmul.f32 %v866, %v1250
    %v1315 = vmul.f32 %v867, %v1251
    %v1316 = vmul.f32 %v868, %v1252
    %v1317 = vmul.f32 %v869, %v1253
    %v1318 = vmul.f32 %v870, %v1254
    %v1319 = vmul.f32 %v871, %v1255
    %v1320 = vmul.f32 %v872, %v1256
    %v1321 = vmul.f32 %v873, %v1257
    %v1322 = vmul.f32 %v874, %v1258
    %v1323 = vmul.f32 %v875, %v1259
    %v1324 = vmul.f32 %v876, %v1260
    %v1325 = vmul.f32 %v877, %v1261
    %v1326 = vmul.f32 %v878, %v1262
    %v1327 = vmul.f32 %v879, %v1263
    %v1328 = vmul.f32 %v880, %v1264
    %v1329 = vmul.f32 %v881, %v1265
    %v1330 = vmul.f32 %v882, %v1266
    %v1331 = vmul.f32 %v883, %v1267
    %v1332 = vmul.f32 %v884, %v1268
    %v1333 = vmul.f32 %v885, %v1269
    %v1334 = vmul.f32 %v886, %v1270
    %v1335 = vmul.f32 %v887, %v1271
    %v1336 = vmul.f32 %v888, %v1272
    %v1337 = vmul.f32 %v889, %v1273
    %v1338 = vmul.f32 %v890, %v1274
    %v1339 = vmul.f32 %v891, %v1275
    %v1340 = vmul.f32 %v892, %v1276
    %v1341 = vmul.f32 %v893, %v1277
    %v1342 = vmul.f32 %v894, %v1278
    %v1343 = vmul.f32 %v895, %v1279
    %v1344 = vmul.f32 %v896, %v1280
    %v1345 = vmul.f32 %v897, %v1281
    %v1346 = vmul.f32 %v898, %v1282
    %v1347 = vmul.f32 %v899, %v1283
    %v1348 = vmul.f32 %v900, %v1284
    %v1349 = vmul.f32 %v901, %v1285
    %v1350 = vmul.f32 %v902, %v1286
    %v1351 = vmul.f32 %v903, %v1287
    %v1352 = vmul.f32 %v904, %v1288
    %v1353 = vmul.f32 %v905, %v1289
    %v1354 = vmul.f32 %v906, %v1290
    %v1355 = vmul.f32 %v907, %v1291
    %v1356 = vmul.f32 %v908, %v1292
    %v1357 = vmul.f32 %v909, %v1293
    %v1358 = vmul.f32 %v910, %v1294
    %v1359 = vmul.f32 %v911, %v1295
    %v1360 = vmul.f32 %v912, %v1296
    %v1361 = vmul.f32 %v913, %v1297
    %v1362 = vmul.f32 %v914, %v1298
    %v1363 = vmul.f32 %v915, %v1299
    %v1364 = vmul.f32 %v916, %v1300
    %v1365 = vmul.f32 %v917, %v1301
    %v1366 = vmul.f32 %v918, %v1302
    %v1367 = vmul.f32 %v919, %v1303
    %v1368 = vmul.f32 %v920, %v1304
    %v1369 = vmul.f32 %v921, %v1305
    %v1370 = vmul.f32 %v922, %v1306
    %v1371 = vmul.f32 %v923, %v1307
    %v1372 = vmul.f32 %v924, %v1308
    %v1373 = vmul.f32 %v925, %v1309
    %v1374 = vmul.f32 %v926, %v1310
    %v1375 = vmul.f32 %v927, %v1311
    %v1376 = vld [vmem:[%s3] sm:$0x1]
    %v1378 = vlaneseq
    %v1379 = vshrl.u32 %v1378, 7
    %v1380 = vsub.s32 0, %v1379
    %v1381 = vrot.slane %v1376, %v1380
    %v1383 = vmul.f32 %v1312, %v1381
    %v1384 = vmul.f32 %v1313, %v1381
    %v1385 = vmul.f32 %v1314, %v1381
    %v1386 = vmul.f32 %v1315, %v1381
    %v1387 = vmul.f32 %v1316, %v1381
    %v1388 = vmul.f32 %v1317, %v1381
    %v1389 = vmul.f32 %v1318, %v1381
    %v1390 = vmul.f32 %v1319, %v1381
    %v1391 = vmul.f32 %v1320, %v1381
    %v1392 = vmul.f32 %v1321, %v1381
    %v1393 = vmul.f32 %v1322, %v1381
    %v1394 = vmul.f32 %v1323, %v1381
    %v1395 = vmul.f32 %v1324, %v1381
    %v1396 = vmul.f32 %v1325, %v1381
    %v1397 = vmul.f32 %v1326, %v1381
    %v1398 = vmul.f32 %v1327, %v1381
    %v1399 = vmul.f32 %v1328, %v1381
    %v1400 = vmul.f32 %v1329, %v1381
    %v1401 = vmul.f32 %v1330, %v1381
    %v1402 = vmul.f32 %v1331, %v1381
    %v1403 = vmul.f32 %v1332, %v1381
    %v1404 = vmul.f32 %v1333, %v1381
    %v1405 = vmul.f32 %v1334, %v1381
    %v1406 = vmul.f32 %v1335, %v1381
    %v1407 = vmul.f32 %v1336, %v1381
    %v1408 = vmul.f32 %v1337, %v1381
    %v1409 = vmul.f32 %v1338, %v1381
    %v1410 = vmul.f32 %v1339, %v1381
    %v1411 = vmul.f32 %v1340, %v1381
    %v1412 = vmul.f32 %v1341, %v1381
    %v1413 = vmul.f32 %v1342, %v1381
    %v1414 = vmul.f32 %v1343, %v1381
    %v1415 = vmul.f32 %v1344, %v1381
    %v1416 = vmul.f32 %v1345, %v1381
    %v1417 = vmul.f32 %v1346, %v1381
    %v1418 = vmul.f32 %v1347, %v1381
    %v1419 = vmul.f32 %v1348, %v1381
    %v1420 = vmul.f32 %v1349, %v1381
    %v1421 = vmul.f32 %v1350, %v1381
    %v1422 = vmul.f32 %v1351, %v1381
    %v1423 = vmul.f32 %v1352, %v1381
    %v1424 = vmul.f32 %v1353, %v1381
    %v1425 = vmul.f32 %v1354, %v1381
    %v1426 = vmul.f32 %v1355, %v1381
    %v1427 = vmul.f32 %v1356, %v1381
    %v1428 = vmul.f32 %v1357, %v1381
    %v1429 = vmul.f32 %v1358, %v1381
    %v1430 = vmul.f32 %v1359, %v1381
    %v1431 = vmul.f32 %v1360, %v1381
    %v1432 = vmul.f32 %v1361, %v1381
    %v1433 = vmul.f32 %v1362, %v1381
    %v1434 = vmul.f32 %v1363, %v1381
    %v1435 = vmul.f32 %v1364, %v1381
    %v1436 = vmul.f32 %v1365, %v1381
    %v1437 = vmul.f32 %v1366, %v1381
    %v1438 = vmul.f32 %v1367, %v1381
    %v1439 = vmul.f32 %v1368, %v1381
    %v1440 = vmul.f32 %v1369, %v1381
    %v1441 = vmul.f32 %v1370, %v1381
    %v1442 = vmul.f32 %v1371, %v1381
    %v1443 = vmul.f32 %v1372, %v1381
    %v1444 = vmul.f32 %v1373, %v1381
    %v1445 = vmul.f32 %v1374, %v1381
    %v1446 = vmul.f32 %v1375, %v1381
    %v1447 = vld [vmem:[%s4] sm:$0x1]
    %v1449 = vlaneseq
    %v1450 = vshrl.u32 %v1449, 7
    %v1451 = vsub.s32 0, %v1450
    %v1452 = vrot.slane %v1447, %v1451
    %v1454 = vadd.f32 %v1383, %v1452
    %v1455 = vadd.f32 %v1384, %v1452
    %v1456 = vadd.f32 %v1385, %v1452
    %v1457 = vadd.f32 %v1386, %v1452
    %v1458 = vadd.f32 %v1387, %v1452
    %v1459 = vadd.f32 %v1388, %v1452
    %v1460 = vadd.f32 %v1389, %v1452
    %v1461 = vadd.f32 %v1390, %v1452
    %v1462 = vadd.f32 %v1391, %v1452
    %v1463 = vadd.f32 %v1392, %v1452
    %v1464 = vadd.f32 %v1393, %v1452
    %v1465 = vadd.f32 %v1394, %v1452
    %v1466 = vadd.f32 %v1395, %v1452
    %v1467 = vadd.f32 %v1396, %v1452
    %v1468 = vadd.f32 %v1397, %v1452
    %v1469 = vadd.f32 %v1398, %v1452
    %v1470 = vadd.f32 %v1399, %v1452
    %v1471 = vadd.f32 %v1400, %v1452
    %v1472 = vadd.f32 %v1401, %v1452
    %v1473 = vadd.f32 %v1402, %v1452
    %v1474 = vadd.f32 %v1403, %v1452
    %v1475 = vadd.f32 %v1404, %v1452
    %v1476 = vadd.f32 %v1405, %v1452
    %v1477 = vadd.f32 %v1406, %v1452
    %v1478 = vadd.f32 %v1407, %v1452
    %v1479 = vadd.f32 %v1408, %v1452
    %v1480 = vadd.f32 %v1409, %v1452
    %v1481 = vadd.f32 %v1410, %v1452
    %v1482 = vadd.f32 %v1411, %v1452
    %v1483 = vadd.f32 %v1412, %v1452
    %v1484 = vadd.f32 %v1413, %v1452
    %v1485 = vadd.f32 %v1414, %v1452
    %v1486 = vadd.f32 %v1415, %v1452
    %v1487 = vadd.f32 %v1416, %v1452
    %v1488 = vadd.f32 %v1417, %v1452
    %v1489 = vadd.f32 %v1418, %v1452
    %v1490 = vadd.f32 %v1419, %v1452
    %v1491 = vadd.f32 %v1420, %v1452
    %v1492 = vadd.f32 %v1421, %v1452
    %v1493 = vadd.f32 %v1422, %v1452
    %v1494 = vadd.f32 %v1423, %v1452
    %v1495 = vadd.f32 %v1424, %v1452
    %v1496 = vadd.f32 %v1425, %v1452
    %v1497 = vadd.f32 %v1426, %v1452
    %v1498 = vadd.f32 %v1427, %v1452
    %v1499 = vadd.f32 %v1428, %v1452
    %v1500 = vadd.f32 %v1429, %v1452
    %v1501 = vadd.f32 %v1430, %v1452
    %v1502 = vadd.f32 %v1431, %v1452
    %v1503 = vadd.f32 %v1432, %v1452
    %v1504 = vadd.f32 %v1433, %v1452
    %v1505 = vadd.f32 %v1434, %v1452
    %v1506 = vadd.f32 %v1435, %v1452
    %v1507 = vadd.f32 %v1436, %v1452
    %v1508 = vadd.f32 %v1437, %v1452
    %v1509 = vadd.f32 %v1438, %v1452
    %v1510 = vadd.f32 %v1439, %v1452
    %v1511 = vadd.f32 %v1440, %v1452
    %v1512 = vadd.f32 %v1441, %v1452
    %v1513 = vadd.f32 %v1442, %v1452
    %v1514 = vadd.f32 %v1443, %v1452
    %v1515 = vadd.f32 %v1444, %v1452
    %v1516 = vadd.f32 %v1445, %v1452
    %v1517 = vadd.f32 %v1446, %v1452
    %1518 = vst [vmem:[#allocation2] sm:$0xff] %v1454
    %1519 = vst [vmem:[#allocation2 + $0x8] sm:$0xff] %v1455
    %1520 = vst [vmem:[#allocation2 + $0x10] sm:$0xff] %v1456
    %1521 = vst [vmem:[#allocation2 + $0x18] sm:$0xff] %v1457
    %1522 = vst [vmem:[#allocation2 + $0x20] sm:$0xff] %v1458
    %1523 = vst [vmem:[#allocation2 + $0x28] sm:$0xff] %v1459
    %1524 = vst [vmem:[#allocation2 + $0x30] sm:$0xff] %v1460
    %1525 = vst [vmem:[#allocation2 + $0x38] sm:$0xff] %v1461
    %1526 = vst [vmem:[#allocation2 + $0x40] sm:$0xff] %v1462
    %1527 = vst [vmem:[#allocation2 + $0x48] sm:$0xff] %v1463
    %1528 = vst [vmem:[#allocation2 + $0x50] sm:$0xff] %v1464
    %1529 = vst [vmem:[#allocation2 + $0x58] sm:$0xff] %v1465
    %1530 = vst [vmem:[#allocation2 + $0x60] sm:$0xff] %v1466
    %1531 = vst [vmem:[#allocation2 + $0x68] sm:$0xff] %v1467
    %1532 = vst [vmem:[#allocation2 + $0x70] sm:$0xff] %v1468
    %1533 = vst [vmem:[#allocation2 + $0x78] sm:$0xff] %v1469
    %1534 = vst [vmem:[#allocation2 + $0x80] sm:$0xff] %v1470
    %1535 = vst [vmem:[#allocation2 + $0x88] sm:$0xff] %v1471
    %1536 = vst [vmem:[#allocation2 + $0x90] sm:$0xff] %v1472
    %1537 = vst [vmem:[#allocation2 + $0x98] sm:$0xff] %v1473
    %1538 = vst [vmem:[#allocation2 + $0xa0] sm:$0xff] %v1474
    %1539 = vst [vmem:[#allocation2 + $0xa8] sm:$0xff] %v1475
    %1540 = vst [vmem:[#allocation2 + $0xb0] sm:$0xff] %v1476
    %1541 = vst [vmem:[#allocation2 + $0xb8] sm:$0xff] %v1477
    %1542 = vst [vmem:[#allocation2 + $0xc0] sm:$0xff] %v1478
    %1543 = vst [vmem:[#allocation2 + $0xc8] sm:$0xff] %v1479
    %1544 = vst [vmem:[#allocation2 + $0xd0] sm:$0xff] %v1480
    %1545 = vst [vmem:[#allocation2 + $0xd8] sm:$0xff] %v1481
    %1546 = vst [vmem:[#allocation2 + $0xe0] sm:$0xff] %v1482
    %1547 = vst [vmem:[#allocation2 + $0xe8] sm:$0xff] %v1483
    %1548 = vst [vmem:[#allocation2 + $0xf0] sm:$0xff] %v1484
    %1549 = vst [vmem:[#allocation2 + $0xf8] sm:$0xff] %v1485
    %1550 = vst [vmem:[#allocation2 + $0x100] sm:$0xff] %v1486
    %1551 = vst [vmem:[#allocation2 + $0x108] sm:$0xff] %v1487
    %1552 = vst [vmem:[#allocation2 + $0x110] sm:$0xff] %v1488
    %1553 = vst [vmem:[#allocation2 + $0x118] sm:$0xff] %v1489
    %1554 = vst [vmem:[#allocation2 + $0x120] sm:$0xff] %v1490
    %1555 = vst [vmem:[#allocation2 + $0x128] sm:$0xff] %v1491
    %1556 = vst [vmem:[#allocation2 + $0x130] sm:$0xff] %v1492
    %1557 = vst [vmem:[#allocation2 + $0x138] sm:$0xff] %v1493
    %1558 = vst [vmem:[#allocation2 + $0x140] sm:$0xff] %v1494
    %1559 = vst [vmem:[#allocation2 + $0x148] sm:$0xff] %v1495
    %1560 = vst [vmem:[#allocation2 + $0x150] sm:$0xff] %v1496
    %1561 = vst [vmem:[#allocation2 + $0x158] sm:$0xff] %v1497
    %1562 = vst [vmem:[#allocation2 + $0x160] sm:$0xff] %v1498
    %1563 = vst [vmem:[#allocation2 + $0x168] sm:$0xff] %v1499
    %1564 = vst [vmem:[#allocation2 + $0x170] sm:$0xff] %v1500
    %1565 = vst [vmem:[#allocation2 + $0x178] sm:$0xff] %v1501
    %1566 = vst [vmem:[#allocation2 + $0x180] sm:$0xff] %v1502
    %1567 = vst [vmem:[#allocation2 + $0x188] sm:$0xff] %v1503
    %1568 = vst [vmem:[#allocation2 + $0x190] sm:$0xff] %v1504
    %1569 = vst [vmem:[#allocation2 + $0x198] sm:$0xff] %v1505
    %1570 = vst [vmem:[#allocation2 + $0x1a0] sm:$0xff] %v1506
    %1571 = vst [vmem:[#allocation2 + $0x1a8] sm:$0xff] %v1507
    %1572 = vst [vmem:[#allocation2 + $0x1b0] sm:$0xff] %v1508
    %1573 = vst [vmem:[#allocation2 + $0x1b8] sm:$0xff] %v1509
    %1574 = vst [vmem:[#allocation2 + $0x1c0] sm:$0xff] %v1510
    %1575 = vst [vmem:[#allocation2 + $0x1c8] sm:$0xff] %v1511
    %1576 = vst [vmem:[#allocation2 + $0x1d0] sm:$0xff] %v1512
    %1577 = vst [vmem:[#allocation2 + $0x1d8] sm:$0xff] %v1513
    %1578 = vst [vmem:[#allocation2 + $0x1e0] sm:$0xff] %v1514
    %1579 = vst [vmem:[#allocation2 + $0x1e8] sm:$0xff] %v1515
    %1580 = vst [vmem:[#allocation2 + $0x1f0] sm:$0xff] %v1516
    %1581 = vst [vmem:[#allocation2 + $0x1f8] sm:$0xff] %v1517
    // Predicated region
    $region22: #{subsample_forward.3} parent=1 // pred_check
      _
    $region23: #{subsample_forward.3} parent=1 // pred_check_branch
      %1583 = sbr.rel (0) target = $region25
    $region24: #{subsample_forward.3} parent=1 // pred_region
      %s1585 = ssub.s32 8192, 8192
      %1586 = vsyncadd [#allocation3], %s1585
      %s1587 = sshll.u32 [#allocation2], 4
      %s1588 = int_to_ptr.vmem [resolvable:$true] %s1587
      %1593 = dma.vmem_to_hbm [thread:$0]  %s1588, 8192, %s5, [#allocation3], 128, 128, 8
    $region25: #{subsample_forward.3} parent=1 // pred_fallthru
      _
    // Predicated region
    $region26: #{subsample_forward.3} parent=1 // pred_check
      _
    $region27: #{subsample_forward.3} parent=1 // pred_check_branch
      %1595 = sbr.rel (0) target = $region29
    $region28: #{subsample_forward.3} parent=1 // pred_region
      %1596 = dma.done [#allocation3], 8192
    $region29: #{subsample_forward.3} parent=1 // pred_fallthru
      _
    %1597 = vsyncpa [#allocation3], 1

// kernel: subsample_forward.2
$region0: #{subsample_forward.2}
  #allocation0 [shape = 'u32[]', space=smem, size = 0x4, offset = 0x4, fixed_abs, tag = 'smem constant byte address 0x4 - core index']
  #allocation1 [shape = 'u32[144,128]{1,0:T(1,128)}', space=vmem, size = 0x12000, scoped, tag = 'internal scratch']
  %s0 = inlined_call_operand.vmem [shape: f32[128,9,36], index: 0, kind: input, shape index: {}]
  %s1 = inlined_call_operand.vmem [shape: f32[128,9,36], index: 1, kind: input, shape index: {}]
  %s2 = inlined_call_operand.vmem [shape: f32[128,8,32], index: 2, kind: output, shape index: {}]
  %s3 = sld [smem:[#allocation0]]
  $region41: #{subsample_forward.2} parent=0
    _
  %s5 = ssub.s32 1, %s3
  %s6 = scalar_select 0, %s5, %s3
  loop: start=0, step=1, limit=4
  $region2: #{subsample_forward.2} parent=0 // loop_pre_header
    _
  $region3: #{subsample_forward.2} parent=0 // loop_header
    %s8 = sphi 0, %s12
    %p9 = scmp.ge.s32.totalorder %s8, 4
    %s18 = sphi 0, %s20
    %s21 = sphi 0, %s18
    %s22 = sphi 0, %s21
    %s38 = sphi 0, %s22
    %s44 = sphi 0, %s46
    %s47 = sphi 0, %s44
    %s48 = sphi 0, %s47
    %s64 = sphi 0, %s48
    %s70 = sphi 0, %s72
    %s73 = sphi 0, %s70
    %s74 = sphi 0, %s73
    %s90 = sphi 0, %s74
  $region4: #{subsample_forward.2} parent=0 // loop_header_branch
    %11 = sbr.rel (%p9) target = $region8
  $region5: #{subsample_forward.2} parent=0 // loop_body
    %s13 = ssub.s32 %s8, 1
    %s14 = ssub.s32 %s8, 2
    %s15 = sadd.s32 %s8, 1
    %s16 = ssub.s32 %s8, %s15
    %p17 = scmp.eq.s32.totalorder %s16, 0
    %s19 = sadd.s32 %s18, 1
    %s20 = scalar_select %p17, %s18, %s19
    %p23 = pneg %p17
    %p24 = scmp.eq.s32.totalorder %s8, 1
    %p25 = por %p23, %p24
    %p26 = scmp.ne.s32.totalorder %s18, %s21
    %p27 = scmp.eq.s32.totalorder %s8, 0
    %p28 = por %p26, %p27
    %p29 = scmp.ne.s32.totalorder %s18, %s21
    %p30 = scmp.eq.s32.totalorder %s13, 1
    %p31 = por %p29, %p30
    %p32 = scmp.ne.s32.totalorder %s21, %s22
    %p33 = scmp.eq.s32.totalorder %s13, 0
    %p34 = por %p32, %p33
    %p35 = scmp.ne.s32.totalorder %s21, %s22
    %p36 = scmp.eq.s32.totalorder %s14, 1
    %p37 = por %p35, %p36
    %p39 = scmp.ne.s32.totalorder %s22, %s38
    %p40 = scmp.eq.s32.totalorder %s14, 0
    %p41 = por %p39, %p40
    %s42 = ssub.s32 %s8, %s15
    %p43 = scmp.eq.s32.totalorder %s42, 0
    %s45 = sadd.s32 %s44, 1
    %s46 = scalar_select %p43, %s44, %s45
    %p49 = pneg %p43
    %p50 = scmp.eq.s32.totalorder %s8, 1
    %p51 = por %p49, %p50
    %p52 = scmp.ne.s32.totalorder %s44, %s47
    %p53 = scmp.eq.s32.totalorder %s8, 0
    %p54 = por %p52, %p53
    %p55 = scmp.ne.s32.totalorder %s44, %s47
    %p56 = scmp.eq.s32.totalorder %s13, 1
    %p57 = por %p55, %p56
    %p58 = scmp.ne.s32.totalorder %s47, %s48
    %p59 = scmp.eq.s32.totalorder %s13, 0
    %p60 = por %p58, %p59
    %p61 = scmp.ne.s32.totalorder %s47, %s48
    %p62 = scmp.eq.s32.totalorder %s14, 1
    %p63 = por %p61, %p62
    %p65 = scmp.ne.s32.totalorder %s48, %s64
    %p66 = scmp.eq.s32.totalorder %s14, 0
    %p67 = por %p65, %p66
    %s68 = ssub.s32 %s8, %s15
    %p69 = scmp.eq.s32.totalorder %s68, 0
    %s71 = sadd.s32 %s70, 1
    %s72 = scalar_select %p69, %s70, %s71
    %p75 = pneg %p69
    %p76 = scmp.eq.s32.totalorder %s8, 1
    %p77 = por %p75, %p76
    %p78 = scmp.ne.s32.totalorder %s70, %s73
    %p79 = scmp.eq.s32.totalorder %s8, 0
    %p80 = por %p78, %p79
    %p81 = scmp.ne.s32.totalorder %s70, %s73
    %p82 = scmp.eq.s32.totalorder %s13, 1
    %p83 = por %p81, %p82
    %p84 = scmp.ne.s32.totalorder %s73, %s74
    %p85 = scmp.eq.s32.totalorder %s13, 0
    %p86 = por %p84, %p85
    %p87 = scmp.ne.s32.totalorder %s73, %s74
    %p88 = scmp.eq.s32.totalorder %s14, 1
    %p89 = por %p87, %p88
    %p91 = scmp.ne.s32.totalorder %s74, %s90
    %p92 = scmp.eq.s32.totalorder %s14, 0
    %p93 = por %p91, %p92
    %p94 = scmp.le.s32.totalorder 1, %s8
    %p95 = scmp.lt.s32.totalorder %s8, 3
    %p96 = pnand %p94, %p95
    %p97 = pneg %p96
    // Predicated region
    $region9: #{subsample_forward.2} parent=5 // pred_check
      _
    $region10: #{subsample_forward.2} parent=5 // pred_check_branch
      %99 = sbr.rel (%p96) target = $region12
    $region11: #{subsample_forward.2} parent=5 // pred_region
      %s100 = ssub.s32 %s8, 1
    $region12: #{subsample_forward.2} parent=5 // pred_fallthru
      _
    %p101 = scmp.lt.s32.totalorder %s8, 2
    // Predicated region
    $region13: #{subsample_forward.2} parent=5 // pred_check
      %p102 = pneg %p101
    $region14: #{subsample_forward.2} parent=5 // pred_check_branch
      %104 = sbr.rel (%p102) target = $region16
    $region15: #{subsample_forward.2} parent=5 // pred_region
      // Predicated region
      $region17: #{subsample_forward.2} parent=15 // pred_check
        %p105 = pneg %p28
      $region18: #{subsample_forward.2} parent=15 // pred_check_branch
        %107 = sbr.rel (%p105) target = $region20
      $region19: #{subsample_forward.2} parent=15 // pred_region
        %s108 = smul.u32 64, %s8
        %p109 = scmp.lt.s32.totalorder %s108, 127
        %s110 = scalar_select %p109, %s108, 127
        %s111 = smul.addr %s110, 2
        %s112 = smul.addr %s111, 8
        %s113 = scalar_lea.vmem %s0, %s112
        %s114 = smul.u32 64, %s8
      $region20: #{subsample_forward.2} parent=15 // pred_fallthru
        _
      // Predicated region
      $region21: #{subsample_forward.2} parent=15 // pred_check
        %p115 = pneg %p54
      $region22: #{subsample_forward.2} parent=15 // pred_check_branch
        %117 = sbr.rel (%p115) target = $region24
      $region23: #{subsample_forward.2} parent=15 // pred_region
        %s118 = smul.u32 64, %s8
        %p119 = scmp.lt.s32.totalorder %s118, 127
        %s120 = scalar_select %p119, %s118, 127
        %s121 = smul.addr %s120, 2
        %s122 = smul.addr %s121, 8
        %s123 = scalar_lea.vmem %s1, %s122
        %s124 = smul.u32 64, %s8
      $region24: #{subsample_forward.2} parent=15 // pred_fallthru
        _
    $region16: #{subsample_forward.2} parent=5 // pred_fallthru
      _
    %p125 = scmp.le.s32.totalorder 1, %s8
    %p126 = scmp.lt.s32.totalorder %s8, 3
    %p127 = pnand %p125, %p126
    %p128 = pneg %p127
    // Predicated region
    $region25: #{subsample_forward.2} parent=5 // pred_check
      _
    $region26: #{subsample_forward.2} parent=5 // pred_check_branch
      %130 = sbr.rel (%p127) target = $region28
    $region27: #{subsample_forward.2} parent=5 // pred_region
      %s131 = ssub.s32 %s8, 1
      %s132 = smul.u32 64, %s13
      %p133 = scmp.lt.s32.totalorder %s132, 127
      %s134 = scalar_select %p133, %s132, 127
      %s135 = smul.addr %s134, 2
      %s136 = smul.addr %s135, 8
      %s137 = scalar_lea.vmem %s0, %s136
      %p138 = pneg %p34
      %p139 = pneg %p31
      %s140 = smul.u32 64, %s13
      %p141 = scmp.lt.s32.totalorder %s140, 127
      %s142 = scalar_select %p141, %s140, 127
      %s143 = smul.addr %s142, 2
      %s144 = smul.addr %s143, 8
      %s145 = scalar_lea.vmem %s1, %s144
      %p146 = pneg %p60
      %p147 = pneg %p57
      %p148 = pneg %p86
      %p149 = pneg %p83
      %s150 = smul.u32 64, %s13
      %p151 = scmp.lt.s32.totalorder %s150, 127
      %s152 = scalar_select %p151, %s150, 127
      %s153 = smul.addr %s152, 8
      %s154 = scalar_lea.vmem %s2, %s153
      %s155 = smul.u32 64, %s13
      %p156 = scmp.lt.s32.totalorder %s155, 127
      %s157 = scalar_select %p156, %s155, 127
      %s158 = smul.addr %s157, 2
      %s159 = smul.addr %s158, 8
      %s160 = scalar_lea.vmem %s0, %s159
      %s161 = smul.u32 64, %s13
      %s162 = smul.u32 64, %s13
      %p163 = scmp.lt.s32.totalorder %s162, 127
      %s164 = scalar_select %p163, %s162, 127
      %s165 = smul.addr %s164, 2
      %s166 = smul.addr %s165, 8
      %s167 = scalar_lea.vmem %s1, %s166
      %s168 = smul.u32 64, %s13
      %s169 = smul.u32 64, %s13
      %p170 = scmp.lt.s32.totalorder %s169, 127
      %s171 = scalar_select %p170, %s169, 127
      %s172 = smul.addr %s171, 8
      %s173 = scalar_lea.vmem %s2, %s172
      %s174 = smul.u32 64, %s13
      %v175 = vlaneseq
      %v176 = vshrl.u32 %v175, 7
      %v177 = vlaneseq
      %v178 = vand.u32 %v177, 127
      %v179 = vmul.u32 %v176, 2
      %vm180 = vcmp.ge.s32.totalorder %v179, 1
      %vm181 = vcmp.lt.s32.totalorder %v179, 17
      %vm182 = vmand %vm180, %vm181
      %vm183 = vcmp.ge.s32.totalorder %v178, 2
      %vm184 = vcmp.lt.s32.totalorder %v178, 34
      %vm185 = vmand %vm183, %vm184
      %vm186 = vmand %vm182, %vm185
      %v187 = vld [vmem:[%s160] sm:$0xff]
      %v188 = vld [vmem:[%s160 + $0x10] sm:$0xff]
      %v189 = vld [vmem:[%s160 + $0x20] sm:$0xff]
      %v190 = vld [vmem:[%s160 + $0x30] sm:$0xff]
      %v191 = vld [vmem:[%s160 + $0x40] sm:$0xff]
      %v192 = vld [vmem:[%s160 + $0x50] sm:$0xff]
      %v193 = vld [vmem:[%s160 + $0x60] sm:$0xff]
      %v194 = vld [vmem:[%s160 + $0x70] sm:$0xff]
      %v195 = vld [vmem:[%s160 + $0x80] sm:$0xff]
      %v196 = vld [vmem:[%s160 + $0x90] sm:$0xff]
      %v197 = vld [vmem:[%s160 + $0xa0] sm:$0xff]
      %v198 = vld [vmem:[%s160 + $0xb0] sm:$0xff]
      %v199 = vld [vmem:[%s160 + $0xc0] sm:$0xff]
      %v200 = vld [vmem:[%s160 + $0xd0] sm:$0xff]
      %v201 = vld [vmem:[%s160 + $0xe0] sm:$0xff]
      %v202 = vld [vmem:[%s160 + $0xf0] sm:$0xff]
      %v203 = vld [vmem:[%s160 + $0x100] sm:$0xff]
      %v204 = vld [vmem:[%s160 + $0x110] sm:$0xff]
      %v205 = vld [vmem:[%s160 + $0x120] sm:$0xff]
      %v206 = vld [vmem:[%s160 + $0x130] sm:$0xff]
      %v207 = vld [vmem:[%s160 + $0x140] sm:$0xff]
      %v208 = vld [vmem:[%s160 + $0x150] sm:$0xff]
      %v209 = vld [vmem:[%s160 + $0x160] sm:$0xff]
      %v210 = vld [vmem:[%s160 + $0x170] sm:$0xff]
      %v211 = vld [vmem:[%s160 + $0x180] sm:$0xff]
      %v212 = vld [vmem:[%s160 + $0x190] sm:$0xff]
      %v213 = vld [vmem:[%s160 + $0x1a0] sm:$0xff]
      %v214 = vld [vmem:[%s160 + $0x1b0] sm:$0xff]
      %v215 = vld [vmem:[%s160 + $0x1c0] sm:$0xff]
      %v216 = vld [vmem:[%s160 + $0x1d0] sm:$0xff]
      %v217 = vld [vmem:[%s160 + $0x1e0] sm:$0xff]
      %v218 = vld [vmem:[%s160 + $0x1f0] sm:$0xff]
      %v219 = vld [vmem:[%s160 + $0x200] sm:$0xff]
      %v220 = vld [vmem:[%s160 + $0x210] sm:$0xff]
      %v221 = vld [vmem:[%s160 + $0x220] sm:$0xff]
      %v222 = vld [vmem:[%s160 + $0x230] sm:$0xff]
      %v223 = vld [vmem:[%s160 + $0x240] sm:$0xff]
      %v224 = vld [vmem:[%s160 + $0x250] sm:$0xff]
      %v225 = vld [vmem:[%s160 + $0x260] sm:$0xff]
      %v226 = vld [vmem:[%s160 + $0x270] sm:$0xff]
      %v227 = vld [vmem:[%s160 + $0x280] sm:$0xff]
      %v228 = vld [vmem:[%s160 + $0x290] sm:$0xff]
      %v229 = vld [vmem:[%s160 + $0x2a0] sm:$0xff]
      %v230 = vld [vmem:[%s160 + $0x2b0] sm:$0xff]
      %v231 = vld [vmem:[%s160 + $0x2c0] sm:$0xff]
      %v232 = vld [vmem:[%s160 + $0x2d0] sm:$0xff]
      %v233 = vld [vmem:[%s160 + $0x2e0] sm:$0xff]
      %v234 = vld [vmem:[%s160 + $0x2f0] sm:$0xff]
      %v235 = vld [vmem:[%s160 + $0x300] sm:$0xff]
      %v236 = vld [vmem:[%s160 + $0x310] sm:$0xff]
      %v237 = vld [vmem:[%s160 + $0x320] sm:$0xff]
      %v238 = vld [vmem:[%s160 + $0x330] sm:$0xff]
      %v239 = vld [vmem:[%s160 + $0x340] sm:$0xff]
      %v240 = vld [vmem:[%s160 + $0x350] sm:$0xff]
      %v241 = vld [vmem:[%s160 + $0x360] sm:$0xff]
      %v242 = vld [vmem:[%s160 + $0x370] sm:$0xff]
      %v243 = vld [vmem:[%s160 + $0x380] sm:$0xff]
      %v244 = vld [vmem:[%s160 + $0x390] sm:$0xff]
      %v245 = vld [vmem:[%s160 + $0x3a0] sm:$0xff]
      %v246 = vld [vmem:[%s160 + $0x3b0] sm:$0xff]
      %v247 = vld [vmem:[%s160 + $0x3c0] sm:$0xff]
      %v248 = vld [vmem:[%s160 + $0x3d0] sm:$0xff]
      %v249 = vld [vmem:[%s160 + $0x3e0] sm:$0xff]
      %v250 = vld [vmem:[%s160 + $0x3f0] sm:$0xff]
      %v251 = vadd.f32 %v187, 0.0
      %v252 = vadd.f32 %v188, 0.0
      %v253 = vadd.f32 %v189, 0.0
      %v254 = vadd.f32 %v190, 0.0
      %v255 = vadd.f32 %v191, 0.0
      %v256 = vadd.f32 %v192, 0.0
      %v257 = vadd.f32 %v193, 0.0
      %v258 = vadd.f32 %v194, 0.0
      %v259 = vadd.f32 %v195, 0.0
      %v260 = vadd.f32 %v196, 0.0
      %v261 = vadd.f32 %v197, 0.0
      %v262 = vadd.f32 %v198, 0.0
      %v263 = vadd.f32 %v199, 0.0
      %v264 = vadd.f32 %v200, 0.0
      %v265 = vadd.f32 %v201, 0.0
      %v266 = vadd.f32 %v202, 0.0
      %v267 = vadd.f32 %v203, 0.0
      %v268 = vadd.f32 %v204, 0.0
      %v269 = vadd.f32 %v205, 0.0
      %v270 = vadd.f32 %v206, 0.0
      %v271 = vadd.f32 %v207, 0.0
      %v272 = vadd.f32 %v208, 0.0
      %v273 = vadd.f32 %v209, 0.0
      %v274 = vadd.f32 %v210, 0.0
      %v275 = vadd.f32 %v211, 0.0
      %v276 = vadd.f32 %v212, 0.0
      %v277 = vadd.f32 %v213, 0.0
      %v278 = vadd.f32 %v214, 0.0
      %v279 = vadd.f32 %v215, 0.0
      %v280 = vadd.f32 %v216, 0.0
      %v281 = vadd.f32 %v217, 0.0
      %v282 = vadd.f32 %v218, 0.0
      %v283 = vadd.f32 %v219, 0.0
      %v284 = vadd.f32 %v220, 0.0
      %v285 = vadd.f32 %v221, 0.0
      %v286 = vadd.f32 %v222, 0.0
      %v287 = vadd.f32 %v223, 0.0
      %v288 = vadd.f32 %v224, 0.0
      %v289 = vadd.f32 %v225, 0.0
      %v290 = vadd.f32 %v226, 0.0
      %v291 = vadd.f32 %v227, 0.0
      %v292 = vadd.f32 %v228, 0.0
      %v293 = vadd.f32 %v229, 0.0
      %v294 = vadd.f32 %v230, 0.0
      %v295 = vadd.f32 %v231, 0.0
      %v296 = vadd.f32 %v232, 0.0
      %v297 = vadd.f32 %v233, 0.0
      %v298 = vadd.f32 %v234, 0.0
      %v299 = vadd.f32 %v235, 0.0
      %v300 = vadd.f32 %v236, 0.0
      %v301 = vadd.f32 %v237, 0.0
      %v302 = vadd.f32 %v238, 0.0
      %v303 = vadd.f32 %v239, 0.0
      %v304 = vadd.f32 %v240, 0.0
      %v305 = vadd.f32 %v241, 0.0
      %v306 = vadd.f32 %v242, 0.0
      %v307 = vadd.f32 %v243, 0.0
      %v308 = vadd.f32 %v244, 0.0
      %v309 = vadd.f32 %v245, 0.0
      %v310 = vadd.f32 %v246, 0.0
      %v311 = vadd.f32 %v247, 0.0
      %v312 = vadd.f32 %v248, 0.0
      %v313 = vadd.f32 %v249, 0.0
      %v314 = vadd.f32 %v250, 0.0
      %v315 = vsel %vm186, %v187, -3e+38
      %v316 = vsel %vm186, %v188, -3e+38
      %v317 = vsel %vm186, %v189, -3e+38
      %v318 = vsel %vm186, %v190, -3e+38
      %v319 = vsel %vm186, %v191, -3e+38
      %v320 = vsel %vm186, %v192, -3e+38
      %v321 = vsel %vm186, %v193, -3e+38
      %v322 = vsel %vm186, %v194, -3e+38
      %v323 = vsel %vm186, %v195, -3e+38
      %v324 = vsel %vm186, %v196, -3e+38
      %v325 = vsel %vm186, %v197, -3e+38
      %v326 = vsel %vm186, %v198, -3e+38
      %v327 = vsel %vm186, %v199, -3e+38
      %v328 = vsel %vm186, %v200, -3e+38
      %v329 = vsel %vm186, %v201, -3e+38
      %v330 = vsel %vm186, %v202, -3e+38
      %v331 = vsel %vm186, %v203, -3e+38
      %v332 = vsel %vm186, %v204, -3e+38
      %v333 = vsel %vm186, %v205, -3e+38
      %v334 = vsel %vm186, %v206, -3e+38
      %v335 = vsel %vm186, %v207, -3e+38
      %v336 = vsel %vm186, %v208, -3e+38
      %v337 = vsel %vm186, %v209, -3e+38
      %v338 = vsel %vm186, %v210, -3e+38
      %v339 = vsel %vm186, %v211, -3e+38
      %v340 = vsel %vm186, %v212, -3e+38
      %v341 = vsel %vm186, %v213, -3e+38
      %v342 = vsel %vm186, %v214, -3e+38
      %v343 = vsel %vm186, %v215, -3e+38
      %v344 = vsel %vm186, %v216, -3e+38
      %v345 = vsel %vm186, %v217, -3e+38
      %v346 = vsel %vm186, %v218, -3e+38
      %v347 = vsel %vm186, %v219, -3e+38
      %v348 = vsel %vm186, %v220, -3e+38
      %v349 = vsel %vm186, %v221, -3e+38
      %v350 = vsel %vm186, %v222, -3e+38
      %v351 = vsel %vm186, %v223, -3e+38
      %v352 = vsel %vm186, %v224, -3e+38
      %v353 = vsel %vm186, %v225, -3e+38
      %v354 = vsel %vm186, %v226, -3e+38
      %v355 = vsel %vm186, %v227, -3e+38
      %v356 = vsel %vm186, %v228, -3e+38
      %v357 = vsel %vm186, %v229, -3e+38
      %v358 = vsel %vm186, %v230, -3e+38
      %v359 = vsel %vm186, %v231, -3e+38
      %v360 = vsel %vm186, %v232, -3e+38
      %v361 = vsel %vm186, %v233, -3e+38
      %v362 = vsel %vm186, %v234, -3e+38
      %v363 = vsel %vm186, %v235, -3e+38
      %v364 = vsel %vm186, %v236, -3e+38
      %v365 = vsel %vm186, %v237, -3e+38
      %v366 = vsel %vm186, %v238, -3e+38
      %v367 = vsel %vm186, %v239, -3e+38
      %v368 = vsel %vm186, %v240, -3e+38
      %v369 = vsel %vm186, %v241, -3e+38
      %v370 = vsel %vm186, %v242, -3e+38
      %v371 = vsel %vm186, %v243, -3e+38
      %v372 = vsel %vm186, %v244, -3e+38
      %v373 = vsel %vm186, %v245, -3e+38
      %v374 = vsel %vm186, %v246, -3e+38
      %v375 = vsel %vm186, %v247, -3e+38
      %v376 = vsel %vm186, %v248, -3e+38
      %v377 = vsel %vm186, %v249, -3e+38
      %v378 = vsel %vm186, %v250, -3e+38
      %v379 = vmax.f32 %v315, -3e+38
      %v380 = vmax.f32 %v316, -3e+38
      %v381 = vmax.f32 %v317, -3e+38
      %v382 = vmax.f32 %v318, -3e+38
      %v383 = vmax.f32 %v319, -3e+38
      %v384 = vmax.f32 %v320, -3e+38
      %v385 = vmax.f32 %v321, -3e+38
      %v386 = vmax.f32 %v322, -3e+38
      %v387 = vmax.f32 %v323, -3e+38
      %v388 = vmax.f32 %v324, -3e+38
      %v389 = vmax.f32 %v325, -3e+38
      %v390 = vmax.f32 %v326, -3e+38
      %v391 = vmax.f32 %v327, -3e+38
      %v392 = vmax.f32 %v328, -3e+38
      %v393 = vmax.f32 %v329, -3e+38
      %v394 = vmax.f32 %v330, -3e+38
      %v395 = vmax.f32 %v331, -3e+38
      %v396 = vmax.f32 %v332, -3e+38
      %v397 = vmax.f32 %v333, -3e+38
      %v398 = vmax.f32 %v334, -3e+38
      %v399 = vmax.f32 %v335, -3e+38
      %v400 = vmax.f32 %v336, -3e+38
      %v401 = vmax.f32 %v337, -3e+38
      %v402 = vmax.f32 %v338, -3e+38
      %v403 = vmax.f32 %v339, -3e+38
      %v404 = vmax.f32 %v340, -3e+38
      %v405 = vmax.f32 %v341, -3e+38
      %v406 = vmax.f32 %v342, -3e+38
      %v407 = vmax.f32 %v343, -3e+38
      %v408 = vmax.f32 %v344, -3e+38
      %v409 = vmax.f32 %v345, -3e+38
      %v410 = vmax.f32 %v346, -3e+38
      %v411 = vmax.f32 %v347, -3e+38
      %v412 = vmax.f32 %v348, -3e+38
      %v413 = vmax.f32 %v349, -3e+38
      %v414 = vmax.f32 %v350, -3e+38
      %v415 = vmax.f32 %v351, -3e+38
      %v416 = vmax.f32 %v352, -3e+38
      %v417 = vmax.f32 %v353, -3e+38
      %v418 = vmax.f32 %v354, -3e+38
      %v419 = vmax.f32 %v355, -3e+38
      %v420 = vmax.f32 %v356, -3e+38
      %v421 = vmax.f32 %v357, -3e+38
      %v422 = vmax.f32 %v358, -3e+38
      %v423 = vmax.f32 %v359, -3e+38
      %v424 = vmax.f32 %v360, -3e+38
      %v425 = vmax.f32 %v361, -3e+38
      %v426 = vmax.f32 %v362, -3e+38
      %v427 = vmax.f32 %v363, -3e+38
      %v428 = vmax.f32 %v364, -3e+38
      %v429 = vmax.f32 %v365, -3e+38
      %v430 = vmax.f32 %v366, -3e+38
      %v431 = vmax.f32 %v367, -3e+38
      %v432 = vmax.f32 %v368, -3e+38
      %v433 = vmax.f32 %v369, -3e+38
      %v434 = vmax.f32 %v370, -3e+38
      %v435 = vmax.f32 %v371, -3e+38
      %v436 = vmax.f32 %v372, -3e+38
      %v437 = vmax.f32 %v373, -3e+38
      %v438 = vmax.f32 %v374, -3e+38
      %v439 = vmax.f32 %v375, -3e+38
      %v440 = vmax.f32 %v376, -3e+38
      %v441 = vmax.f32 %v377, -3e+38
      %v442 = vmax.f32 %v378, -3e+38
      %v443 = vadd.s32 %v178, 1
      %vm444 = vcmp.ge.s32.totalorder %v443, 2
      %vm445 = vcmp.lt.s32.totalorder %v443, 34
      %vm446 = vmand %vm444, %vm445
      %vm447 = vmand %vm182, %vm446
      %512 = vrot.lane.b32.xlu0 %v187, 127
      %v513 = vpop.permute.xlu0 %512
      %514 = vrot.lane.b32.xlu0 %v188, 127
      %v515 = vpop.permute.xlu0 %514
      %516 = vrot.lane.b32.xlu0 %v189, 127
      %v517 = vpop.permute.xlu0 %516
      %518 = vrot.lane.b32.xlu0 %v190, 127
      %v519 = vpop.permute.xlu0 %518
      %520 = vrot.lane.b32.xlu0 %v191, 127
      %v521 = vpop.permute.xlu0 %520
      %522 = vrot.lane.b32.xlu0 %v192, 127
      %v523 = vpop.permute.xlu0 %522
      %524 = vrot.lane.b32.xlu0 %v193, 127
      %v525 = vpop.permute.xlu0 %524
      %526 = vrot.lane.b32.xlu0 %v194, 127
      %v527 = vpop.permute.xlu0 %526
      %528 = vrot.lane.b32.xlu0 %v195, 127
      %v529 = vpop.permute.xlu0 %528
      %530 = vrot.lane.b32.xlu0 %v196, 127
      %v531 = vpop.permute.xlu0 %530
      %532 = vrot.lane.b32.xlu0 %v197, 127
      %v533 = vpop.permute.xlu0 %532
      %534 = vrot.lane.b32.xlu0 %v198, 127
      %v535 = vpop.permute.xlu0 %534
      %536 = vrot.lane.b32.xlu0 %v199, 127
      %v537 = vpop.permute.xlu0 %536
      %538 = vrot.lane.b32.xlu0 %v200, 127
      %v539 = vpop.permute.xlu0 %538
      %540 = vrot.lane.b32.xlu0 %v201, 127
      %v541 = vpop.permute.xlu0 %540
      %542 = vrot.lane.b32.xlu0 %v202, 127
      %v543 = vpop.permute.xlu0 %542
      %544 = vrot.lane.b32.xlu0 %v203, 127
      %v545 = vpop.permute.xlu0 %544
      %546 = vrot.lane.b32.xlu0 %v204, 127
      %v547 = vpop.permute.xlu0 %546
      %548 = vrot.lane.b32.xlu0 %v205, 127
      %v549 = vpop.permute.xlu0 %548
      %550 = vrot.lane.b32.xlu0 %v206, 127
      %v551 = vpop.permute.xlu0 %550
      %552 = vrot.lane.b32.xlu0 %v207, 127
      %v553 = vpop.permute.xlu0 %552
      %554 = vrot.lane.b32.xlu0 %v208, 127
      %v555 = vpop.permute.xlu0 %554
      %556 = vrot.lane.b32.xlu0 %v209, 127
      %v557 = vpop.permute.xlu0 %556
      %558 = vrot.lane.b32.xlu0 %v210, 127
      %v559 = vpop.permute.xlu0 %558
      %560 = vrot.lane.b32.xlu0 %v211, 127
      %v561 = vpop.permute.xlu0 %560
      %562 = vrot.lane.b32.xlu0 %v212, 127
      %v563 = vpop.permute.xlu0 %562
      %564 = vrot.lane.b32.xlu0 %v213, 127
      %v565 = vpop.permute.xlu0 %564
      %566 = vrot.lane.b32.xlu0 %v214, 127
      %v567 = vpop.permute.xlu0 %566
      %568 = vrot.lane.b32.xlu0 %v215, 127
      %v569 = vpop.permute.xlu0 %568
      %570 = vrot.lane.b32.xlu0 %v216, 127
      %v571 = vpop.permute.xlu0 %570
      %572 = vrot.lane.b32.xlu0 %v217, 127
      %v573 = vpop.permute.xlu0 %572
      %574 = vrot.lane.b32.xlu0 %v218, 127
      %v575 = vpop.permute.xlu0 %574
      %576 = vrot.lane.b32.xlu0 %v219, 127
      %v577 = vpop.permute.xlu0 %576
      %578 = vrot.lane.b32.xlu0 %v220, 127
      %v579 = vpop.permute.xlu0 %578
      %580 = vrot.lane.b32.xlu0 %v221, 127
      %v581 = vpop.permute.xlu0 %580
      %582 = vrot.lane.b32.xlu0 %v222, 127
      %v583 = vpop.permute.xlu0 %582
      %584 = vrot.lane.b32.xlu0 %v223, 127
      %v585 = vpop.permute.xlu0 %584
      %586 = vrot.lane.b32.xlu0 %v224, 127
      %v587 = vpop.permute.xlu0 %586
      %588 = vrot.lane.b32.xlu0 %v225, 127
      %v589 = vpop.permute.xlu0 %588
      %590 = vrot.lane.b32.xlu0 %v226, 127
      %v591 = vpop.permute.xlu0 %590
      %592 = vrot.lane.b32.xlu0 %v227, 127
      %v593 = vpop.permute.xlu0 %592
      %594 = vrot.lane.b32.xlu0 %v228, 127
      %v595 = vpop.permute.xlu0 %594
      %596 = vrot.lane.b32.xlu0 %v229, 127
      %v597 = vpop.permute.xlu0 %596
      %598 = vrot.lane.b32.xlu0 %v230, 127
      %v599 = vpop.permute.xlu0 %598
      %600 = vrot.lane.b32.xlu0 %v231, 127
      %v601 = vpop.permute.xlu0 %600
      %602 = vrot.lane.b32.xlu0 %v232, 127
      %v603 = vpop.permute.xlu0 %602
      %604 = vrot.lane.b32.xlu0 %v233, 127
      %v605 = vpop.permute.xlu0 %604
      %606 = vrot.lane.b32.xlu0 %v234, 127
      %v607 = vpop.permute.xlu0 %606
      %608 = vrot.lane.b32.xlu0 %v235, 127
      %v609 = vpop.permute.xlu0 %608
      %610 = vrot.lane.b32.xlu0 %v236, 127
      %v611 = vpop.permute.xlu0 %610
      %612 = vrot.lane.b32.xlu0 %v237, 127
      %v613 = vpop.permute.xlu0 %612
      %614 = vrot.lane.b32.xlu0 %v238, 127
      %v615 = vpop.permute.xlu0 %614
      %616 = vrot.lane.b32.xlu0 %v239, 127
      %v617 = vpop.permute.xlu0 %616
      %618 = vrot.lane.b32.xlu0 %v240, 127
      %v619 = vpop.permute.xlu0 %618
      %620 = vrot.lane.b32.xlu0 %v241, 127
      %v621 = vpop.permute.xlu0 %620
      %622 = vrot.lane.b32.xlu0 %v242, 127
      %v623 = vpop.permute.xlu0 %622
      %624 = vrot.lane.b32.xlu0 %v243, 127
      %v625 = vpop.permute.xlu0 %624
      %626 = vrot.lane.b32.xlu0 %v244, 127
      %v627 = vpop.permute.xlu0 %626
      %628 = vrot.lane.b32.xlu0 %v245, 127
      %v629 = vpop.permute.xlu0 %628
      %630 = vrot.lane.b32.xlu0 %v246, 127
      %v631 = vpop.permute.xlu0 %630
      %632 = vrot.lane.b32.xlu0 %v247, 127
      %v633 = vpop.permute.xlu0 %632
      %634 = vrot.lane.b32.xlu0 %v248, 127
      %v635 = vpop.permute.xlu0 %634
      %636 = vrot.lane.b32.xlu0 %v249, 127
      %v637 = vpop.permute.xlu0 %636
      %638 = vrot.lane.b32.xlu0 %v250, 127
      %v639 = vpop.permute.xlu0 %638
      %v704 = vadd.f32 %v251, %v513
      %v705 = vadd.f32 %v252, %v515
      %v706 = vadd.f32 %v253, %v517
      %v707 = vadd.f32 %v254, %v519
      %v708 = vadd.f32 %v255, %v521
      %v709 = vadd.f32 %v256, %v523
      %v710 = vadd.f32 %v257, %v525
      %v711 = vadd.f32 %v258, %v527
      %v712 = vadd.f32 %v259, %v529
      %v713 = vadd.f32 %v260, %v531
      %v714 = vadd.f32 %v261, %v533
      %v715 = vadd.f32 %v262, %v535
      %v716 = vadd.f32 %v263, %v537
      %v717 = vadd.f32 %v264, %v539
      %v718 = vadd.f32 %v265, %v541
      %v719 = vadd.f32 %v266, %v543
      %v720 = vadd.f32 %v267, %v545
      %v721 = vadd.f32 %v268, %v547
      %v722 = vadd.f32 %v269, %v549
      %v723 = vadd.f32 %v270, %v551
      %v724 = vadd.f32 %v271, %v553
      %v725 = vadd.f32 %v272, %v555
      %v726 = vadd.f32 %v273, %v557
      %v727 = vadd.f32 %v274, %v559
      %v728 = vadd.f32 %v275, %v561
      %v729 = vadd.f32 %v276, %v563
      %v730 = vadd.f32 %v277, %v565
      %v731 = vadd.f32 %v278, %v567
      %v732 = vadd.f32 %v279, %v569
      %v733 = vadd.f32 %v280, %v571
      %v734 = vadd.f32 %v281, %v573
      %v735 = vadd.f32 %v282, %v575
      %v736 = vadd.f32 %v283, %v577
      %v737 = vadd.f32 %v284, %v579
      %v738 = vadd.f32 %v285, %v581
      %v739 = vadd.f32 %v286, %v583
      %v740 = vadd.f32 %v287, %v585
      %v741 = vadd.f32 %v288, %v587
      %v742 = vadd.f32 %v289, %v589
      %v743 = vadd.f32 %v290, %v591
      %v744 = vadd.f32 %v291, %v593
      %v745 = vadd.f32 %v292, %v595
      %v746 = vadd.f32 %v293, %v597
      %v747 = vadd.f32 %v294, %v599
      %v748 = vadd.f32 %v295, %v601
      %v749 = vadd.f32 %v296, %v603
      %v750 = vadd.f32 %v297, %v605
      %v751 = vadd.f32 %v298, %v607
      %v752 = vadd.f32 %v299, %v609
      %v753 = vadd.f32 %v300, %v611
      %v754 = vadd.f32 %v301, %v613
      %v755 = vadd.f32 %v302, %v615
      %v756 = vadd.f32 %v303, %v617
      %v757 = vadd.f32 %v304, %v619
      %v758 = vadd.f32 %v305, %v621
      %v759 = vadd.f32 %v306, %v623
      %v760 = vadd.f32 %v307, %v625
      %v761 = vadd.f32 %v308, %v627
      %v762 = vadd.f32 %v309, %v629
      %v763 = vadd.f32 %v310, %v631
      %v764 = vadd.f32 %v311, %v633
      %v765 = vadd.f32 %v312, %v635
      %v766 = vadd.f32 %v313, %v637
      %v767 = vadd.f32 %v314, %v639
      %v768 = vsel %vm447, %v513, -3e+38
      %v769 = vsel %vm447, %v515, -3e+38
      %v770 = vsel %vm447, %v517, -3e+38
      %v771 = vsel %vm447, %v519, -3e+38
      %v772 = vsel %vm447, %v521, -3e+38
      %v773 = vsel %vm447, %v523, -3e+38
      %v774 = vsel %vm447, %v525, -3e+38
      %v775 = vsel %vm447, %v527, -3e+38
      %v776 = vsel %vm447, %v529, -3e+38
      %v777 = vsel %vm447, %v531, -3e+38
      %v778 = vsel %vm447, %v533, -3e+38
      %v779 = vsel %vm447, %v535, -3e+38
      %v780 = vsel %vm447, %v537, -3e+38
      %v781 = vsel %vm447, %v539, -3e+38
      %v782 = vsel %vm447, %v541, -3e+38
      %v783 = vsel %vm447, %v543, -3e+38
      %v784 = vsel %vm447, %v545, -3e+38
      %v785 = vsel %vm447, %v547, -3e+38
      %v786 = vsel %vm447, %v549, -3e+38
      %v787 = vsel %vm447, %v551, -3e+38
      %v788 = vsel %vm447, %v553, -3e+38
      %v789 = vsel %vm447, %v555, -3e+38
      %v790 = vsel %vm447, %v557, -3e+38
      %v791 = vsel %vm447, %v559, -3e+38
      %v792 = vsel %vm447, %v561, -3e+38
      %v793 = vsel %vm447, %v563, -3e+38
      %v794 = vsel %vm447, %v565, -3e+38
      %v795 = vsel %vm447, %v567, -3e+38
      %v796 = vsel %vm447, %v569, -3e+38
      %v797 = vsel %vm447, %v571, -3e+38
      %v798 = vsel %vm447, %v573, -3e+38
      %v799 = vsel %vm447, %v575, -3e+38
      %v800 = vsel %vm447, %v577, -3e+38
      %v801 = vsel %vm447, %v579, -3e+38
      %v802 = vsel %vm447, %v581, -3e+38
      %v803 = vsel %vm447, %v583, -3e+38
      %v804 = vsel %vm447, %v585, -3e+38
      %v805 = vsel %vm447, %v587, -3e+38
      %v806 = vsel %vm447, %v589, -3e+38
      %v807 = vsel %vm447, %v591, -3e+38
      %v808 = vsel %vm447, %v593, -3e+38
      %v809 = vsel %vm447, %v595, -3e+38
      %v810 = vsel %vm447, %v597, -3e+38
      %v811 = vsel %vm447, %v599, -3e+38
      %v812 = vsel %vm447, %v601, -3e+38
      %v813 = vsel %vm447, %v603, -3e+38
      %v814 = vsel %vm447, %v605, -3e+38
      %v815 = vsel %vm447, %v607, -3e+38
      %v816 = vsel %vm447, %v609, -3e+38
      %v817 = vsel %vm447, %v611, -3e+38
      %v818 = vsel %vm447, %v613, -3e+38
      %v819 = vsel %vm447, %v615, -3e+38
      %v820 = vsel %vm447, %v617, -3e+38
      %v821 = vsel %vm447, %v619, -3e+38
      %v822 = vsel %vm447, %v621, -3e+38
      %v823 = vsel %vm447, %v623, -3e+38
      %v824 = vsel %vm447, %v625, -3e+38
      %v825 = vsel %vm447, %v627, -3e+38
      %v826 = vsel %vm447, %v629, -3e+38
      %v827 = vsel %vm447, %v631, -3e+38
      %v828 = vsel %vm447, %v633, -3e+38
      %v829 = vsel %vm447, %v635, -3e+38
      %v830 = vsel %vm447, %v637, -3e+38
      %v831 = vsel %vm447, %v639, -3e+38
      %v832 = vmax.f32 %v379, %v768
      %v833 = vmax.f32 %v380, %v769
      %v834 = vmax.f32 %v381, %v770
      %v835 = vmax.f32 %v382, %v771
      %v836 = vmax.f32 %v383, %v772
      %v837 = vmax.f32 %v384, %v773
      %v838 = vmax.f32 %v385, %v774
      %v839 = vmax.f32 %v386, %v775
      %v840 = vmax.f32 %v387, %v776
      %v841 = vmax.f32 %v388, %v777
      %v842 = vmax.f32 %v389, %v778
      %v843 = vmax.f32 %v390, %v779
      %v844 = vmax.f32 %v391, %v780
      %v845 = vmax.f32 %v392, %v781
      %v846 = vmax.f32 %v393, %v782
      %v847 = vmax.f32 %v394, %v783
      %v848 = vmax.f32 %v395, %v784
      %v849 = vmax.f32 %v396, %v785
      %v850 = vmax.f32 %v397, %v786
      %v851 = vmax.f32 %v398, %v787
      %v852 = vmax.f32 %v399, %v788
      %v853 = vmax.f32 %v400, %v789
      %v854 = vmax.f32 %v401, %v790
      %v855 = vmax.f32 %v402, %v791
      %v856 = vmax.f32 %v403, %v792
      %v857 = vmax.f32 %v404, %v793
      %v858 = vmax.f32 %v405, %v794
      %v859 = vmax.f32 %v406, %v795
      %v860 = vmax.f32 %v407, %v796
      %v861 = vmax.f32 %v408, %v797
      %v862 = vmax.f32 %v409, %v798
      %v863 = vmax.f32 %v410, %v799
      %v864 = vmax.f32 %v411, %v800
      %v865 = vmax.f32 %v412, %v801
      %v866 = vmax.f32 %v413, %v802
      %v867 = vmax.f32 %v414, %v803
      %v868 = vmax.f32 %v415, %v804
      %v869 = vmax.f32 %v416, %v805
      %v870 = vmax.f32 %v417, %v806
      %v871 = vmax.f32 %v418, %v807
      %v872 = vmax.f32 %v419, %v808
      %v873 = vmax.f32 %v420, %v809
      %v874 = vmax.f32 %v421, %v810
      %v875 = vmax.f32 %v422, %v811
      %v876 = vmax.f32 %v423, %v812
      %v877 = vmax.f32 %v424, %v813
      %v878 = vmax.f32 %v425, %v814
      %v879 = vmax.f32 %v426, %v815
      %v880 = vmax.f32 %v427, %v816
      %v881 = vmax.f32 %v428, %v817
      %v882 = vmax.f32 %v429, %v818
      %v883 = vmax.f32 %v430, %v819
      %v884 = vmax.f32 %v431, %v820
      %v885 = vmax.f32 %v432, %v821
      %v886 = vmax.f32 %v433, %v822
      %v887 = vmax.f32 %v434, %v823
      %v888 = vmax.f32 %v435, %v824
      %v889 = vmax.f32 %v436, %v825
      %v890 = vmax.f32 %v437, %v826
      %v891 = vmax.f32 %v438, %v827
      %v892 = vmax.f32 %v439, %v828
      %v893 = vmax.f32 %v440, %v829
      %v894 = vmax.f32 %v441, %v830
      %v895 = vmax.f32 %v442, %v831
      %v896 = vadd.s32 %v178, 2
      %vm897 = vcmp.ge.s32.totalorder %v896, 2
      %vm898 = vcmp.lt.s32.totalorder %v896, 34
      %vm899 = vmand %vm897, %vm898
      %vm900 = vmand %vm182, %vm899
      %901 = vrot.lane.b32.xlu0 %v187, 126
      %v902 = vpop.permute.xlu0 %901
      %903 = vrot.lane.b32.xlu0 %v188, 126
      %v904 = vpop.permute.xlu0 %903
      %905 = vrot.lane.b32.xlu0 %v189, 126
      %v906 = vpop.permute.xlu0 %905
      %907 = vrot.lane.b32.xlu0 %v190, 126
      %v908 = vpop.permute.xlu0 %907
      %909 = vrot.lane.b32.xlu0 %v191, 126
      %v910 = vpop.permute.xlu0 %909
      %911 = vrot.lane.b32.xlu0 %v192, 126
      %v912 = vpop.permute.xlu0 %911
      %913 = vrot.lane.b32.xlu0 %v193, 126
      %v914 = vpop.permute.xlu0 %913
      %915 = vrot.lane.b32.xlu0 %v194, 126
      %v916 = vpop.permute.xlu0 %915
      %917 = vrot.lane.b32.xlu0 %v195, 126
      %v918 = vpop.permute.xlu0 %917
      %919 = vrot.lane.b32.xlu0 %v196, 126
      %v920 = vpop.permute.xlu0 %919
      %921 = vrot.lane.b32.xlu0 %v197, 126
      %v922 = vpop.permute.xlu0 %921
      %923 = vrot.lane.b32.xlu0 %v198, 126
      %v924 = vpop.permute.xlu0 %923
      %925 = vrot.lane.b32.xlu0 %v199, 126
      %v926 = vpop.permute.xlu0 %925
      %927 = vrot.lane.b32.xlu0 %v200, 126
      %v928 = vpop.permute.xlu0 %927
      %929 = vrot.lane.b32.xlu0 %v201, 126
      %v930 = vpop.permute.xlu0 %929
      %931 = vrot.lane.b32.xlu0 %v202, 126
      %v932 = vpop.permute.xlu0 %931
      %933 = vrot.lane.b32.xlu0 %v203, 126
      %v934 = vpop.permute.xlu0 %933
      %935 = vrot.lane.b32.xlu0 %v204, 126
      %v936 = vpop.permute.xlu0 %935
      %937 = vrot.lane.b32.xlu0 %v205, 126
      %v938 = vpop.permute.xlu0 %937
      %939 = vrot.lane.b32.xlu0 %v206, 126
      %v940 = vpop.permute.xlu0 %939
      %941 = vrot.lane.b32.xlu0 %v207, 126
      %v942 = vpop.permute.xlu0 %941
      %943 = vrot.lane.b32.xlu0 %v208, 126
      %v944 = vpop.permute.xlu0 %943
      %945 = vrot.lane.b32.xlu0 %v209, 126
      %v946 = vpop.permute.xlu0 %945
      %947 = vrot.lane.b32.xlu0 %v210, 126
      %v948 = vpop.permute.xlu0 %947
      %949 = vrot.lane.b32.xlu0 %v211, 126
      %v950 = vpop.permute.xlu0 %949
      %951 = vrot.lane.b32.xlu0 %v212, 126
      %v952 = vpop.permute.xlu0 %951
      %953 = vrot.lane.b32.xlu0 %v213, 126
      %v954 = vpop.permute.xlu0 %953
      %955 = vrot.lane.b32.xlu0 %v214, 126
      %v956 = vpop.permute.xlu0 %955
      %957 = vrot.lane.b32.xlu0 %v215, 126
      %v958 = vpop.permute.xlu0 %957
      %959 = vrot.lane.b32.xlu0 %v216, 126
      %v960 = vpop.permute.xlu0 %959
      %961 = vrot.lane.b32.xlu0 %v217, 126
      %v962 = vpop.permute.xlu0 %961
      %963 = vrot.lane.b32.xlu0 %v218, 126
      %v964 = vpop.permute.xlu0 %963
      %965 = vrot.lane.b32.xlu0 %v219, 126
      %v966 = vpop.permute.xlu0 %965
      %967 = vrot.lane.b32.xlu0 %v220, 126
      %v968 = vpop.permute.xlu0 %967
      %969 = vrot.lane.b32.xlu0 %v221, 126
      %v970 = vpop.permute.xlu0 %969
      %971 = vrot.lane.b32.xlu0 %v222, 126
      %v972 = vpop.permute.xlu0 %971
      %973 = vrot.lane.b32.xlu0 %v223, 126
      %v974 = vpop.permute.xlu0 %973
      %975 = vrot.lane.b32.xlu0 %v224, 126
      %v976 = vpop.permute.xlu0 %975
      %977 = vrot.lane.b32.xlu0 %v225, 126
      %v978 = vpop.permute.xlu0 %977
      %979 = vrot.lane.b32.xlu0 %v226, 126
      %v980 = vpop.permute.xlu0 %979
      %981 = vrot.lane.b32.xlu0 %v227, 126
      %v982 = vpop.permute.xlu0 %981
      %983 = vrot.lane.b32.xlu0 %v228, 126
      %v984 = vpop.permute.xlu0 %983
      %985 = vrot.lane.b32.xlu0 %v229, 126
      %v986 = vpop.permute.xlu0 %985
      %987 = vrot.lane.b32.xlu0 %v230, 126
      %v988 = vpop.permute.xlu0 %987
      %989 = vrot.lane.b32.xlu0 %v231, 126
      %v990 = vpop.permute.xlu0 %989
      %991 = vrot.lane.b32.xlu0 %v232, 126
      %v992 = vpop.permute.xlu0 %991
      %993 = vrot.lane.b32.xlu0 %v233, 126
      %v994 = vpop.permute.xlu0 %993
      %995 = vrot.lane.b32.xlu0 %v234, 126
      %v996 = vpop.permute.xlu0 %995
      %997 = vrot.lane.b32.xlu0 %v235, 126
      %v998 = vpop.permute.xlu0 %997
      %999 = vrot.lane.b32.xlu0 %v236, 126
      %v1000 = vpop.permute.xlu0 %999
      %1001 = vrot.lane.b32.xlu0 %v237, 126
      %v1002 = vpop.permute.xlu0 %1001
      %1003 = vrot.lane.b32.xlu0 %v238, 126
      %v1004 = vpop.permute.xlu0 %1003
      %1005 = vrot.lane.b32.xlu0 %v239, 126
      %v1006 = vpop.permute.xlu0 %1005
      %1007 = vrot.lane.b32.xlu0 %v240, 126
      %v1008 = vpop.permute.xlu0 %1007
      %1009 = vrot.lane.b32.xlu0 %v241, 126
      %v1010 = vpop.permute.xlu0 %1009
      %1011 = vrot.lane.b32.xlu0 %v242, 126
      %v1012 = vpop.permute.xlu0 %1011
      %1013 = vrot.lane.b32.xlu0 %v243, 126
      %v1014 = vpop.permute.xlu0 %1013
      %1015 = vrot.lane.b32.xlu0 %v244, 126
      %v1016 = vpop.permute.xlu0 %1015
      %1017 = vrot.lane.b32.xlu0 %v245, 126
      %v1018 = vpop.permute.xlu0 %1017
      %1019 = vrot.lane.b32.xlu0 %v246, 126
      %v1020 = vpop.permute.xlu0 %1019
      %1021 = vrot.lane.b32.xlu0 %v247, 126
      %v1022 = vpop.permute.xlu0 %1021
      %1023 = vrot.lane.b32.xlu0 %v248, 126
      %v1024 = vpop.permute.xlu0 %1023
      %1025 = vrot.lane.b32.xlu0 %v249, 126
      %v1026 = vpop.permute.xlu0 %1025
      %1027 = vrot.lane.b32.xlu0 %v250, 126
      %v1028 = vpop.permute.xlu0 %1027
      %v1093 = vadd.f32 %v704, %v902
      %v1094 = vadd.f32 %v705, %v904
      %v1095 = vadd.f32 %v706, %v906
      %v1096 = vadd.f32 %v707, %v908
      %v1097 = vadd.f32 %v708, %v910
      %v1098 = vadd.f32 %v709, %v912
      %v1099 = vadd.f32 %v710, %v914
      %v1100 = vadd.f32 %v711, %v916
      %v1101 = vadd.f32 %v712, %v918
      %v1102 = vadd.f32 %v713, %v920
      %v1103 = vadd.f32 %v714, %v922
      %v1104 = vadd.f32 %v715, %v924
      %v1105 = vadd.f32 %v716, %v926
      %v1106 = vadd.f32 %v717, %v928
      %v1107 = vadd.f32 %v718, %v930
      %v1108 = vadd.f32 %v719, %v932
      %v1109 = vadd.f32 %v720, %v934
      %v1110 = vadd.f32 %v721, %v936
      %v1111 = vadd.f32 %v722, %v938
      %v1112 = vadd.f32 %v723, %v940
      %v1113 = vadd.f32 %v724, %v942
      %v1114 = vadd.f32 %v725, %v944
      %v1115 = vadd.f32 %v726, %v946
      %v1116 = vadd.f32 %v727, %v948
      %v1117 = vadd.f32 %v728, %v950
      %v1118 = vadd.f32 %v729, %v952
      %v1119 = vadd.f32 %v730, %v954
      %v1120 = vadd.f32 %v731, %v956
      %v1121 = vadd.f32 %v732, %v958
      %v1122 = vadd.f32 %v733, %v960
      %v1123 = vadd.f32 %v734, %v962
      %v1124 = vadd.f32 %v735, %v964
      %v1125 = vadd.f32 %v736, %v966
      %v1126 = vadd.f32 %v737, %v968
      %v1127 = vadd.f32 %v738, %v970
      %v1128 = vadd.f32 %v739, %v972
      %v1129 = vadd.f32 %v740, %v974
      %v1130 = vadd.f32 %v741, %v976
      %v1131 = vadd.f32 %v742, %v978
      %v1132 = vadd.f32 %v743, %v980
      %v1133 = vadd.f32 %v744, %v982
      %v1134 = vadd.f32 %v745, %v984
      %v1135 = vadd.f32 %v746, %v986
      %v1136 = vadd.f32 %v747, %v988
      %v1137 = vadd.f32 %v748, %v990
      %v1138 = vadd.f32 %v749, %v992
      %v1139 = vadd.f32 %v750, %v994
      %v1140 = vadd.f32 %v751, %v996
      %v1141 = vadd.f32 %v752, %v998
      %v1142 = vadd.f32 %v753, %v1000
      %v1143 = vadd.f32 %v754, %v1002
      %v1144 = vadd.f32 %v755, %v1004
      %v1145 = vadd.f32 %v756, %v1006
      %v1146 = vadd.f32 %v757, %v1008
      %v1147 = vadd.f32 %v758, %v1010
      %v1148 = vadd.f32 %v759, %v1012
      %v1149 = vadd.f32 %v760, %v1014
      %v1150 = vadd.f32 %v761, %v1016
      %v1151 = vadd.f32 %v762, %v1018
      %v1152 = vadd.f32 %v763, %v1020
      %v1153 = vadd.f32 %v764, %v1022
      %v1154 = vadd.f32 %v765, %v1024
      %v1155 = vadd.f32 %v766, %v1026
      %v1156 = vadd.f32 %v767, %v1028
      %v1157 = vsel %vm900, %v902, -3e+38
      %v1158 = vsel %vm900, %v904, -3e+38
      %v1159 = vsel %vm900, %v906, -3e+38
      %v1160 = vsel %vm900, %v908, -3e+38
      %v1161 = vsel %vm900, %v910, -3e+38
      %v1162 = vsel %vm900, %v912, -3e+38
      %v1163 = vsel %vm900, %v914, -3e+38
      %v1164 = vsel %vm900, %v916, -3e+38
      %v1165 = vsel %vm900, %v918, -3e+38
      %v1166 = vsel %vm900, %v920, -3e+38
      %v1167 = vsel %vm900, %v922, -3e+38
      %v1168 = vsel %vm900, %v924, -3e+38
      %v1169 = vsel %vm900, %v926, -3e+38
      %v1170 = vsel %vm900, %v928, -3e+38
      %v1171 = vsel %vm900, %v930, -3e+38
      %v1172 = vsel %vm900, %v932, -3e+38
      %v1173 = vsel %vm900, %v934, -3e+38
      %v1174 = vsel %vm900, %v936, -3e+38
      %v1175 = vsel %vm900, %v938, -3e+38
      %v1176 = vsel %vm900, %v940, -3e+38
      %v1177 = vsel %vm900, %v942, -3e+38
      %v1178 = vsel %vm900, %v944, -3e+38
      %v1179 = vsel %vm900, %v946, -3e+38
      %v1180 = vsel %vm900, %v948, -3e+38
      %v1181 = vsel %vm900, %v950, -3e+38
      %v1182 = vsel %vm900, %v952, -3e+38
      %v1183 = vsel %vm900, %v954, -3e+38
      %v1184 = vsel %vm900, %v956, -3e+38
      %v1185 = vsel %vm900, %v958, -3e+38
      %v1186 = vsel %vm900, %v960, -3e+38
      %v1187 = vsel %vm900, %v962, -3e+38
      %v1188 = vsel %vm900, %v964, -3e+38
      %v1189 = vsel %vm900, %v966, -3e+38
      %v1190 = vsel %vm900, %v968, -3e+38
      %v1191 = vsel %vm900, %v970, -3e+38
      %v1192 = vsel %vm900, %v972, -3e+38
      %v1193 = vsel %vm900, %v974, -3e+38
      %v1194 = vsel %vm900, %v976, -3e+38
      %v1195 = vsel %vm900, %v978, -3e+38
      %v1196 = vsel %vm900, %v980, -3e+38
      %v1197 = vsel %vm900, %v982, -3e+38
      %v1198 = vsel %vm900, %v984, -3e+38
      %v1199 = vsel %vm900, %v986, -3e+38
      %v1200 = vsel %vm900, %v988, -3e+38
      %v1201 = vsel %vm900, %v990, -3e+38
      %v1202 = vsel %vm900, %v992, -3e+38
      %v1203 = vsel %vm900, %v994, -3e+38
      %v1204 = vsel %vm900, %v996, -3e+38
      %v1205 = vsel %vm900, %v998, -3e+38
      %v1206 = vsel %vm900, %v1000, -3e+38
      %v1207 = vsel %vm900, %v1002, -3e+38
      %v1208 = vsel %vm900, %v1004, -3e+38
      %v1209 = vsel %vm900, %v1006, -3e+38
      %v1210 = vsel %vm900, %v1008, -3e+38
      %v1211 = vsel %vm900, %v1010, -3e+38
      %v1212 = vsel %vm900, %v1012, -3e+38
      %v1213 = vsel %vm900, %v1014, -3e+38
      %v1214 = vsel %vm900, %v1016, -3e+38
      %v1215 = vsel %vm900, %v1018, -3e+38
      %v1216 = vsel %vm900, %v1020, -3e+38
      %v1217 = vsel %vm900, %v1022, -3e+38
      %v1218 = vsel %vm900, %v1024, -3e+38
      %v1219 = vsel %vm900, %v1026, -3e+38
      %v1220 = vsel %vm900, %v1028, -3e+38
      %v1221 = vmax.f32 %v832, %v1157
      %v1222 = vmax.f32 %v833, %v1158
      %v1223 = vmax.f32 %v834, %v1159
      %v1224 = vmax.f32 %v835, %v1160
      %v1225 = vmax.f32 %v836, %v1161
      %v1226 = vmax.f32 %v837, %v1162
      %v1227 = vmax.f32 %v838, %v1163
      %v1228 = vmax.f32 %v839, %v1164
      %v1229 = vmax.f32 %v840, %v1165
      %v1230 = vmax.f32 %v841, %v1166
      %v1231 = vmax.f32 %v842, %v1167
      %v1232 = vmax.f32 %v843, %v1168
      %v1233 = vmax.f32 %v844, %v1169
      %v1234 = vmax.f32 %v845, %v1170
      %v1235 = vmax.f32 %v846, %v1171
      %v1236 = vmax.f32 %v847, %v1172
      %v1237 = vmax.f32 %v848, %v1173
      %v1238 = vmax.f32 %v849, %v1174
      %v1239 = vmax.f32 %v850, %v1175
      %v1240 = vmax.f32 %v851, %v1176
      %v1241 = vmax.f32 %v852, %v1177
      %v1242 = vmax.f32 %v853, %v1178
      %v1243 = vmax.f32 %v854, %v1179
      %v1244 = vmax.f32 %v855, %v1180
      %v1245 = vmax.f32 %v856, %v1181
      %v1246 = vmax.f32 %v857, %v1182
      %v1247 = vmax.f32 %v858, %v1183
      %v1248 = vmax.f32 %v859, %v1184
      %v1249 = vmax.f32 %v860, %v1185
      %v1250 = vmax.f32 %v861, %v1186
      %v1251 = vmax.f32 %v862, %v1187
      %v1252 = vmax.f32 %v863, %v1188
      %v1253 = vmax.f32 %v864, %v1189
      %v1254 = vmax.f32 %v865, %v1190
      %v1255 = vmax.f32 %v866, %v1191
      %v1256 = vmax.f32 %v867, %v1192
      %v1257 = vmax.f32 %v868, %v1193
      %v1258 = vmax.f32 %v869, %v1194
      %v1259 = vmax.f32 %v870, %v1195
      %v1260 = vmax.f32 %v871, %v1196
      %v1261 = vmax.f32 %v872, %v1197
      %v1262 = vmax.f32 %v873, %v1198
      %v1263 = vmax.f32 %v874, %v1199
      %v1264 = vmax.f32 %v875, %v1200
      %v1265 = vmax.f32 %v876, %v1201
      %v1266 = vmax.f32 %v877, %v1202
      %v1267 = vmax.f32 %v878, %v1203
      %v1268 = vmax.f32 %v879, %v1204
      %v1269 = vmax.f32 %v880, %v1205
      %v1270 = vmax.f32 %v881, %v1206
      %v1271 = vmax.f32 %v882, %v1207
      %v1272 = vmax.f32 %v883, %v1208
      %v1273 = vmax.f32 %v884, %v1209
      %v1274 = vmax.f32 %v885, %v1210
      %v1275 = vmax.f32 %v886, %v1211
      %v1276 = vmax.f32 %v887, %v1212
      %v1277 = vmax.f32 %v888, %v1213
      %v1278 = vmax.f32 %v889, %v1214
      %v1279 = vmax.f32 %v890, %v1215
      %v1280 = vmax.f32 %v891, %v1216
      %v1281 = vmax.f32 %v892, %v1217
      %v1282 = vmax.f32 %v893, %v1218
      %v1283 = vmax.f32 %v894, %v1219
      %v1284 = vmax.f32 %v895, %v1220
      %v1285 = vadd.s32 %v178, 3
      %vm1286 = vcmp.ge.s32.totalorder %v1285, 2
      %vm1287 = vcmp.lt.s32.totalorder %v1285, 34
      %vm1288 = vmand %vm1286, %vm1287
      %vm1289 = vmand %vm182, %vm1288
      %1290 = vrot.lane.b32.xlu0 %v187, 125
      %v1291 = vpop.permute.xlu0 %1290
      %1292 = vrot.lane.b32.xlu0 %v188, 125
      %v1293 = vpop.permute.xlu0 %1292
      %1294 = vrot.lane.b32.xlu0 %v189, 125
      %v1295 = vpop.permute.xlu0 %1294
      %1296 = vrot.lane.b32.xlu0 %v190, 125
      %v1297 = vpop.permute.xlu0 %1296
      %1298 = vrot.lane.b32.xlu0 %v191, 125
      %v1299 = vpop.permute.xlu0 %1298
      %1300 = vrot.lane.b32.xlu0 %v192, 125
      %v1301 = vpop.permute.xlu0 %1300
      %1302 = vrot.lane.b32.xlu0 %v193, 125
      %v1303 = vpop.permute.xlu0 %1302
      %1304 = vrot.lane.b32.xlu0 %v194, 125
      %v1305 = vpop.permute.xlu0 %1304
      %1306 = vrot.lane.b32.xlu0 %v195, 125
      %v1307 = vpop.permute.xlu0 %1306
      %1308 = vrot.lane.b32.xlu0 %v196, 125
      %v1309 = vpop.permute.xlu0 %1308
      %1310 = vrot.lane.b32.xlu0 %v197, 125
      %v1311 = vpop.permute.xlu0 %1310
      %1312 = vrot.lane.b32.xlu0 %v198, 125
      %v1313 = vpop.permute.xlu0 %1312
      %1314 = vrot.lane.b32.xlu0 %v199, 125
      %v1315 = vpop.permute.xlu0 %1314
      %1316 = vrot.lane.b32.xlu0 %v200, 125
      %v1317 = vpop.permute.xlu0 %1316
      %1318 = vrot.lane.b32.xlu0 %v201, 125
      %v1319 = vpop.permute.xlu0 %1318
      %1320 = vrot.lane.b32.xlu0 %v202, 125
      %v1321 = vpop.permute.xlu0 %1320
      %1322 = vrot.lane.b32.xlu0 %v203, 125
      %v1323 = vpop.permute.xlu0 %1322
      %1324 = vrot.lane.b32.xlu0 %v204, 125
      %v1325 = vpop.permute.xlu0 %1324
      %1326 = vrot.lane.b32.xlu0 %v205, 125
      %v1327 = vpop.permute.xlu0 %1326
      %1328 = vrot.lane.b32.xlu0 %v206, 125
      %v1329 = vpop.permute.xlu0 %1328
      %1330 = vrot.lane.b32.xlu0 %v207, 125
      %v1331 = vpop.permute.xlu0 %1330
      %1332 = vrot.lane.b32.xlu0 %v208, 125
      %v1333 = vpop.permute.xlu0 %1332
      %1334 = vrot.lane.b32.xlu0 %v209, 125
      %v1335 = vpop.permute.xlu0 %1334
      %1336 = vrot.lane.b32.xlu0 %v210, 125
      %v1337 = vpop.permute.xlu0 %1336
      %1338 = vrot.lane.b32.xlu0 %v211, 125
      %v1339 = vpop.permute.xlu0 %1338
      %1340 = vrot.lane.b32.xlu0 %v212, 125
      %v1341 = vpop.permute.xlu0 %1340
      %1342 = vrot.lane.b32.xlu0 %v213, 125
      %v1343 = vpop.permute.xlu0 %1342
      %1344 = vrot.lane.b32.xlu0 %v214, 125
      %v1345 = vpop.permute.xlu0 %1344
      %1346 = vrot.lane.b32.xlu0 %v215, 125
      %v1347 = vpop.permute.xlu0 %1346
      %1348 = vrot.lane.b32.xlu0 %v216, 125
      %v1349 = vpop.permute.xlu0 %1348
      %1350 = vrot.lane.b32.xlu0 %v217, 125
      %v1351 = vpop.permute.xlu0 %1350
      %1352 = vrot.lane.b32.xlu0 %v218, 125
      %v1353 = vpop.permute.xlu0 %1352
      %1354 = vrot.lane.b32.xlu0 %v219, 125
      %v1355 = vpop.permute.xlu0 %1354
      %1356 = vrot.lane.b32.xlu0 %v220, 125
      %v1357 = vpop.permute.xlu0 %1356
      %1358 = vrot.lane.b32.xlu0 %v221, 125
      %v1359 = vpop.permute.xlu0 %1358
      %1360 = vrot.lane.b32.xlu0 %v222, 125
      %v1361 = vpop.permute.xlu0 %1360
      %1362 = vrot.lane.b32.xlu0 %v223, 125
      %v1363 = vpop.permute.xlu0 %1362
      %1364 = vrot.lane.b32.xlu0 %v224, 125
      %v1365 = vpop.permute.xlu0 %1364
      %1366 = vrot.lane.b32.xlu0 %v225, 125
      %v1367 = vpop.permute.xlu0 %1366
      %1368 = vrot.lane.b32.xlu0 %v226, 125
      %v1369 = vpop.permute.xlu0 %1368
      %1370 = vrot.lane.b32.xlu0 %v227, 125
      %v1371 = vpop.permute.xlu0 %1370
      %1372 = vrot.lane.b32.xlu0 %v228, 125
      %v1373 = vpop.permute.xlu0 %1372
      %1374 = vrot.lane.b32.xlu0 %v229, 125
      %v1375 = vpop.permute.xlu0 %1374
      %1376 = vrot.lane.b32.xlu0 %v230, 125
      %v1377 = vpop.permute.xlu0 %1376
      %1378 = vrot.lane.b32.xlu0 %v231, 125
      %v1379 = vpop.permute.xlu0 %1378
      %1380 = vrot.lane.b32.xlu0 %v232, 125
      %v1381 = vpop.permute.xlu0 %1380
      %1382 = vrot.lane.b32.xlu0 %v233, 125
      %v1383 = vpop.permute.xlu0 %1382
      %1384 = vrot.lane.b32.xlu0 %v234, 125
      %v1385 = vpop.permute.xlu0 %1384
      %1386 = vrot.lane.b32.xlu0 %v235, 125
      %v1387 = vpop.permute.xlu0 %1386
      %1388 = vrot.lane.b32.xlu0 %v236, 125
      %v1389 = vpop.permute.xlu0 %1388
      %1390 = vrot.lane.b32.xlu0 %v237, 125
      %v1391 = vpop.permute.xlu0 %1390
      %1392 = vrot.lane.b32.xlu0 %v238, 125
      %v1393 = vpop.permute.xlu0 %1392
      %1394 = vrot.lane.b32.xlu0 %v239, 125
      %v1395 = vpop.permute.xlu0 %1394
      %1396 = vrot.lane.b32.xlu0 %v240, 125
      %v1397 = vpop.permute.xlu0 %1396
      %1398 = vrot.lane.b32.xlu0 %v241, 125
      %v1399 = vpop.permute.xlu0 %1398
      %1400 = vrot.lane.b32.xlu0 %v242, 125
      %v1401 = vpop.permute.xlu0 %1400
      %1402 = vrot.lane.b32.xlu0 %v243, 125
      %v1403 = vpop.permute.xlu0 %1402
      %1404 = vrot.lane.b32.xlu0 %v244, 125
      %v1405 = vpop.permute.xlu0 %1404
      %1406 = vrot.lane.b32.xlu0 %v245, 125
      %v1407 = vpop.permute.xlu0 %1406
      %1408 = vrot.lane.b32.xlu0 %v246, 125
      %v1409 = vpop.permute.xlu0 %1408
      %1410 = vrot.lane.b32.xlu0 %v247, 125
      %v1411 = vpop.permute.xlu0 %1410
      %1412 = vrot.lane.b32.xlu0 %v248, 125
      %v1413 = vpop.permute.xlu0 %1412
      %1414 = vrot.lane.b32.xlu0 %v249, 125
      %v1415 = vpop.permute.xlu0 %1414
      %1416 = vrot.lane.b32.xlu0 %v250, 125
      %v1417 = vpop.permute.xlu0 %1416
      %v1482 = vadd.f32 %v1093, %v1291
      %v1483 = vadd.f32 %v1094, %v1293
      %v1484 = vadd.f32 %v1095, %v1295
      %v1485 = vadd.f32 %v1096, %v1297
      %v1486 = vadd.f32 %v1097, %v1299
      %v1487 = vadd.f32 %v1098, %v1301
      %v1488 = vadd.f32 %v1099, %v1303
      %v1489 = vadd.f32 %v1100, %v1305
      %v1490 = vadd.f32 %v1101, %v1307
      %v1491 = vadd.f32 %v1102, %v1309
      %v1492 = vadd.f32 %v1103, %v1311
      %v1493 = vadd.f32 %v1104, %v1313
      %v1494 = vadd.f32 %v1105, %v1315
      %v1495 = vadd.f32 %v1106, %v1317
      %v1496 = vadd.f32 %v1107, %v1319
      %v1497 = vadd.f32 %v1108, %v1321
      %v1498 = vadd.f32 %v1109, %v1323
      %v1499 = vadd.f32 %v1110, %v1325
      %v1500 = vadd.f32 %v1111, %v1327
      %v1501 = vadd.f32 %v1112, %v1329
      %v1502 = vadd.f32 %v1113, %v1331
      %v1503 = vadd.f32 %v1114, %v1333
      %v1504 = vadd.f32 %v1115, %v1335
      %v1505 = vadd.f32 %v1116, %v1337
      %v1506 = vadd.f32 %v1117, %v1339
      %v1507 = vadd.f32 %v1118, %v1341
      %v1508 = vadd.f32 %v1119, %v1343
      %v1509 = vadd.f32 %v1120, %v1345
      %v1510 = vadd.f32 %v1121, %v1347
      %v1511 = vadd.f32 %v1122, %v1349
      %v1512 = vadd.f32 %v1123, %v1351
      %v1513 = vadd.f32 %v1124, %v1353
      %v1514 = vadd.f32 %v1125, %v1355
      %v1515 = vadd.f32 %v1126, %v1357
      %v1516 = vadd.f32 %v1127, %v1359
      %v1517 = vadd.f32 %v1128, %v1361
      %v1518 = vadd.f32 %v1129, %v1363
      %v1519 = vadd.f32 %v1130, %v1365
      %v1520 = vadd.f32 %v1131, %v1367
      %v1521 = vadd.f32 %v1132, %v1369
      %v1522 = vadd.f32 %v1133, %v1371
      %v1523 = vadd.f32 %v1134, %v1373
      %v1524 = vadd.f32 %v1135, %v1375
      %v1525 = vadd.f32 %v1136, %v1377
      %v1526 = vadd.f32 %v1137, %v1379
      %v1527 = vadd.f32 %v1138, %v1381
      %v1528 = vadd.f32 %v1139, %v1383
      %v1529 = vadd.f32 %v1140, %v1385
      %v1530 = vadd.f32 %v1141, %v1387
      %v1531 = vadd.f32 %v1142, %v1389
      %v1532 = vadd.f32 %v1143, %v1391
      %v1533 = vadd.f32 %v1144, %v1393
      %v1534 = vadd.f32 %v1145, %v1395
      %v1535 = vadd.f32 %v1146, %v1397
      %v1536 = vadd.f32 %v1147, %v1399
      %v1537 = vadd.f32 %v1148, %v1401
      %v1538 = vadd.f32 %v1149, %v1403
      %v1539 = vadd.f32 %v1150, %v1405
      %v1540 = vadd.f32 %v1151, %v1407
      %v1541 = vadd.f32 %v1152, %v1409
      %v1542 = vadd.f32 %v1153, %v1411
      %v1543 = vadd.f32 %v1154, %v1413
      %v1544 = vadd.f32 %v1155, %v1415
      %v1545 = vadd.f32 %v1156, %v1417
      %v1546 = vsel %vm1289, %v1291, -3e+38
      %v1547 = vsel %vm1289, %v1293, -3e+38
      %v1548 = vsel %vm1289, %v1295, -3e+38
      %v1549 = vsel %vm1289, %v1297, -3e+38
      %v1550 = vsel %vm1289, %v1299, -3e+38
      %v1551 = vsel %vm1289, %v1301, -3e+38
      %v1552 = vsel %vm1289, %v1303, -3e+38
      %v1553 = vsel %vm1289, %v1305, -3e+38
      %v1554 = vsel %vm1289, %v1307, -3e+38
      %v1555 = vsel %vm1289, %v1309, -3e+38
      %v1556 = vsel %vm1289, %v1311, -3e+38
      %v1557 = vsel %vm1289, %v1313, -3e+38
      %v1558 = vsel %vm1289, %v1315, -3e+38
      %v1559 = vsel %vm1289, %v1317, -3e+38
      %v1560 = vsel %vm1289, %v1319, -3e+38
      %v1561 = vsel %vm1289, %v1321, -3e+38
      %v1562 = vsel %vm1289, %v1323, -3e+38
      %v1563 = vsel %vm1289, %v1325, -3e+38
      %v1564 = vsel %vm1289, %v1327, -3e+38
      %v1565 = vsel %vm1289, %v1329, -3e+38
      %v1566 = vsel %vm1289, %v1331, -3e+38
      %v1567 = vsel %vm1289, %v1333, -3e+38
      %v1568 = vsel %vm1289, %v1335, -3e+38
      %v1569 = vsel %vm1289, %v1337, -3e+38
      %v1570 = vsel %vm1289, %v1339, -3e+38
      %v1571 = vsel %vm1289, %v1341, -3e+38
      %v1572 = vsel %vm1289, %v1343, -3e+38
      %v1573 = vsel %vm1289, %v1345, -3e+38
      %v1574 = vsel %vm1289, %v1347, -3e+38
      %v1575 = vsel %vm1289, %v1349, -3e+38
      %v1576 = vsel %vm1289, %v1351, -3e+38
      %v1577 = vsel %vm1289, %v1353, -3e+38
      %v1578 = vsel %vm1289, %v1355, -3e+38
      %v1579 = vsel %vm1289, %v1357, -3e+38
      %v1580 = vsel %vm1289, %v1359, -3e+38
      %v1581 = vsel %vm1289, %v1361, -3e+38
      %v1582 = vsel %vm1289, %v1363, -3e+38
      %v1583 = vsel %vm1289, %v1365, -3e+38
      %v1584 = vsel %vm1289, %v1367, -3e+38
      %v1585 = vsel %vm1289, %v1369, -3e+38
      %v1586 = vsel %vm1289, %v1371, -3e+38
      %v1587 = vsel %vm1289, %v1373, -3e+38
      %v1588 = vsel %vm1289, %v1375, -3e+38
      %v1589 = vsel %vm1289, %v1377, -3e+38
      %v1590 = vsel %vm1289, %v1379, -3e+38
      %v1591 = vsel %vm1289, %v1381, -3e+38
      %v1592 = vsel %vm1289, %v1383, -3e+38
      %v1593 = vsel %vm1289, %v1385, -3e+38
      %v1594 = vsel %vm1289, %v1387, -3e+38
      %v1595 = vsel %vm1289, %v1389, -3e+38
      %v1596 = vsel %vm1289, %v1391, -3e+38
      %v1597 = vsel %vm1289, %v1393, -3e+38
      %v1598 = vsel %vm1289, %v1395, -3e+38
      %v1599 = vsel %vm1289, %v1397, -3e+38
      %v1600 = vsel %vm1289, %v1399, -3e+38
      %v1601 = vsel %vm1289, %v1401, -3e+38
      %v1602 = vsel %vm1289, %v1403, -3e+38
      %v1603 = vsel %vm1289, %v1405, -3e+38
      %v1604 = vsel %vm1289, %v1407, -3e+38
      %v1605 = vsel %vm1289, %v1409, -3e+38
      %v1606 = vsel %vm1289, %v1411, -3e+38
      %v1607 = vsel %vm1289, %v1413, -3e+38
      %v1608 = vsel %vm1289, %v1415, -3e+38
      %v1609 = vsel %vm1289, %v1417, -3e+38
      %v1610 = vmax.f32 %v1221, %v1546
      %v1611 = vmax.f32 %v1222, %v1547
      %v1612 = vmax.f32 %v1223, %v1548
      %v1613 = vmax.f32 %v1224, %v1549
      %v1614 = vmax.f32 %v1225, %v1550
      %v1615 = vmax.f32 %v1226, %v1551
      %v1616 = vmax.f32 %v1227, %v1552
      %v1617 = vmax.f32 %v1228, %v1553
      %v1618 = vmax.f32 %v1229, %v1554
      %v1619 = vmax.f32 %v1230, %v1555
      %v1620 = vmax.f32 %v1231, %v1556
      %v1621 = vmax.f32 %v1232, %v1557
      %v1622 = vmax.f32 %v1233, %v1558
      %v1623 = vmax.f32 %v1234, %v1559
      %v1624 = vmax.f32 %v1235, %v1560
      %v1625 = vmax.f32 %v1236, %v1561
      %v1626 = vmax.f32 %v1237, %v1562
      %v1627 = vmax.f32 %v1238, %v1563
      %v1628 = vmax.f32 %v1239, %v1564
      %v1629 = vmax.f32 %v1240, %v1565
      %v1630 = vmax.f32 %v1241, %v1566
      %v1631 = vmax.f32 %v1242, %v1567
      %v1632 = vmax.f32 %v1243, %v1568
      %v1633 = vmax.f32 %v1244, %v1569
      %v1634 = vmax.f32 %v1245, %v1570
      %v1635 = vmax.f32 %v1246, %v1571
      %v1636 = vmax.f32 %v1247, %v1572
      %v1637 = vmax.f32 %v1248, %v1573
      %v1638 = vmax.f32 %v1249, %v1574
      %v1639 = vmax.f32 %v1250, %v1575
      %v1640 = vmax.f32 %v1251, %v1576
      %v1641 = vmax.f32 %v1252, %v1577
      %v1642 = vmax.f32 %v1253, %v1578
      %v1643 = vmax.f32 %v1254, %v1579
      %v1644 = vmax.f32 %v1255, %v1580
      %v1645 = vmax.f32 %v1256, %v1581
      %v1646 = vmax.f32 %v1257, %v1582
      %v1647 = vmax.f32 %v1258, %v1583
      %v1648 = vmax.f32 %v1259, %v1584
      %v1649 = vmax.f32 %v1260, %v1585
      %v1650 = vmax.f32 %v1261, %v1586
      %v1651 = vmax.f32 %v1262, %v1587
      %v1652 = vmax.f32 %v1263, %v1588
      %v1653 = vmax.f32 %v1264, %v1589
      %v1654 = vmax.f32 %v1265, %v1590
      %v1655 = vmax.f32 %v1266, %v1591
      %v1656 = vmax.f32 %v1267, %v1592
      %v1657 = vmax.f32 %v1268, %v1593
      %v1658 = vmax.f32 %v1269, %v1594
      %v1659 = vmax.f32 %v1270, %v1595
      %v1660 = vmax.f32 %v1271, %v1596
      %v1661 = vmax.f32 %v1272, %v1597
      %v1662 = vmax.f32 %v1273, %v1598
      %v1663 = vmax.f32 %v1274, %v1599
      %v1664 = vmax.f32 %v1275, %v1600
      %v1665 = vmax.f32 %v1276, %v1601
      %v1666 = vmax.f32 %v1277, %v1602
      %v1667 = vmax.f32 %v1278, %v1603
      %v1668 = vmax.f32 %v1279, %v1604
      %v1669 = vmax.f32 %v1280, %v1605
      %v1670 = vmax.f32 %v1281, %v1606
      %v1671 = vmax.f32 %v1282, %v1607
      %v1672 = vmax.f32 %v1283, %v1608
      %v1673 = vmax.f32 %v1284, %v1609
      %v1674 = vadd.s32 %v178, 4
      %vm1675 = vcmp.ge.s32.totalorder %v1674, 2
      %vm1676 = vcmp.lt.s32.totalorder %v1674, 34
      %vm1677 = vmand %vm1675, %vm1676
      %vm1678 = vmand %vm182, %vm1677
      %1679 = vrot.lane.b32.xlu0 %v187, 124
      %v1680 = vpop.permute.xlu0 %1679
      %1681 = vrot.lane.b32.xlu0 %v188, 124
      %v1682 = vpop.permute.xlu0 %1681
      %1683 = vrot.lane.b32.xlu0 %v189, 124
      %v1684 = vpop.permute.xlu0 %1683
      %1685 = vrot.lane.b32.xlu0 %v190, 124
      %v1686 = vpop.permute.xlu0 %1685
      %1687 = vrot.lane.b32.xlu0 %v191, 124
      %v1688 = vpop.permute.xlu0 %1687
      %1689 = vrot.lane.b32.xlu0 %v192, 124
      %v1690 = vpop.permute.xlu0 %1689
      %1691 = vrot.lane.b32.xlu0 %v193, 124
      %v1692 = vpop.permute.xlu0 %1691
      %1693 = vrot.lane.b32.xlu0 %v194, 124
      %v1694 = vpop.permute.xlu0 %1693
      %1695 = vrot.lane.b32.xlu0 %v195, 124
      %v1696 = vpop.permute.xlu0 %1695
      %1697 = vrot.lane.b32.xlu0 %v196, 124
      %v1698 = vpop.permute.xlu0 %1697
      %1699 = vrot.lane.b32.xlu0 %v197, 124
      %v1700 = vpop.permute.xlu0 %1699
      %1701 = vrot.lane.b32.xlu0 %v198, 124
      %v1702 = vpop.permute.xlu0 %1701
      %1703 = vrot.lane.b32.xlu0 %v199, 124
      %v1704 = vpop.permute.xlu0 %1703
      %1705 = vrot.lane.b32.xlu0 %v200, 124
      %v1706 = vpop.permute.xlu0 %1705
      %1707 = vrot.lane.b32.xlu0 %v201, 124
      %v1708 = vpop.permute.xlu0 %1707
      %1709 = vrot.lane.b32.xlu0 %v202, 124
      %v1710 = vpop.permute.xlu0 %1709
      %1711 = vrot.lane.b32.xlu0 %v203, 124
      %v1712 = vpop.permute.xlu0 %1711
      %1713 = vrot.lane.b32.xlu0 %v204, 124
      %v1714 = vpop.permute.xlu0 %1713
      %1715 = vrot.lane.b32.xlu0 %v205, 124
      %v1716 = vpop.permute.xlu0 %1715
      %1717 = vrot.lane.b32.xlu0 %v206, 124
      %v1718 = vpop.permute.xlu0 %1717
      %1719 = vrot.lane.b32.xlu0 %v207, 124
      %v1720 = vpop.permute.xlu0 %1719
      %1721 = vrot.lane.b32.xlu0 %v208, 124
      %v1722 = vpop.permute.xlu0 %1721
      %1723 = vrot.lane.b32.xlu0 %v209, 124
      %v1724 = vpop.permute.xlu0 %1723
      %1725 = vrot.lane.b32.xlu0 %v210, 124
      %v1726 = vpop.permute.xlu0 %1725
      %1727 = vrot.lane.b32.xlu0 %v211, 124
      %v1728 = vpop.permute.xlu0 %1727
      %1729 = vrot.lane.b32.xlu0 %v212, 124
      %v1730 = vpop.permute.xlu0 %1729
      %1731 = vrot.lane.b32.xlu0 %v213, 124
      %v1732 = vpop.permute.xlu0 %1731
      %1733 = vrot.lane.b32.xlu0 %v214, 124
      %v1734 = vpop.permute.xlu0 %1733
      %1735 = vrot.lane.b32.xlu0 %v215, 124
      %v1736 = vpop.permute.xlu0 %1735
      %1737 = vrot.lane.b32.xlu0 %v216, 124
      %v1738 = vpop.permute.xlu0 %1737
      %1739 = vrot.lane.b32.xlu0 %v217, 124
      %v1740 = vpop.permute.xlu0 %1739
      %1741 = vrot.lane.b32.xlu0 %v218, 124
      %v1742 = vpop.permute.xlu0 %1741
      %1743 = vrot.lane.b32.xlu0 %v219, 124
      %v1744 = vpop.permute.xlu0 %1743
      %1745 = vrot.lane.b32.xlu0 %v220, 124
      %v1746 = vpop.permute.xlu0 %1745
      %1747 = vrot.lane.b32.xlu0 %v221, 124
      %v1748 = vpop.permute.xlu0 %1747
      %1749 = vrot.lane.b32.xlu0 %v222, 124
      %v1750 = vpop.permute.xlu0 %1749
      %1751 = vrot.lane.b32.xlu0 %v223, 124
      %v1752 = vpop.permute.xlu0 %1751
      %1753 = vrot.lane.b32.xlu0 %v224, 124
      %v1754 = vpop.permute.xlu0 %1753
      %1755 = vrot.lane.b32.xlu0 %v225, 124
      %v1756 = vpop.permute.xlu0 %1755
      %1757 = vrot.lane.b32.xlu0 %v226, 124
      %v1758 = vpop.permute.xlu0 %1757
      %1759 = vrot.lane.b32.xlu0 %v227, 124
      %v1760 = vpop.permute.xlu0 %1759
      %1761 = vrot.lane.b32.xlu0 %v228, 124
      %v1762 = vpop.permute.xlu0 %1761
      %1763 = vrot.lane.b32.xlu0 %v229, 124
      %v1764 = vpop.permute.xlu0 %1763
      %1765 = vrot.lane.b32.xlu0 %v230, 124
      %v1766 = vpop.permute.xlu0 %1765
      %1767 = vrot.lane.b32.xlu0 %v231, 124
      %v1768 = vpop.permute.xlu0 %1767
      %1769 = vrot.lane.b32.xlu0 %v232, 124
      %v1770 = vpop.permute.xlu0 %1769
      %1771 = vrot.lane.b32.xlu0 %v233, 124
      %v1772 = vpop.permute.xlu0 %1771
      %1773 = vrot.lane.b32.xlu0 %v234, 124
      %v1774 = vpop.permute.xlu0 %1773
      %1775 = vrot.lane.b32.xlu0 %v235, 124
      %v1776 = vpop.permute.xlu0 %1775
      %1777 = vrot.lane.b32.xlu0 %v236, 124
      %v1778 = vpop.permute.xlu0 %1777
      %1779 = vrot.lane.b32.xlu0 %v237, 124
      %v1780 = vpop.permute.xlu0 %1779
      %1781 = vrot.lane.b32.xlu0 %v238, 124
      %v1782 = vpop.permute.xlu0 %1781
      %1783 = vrot.lane.b32.xlu0 %v239, 124
      %v1784 = vpop.permute.xlu0 %1783
      %1785 = vrot.lane.b32.xlu0 %v240, 124
      %v1786 = vpop.permute.xlu0 %1785
      %1787 = vrot.lane.b32.xlu0 %v241, 124
      %v1788 = vpop.permute.xlu0 %1787
      %1789 = vrot.lane.b32.xlu0 %v242, 124
      %v1790 = vpop.permute.xlu0 %1789
      %1791 = vrot.lane.b32.xlu0 %v243, 124
      %v1792 = vpop.permute.xlu0 %1791
      %1793 = vrot.lane.b32.xlu0 %v244, 124
      %v1794 = vpop.permute.xlu0 %1793
      %1795 = vrot.lane.b32.xlu0 %v245, 124
      %v1796 = vpop.permute.xlu0 %1795
      %1797 = vrot.lane.b32.xlu0 %v246, 124
      %v1798 = vpop.permute.xlu0 %1797
      %1799 = vrot.lane.b32.xlu0 %v247, 124
      %v1800 = vpop.permute.xlu0 %1799
      %1801 = vrot.lane.b32.xlu0 %v248, 124
      %v1802 = vpop.permute.xlu0 %1801
      %1803 = vrot.lane.b32.xlu0 %v249, 124
      %v1804 = vpop.permute.xlu0 %1803
      %1805 = vrot.lane.b32.xlu0 %v250, 124
      %v1806 = vpop.permute.xlu0 %1805
      %v1871 = vadd.f32 %v1482, %v1680
      %v1872 = vadd.f32 %v1483, %v1682
      %v1873 = vadd.f32 %v1484, %v1684
      %v1874 = vadd.f32 %v1485, %v1686
      %v1875 = vadd.f32 %v1486, %v1688
      %v1876 = vadd.f32 %v1487, %v1690
      %v1877 = vadd.f32 %v1488, %v1692
      %v1878 = vadd.f32 %v1489, %v1694
      %v1879 = vadd.f32 %v1490, %v1696
      %v1880 = vadd.f32 %v1491, %v1698
      %v1881 = vadd.f32 %v1492, %v1700
      %v1882 = vadd.f32 %v1493, %v1702
      %v1883 = vadd.f32 %v1494, %v1704
      %v1884 = vadd.f32 %v1495, %v1706
      %v1885 = vadd.f32 %v1496, %v1708
      %v1886 = vadd.f32 %v1497, %v1710
      %v1887 = vadd.f32 %v1498, %v1712
      %v1888 = vadd.f32 %v1499, %v1714
      %v1889 = vadd.f32 %v1500, %v1716
      %v1890 = vadd.f32 %v1501, %v1718
      %v1891 = vadd.f32 %v1502, %v1720
      %v1892 = vadd.f32 %v1503, %v1722
      %v1893 = vadd.f32 %v1504, %v1724
      %v1894 = vadd.f32 %v1505, %v1726
      %v1895 = vadd.f32 %v1506, %v1728
      %v1896 = vadd.f32 %v1507, %v1730
      %v1897 = vadd.f32 %v1508, %v1732
      %v1898 = vadd.f32 %v1509, %v1734
      %v1899 = vadd.f32 %v1510, %v1736
      %v1900 = vadd.f32 %v1511, %v1738
      %v1901 = vadd.f32 %v1512, %v1740
      %v1902 = vadd.f32 %v1513, %v1742
      %v1903 = vadd.f32 %v1514, %v1744
      %v1904 = vadd.f32 %v1515, %v1746
      %v1905 = vadd.f32 %v1516, %v1748
      %v1906 = vadd.f32 %v1517, %v1750
      %v1907 = vadd.f32 %v1518, %v1752
      %v1908 = vadd.f32 %v1519, %v1754
      %v1909 = vadd.f32 %v1520, %v1756
      %v1910 = vadd.f32 %v1521, %v1758
      %v1911 = vadd.f32 %v1522, %v1760
      %v1912 = vadd.f32 %v1523, %v1762
      %v1913 = vadd.f32 %v1524, %v1764
      %v1914 = vadd.f32 %v1525, %v1766
      %v1915 = vadd.f32 %v1526, %v1768
      %v1916 = vadd.f32 %v1527, %v1770
      %v1917 = vadd.f32 %v1528, %v1772
      %v1918 = vadd.f32 %v1529, %v1774
      %v1919 = vadd.f32 %v1530, %v1776
      %v1920 = vadd.f32 %v1531, %v1778
      %v1921 = vadd.f32 %v1532, %v1780
      %v1922 = vadd.f32 %v1533, %v1782
      %v1923 = vadd.f32 %v1534, %v1784
      %v1924 = vadd.f32 %v1535, %v1786
      %v1925 = vadd.f32 %v1536, %v1788
      %v1926 = vadd.f32 %v1537, %v1790
      %v1927 = vadd.f32 %v1538, %v1792
      %v1928 = vadd.f32 %v1539, %v1794
      %v1929 = vadd.f32 %v1540, %v1796
      %v1930 = vadd.f32 %v1541, %v1798
      %v1931 = vadd.f32 %v1542, %v1800
      %v1932 = vadd.f32 %v1543, %v1802
      %v1933 = vadd.f32 %v1544, %v1804
      %v1934 = vadd.f32 %v1545, %v1806
      %v1935 = vsel %vm1678, %v1680, -3e+38
      %v1936 = vsel %vm1678, %v1682, -3e+38
      %v1937 = vsel %vm1678, %v1684, -3e+38
      %v1938 = vsel %vm1678, %v1686, -3e+38
      %v1939 = vsel %vm1678, %v1688, -3e+38
      %v1940 = vsel %vm1678, %v1690, -3e+38
      %v1941 = vsel %vm1678, %v1692, -3e+38
      %v1942 = vsel %vm1678, %v1694, -3e+38
      %v1943 = vsel %vm1678, %v1696, -3e+38
      %v1944 = vsel %vm1678, %v1698, -3e+38
      %v1945 = vsel %vm1678, %v1700, -3e+38
      %v1946 = vsel %vm1678, %v1702, -3e+38
      %v1947 = vsel %vm1678, %v1704, -3e+38
      %v1948 = vsel %vm1678, %v1706, -3e+38
      %v1949 = vsel %vm1678, %v1708, -3e+38
      %v1950 = vsel %vm1678, %v1710, -3e+38
      %v1951 = vsel %vm1678, %v1712, -3e+38
      %v1952 = vsel %vm1678, %v1714, -3e+38
      %v1953 = vsel %vm1678, %v1716, -3e+38
      %v1954 = vsel %vm1678, %v1718, -3e+38
      %v1955 = vsel %vm1678, %v1720, -3e+38
      %v1956 = vsel %vm1678, %v1722, -3e+38
      %v1957 = vsel %vm1678, %v1724, -3e+38
      %v1958 = vsel %vm1678, %v1726, -3e+38
      %v1959 = vsel %vm1678, %v1728, -3e+38
      %v1960 = vsel %vm1678, %v1730, -3e+38
      %v1961 = vsel %vm1678, %v1732, -3e+38
      %v1962 = vsel %vm1678, %v1734, -3e+38
      %v1963 = vsel %vm1678, %v1736, -3e+38
      %v1964 = vsel %vm1678, %v1738, -3e+38
      %v1965 = vsel %vm1678, %v1740, -3e+38
      %v1966 = vsel %vm1678, %v1742, -3e+38
      %v1967 = vsel %vm1678, %v1744, -3e+38
      %v1968 = vsel %vm1678, %v1746, -3e+38
      %v1969 = vsel %vm1678, %v1748, -3e+38
      %v1970 = vsel %vm1678, %v1750, -3e+38
      %v1971 = vsel %vm1678, %v1752, -3e+38
      %v1972 = vsel %vm1678, %v1754, -3e+38
      %v1973 = vsel %vm1678, %v1756, -3e+38
      %v1974 = vsel %vm1678, %v1758, -3e+38
      %v1975 = vsel %vm1678, %v1760, -3e+38
      %v1976 = vsel %vm1678, %v1762, -3e+38
      %v1977 = vsel %vm1678, %v1764, -3e+38
      %v1978 = vsel %vm1678, %v1766, -3e+38
      %v1979 = vsel %vm1678, %v1768, -3e+38
      %v1980 = vsel %vm1678, %v1770, -3e+38
      %v1981 = vsel %vm1678, %v1772, -3e+38
      %v1982 = vsel %vm1678, %v1774, -3e+38
      %v1983 = vsel %vm1678, %v1776, -3e+38
      %v1984 = vsel %vm1678, %v1778, -3e+38
      %v1985 = vsel %vm1678, %v1780, -3e+38
      %v1986 = vsel %vm1678, %v1782, -3e+38
      %v1987 = vsel %vm1678, %v1784, -3e+38
      %v1988 = vsel %vm1678, %v1786, -3e+38
      %v1989 = vsel %vm1678, %v1788, -3e+38
      %v1990 = vsel %vm1678, %v1790, -3e+38
      %v1991 = vsel %vm1678, %v1792, -3e+38
      %v1992 = vsel %vm1678, %v1794, -3e+38
      %v1993 = vsel %vm1678, %v1796, -3e+38
      %v1994 = vsel %vm1678, %v1798, -3e+38
      %v1995 = vsel %vm1678, %v1800, -3e+38
      %v1996 = vsel %vm1678, %v1802, -3e+38
      %v1997 = vsel %vm1678, %v1804, -3e+38
      %v1998 = vsel %vm1678, %v1806, -3e+38
      %v1999 = vmax.f32 %v1610, %v1935
      %v2000 = vmax.f32 %v1611, %v1936
      %v2001 = vmax.f32 %v1612, %v1937
      %v2002 = vmax.f32 %v1613, %v1938
      %v2003 = vmax.f32 %v1614, %v1939
      %v2004 = vmax.f32 %v1615, %v1940
      %v2005 = vmax.f32 %v1616, %v1941
      %v2006 = vmax.f32 %v1617, %v1942
      %v2007 = vmax.f32 %v1618, %v1943
      %v2008 = vmax.f32 %v1619, %v1944
      %v2009 = vmax.f32 %v1620, %v1945
      %v2010 = vmax.f32 %v1621, %v1946
      %v2011 = vmax.f32 %v1622, %v1947
      %v2012 = vmax.f32 %v1623, %v1948
      %v2013 = vmax.f32 %v1624, %v1949
      %v2014 = vmax.f32 %v1625, %v1950
      %v2015 = vmax.f32 %v1626, %v1951
      %v2016 = vmax.f32 %v1627, %v1952
      %v2017 = vmax.f32 %v1628, %v1953
      %v2018 = vmax.f32 %v1629, %v1954
      %v2019 = vmax.f32 %v1630, %v1955
      %v2020 = vmax.f32 %v1631, %v1956
      %v2021 = vmax.f32 %v1632, %v1957
      %v2022 = vmax.f32 %v1633, %v1958
      %v2023 = vmax.f32 %v1634, %v1959
      %v2024 = vmax.f32 %v1635, %v1960
      %v2025 = vmax.f32 %v1636, %v1961
      %v2026 = vmax.f32 %v1637, %v1962
      %v2027 = vmax.f32 %v1638, %v1963
      %v2028 = vmax.f32 %v1639, %v1964
      %v2029 = vmax.f32 %v1640, %v1965
      %v2030 = vmax.f32 %v1641, %v1966
      %v2031 = vmax.f32 %v1642, %v1967
      %v2032 = vmax.f32 %v1643, %v1968
      %v2033 = vmax.f32 %v1644, %v1969
      %v2034 = vmax.f32 %v1645, %v1970
      %v2035 = vmax.f32 %v1646, %v1971
      %v2036 = vmax.f32 %v1647, %v1972
      %v2037 = vmax.f32 %v1648, %v1973
      %v2038 = vmax.f32 %v1649, %v1974
      %v2039 = vmax.f32 %v1650, %v1975
      %v2040 = vmax.f32 %v1651, %v1976
      %v2041 = vmax.f32 %v1652, %v1977
      %v2042 = vmax.f32 %v1653, %v1978
      %v2043 = vmax.f32 %v1654, %v1979
      %v2044 = vmax.f32 %v1655, %v1980
      %v2045 = vmax.f32 %v1656, %v1981
      %v2046 = vmax.f32 %v1657, %v1982
      %v2047 = vmax.f32 %v1658, %v1983
      %v2048 = vmax.f32 %v1659, %v1984
      %v2049 = vmax.f32 %v1660, %v1985
      %v2050 = vmax.f32 %v1661, %v1986
      %v2051 = vmax.f32 %v1662, %v1987
      %v2052 = vmax.f32 %v1663, %v1988
      %v2053 = vmax.f32 %v1664, %v1989
      %v2054 = vmax.f32 %v1665, %v1990
      %v2055 = vmax.f32 %v1666, %v1991
      %v2056 = vmax.f32 %v1667, %v1992
      %v2057 = vmax.f32 %v1668, %v1993
      %v2058 = vmax.f32 %v1669, %v1994
      %v2059 = vmax.f32 %v1670, %v1995
      %v2060 = vmax.f32 %v1671, %v1996
      %v2061 = vmax.f32 %v1672, %v1997
      %v2062 = vmax.f32 %v1673, %v1998
      %v2063 = vadd.s32 %v179, 1
      %vm2064 = vcmp.ge.s32.totalorder %v2063, 1
      %vm2065 = vcmp.lt.s32.totalorder %v2063, 17
      %vm2066 = vmand %vm2064, %vm2065
      %vm2067 = vmand %vm2066, %vm185
      %v2068 = vld [vmem:[%s167] sm:$0xff]
      %v2069 = vld [vmem:[%s167 + $0x10] sm:$0xff]
      %v2070 = vld [vmem:[%s167 + $0x20] sm:$0xff]
      %v2071 = vld [vmem:[%s167 + $0x30] sm:$0xff]
      %v2072 = vld [vmem:[%s167 + $0x40] sm:$0xff]
      %v2073 = vld [vmem:[%s167 + $0x50] sm:$0xff]
      %v2074 = vld [vmem:[%s167 + $0x60] sm:$0xff]
      %v2075 = vld [vmem:[%s167 + $0x70] sm:$0xff]
      %v2076 = vld [vmem:[%s167 + $0x80] sm:$0xff]
      %v2077 = vld [vmem:[%s167 + $0x90] sm:$0xff]
      %v2078 = vld [vmem:[%s167 + $0xa0] sm:$0xff]
      %v2079 = vld [vmem:[%s167 + $0xb0] sm:$0xff]
      %v2080 = vld [vmem:[%s167 + $0xc0] sm:$0xff]
      %v2081 = vld [vmem:[%s167 + $0xd0] sm:$0xff]
      %v2082 = vld [vmem:[%s167 + $0xe0] sm:$0xff]
      %v2083 = vld [vmem:[%s167 + $0xf0] sm:$0xff]
      %v2084 = vld [vmem:[%s167 + $0x100] sm:$0xff]
      %v2085 = vld [vmem:[%s167 + $0x110] sm:$0xff]
      %v2086 = vld [vmem:[%s167 + $0x120] sm:$0xff]
      %v2087 = vld [vmem:[%s167 + $0x130] sm:$0xff]
      %v2088 = vld [vmem:[%s167 + $0x140] sm:$0xff]
      %v2089 = vld [vmem:[%s167 + $0x150] sm:$0xff]
      %v2090 = vld [vmem:[%s167 + $0x160] sm:$0xff]
      %v2091 = vld [vmem:[%s167 + $0x170] sm:$0xff]
      %v2092 = vld [vmem:[%s167 + $0x180] sm:$0xff]
      %v2093 = vld [vmem:[%s167 + $0x190] sm:$0xff]
      %v2094 = vld [vmem:[%s167 + $0x1a0] sm:$0xff]
      %v2095 = vld [vmem:[%s167 + $0x1b0] sm:$0xff]
      %v2096 = vld [vmem:[%s167 + $0x1c0] sm:$0xff]
      %v2097 = vld [vmem:[%s167 + $0x1d0] sm:$0xff]
      %v2098 = vld [vmem:[%s167 + $0x1e0] sm:$0xff]
      %v2099 = vld [vmem:[%s167 + $0x1f0] sm:$0xff]
      %v2100 = vld [vmem:[%s167 + $0x200] sm:$0xff]
      %v2101 = vld [vmem:[%s167 + $0x210] sm:$0xff]
      %v2102 = vld [vmem:[%s167 + $0x220] sm:$0xff]
      %v2103 = vld [vmem:[%s167 + $0x230] sm:$0xff]
      %v2104 = vld [vmem:[%s167 + $0x240] sm:$0xff]
      %v2105 = vld [vmem:[%s167 + $0x250] sm:$0xff]
      %v2106 = vld [vmem:[%s167 + $0x260] sm:$0xff]
      %v2107 = vld [vmem:[%s167 + $0x270] sm:$0xff]
      %v2108 = vld [vmem:[%s167 + $0x280] sm:$0xff]
      %v2109 = vld [vmem:[%s167 + $0x290] sm:$0xff]
      %v2110 = vld [vmem:[%s167 + $0x2a0] sm:$0xff]
      %v2111 = vld [vmem:[%s167 + $0x2b0] sm:$0xff]
      %v2112 = vld [vmem:[%s167 + $0x2c0] sm:$0xff]
      %v2113 = vld [vmem:[%s167 + $0x2d0] sm:$0xff]
      %v2114 = vld [vmem:[%s167 + $0x2e0] sm:$0xff]
      %v2115 = vld [vmem:[%s167 + $0x2f0] sm:$0xff]
      %v2116 = vld [vmem:[%s167 + $0x300] sm:$0xff]
      %v2117 = vld [vmem:[%s167 + $0x310] sm:$0xff]
      %v2118 = vld [vmem:[%s167 + $0x320] sm:$0xff]
      %v2119 = vld [vmem:[%s167 + $0x330] sm:$0xff]
      %v2120 = vld [vmem:[%s167 + $0x340] sm:$0xff]
      %v2121 = vld [vmem:[%s167 + $0x350] sm:$0xff]
      %v2122 = vld [vmem:[%s167 + $0x360] sm:$0xff]
      %v2123 = vld [vmem:[%s167 + $0x370] sm:$0xff]
      %v2124 = vld [vmem:[%s167 + $0x380] sm:$0xff]
      %v2125 = vld [vmem:[%s167 + $0x390] sm:$0xff]
      %v2126 = vld [vmem:[%s167 + $0x3a0] sm:$0xff]
      %v2127 = vld [vmem:[%s167 + $0x3b0] sm:$0xff]
      %v2128 = vld [vmem:[%s167 + $0x3c0] sm:$0xff]
      %v2129 = vld [vmem:[%s167 + $0x3d0] sm:$0xff]
      %v2130 = vld [vmem:[%s167 + $0x3e0] sm:$0xff]
      %v2131 = vld [vmem:[%s167 + $0x3f0] sm:$0xff]
      %v2132 = vadd.f32 %v1871, %v2068
      %v2133 = vadd.f32 %v1872, %v2069
      %v2134 = vadd.f32 %v1873, %v2070
      %v2135 = vadd.f32 %v1874, %v2071
      %v2136 = vadd.f32 %v1875, %v2072
      %v2137 = vadd.f32 %v1876, %v2073
      %v2138 = vadd.f32 %v1877, %v2074
      %v2139 = vadd.f32 %v1878, %v2075
      %v2140 = vadd.f32 %v1879, %v2076
      %v2141 = vadd.f32 %v1880, %v2077
      %v2142 = vadd.f32 %v1881, %v2078
      %v2143 = vadd.f32 %v1882, %v2079
      %v2144 = vadd.f32 %v1883, %v2080
      %v2145 = vadd.f32 %v1884, %v2081
      %v2146 = vadd.f32 %v1885, %v2082
      %v2147 = vadd.f32 %v1886, %v2083
      %v2148 = vadd.f32 %v1887, %v2084
      %v2149 = vadd.f32 %v1888, %v2085
      %v2150 = vadd.f32 %v1889, %v2086
      %v2151 = vadd.f32 %v1890, %v2087
      %v2152 = vadd.f32 %v1891, %v2088
      %v2153 = vadd.f32 %v1892, %v2089
      %v2154 = vadd.f32 %v1893, %v2090
      %v2155 = vadd.f32 %v1894, %v2091
      %v2156 = vadd.f32 %v1895, %v2092
      %v2157 = vadd.f32 %v1896, %v2093
      %v2158 = vadd.f32 %v1897, %v2094
      %v2159 = vadd.f32 %v1898, %v2095
      %v2160 = vadd.f32 %v1899, %v2096
      %v2161 = vadd.f32 %v1900, %v2097
      %v2162 = vadd.f32 %v1901, %v2098
      %v2163 = vadd.f32 %v1902, %v2099
      %v2164 = vadd.f32 %v1903, %v2100
      %v2165 = vadd.f32 %v1904, %v2101
      %v2166 = vadd.f32 %v1905, %v2102
      %v2167 = vadd.f32 %v1906, %v2103
      %v2168 = vadd.f32 %v1907, %v2104
      %v2169 = vadd.f32 %v1908, %v2105
      %v2170 = vadd.f32 %v1909, %v2106
      %v2171 = vadd.f32 %v1910, %v2107
      %v2172 = vadd.f32 %v1911, %v2108
      %v2173 = vadd.f32 %v1912, %v2109
      %v2174 = vadd.f32 %v1913, %v2110
      %v2175 = vadd.f32 %v1914, %v2111
      %v2176 = vadd.f32 %v1915, %v2112
      %v2177 = vadd.f32 %v1916, %v2113
      %v2178 = vadd.f32 %v1917, %v2114
      %v2179 = vadd.f32 %v1918, %v2115
      %v2180 = vadd.f32 %v1919, %v2116
      %v2181 = vadd.f32 %v1920, %v2117
      %v2182 = vadd.f32 %v1921, %v2118
      %v2183 = vadd.f32 %v1922, %v2119
      %v2184 = vadd.f32 %v1923, %v2120
      %v2185 = vadd.f32 %v1924, %v2121
      %v2186 = vadd.f32 %v1925, %v2122
      %v2187 = vadd.f32 %v1926, %v2123
      %v2188 = vadd.f32 %v1927, %v2124
      %v2189 = vadd.f32 %v1928, %v2125
      %v2190 = vadd.f32 %v1929, %v2126
      %v2191 = vadd.f32 %v1930, %v2127
      %v2192 = vadd.f32 %v1931, %v2128
      %v2193 = vadd.f32 %v1932, %v2129
      %v2194 = vadd.f32 %v1933, %v2130
      %v2195 = vadd.f32 %v1934, %v2131
      %v2196 = vsel %vm2067, %v2068, -3e+38
      %v2197 = vsel %vm2067, %v2069, -3e+38
      %v2198 = vsel %vm2067, %v2070, -3e+38
      %v2199 = vsel %vm2067, %v2071, -3e+38
      %v2200 = vsel %vm2067, %v2072, -3e+38
      %v2201 = vsel %vm2067, %v2073, -3e+38
      %v2202 = vsel %vm2067, %v2074, -3e+38
      %v2203 = vsel %vm2067, %v2075, -3e+38
      %v2204 = vsel %vm2067, %v2076, -3e+38
      %v2205 = vsel %vm2067, %v2077, -3e+38
      %v2206 = vsel %vm2067, %v2078, -3e+38
      %v2207 = vsel %vm2067, %v2079, -3e+38
      %v2208 = vsel %vm2067, %v2080, -3e+38
      %v2209 = vsel %vm2067, %v2081, -3e+38
      %v2210 = vsel %vm2067, %v2082, -3e+38
      %v2211 = vsel %vm2067, %v2083, -3e+38
      %v2212 = vsel %vm2067, %v2084, -3e+38
      %v2213 = vsel %vm2067, %v2085, -3e+38
      %v2214 = vsel %vm2067, %v2086, -3e+38
      %v2215 = vsel %vm2067, %v2087, -3e+38
      %v2216 = vsel %vm2067, %v2088, -3e+38
      %v2217 = vsel %vm2067, %v2089, -3e+38
      %v2218 = vsel %vm2067, %v2090, -3e+38
      %v2219 = vsel %vm2067, %v2091, -3e+38
      %v2220 = vsel %vm2067, %v2092, -3e+38
      %v2221 = vsel %vm2067, %v2093, -3e+38
      %v2222 = vsel %vm2067, %v2094, -3e+38
      %v2223 = vsel %vm2067, %v2095, -3e+38
      %v2224 = vsel %vm2067, %v2096, -3e+38
      %v2225 = vsel %vm2067, %v2097, -3e+38
      %v2226 = vsel %vm2067, %v2098, -3e+38
      %v2227 = vsel %vm2067, %v2099, -3e+38
      %v2228 = vsel %vm2067, %v2100, -3e+38
      %v2229 = vsel %vm2067, %v2101, -3e+38
      %v2230 = vsel %vm2067, %v2102, -3e+38
      %v2231 = vsel %vm2067, %v2103, -3e+38
      %v2232 = vsel %vm2067, %v2104, -3e+38
      %v2233 = vsel %vm2067, %v2105, -3e+38
      %v2234 = vsel %vm2067, %v2106, -3e+38
      %v2235 = vsel %vm2067, %v2107, -3e+38
      %v2236 = vsel %vm2067, %v2108, -3e+38
      %v2237 = vsel %vm2067, %v2109, -3e+38
      %v2238 = vsel %vm2067, %v2110, -3e+38
      %v2239 = vsel %vm2067, %v2111, -3e+38
      %v2240 = vsel %vm2067, %v2112, -3e+38
      %v2241 = vsel %vm2067, %v2113, -3e+38
      %v2242 = vsel %vm2067, %v2114, -3e+38
      %v2243 = vsel %vm2067, %v2115, -3e+38
      %v2244 = vsel %vm2067, %v2116, -3e+38
      %v2245 = vsel %vm2067, %v2117, -3e+38
      %v2246 = vsel %vm2067, %v2118, -3e+38
      %v2247 = vsel %vm2067, %v2119, -3e+38
      %v2248 = vsel %vm2067, %v2120, -3e+38
      %v2249 = vsel %vm2067, %v2121, -3e+38
      %v2250 = vsel %vm2067, %v2122, -3e+38
      %v2251 = vsel %vm2067, %v2123, -3e+38
      %v2252 = vsel %vm2067, %v2124, -3e+38
      %v2253 = vsel %vm2067, %v2125, -3e+38
      %v2254 = vsel %vm2067, %v2126, -3e+38
      %v2255 = vsel %vm2067, %v2127, -3e+38
      %v2256 = vsel %vm2067, %v2128, -3e+38
      %v2257 = vsel %vm2067, %v2129, -3e+38
      %v2258 = vsel %vm2067, %v2130, -3e+38
      %v2259 = vsel %vm2067, %v2131, -3e+38
      %v2260 = vmax.f32 %v1999, %v2196
      %v2261 = vmax.f32 %v2000, %v2197
      %v2262 = vmax.f32 %v2001, %v2198
      %v2263 = vmax.f32 %v2002, %v2199
      %v2264 = vmax.f32 %v2003, %v2200
      %v2265 = vmax.f32 %v2004, %v2201
      %v2266 = vmax.f32 %v2005, %v2202
      %v2267 = vmax.f32 %v2006, %v2203
      %v2268 = vmax.f32 %v2007, %v2204
      %v2269 = vmax.f32 %v2008, %v2205
      %v2270 = vmax.f32 %v2009, %v2206
      %v2271 = vmax.f32 %v2010, %v2207
      %v2272 = vmax.f32 %v2011, %v2208
      %v2273 = vmax.f32 %v2012, %v2209
      %v2274 = vmax.f32 %v2013, %v2210
      %v2275 = vmax.f32 %v2014, %v2211
      %v2276 = vmax.f32 %v2015, %v2212
      %v2277 = vmax.f32 %v2016, %v2213
      %v2278 = vmax.f32 %v2017, %v2214
      %v2279 = vmax.f32 %v2018, %v2215
      %v2280 = vmax.f32 %v2019, %v2216
      %v2281 = vmax.f32 %v2020, %v2217
      %v2282 = vmax.f32 %v2021, %v2218
      %v2283 = vmax.f32 %v2022, %v2219
      %v2284 = vmax.f32 %v2023, %v2220
      %v2285 = vmax.f32 %v2024, %v2221
      %v2286 = vmax.f32 %v2025, %v2222
      %v2287 = vmax.f32 %v2026, %v2223
      %v2288 = vmax.f32 %v2027, %v2224
      %v2289 = vmax.f32 %v2028, %v2225
      %v2290 = vmax.f32 %v2029, %v2226
      %v2291 = vmax.f32 %v2030, %v2227
      %v2292 = vmax.f32 %v2031, %v2228
      %v2293 = vmax.f32 %v2032, %v2229
      %v2294 = vmax.f32 %v2033, %v2230
      %v2295 = vmax.f32 %v2034, %v2231
      %v2296 = vmax.f32 %v2035, %v2232
      %v2297 = vmax.f32 %v2036, %v2233
      %v2298 = vmax.f32 %v2037, %v2234
      %v2299 = vmax.f32 %v2038, %v2235
      %v2300 = vmax.f32 %v2039, %v2236
      %v2301 = vmax.f32 %v2040, %v2237
      %v2302 = vmax.f32 %v2041, %v2238
      %v2303 = vmax.f32 %v2042, %v2239
      %v2304 = vmax.f32 %v2043, %v2240
      %v2305 = vmax.f32 %v2044, %v2241
      %v2306 = vmax.f32 %v2045, %v2242
      %v2307 = vmax.f32 %v2046, %v2243
      %v2308 = vmax.f32 %v2047, %v2244
      %v2309 = vmax.f32 %v2048, %v2245
      %v2310 = vmax.f32 %v2049, %v2246
      %v2311 = vmax.f32 %v2050, %v2247
      %v2312 = vmax.f32 %v2051, %v2248
      %v2313 = vmax.f32 %v2052, %v2249
      %v2314 = vmax.f32 %v2053, %v2250
      %v2315 = vmax.f32 %v2054, %v2251
      %v2316 = vmax.f32 %v2055, %v2252
      %v2317 = vmax.f32 %v2056, %v2253
      %v2318 = vmax.f32 %v2057, %v2254
      %v2319 = vmax.f32 %v2058, %v2255
      %v2320 = vmax.f32 %v2059, %v2256
      %v2321 = vmax.f32 %v2060, %v2257
      %v2322 = vmax.f32 %v2061, %v2258
      %v2323 = vmax.f32 %v2062, %v2259
      %vm2324 = vmand %vm2066, %vm446
      %2389 = vrot.lane.b32.xlu0 %v2068, 127
      %v2390 = vpop.permute.xlu0 %2389
      %2391 = vrot.lane.b32.xlu0 %v2069, 127
      %v2392 = vpop.permute.xlu0 %2391
      %2393 = vrot.lane.b32.xlu0 %v2070, 127
      %v2394 = vpop.permute.xlu0 %2393
      %2395 = vrot.lane.b32.xlu0 %v2071, 127
      %v2396 = vpop.permute.xlu0 %2395
      %2397 = vrot.lane.b32.xlu0 %v2072, 127
      %v2398 = vpop.permute.xlu0 %2397
      %2399 = vrot.lane.b32.xlu0 %v2073, 127
      %v2400 = vpop.permute.xlu0 %2399
      %2401 = vrot.lane.b32.xlu0 %v2074, 127
      %v2402 = vpop.permute.xlu0 %2401
      %2403 = vrot.lane.b32.xlu0 %v2075, 127
      %v2404 = vpop.permute.xlu0 %2403
      %2405 = vrot.lane.b32.xlu0 %v2076, 127
      %v2406 = vpop.permute.xlu0 %2405
      %2407 = vrot.lane.b32.xlu0 %v2077, 127
      %v2408 = vpop.permute.xlu0 %2407
      %2409 = vrot.lane.b32.xlu0 %v2078, 127
      %v2410 = vpop.permute.xlu0 %2409
      %2411 = vrot.lane.b32.xlu0 %v2079, 127
      %v2412 = vpop.permute.xlu0 %2411
      %2413 = vrot.lane.b32.xlu0 %v2080, 127
      %v2414 = vpop.permute.xlu0 %2413
      %2415 = vrot.lane.b32.xlu0 %v2081, 127
      %v2416 = vpop.permute.xlu0 %2415
      %2417 = vrot.lane.b32.xlu0 %v2082, 127
      %v2418 = vpop.permute.xlu0 %2417
      %2419 = vrot.lane.b32.xlu0 %v2083, 127
      %v2420 = vpop.permute.xlu0 %2419
      %2421 = vrot.lane.b32.xlu0 %v2084, 127
      %v2422 = vpop.permute.xlu0 %2421
      %2423 = vrot.lane.b32.xlu0 %v2085, 127
      %v2424 = vpop.permute.xlu0 %2423
      %2425 = vrot.lane.b32.xlu0 %v2086, 127
      %v2426 = vpop.permute.xlu0 %2425
      %2427 = vrot.lane.b32.xlu0 %v2087, 127
      %v2428 = vpop.permute.xlu0 %2427
      %2429 = vrot.lane.b32.xlu0 %v2088, 127
      %v2430 = vpop.permute.xlu0 %2429
      %2431 = vrot.lane.b32.xlu0 %v2089, 127
      %v2432 = vpop.permute.xlu0 %2431
      %2433 = vrot.lane.b32.xlu0 %v2090, 127
      %v2434 = vpop.permute.xlu0 %2433
      %2435 = vrot.lane.b32.xlu0 %v2091, 127
      %v2436 = vpop.permute.xlu0 %2435
      %2437 = vrot.lane.b32.xlu0 %v2092, 127
      %v2438 = vpop.permute.xlu0 %2437
      %2439 = vrot.lane.b32.xlu0 %v2093, 127
      %v2440 = vpop.permute.xlu0 %2439
      %2441 = vrot.lane.b32.xlu0 %v2094, 127
      %v2442 = vpop.permute.xlu0 %2441
      %2443 = vrot.lane.b32.xlu0 %v2095, 127
      %v2444 = vpop.permute.xlu0 %2443
      %2445 = vrot.lane.b32.xlu0 %v2096, 127
      %v2446 = vpop.permute.xlu0 %2445
      %2447 = vrot.lane.b32.xlu0 %v2097, 127
      %v2448 = vpop.permute.xlu0 %2447
      %2449 = vrot.lane.b32.xlu0 %v2098, 127
      %v2450 = vpop.permute.xlu0 %2449
      %2451 = vrot.lane.b32.xlu0 %v2099, 127
      %v2452 = vpop.permute.xlu0 %2451
      %2453 = vrot.lane.b32.xlu0 %v2100, 127
      %v2454 = vpop.permute.xlu0 %2453
      %2455 = vrot.lane.b32.xlu0 %v2101, 127
      %v2456 = vpop.permute.xlu0 %2455
      %2457 = vrot.lane.b32.xlu0 %v2102, 127
      %v2458 = vpop.permute.xlu0 %2457
      %2459 = vrot.lane.b32.xlu0 %v2103, 127
      %v2460 = vpop.permute.xlu0 %2459
      %2461 = vrot.lane.b32.xlu0 %v2104, 127
      %v2462 = vpop.permute.xlu0 %2461
      %2463 = vrot.lane.b32.xlu0 %v2105, 127
      %v2464 = vpop.permute.xlu0 %2463
      %2465 = vrot.lane.b32.xlu0 %v2106, 127
      %v2466 = vpop.permute.xlu0 %2465
      %2467 = vrot.lane.b32.xlu0 %v2107, 127
      %v2468 = vpop.permute.xlu0 %2467
      %2469 = vrot.lane.b32.xlu0 %v2108, 127
      %v2470 = vpop.permute.xlu0 %2469
      %2471 = vrot.lane.b32.xlu0 %v2109, 127
      %v2472 = vpop.permute.xlu0 %2471
      %2473 = vrot.lane.b32.xlu0 %v2110, 127
      %v2474 = vpop.permute.xlu0 %2473
      %2475 = vrot.lane.b32.xlu0 %v2111, 127
      %v2476 = vpop.permute.xlu0 %2475
      %2477 = vrot.lane.b32.xlu0 %v2112, 127
      %v2478 = vpop.permute.xlu0 %2477
      %2479 = vrot.lane.b32.xlu0 %v2113, 127
      %v2480 = vpop.permute.xlu0 %2479
      %2481 = vrot.lane.b32.xlu0 %v2114, 127
      %v2482 = vpop.permute.xlu0 %2481
      %2483 = vrot.lane.b32.xlu0 %v2115, 127
      %v2484 = vpop.permute.xlu0 %2483
      %2485 = vrot.lane.b32.xlu0 %v2116, 127
      %v2486 = vpop.permute.xlu0 %2485
      %2487 = vrot.lane.b32.xlu0 %v2117, 127
      %v2488 = vpop.permute.xlu0 %2487
      %2489 = vrot.lane.b32.xlu0 %v2118, 127
      %v2490 = vpop.permute.xlu0 %2489
      %2491 = vrot.lane.b32.xlu0 %v2119, 127
      %v2492 = vpop.permute.xlu0 %2491
      %2493 = vrot.lane.b32.xlu0 %v2120, 127
      %v2494 = vpop.permute.xlu0 %2493
      %2495 = vrot.lane.b32.xlu0 %v2121, 127
      %v2496 = vpop.permute.xlu0 %2495
      %2497 = vrot.lane.b32.xlu0 %v2122, 127
      %v2498 = vpop.permute.xlu0 %2497
      %2499 = vrot.lane.b32.xlu0 %v2123, 127
      %v2500 = vpop.permute.xlu0 %2499
      %2501 = vrot.lane.b32.xlu0 %v2124, 127
      %v2502 = vpop.permute.xlu0 %2501
      %2503 = vrot.lane.b32.xlu0 %v2125, 127
      %v2504 = vpop.permute.xlu0 %2503
      %2505 = vrot.lane.b32.xlu0 %v2126, 127
      %v2506 = vpop.permute.xlu0 %2505
      %2507 = vrot.lane.b32.xlu0 %v2127, 127
      %v2508 = vpop.permute.xlu0 %2507
      %2509 = vrot.lane.b32.xlu0 %v2128, 127
      %v2510 = vpop.permute.xlu0 %2509
      %2511 = vrot.lane.b32.xlu0 %v2129, 127
      %v2512 = vpop.permute.xlu0 %2511
      %2513 = vrot.lane.b32.xlu0 %v2130, 127
      %v2514 = vpop.permute.xlu0 %2513
      %2515 = vrot.lane.b32.xlu0 %v2131, 127
      %v2516 = vpop.permute.xlu0 %2515
      %v2581 = vadd.f32 %v2132, %v2390
      %v2582 = vadd.f32 %v2133, %v2392
      %v2583 = vadd.f32 %v2134, %v2394
      %v2584 = vadd.f32 %v2135, %v2396
      %v2585 = vadd.f32 %v2136, %v2398
      %v2586 = vadd.f32 %v2137, %v2400
      %v2587 = vadd.f32 %v2138, %v2402
      %v2588 = vadd.f32 %v2139, %v2404
      %v2589 = vadd.f32 %v2140, %v2406
      %v2590 = vadd.f32 %v2141, %v2408
      %v2591 = vadd.f32 %v2142, %v2410
      %v2592 = vadd.f32 %v2143, %v2412
      %v2593 = vadd.f32 %v2144, %v2414
      %v2594 = vadd.f32 %v2145, %v2416
      %v2595 = vadd.f32 %v2146, %v2418
      %v2596 = vadd.f32 %v2147, %v2420
      %v2597 = vadd.f32 %v2148, %v2422
      %v2598 = vadd.f32 %v2149, %v2424
      %v2599 = vadd.f32 %v2150, %v2426
      %v2600 = vadd.f32 %v2151, %v2428
      %v2601 = vadd.f32 %v2152, %v2430
      %v2602 = vadd.f32 %v2153, %v2432
      %v2603 = vadd.f32 %v2154, %v2434
      %v2604 = vadd.f32 %v2155, %v2436
      %v2605 = vadd.f32 %v2156, %v2438
      %v2606 = vadd.f32 %v2157, %v2440
      %v2607 = vadd.f32 %v2158, %v2442
      %v2608 = vadd.f32 %v2159, %v2444
      %v2609 = vadd.f32 %v2160, %v2446
      %v2610 = vadd.f32 %v2161, %v2448
      %v2611 = vadd.f32 %v2162, %v2450
      %v2612 = vadd.f32 %v2163, %v2452
      %v2613 = vadd.f32 %v2164, %v2454
      %v2614 = vadd.f32 %v2165, %v2456
      %v2615 = vadd.f32 %v2166, %v2458
      %v2616 = vadd.f32 %v2167, %v2460
      %v2617 = vadd.f32 %v2168, %v2462
      %v2618 = vadd.f32 %v2169, %v2464
      %v2619 = vadd.f32 %v2170, %v2466
      %v2620 = vadd.f32 %v2171, %v2468
      %v2621 = vadd.f32 %v2172, %v2470
      %v2622 = vadd.f32 %v2173, %v2472
      %v2623 = vadd.f32 %v2174, %v2474
      %v2624 = vadd.f32 %v2175, %v2476
      %v2625 = vadd.f32 %v2176, %v2478
      %v2626 = vadd.f32 %v2177, %v2480
      %v2627 = vadd.f32 %v2178, %v2482
      %v2628 = vadd.f32 %v2179, %v2484
      %v2629 = vadd.f32 %v2180, %v2486
      %v2630 = vadd.f32 %v2181, %v2488
      %v2631 = vadd.f32 %v2182, %v2490
      %v2632 = vadd.f32 %v2183, %v2492
      %v2633 = vadd.f32 %v2184, %v2494
      %v2634 = vadd.f32 %v2185, %v2496
      %v2635 = vadd.f32 %v2186, %v2498
      %v2636 = vadd.f32 %v2187, %v2500
      %v2637 = vadd.f32 %v2188, %v2502
      %v2638 = vadd.f32 %v2189, %v2504
      %v2639 = vadd.f32 %v2190, %v2506
      %v2640 = vadd.f32 %v2191, %v2508
      %v2641 = vadd.f32 %v2192, %v2510
      %v2642 = vadd.f32 %v2193, %v2512
      %v2643 = vadd.f32 %v2194, %v2514
      %v2644 = vadd.f32 %v2195, %v2516
      %v2645 = vsel %vm2324, %v2390, -3e+38
      %v2646 = vsel %vm2324, %v2392, -3e+38
      %v2647 = vsel %vm2324, %v2394, -3e+38
      %v2648 = vsel %vm2324, %v2396, -3e+38
      %v2649 = vsel %vm2324, %v2398, -3e+38
      %v2650 = vsel %vm2324, %v2400, -3e+38
      %v2651 = vsel %vm2324, %v2402, -3e+38
      %v2652 = vsel %vm2324, %v2404, -3e+38
      %v2653 = vsel %vm2324, %v2406, -3e+38
      %v2654 = vsel %vm2324, %v2408, -3e+38
      %v2655 = vsel %vm2324, %v2410, -3e+38
      %v2656 = vsel %vm2324, %v2412, -3e+38
      %v2657 = vsel %vm2324, %v2414, -3e+38
      %v2658 = vsel %vm2324, %v2416, -3e+38
      %v2659 = vsel %vm2324, %v2418, -3e+38
      %v2660 = vsel %vm2324, %v2420, -3e+38
      %v2661 = vsel %vm2324, %v2422, -3e+38
      %v2662 = vsel %vm2324, %v2424, -3e+38
      %v2663 = vsel %vm2324, %v2426, -3e+38
      %v2664 = vsel %vm2324, %v2428, -3e+38
      %v2665 = vsel %vm2324, %v2430, -3e+38
      %v2666 = vsel %vm2324, %v2432, -3e+38
      %v2667 = vsel %vm2324, %v2434, -3e+38
      %v2668 = vsel %vm2324, %v2436, -3e+38
      %v2669 = vsel %vm2324, %v2438, -3e+38
      %v2670 = vsel %vm2324, %v2440, -3e+38
      %v2671 = vsel %vm2324, %v2442, -3e+38
      %v2672 = vsel %vm2324, %v2444, -3e+38
      %v2673 = vsel %vm2324, %v2446, -3e+38
      %v2674 = vsel %vm2324, %v2448, -3e+38
      %v2675 = vsel %vm2324, %v2450, -3e+38
      %v2676 = vsel %vm2324, %v2452, -3e+38
      %v2677 = vsel %vm2324, %v2454, -3e+38
      %v2678 = vsel %vm2324, %v2456, -3e+38
      %v2679 = vsel %vm2324, %v2458, -3e+38
      %v2680 = vsel %vm2324, %v2460, -3e+38
      %v2681 = vsel %vm2324, %v2462, -3e+38
      %v2682 = vsel %vm2324, %v2464, -3e+38
      %v2683 = vsel %vm2324, %v2466, -3e+38
      %v2684 = vsel %vm2324, %v2468, -3e+38
      %v2685 = vsel %vm2324, %v2470, -3e+38
      %v2686 = vsel %vm2324, %v2472, -3e+38
      %v2687 = vsel %vm2324, %v2474, -3e+38
      %v2688 = vsel %vm2324, %v2476, -3e+38
      %v2689 = vsel %vm2324, %v2478, -3e+38
      %v2690 = vsel %vm2324, %v2480, -3e+38
      %v2691 = vsel %vm2324, %v2482, -3e+38
      %v2692 = vsel %vm2324, %v2484, -3e+38
      %v2693 = vsel %vm2324, %v2486, -3e+38
      %v2694 = vsel %vm2324, %v2488, -3e+38
      %v2695 = vsel %vm2324, %v2490, -3e+38
      %v2696 = vsel %vm2324, %v2492, -3e+38
      %v2697 = vsel %vm2324, %v2494, -3e+38
      %v2698 = vsel %vm2324, %v2496, -3e+38
      %v2699 = vsel %vm2324, %v2498, -3e+38
      %v2700 = vsel %vm2324, %v2500, -3e+38
      %v2701 = vsel %vm2324, %v2502, -3e+38
      %v2702 = vsel %vm2324, %v2504, -3e+38
      %v2703 = vsel %vm2324, %v2506, -3e+38
      %v2704 = vsel %vm2324, %v2508, -3e+38
      %v2705 = vsel %vm2324, %v2510, -3e+38
      %v2706 = vsel %vm2324, %v2512, -3e+38
      %v2707 = vsel %vm2324, %v2514, -3e+38
      %v2708 = vsel %vm2324, %v2516, -3e+38
      %v2709 = vmax.f32 %v2260, %v2645
      %v2710 = vmax.f32 %v2261, %v2646
      %v2711 = vmax.f32 %v2262, %v2647
      %v2712 = vmax.f32 %v2263, %v2648
      %v2713 = vmax.f32 %v2264, %v2649
      %v2714 = vmax.f32 %v2265, %v2650
      %v2715 = vmax.f32 %v2266, %v2651
      %v2716 = vmax.f32 %v2267, %v2652
      %v2717 = vmax.f32 %v2268, %v2653
      %v2718 = vmax.f32 %v2269, %v2654
      %v2719 = vmax.f32 %v2270, %v2655
      %v2720 = vmax.f32 %v2271, %v2656
      %v2721 = vmax.f32 %v2272, %v2657
      %v2722 = vmax.f32 %v2273, %v2658
      %v2723 = vmax.f32 %v2274, %v2659
      %v2724 = vmax.f32 %v2275, %v2660
      %v2725 = vmax.f32 %v2276, %v2661
      %v2726 = vmax.f32 %v2277, %v2662
      %v2727 = vmax.f32 %v2278, %v2663
      %v2728 = vmax.f32 %v2279, %v2664
      %v2729 = vmax.f32 %v2280, %v2665
      %v2730 = vmax.f32 %v2281, %v2666
      %v2731 = vmax.f32 %v2282, %v2667
      %v2732 = vmax.f32 %v2283, %v2668
      %v2733 = vmax.f32 %v2284, %v2669
      %v2734 = vmax.f32 %v2285, %v2670
      %v2735 = vmax.f32 %v2286, %v2671
      %v2736 = vmax.f32 %v2287, %v2672
      %v2737 = vmax.f32 %v2288, %v2673
      %v2738 = vmax.f32 %v2289, %v2674
      %v2739 = vmax.f32 %v2290, %v2675
      %v2740 = vmax.f32 %v2291, %v2676
      %v2741 = vmax.f32 %v2292, %v2677
      %v2742 = vmax.f32 %v2293, %v2678
      %v2743 = vmax.f32 %v2294, %v2679
      %v2744 = vmax.f32 %v2295, %v2680
      %v2745 = vmax.f32 %v2296, %v2681
      %v2746 = vmax.f32 %v2297, %v2682
      %v2747 = vmax.f32 %v2298, %v2683
      %v2748 = vmax.f32 %v2299, %v2684
      %v2749 = vmax.f32 %v2300, %v2685
      %v2750 = vmax.f32 %v2301, %v2686
      %v2751 = vmax.f32 %v2302, %v2687
      %v2752 = vmax.f32 %v2303, %v2688
      %v2753 = vmax.f32 %v2304, %v2689
      %v2754 = vmax.f32 %v2305, %v2690
      %v2755 = vmax.f32 %v2306, %v2691
      %v2756 = vmax.f32 %v2307, %v2692
      %v2757 = vmax.f32 %v2308, %v2693
      %v2758 = vmax.f32 %v2309, %v2694
      %v2759 = vmax.f32 %v2310, %v2695
      %v2760 = vmax.f32 %v2311, %v2696
      %v2761 = vmax.f32 %v2312, %v2697
      %v2762 = vmax.f32 %v2313, %v2698
      %v2763 = vmax.f32 %v2314, %v2699
      %v2764 = vmax.f32 %v2315, %v2700
      %v2765 = vmax.f32 %v2316, %v2701
      %v2766 = vmax.f32 %v2317, %v2702
      %v2767 = vmax.f32 %v2318, %v2703
      %v2768 = vmax.f32 %v2319, %v2704
      %v2769 = vmax.f32 %v2320, %v2705
      %v2770 = vmax.f32 %v2321, %v2706
      %v2771 = vmax.f32 %v2322, %v2707
      %v2772 = vmax.f32 %v2323, %v2708
      %vm2773 = vmand %vm2066, %vm899
      %2774 = vrot.lane.b32.xlu0 %v2068, 126
      %v2775 = vpop.permute.xlu0 %2774
      %2776 = vrot.lane.b32.xlu0 %v2069, 126
      %v2777 = vpop.permute.xlu0 %2776
      %2778 = vrot.lane.b32.xlu0 %v2070, 126
      %v2779 = vpop.permute.xlu0 %2778
      %2780 = vrot.lane.b32.xlu0 %v2071, 126
      %v2781 = vpop.permute.xlu0 %2780
      %2782 = vrot.lane.b32.xlu0 %v2072, 126
      %v2783 = vpop.permute.xlu0 %2782
      %2784 = vrot.lane.b32.xlu0 %v2073, 126
      %v2785 = vpop.permute.xlu0 %2784
      %2786 = vrot.lane.b32.xlu0 %v2074, 126
      %v2787 = vpop.permute.xlu0 %2786
      %2788 = vrot.lane.b32.xlu0 %v2075, 126
      %v2789 = vpop.permute.xlu0 %2788
      %2790 = vrot.lane.b32.xlu0 %v2076, 126
      %v2791 = vpop.permute.xlu0 %2790
      %2792 = vrot.lane.b32.xlu0 %v2077, 126
      %v2793 = vpop.permute.xlu0 %2792
      %2794 = vrot.lane.b32.xlu0 %v2078, 126
      %v2795 = vpop.permute.xlu0 %2794
      %2796 = vrot.lane.b32.xlu0 %v2079, 126
      %v2797 = vpop.permute.xlu0 %2796
      %2798 = vrot.lane.b32.xlu0 %v2080, 126
      %v2799 = vpop.permute.xlu0 %2798
      %2800 = vrot.lane.b32.xlu0 %v2081, 126
      %v2801 = vpop.permute.xlu0 %2800
      %2802 = vrot.lane.b32.xlu0 %v2082, 126
      %v2803 = vpop.permute.xlu0 %2802
      %2804 = vrot.lane.b32.xlu0 %v2083, 126
      %v2805 = vpop.permute.xlu0 %2804
      %2806 = vrot.lane.b32.xlu0 %v2084, 126
      %v2807 = vpop.permute.xlu0 %2806
      %2808 = vrot.lane.b32.xlu0 %v2085, 126
      %v2809 = vpop.permute.xlu0 %2808
      %2810 = vrot.lane.b32.xlu0 %v2086, 126
      %v2811 = vpop.permute.xlu0 %2810
      %2812 = vrot.lane.b32.xlu0 %v2087, 126
      %v2813 = vpop.permute.xlu0 %2812
      %2814 = vrot.lane.b32.xlu0 %v2088, 126
      %v2815 = vpop.permute.xlu0 %2814
      %2816 = vrot.lane.b32.xlu0 %v2089, 126
      %v2817 = vpop.permute.xlu0 %2816
      %2818 = vrot.lane.b32.xlu0 %v2090, 126
      %v2819 = vpop.permute.xlu0 %2818
      %2820 = vrot.lane.b32.xlu0 %v2091, 126
      %v2821 = vpop.permute.xlu0 %2820
      %2822 = vrot.lane.b32.xlu0 %v2092, 126
      %v2823 = vpop.permute.xlu0 %2822
      %2824 = vrot.lane.b32.xlu0 %v2093, 126
      %v2825 = vpop.permute.xlu0 %2824
      %2826 = vrot.lane.b32.xlu0 %v2094, 126
      %v2827 = vpop.permute.xlu0 %2826
      %2828 = vrot.lane.b32.xlu0 %v2095, 126
      %v2829 = vpop.permute.xlu0 %2828
      %2830 = vrot.lane.b32.xlu0 %v2096, 126
      %v2831 = vpop.permute.xlu0 %2830
      %2832 = vrot.lane.b32.xlu0 %v2097, 126
      %v2833 = vpop.permute.xlu0 %2832
      %2834 = vrot.lane.b32.xlu0 %v2098, 126
      %v2835 = vpop.permute.xlu0 %2834
      %2836 = vrot.lane.b32.xlu0 %v2099, 126
      %v2837 = vpop.permute.xlu0 %2836
      %2838 = vrot.lane.b32.xlu0 %v2100, 126
      %v2839 = vpop.permute.xlu0 %2838
      %2840 = vrot.lane.b32.xlu0 %v2101, 126
      %v2841 = vpop.permute.xlu0 %2840
      %2842 = vrot.lane.b32.xlu0 %v2102, 126
      %v2843 = vpop.permute.xlu0 %2842
      %2844 = vrot.lane.b32.xlu0 %v2103, 126
      %v2845 = vpop.permute.xlu0 %2844
      %2846 = vrot.lane.b32.xlu0 %v2104, 126
      %v2847 = vpop.permute.xlu0 %2846
      %2848 = vrot.lane.b32.xlu0 %v2105, 126
      %v2849 = vpop.permute.xlu0 %2848
      %2850 = vrot.lane.b32.xlu0 %v2106, 126
      %v2851 = vpop.permute.xlu0 %2850
      %2852 = vrot.lane.b32.xlu0 %v2107, 126
      %v2853 = vpop.permute.xlu0 %2852
      %2854 = vrot.lane.b32.xlu0 %v2108, 126
      %v2855 = vpop.permute.xlu0 %2854
      %2856 = vrot.lane.b32.xlu0 %v2109, 126
      %v2857 = vpop.permute.xlu0 %2856
      %2858 = vrot.lane.b32.xlu0 %v2110, 126
      %v2859 = vpop.permute.xlu0 %2858
      %2860 = vrot.lane.b32.xlu0 %v2111, 126
      %v2861 = vpop.permute.xlu0 %2860
      %2862 = vrot.lane.b32.xlu0 %v2112, 126
      %v2863 = vpop.permute.xlu0 %2862
      %2864 = vrot.lane.b32.xlu0 %v2113, 126
      %v2865 = vpop.permute.xlu0 %2864
      %2866 = vrot.lane.b32.xlu0 %v2114, 126
      %v2867 = vpop.permute.xlu0 %2866
      %2868 = vrot.lane.b32.xlu0 %v2115, 126
      %v2869 = vpop.permute.xlu0 %2868
      %2870 = vrot.lane.b32.xlu0 %v2116, 126
      %v2871 = vpop.permute.xlu0 %2870
      %2872 = vrot.lane.b32.xlu0 %v2117, 126
      %v2873 = vpop.permute.xlu0 %2872
      %2874 = vrot.lane.b32.xlu0 %v2118, 126
      %v2875 = vpop.permute.xlu0 %2874
      %2876 = vrot.lane.b32.xlu0 %v2119, 126
      %v2877 = vpop.permute.xlu0 %2876
      %2878 = vrot.lane.b32.xlu0 %v2120, 126
      %v2879 = vpop.permute.xlu0 %2878
      %2880 = vrot.lane.b32.xlu0 %v2121, 126
      %v2881 = vpop.permute.xlu0 %2880
      %2882 = vrot.lane.b32.xlu0 %v2122, 126
      %v2883 = vpop.permute.xlu0 %2882
      %2884 = vrot.lane.b32.xlu0 %v2123, 126
      %v2885 = vpop.permute.xlu0 %2884
      %2886 = vrot.lane.b32.xlu0 %v2124, 126
      %v2887 = vpop.permute.xlu0 %2886
      %2888 = vrot.lane.b32.xlu0 %v2125, 126
      %v2889 = vpop.permute.xlu0 %2888
      %2890 = vrot.lane.b32.xlu0 %v2126, 126
      %v2891 = vpop.permute.xlu0 %2890
      %2892 = vrot.lane.b32.xlu0 %v2127, 126
      %v2893 = vpop.permute.xlu0 %2892
      %2894 = vrot.lane.b32.xlu0 %v2128, 126
      %v2895 = vpop.permute.xlu0 %2894
      %2896 = vrot.lane.b32.xlu0 %v2129, 126
      %v2897 = vpop.permute.xlu0 %2896
      %2898 = vrot.lane.b32.xlu0 %v2130, 126
      %v2899 = vpop.permute.xlu0 %2898
      %2900 = vrot.lane.b32.xlu0 %v2131, 126
      %v2901 = vpop.permute.xlu0 %2900
      %v2966 = vadd.f32 %v2581, %v2775
      %v2967 = vadd.f32 %v2582, %v2777
      %v2968 = vadd.f32 %v2583, %v2779
      %v2969 = vadd.f32 %v2584, %v2781
      %v2970 = vadd.f32 %v2585, %v2783
      %v2971 = vadd.f32 %v2586, %v2785
      %v2972 = vadd.f32 %v2587, %v2787
      %v2973 = vadd.f32 %v2588, %v2789
      %v2974 = vadd.f32 %v2589, %v2791
      %v2975 = vadd.f32 %v2590, %v2793
      %v2976 = vadd.f32 %v2591, %v2795
      %v2977 = vadd.f32 %v2592, %v2797
      %v2978 = vadd.f32 %v2593, %v2799
      %v2979 = vadd.f32 %v2594, %v2801
      %v2980 = vadd.f32 %v2595, %v2803
      %v2981 = vadd.f32 %v2596, %v2805
      %v2982 = vadd.f32 %v2597, %v2807
      %v2983 = vadd.f32 %v2598, %v2809
      %v2984 = vadd.f32 %v2599, %v2811
      %v2985 = vadd.f32 %v2600, %v2813
      %v2986 = vadd.f32 %v2601, %v2815
      %v2987 = vadd.f32 %v2602, %v2817
      %v2988 = vadd.f32 %v2603, %v2819
      %v2989 = vadd.f32 %v2604, %v2821
      %v2990 = vadd.f32 %v2605, %v2823
      %v2991 = vadd.f32 %v2606, %v2825
      %v2992 = vadd.f32 %v2607, %v2827
      %v2993 = vadd.f32 %v2608, %v2829
      %v2994 = vadd.f32 %v2609, %v2831
      %v2995 = vadd.f32 %v2610, %v2833
      %v2996 = vadd.f32 %v2611, %v2835
      %v2997 = vadd.f32 %v2612, %v2837
      %v2998 = vadd.f32 %v2613, %v2839
      %v2999 = vadd.f32 %v2614, %v2841
      %v3000 = vadd.f32 %v2615, %v2843
      %v3001 = vadd.f32 %v2616, %v2845
      %v3002 = vadd.f32 %v2617, %v2847
      %v3003 = vadd.f32 %v2618, %v2849
      %v3004 = vadd.f32 %v2619, %v2851
      %v3005 = vadd.f32 %v2620, %v2853
      %v3006 = vadd.f32 %v2621, %v2855
      %v3007 = vadd.f32 %v2622, %v2857
      %v3008 = vadd.f32 %v2623, %v2859
      %v3009 = vadd.f32 %v2624, %v2861
      %v3010 = vadd.f32 %v2625, %v2863
      %v3011 = vadd.f32 %v2626, %v2865
      %v3012 = vadd.f32 %v2627, %v2867
      %v3013 = vadd.f32 %v2628, %v2869
      %v3014 = vadd.f32 %v2629, %v2871
      %v3015 = vadd.f32 %v2630, %v2873
      %v3016 = vadd.f32 %v2631, %v2875
      %v3017 = vadd.f32 %v2632, %v2877
      %v3018 = vadd.f32 %v2633, %v2879
      %v3019 = vadd.f32 %v2634, %v2881
      %v3020 = vadd.f32 %v2635, %v2883
      %v3021 = vadd.f32 %v2636, %v2885
      %v3022 = vadd.f32 %v2637, %v2887
      %v3023 = vadd.f32 %v2638, %v2889
      %v3024 = vadd.f32 %v2639, %v2891
      %v3025 = vadd.f32 %v2640, %v2893
      %v3026 = vadd.f32 %v2641, %v2895
      %v3027 = vadd.f32 %v2642, %v2897
      %v3028 = vadd.f32 %v2643, %v2899
      %v3029 = vadd.f32 %v2644, %v2901
      %v3030 = vsel %vm2773, %v2775, -3e+38
      %v3031 = vsel %vm2773, %v2777, -3e+38
      %v3032 = vsel %vm2773, %v2779, -3e+38
      %v3033 = vsel %vm2773, %v2781, -3e+38
      %v3034 = vsel %vm2773, %v2783, -3e+38
      %v3035 = vsel %vm2773, %v2785, -3e+38
      %v3036 = vsel %vm2773, %v2787, -3e+38
      %v3037 = vsel %vm2773, %v2789, -3e+38
      %v3038 = vsel %vm2773, %v2791, -3e+38
      %v3039 = vsel %vm2773, %v2793, -3e+38
      %v3040 = vsel %vm2773, %v2795, -3e+38
      %v3041 = vsel %vm2773, %v2797, -3e+38
      %v3042 = vsel %vm2773, %v2799, -3e+38
      %v3043 = vsel %vm2773, %v2801, -3e+38
      %v3044 = vsel %vm2773, %v2803, -3e+38
      %v3045 = vsel %vm2773, %v2805, -3e+38
      %v3046 = vsel %vm2773, %v2807, -3e+38
      %v3047 = vsel %vm2773, %v2809, -3e+38
      %v3048 = vsel %vm2773, %v2811, -3e+38
      %v3049 = vsel %vm2773, %v2813, -3e+38
      %v3050 = vsel %vm2773, %v2815, -3e+38
      %v3051 = vsel %vm2773, %v2817, -3e+38
      %v3052 = vsel %vm2773, %v2819, -3e+38
      %v3053 = vsel %vm2773, %v2821, -3e+38
      %v3054 = vsel %vm2773, %v2823, -3e+38
      %v3055 = vsel %vm2773, %v2825, -3e+38
      %v3056 = vsel %vm2773, %v2827, -3e+38
      %v3057 = vsel %vm2773, %v2829, -3e+38
      %v3058 = vsel %vm2773, %v2831, -3e+38
      %v3059 = vsel %vm2773, %v2833, -3e+38
      %v3060 = vsel %vm2773, %v2835, -3e+38
      %v3061 = vsel %vm2773, %v2837, -3e+38
      %v3062 = vsel %vm2773, %v2839, -3e+38
      %v3063 = vsel %vm2773, %v2841, -3e+38
      %v3064 = vsel %vm2773, %v2843, -3e+38
      %v3065 = vsel %vm2773, %v2845, -3e+38
      %v3066 = vsel %vm2773, %v2847, -3e+38
      %v3067 = vsel %vm2773, %v2849, -3e+38
      %v3068 = vsel %vm2773, %v2851, -3e+38
      %v3069 = vsel %vm2773, %v2853, -3e+38
      %v3070 = vsel %vm2773, %v2855, -3e+38
      %v3071 = vsel %vm2773, %v2857, -3e+38
      %v3072 = vsel %vm2773, %v2859, -3e+38
      %v3073 = vsel %vm2773, %v2861, -3e+38
      %v3074 = vsel %vm2773, %v2863, -3e+38
      %v3075 = vsel %vm2773, %v2865, -3e+38
      %v3076 = vsel %vm2773, %v2867, -3e+38
      %v3077 = vsel %vm2773, %v2869, -3e+38
      %v3078 = vsel %vm2773, %v2871, -3e+38
      %v3079 = vsel %vm2773, %v2873, -3e+38
      %v3080 = vsel %vm2773, %v2875, -3e+38
      %v3081 = vsel %vm2773, %v2877, -3e+38
      %v3082 = vsel %vm2773, %v2879, -3e+38
      %v3083 = vsel %vm2773, %v2881, -3e+38
      %v3084 = vsel %vm2773, %v2883, -3e+38
      %v3085 = vsel %vm2773, %v2885, -3e+38
      %v3086 = vsel %vm2773, %v2887, -3e+38
      %v3087 = vsel %vm2773, %v2889, -3e+38
      %v3088 = vsel %vm2773, %v2891, -3e+38
      %v3089 = vsel %vm2773, %v2893, -3e+38
      %v3090 = vsel %vm2773, %v2895, -3e+38
      %v3091 = vsel %vm2773, %v2897, -3e+38
      %v3092 = vsel %vm2773, %v2899, -3e+38
      %v3093 = vsel %vm2773, %v2901, -3e+38
      %v3094 = vmax.f32 %v2709, %v3030
      %v3095 = vmax.f32 %v2710, %v3031
      %v3096 = vmax.f32 %v2711, %v3032
      %v3097 = vmax.f32 %v2712, %v3033
      %v3098 = vmax.f32 %v2713, %v3034
      %v3099 = vmax.f32 %v2714, %v3035
      %v3100 = vmax.f32 %v2715, %v3036
      %v3101 = vmax.f32 %v2716, %v3037
      %v3102 = vmax.f32 %v2717, %v3038
      %v3103 = vmax.f32 %v2718, %v3039
      %v3104 = vmax.f32 %v2719, %v3040
      %v3105 = vmax.f32 %v2720, %v3041
      %v3106 = vmax.f32 %v2721, %v3042
      %v3107 = vmax.f32 %v2722, %v3043
      %v3108 = vmax.f32 %v2723, %v3044
      %v3109 = vmax.f32 %v2724, %v3045
      %v3110 = vmax.f32 %v2725, %v3046
      %v3111 = vmax.f32 %v2726, %v3047
      %v3112 = vmax.f32 %v2727, %v3048
      %v3113 = vmax.f32 %v2728, %v3049
      %v3114 = vmax.f32 %v2729, %v3050
      %v3115 = vmax.f32 %v2730, %v3051
      %v3116 = vmax.f32 %v2731, %v3052
      %v3117 = vmax.f32 %v2732, %v3053
      %v3118 = vmax.f32 %v2733, %v3054
      %v3119 = vmax.f32 %v2734, %v3055
      %v3120 = vmax.f32 %v2735, %v3056
      %v3121 = vmax.f32 %v2736, %v3057
      %v3122 = vmax.f32 %v2737, %v3058
      %v3123 = vmax.f32 %v2738, %v3059
      %v3124 = vmax.f32 %v2739, %v3060
      %v3125 = vmax.f32 %v2740, %v3061
      %v3126 = vmax.f32 %v2741, %v3062
      %v3127 = vmax.f32 %v2742, %v3063
      %v3128 = vmax.f32 %v2743, %v3064
      %v3129 = vmax.f32 %v2744, %v3065
      %v3130 = vmax.f32 %v2745, %v3066
      %v3131 = vmax.f32 %v2746, %v3067
      %v3132 = vmax.f32 %v2747, %v3068
      %v3133 = vmax.f32 %v2748, %v3069
      %v3134 = vmax.f32 %v2749, %v3070
      %v3135 = vmax.f32 %v2750, %v3071
      %v3136 = vmax.f32 %v2751, %v3072
      %v3137 = vmax.f32 %v2752, %v3073
      %v3138 = vmax.f32 %v2753, %v3074
      %v3139 = vmax.f32 %v2754, %v3075
      %v3140 = vmax.f32 %v2755, %v3076
      %v3141 = vmax.f32 %v2756, %v3077
      %v3142 = vmax.f32 %v2757, %v3078
      %v3143 = vmax.f32 %v2758, %v3079
      %v3144 = vmax.f32 %v2759, %v3080
      %v3145 = vmax.f32 %v2760, %v3081
      %v3146 = vmax.f32 %v2761, %v3082
      %v3147 = vmax.f32 %v2762, %v3083
      %v3148 = vmax.f32 %v2763, %v3084
      %v3149 = vmax.f32 %v2764, %v3085
      %v3150 = vmax.f32 %v2765, %v3086
      %v3151 = vmax.f32 %v2766, %v3087
      %v3152 = vmax.f32 %v2767, %v3088
      %v3153 = vmax.f32 %v2768, %v3089
      %v3154 = vmax.f32 %v2769, %v3090
      %v3155 = vmax.f32 %v2770, %v3091
      %v3156 = vmax.f32 %v2771, %v3092
      %v3157 = vmax.f32 %v2772, %v3093
      %vm3158 = vmand %vm2066, %vm1288
      %3159 = vrot.lane.b32.xlu0 %v2068, 125
      %v3160 = vpop.permute.xlu0 %3159
      %3161 = vrot.lane.b32.xlu0 %v2069, 125
      %v3162 = vpop.permute.xlu0 %3161
      %3163 = vrot.lane.b32.xlu0 %v2070, 125
      %v3164 = vpop.permute.xlu0 %3163
      %3165 = vrot.lane.b32.xlu0 %v2071, 125
      %v3166 = vpop.permute.xlu0 %3165
      %3167 = vrot.lane.b32.xlu0 %v2072, 125
      %v3168 = vpop.permute.xlu0 %3167
      %3169 = vrot.lane.b32.xlu0 %v2073, 125
      %v3170 = vpop.permute.xlu0 %3169
      %3171 = vrot.lane.b32.xlu0 %v2074, 125
      %v3172 = vpop.permute.xlu0 %3171
      %3173 = vrot.lane.b32.xlu0 %v2075, 125
      %v3174 = vpop.permute.xlu0 %3173
      %3175 = vrot.lane.b32.xlu0 %v2076, 125
      %v3176 = vpop.permute.xlu0 %3175
      %3177 = vrot.lane.b32.xlu0 %v2077, 125
      %v3178 = vpop.permute.xlu0 %3177
      %3179 = vrot.lane.b32.xlu0 %v2078, 125
      %v3180 = vpop.permute.xlu0 %3179
      %3181 = vrot.lane.b32.xlu0 %v2079, 125
      %v3182 = vpop.permute.xlu0 %3181
      %3183 = vrot.lane.b32.xlu0 %v2080, 125
      %v3184 = vpop.permute.xlu0 %3183
      %3185 = vrot.lane.b32.xlu0 %v2081, 125
      %v3186 = vpop.permute.xlu0 %3185
      %3187 = vrot.lane.b32.xlu0 %v2082, 125
      %v3188 = vpop.permute.xlu0 %3187
      %3189 = vrot.lane.b32.xlu0 %v2083, 125
      %v3190 = vpop.permute.xlu0 %3189
      %3191 = vrot.lane.b32.xlu0 %v2084, 125
      %v3192 = vpop.permute.xlu0 %3191
      %3193 = vrot.lane.b32.xlu0 %v2085, 125
      %v3194 = vpop.permute.xlu0 %3193
      %3195 = vrot.lane.b32.xlu0 %v2086, 125
      %v3196 = vpop.permute.xlu0 %3195
      %3197 = vrot.lane.b32.xlu0 %v2087, 125
      %v3198 = vpop.permute.xlu0 %3197
      %3199 = vrot.lane.b32.xlu0 %v2088, 125
      %v3200 = vpop.permute.xlu0 %3199
      %3201 = vrot.lane.b32.xlu0 %v2089, 125
      %v3202 = vpop.permute.xlu0 %3201
      %3203 = vrot.lane.b32.xlu0 %v2090, 125
      %v3204 = vpop.permute.xlu0 %3203
      %3205 = vrot.lane.b32.xlu0 %v2091, 125
      %v3206 = vpop.permute.xlu0 %3205
      %3207 = vrot.lane.b32.xlu0 %v2092, 125
      %v3208 = vpop.permute.xlu0 %3207
      %3209 = vrot.lane.b32.xlu0 %v2093, 125
      %v3210 = vpop.permute.xlu0 %3209
      %3211 = vrot.lane.b32.xlu0 %v2094, 125
      %v3212 = vpop.permute.xlu0 %3211
      %3213 = vrot.lane.b32.xlu0 %v2095, 125
      %v3214 = vpop.permute.xlu0 %3213
      %3215 = vrot.lane.b32.xlu0 %v2096, 125
      %v3216 = vpop.permute.xlu0 %3215
      %3217 = vrot.lane.b32.xlu0 %v2097, 125
      %v3218 = vpop.permute.xlu0 %3217
      %3219 = vrot.lane.b32.xlu0 %v2098, 125
      %v3220 = vpop.permute.xlu0 %3219
      %3221 = vrot.lane.b32.xlu0 %v2099, 125
      %v3222 = vpop.permute.xlu0 %3221
      %3223 = vrot.lane.b32.xlu0 %v2100, 125
      %v3224 = vpop.permute.xlu0 %3223
      %3225 = vrot.lane.b32.xlu0 %v2101, 125
      %v3226 = vpop.permute.xlu0 %3225
      %3227 = vrot.lane.b32.xlu0 %v2102, 125
      %v3228 = vpop.permute.xlu0 %3227
      %3229 = vrot.lane.b32.xlu0 %v2103, 125
      %v3230 = vpop.permute.xlu0 %3229
      %3231 = vrot.lane.b32.xlu0 %v2104, 125
      %v3232 = vpop.permute.xlu0 %3231
      %3233 = vrot.lane.b32.xlu0 %v2105, 125
      %v3234 = vpop.permute.xlu0 %3233
      %3235 = vrot.lane.b32.xlu0 %v2106, 125
      %v3236 = vpop.permute.xlu0 %3235
      %3237 = vrot.lane.b32.xlu0 %v2107, 125
      %v3238 = vpop.permute.xlu0 %3237
      %3239 = vrot.lane.b32.xlu0 %v2108, 125
      %v3240 = vpop.permute.xlu0 %3239
      %3241 = vrot.lane.b32.xlu0 %v2109, 125
      %v3242 = vpop.permute.xlu0 %3241
      %3243 = vrot.lane.b32.xlu0 %v2110, 125
      %v3244 = vpop.permute.xlu0 %3243
      %3245 = vrot.lane.b32.xlu0 %v2111, 125
      %v3246 = vpop.permute.xlu0 %3245
      %3247 = vrot.lane.b32.xlu0 %v2112, 125
      %v3248 = vpop.permute.xlu0 %3247
      %3249 = vrot.lane.b32.xlu0 %v2113, 125
      %v3250 = vpop.permute.xlu0 %3249
      %3251 = vrot.lane.b32.xlu0 %v2114, 125
      %v3252 = vpop.permute.xlu0 %3251
      %3253 = vrot.lane.b32.xlu0 %v2115, 125
      %v3254 = vpop.permute.xlu0 %3253
      %3255 = vrot.lane.b32.xlu0 %v2116, 125
      %v3256 = vpop.permute.xlu0 %3255
      %3257 = vrot.lane.b32.xlu0 %v2117, 125
      %v3258 = vpop.permute.xlu0 %3257
      %3259 = vrot.lane.b32.xlu0 %v2118, 125
      %v3260 = vpop.permute.xlu0 %3259
      %3261 = vrot.lane.b32.xlu0 %v2119, 125
      %v3262 = vpop.permute.xlu0 %3261
      %3263 = vrot.lane.b32.xlu0 %v2120, 125
      %v3264 = vpop.permute.xlu0 %3263
      %3265 = vrot.lane.b32.xlu0 %v2121, 125
      %v3266 = vpop.permute.xlu0 %3265
      %3267 = vrot.lane.b32.xlu0 %v2122, 125
      %v3268 = vpop.permute.xlu0 %3267
      %3269 = vrot.lane.b32.xlu0 %v2123, 125
      %v3270 = vpop.permute.xlu0 %3269
      %3271 = vrot.lane.b32.xlu0 %v2124, 125
      %v3272 = vpop.permute.xlu0 %3271
      %3273 = vrot.lane.b32.xlu0 %v2125, 125
      %v3274 = vpop.permute.xlu0 %3273
      %3275 = vrot.lane.b32.xlu0 %v2126, 125
      %v3276 = vpop.permute.xlu0 %3275
      %3277 = vrot.lane.b32.xlu0 %v2127, 125
      %v3278 = vpop.permute.xlu0 %3277
      %3279 = vrot.lane.b32.xlu0 %v2128, 125
      %v3280 = vpop.permute.xlu0 %3279
      %3281 = vrot.lane.b32.xlu0 %v2129, 125
      %v3282 = vpop.permute.xlu0 %3281
      %3283 = vrot.lane.b32.xlu0 %v2130, 125
      %v3284 = vpop.permute.xlu0 %3283
      %3285 = vrot.lane.b32.xlu0 %v2131, 125
      %v3286 = vpop.permute.xlu0 %3285
      %v3351 = vadd.f32 %v2966, %v3160
      %v3352 = vadd.f32 %v2967, %v3162
      %v3353 = vadd.f32 %v2968, %v3164
      %v3354 = vadd.f32 %v2969, %v3166
      %v3355 = vadd.f32 %v2970, %v3168
      %v3356 = vadd.f32 %v2971, %v3170
      %v3357 = vadd.f32 %v2972, %v3172
      %v3358 = vadd.f32 %v2973, %v3174
      %v3359 = vadd.f32 %v2974, %v3176
      %v3360 = vadd.f32 %v2975, %v3178
      %v3361 = vadd.f32 %v2976, %v3180
      %v3362 = vadd.f32 %v2977, %v3182
      %v3363 = vadd.f32 %v2978, %v3184
      %v3364 = vadd.f32 %v2979, %v3186
      %v3365 = vadd.f32 %v2980, %v3188
      %v3366 = vadd.f32 %v2981, %v3190
      %v3367 = vadd.f32 %v2982, %v3192
      %v3368 = vadd.f32 %v2983, %v3194
      %v3369 = vadd.f32 %v2984, %v3196
      %v3370 = vadd.f32 %v2985, %v3198
      %v3371 = vadd.f32 %v2986, %v3200
      %v3372 = vadd.f32 %v2987, %v3202
      %v3373 = vadd.f32 %v2988, %v3204
      %v3374 = vadd.f32 %v2989, %v3206
      %v3375 = vadd.f32 %v2990, %v3208
      %v3376 = vadd.f32 %v2991, %v3210
      %v3377 = vadd.f32 %v2992, %v3212
      %v3378 = vadd.f32 %v2993, %v3214
      %v3379 = vadd.f32 %v2994, %v3216
      %v3380 = vadd.f32 %v2995, %v3218
      %v3381 = vadd.f32 %v2996, %v3220
      %v3382 = vadd.f32 %v2997, %v3222
      %v3383 = vadd.f32 %v2998, %v3224
      %v3384 = vadd.f32 %v2999, %v3226
      %v3385 = vadd.f32 %v3000, %v3228
      %v3386 = vadd.f32 %v3001, %v3230
      %v3387 = vadd.f32 %v3002, %v3232
      %v3388 = vadd.f32 %v3003, %v3234
      %v3389 = vadd.f32 %v3004, %v3236
      %v3390 = vadd.f32 %v3005, %v3238
      %v3391 = vadd.f32 %v3006, %v3240
      %v3392 = vadd.f32 %v3007, %v3242
      %v3393 = vadd.f32 %v3008, %v3244
      %v3394 = vadd.f32 %v3009, %v3246
      %v3395 = vadd.f32 %v3010, %v3248
      %v3396 = vadd.f32 %v3011, %v3250
      %v3397 = vadd.f32 %v3012, %v3252
      %v3398 = vadd.f32 %v3013, %v3254
      %v3399 = vadd.f32 %v3014, %v3256
      %v3400 = vadd.f32 %v3015, %v3258
      %v3401 = vadd.f32 %v3016, %v3260
      %v3402 = vadd.f32 %v3017, %v3262
      %v3403 = vadd.f32 %v3018, %v3264
      %v3404 = vadd.f32 %v3019, %v3266
      %v3405 = vadd.f32 %v3020, %v3268
      %v3406 = vadd.f32 %v3021, %v3270
      %v3407 = vadd.f32 %v3022, %v3272
      %v3408 = vadd.f32 %v3023, %v3274
      %v3409 = vadd.f32 %v3024, %v3276
      %v3410 = vadd.f32 %v3025, %v3278
      %v3411 = vadd.f32 %v3026, %v3280
      %v3412 = vadd.f32 %v3027, %v3282
      %v3413 = vadd.f32 %v3028, %v3284
      %v3414 = vadd.f32 %v3029, %v3286
      %v3415 = vsel %vm3158, %v3160, -3e+38
      %v3416 = vsel %vm3158, %v3162, -3e+38
      %v3417 = vsel %vm3158, %v3164, -3e+38
      %v3418 = vsel %vm3158, %v3166, -3e+38
      %v3419 = vsel %vm3158, %v3168, -3e+38
      %v3420 = vsel %vm3158, %v3170, -3e+38
      %v3421 = vsel %vm3158, %v3172, -3e+38
      %v3422 = vsel %vm3158, %v3174, -3e+38
      %v3423 = vsel %vm3158, %v3176, -3e+38
      %v3424 = vsel %vm3158, %v3178, -3e+38
      %v3425 = vsel %vm3158, %v3180, -3e+38
      %v3426 = vsel %vm3158, %v3182, -3e+38
      %v3427 = vsel %vm3158, %v3184, -3e+38
      %v3428 = vsel %vm3158, %v3186, -3e+38
      %v3429 = vsel %vm3158, %v3188, -3e+38
      %v3430 = vsel %vm3158, %v3190, -3e+38
      %v3431 = vsel %vm3158, %v3192, -3e+38
      %v3432 = vsel %vm3158, %v3194, -3e+38
      %v3433 = vsel %vm3158, %v3196, -3e+38
      %v3434 = vsel %vm3158, %v3198, -3e+38
      %v3435 = vsel %vm3158, %v3200, -3e+38
      %v3436 = vsel %vm3158, %v3202, -3e+38
      %v3437 = vsel %vm3158, %v3204, -3e+38
      %v3438 = vsel %vm3158, %v3206, -3e+38
      %v3439 = vsel %vm3158, %v3208, -3e+38
      %v3440 = vsel %vm3158, %v3210, -3e+38
      %v3441 = vsel %vm3158, %v3212, -3e+38
      %v3442 = vsel %vm3158, %v3214, -3e+38
      %v3443 = vsel %vm3158, %v3216, -3e+38
      %v3444 = vsel %vm3158, %v3218, -3e+38
      %v3445 = vsel %vm3158, %v3220, -3e+38
      %v3446 = vsel %vm3158, %v3222, -3e+38
      %v3447 = vsel %vm3158, %v3224, -3e+38
      %v3448 = vsel %vm3158, %v3226, -3e+38
      %v3449 = vsel %vm3158, %v3228, -3e+38
      %v3450 = vsel %vm3158, %v3230, -3e+38
      %v3451 = vsel %vm3158, %v3232, -3e+38
      %v3452 = vsel %vm3158, %v3234, -3e+38
      %v3453 = vsel %vm3158, %v3236, -3e+38
      %v3454 = vsel %vm3158, %v3238, -3e+38
      %v3455 = vsel %vm3158, %v3240, -3e+38
      %v3456 = vsel %vm3158, %v3242, -3e+38
      %v3457 = vsel %vm3158, %v3244, -3e+38
      %v3458 = vsel %vm3158, %v3246, -3e+38
      %v3459 = vsel %vm3158, %v3248, -3e+38
      %v3460 = vsel %vm3158, %v3250, -3e+38
      %v3461 = vsel %vm3158, %v3252, -3e+38
      %v3462 = vsel %vm3158, %v3254, -3e+38
      %v3463 = vsel %vm3158, %v3256, -3e+38
      %v3464 = vsel %vm3158, %v3258, -3e+38
      %v3465 = vsel %vm3158, %v3260, -3e+38
      %v3466 = vsel %vm3158, %v3262, -3e+38
      %v3467 = vsel %vm3158, %v3264, -3e+38
      %v3468 = vsel %vm3158, %v3266, -3e+38
      %v3469 = vsel %vm3158, %v3268, -3e+38
      %v3470 = vsel %vm3158, %v3270, -3e+38
      %v3471 = vsel %vm3158, %v3272, -3e+38
      %v3472 = vsel %vm3158, %v3274, -3e+38
      %v3473 = vsel %vm3158, %v3276, -3e+38
      %v3474 = vsel %vm3158, %v3278, -3e+38
      %v3475 = vsel %vm3158, %v3280, -3e+38
      %v3476 = vsel %vm3158, %v3282, -3e+38
      %v3477 = vsel %vm3158, %v3284, -3e+38
      %v3478 = vsel %vm3158, %v3286, -3e+38
      %v3479 = vmax.f32 %v3094, %v3415
      %v3480 = vmax.f32 %v3095, %v3416
      %v3481 = vmax.f32 %v3096, %v3417
      %v3482 = vmax.f32 %v3097, %v3418
      %v3483 = vmax.f32 %v3098, %v3419
      %v3484 = vmax.f32 %v3099, %v3420
      %v3485 = vmax.f32 %v3100, %v3421
      %v3486 = vmax.f32 %v3101, %v3422
      %v3487 = vmax.f32 %v3102, %v3423
      %v3488 = vmax.f32 %v3103, %v3424
      %v3489 = vmax.f32 %v3104, %v3425
      %v3490 = vmax.f32 %v3105, %v3426
      %v3491 = vmax.f32 %v3106, %v3427
      %v3492 = vmax.f32 %v3107, %v3428
      %v3493 = vmax.f32 %v3108, %v3429
      %v3494 = vmax.f32 %v3109, %v3430
      %v3495 = vmax.f32 %v3110, %v3431
      %v3496 = vmax.f32 %v3111, %v3432
      %v3497 = vmax.f32 %v3112, %v3433
      %v3498 = vmax.f32 %v3113, %v3434
      %v3499 = vmax.f32 %v3114, %v3435
      %v3500 = vmax.f32 %v3115, %v3436
      %v3501 = vmax.f32 %v3116, %v3437
      %v3502 = vmax.f32 %v3117, %v3438
      %v3503 = vmax.f32 %v3118, %v3439
      %v3504 = vmax.f32 %v3119, %v3440
      %v3505 = vmax.f32 %v3120, %v3441
      %v3506 = vmax.f32 %v3121, %v3442
      %v3507 = vmax.f32 %v3122, %v3443
      %v3508 = vmax.f32 %v3123, %v3444
      %v3509 = vmax.f32 %v3124, %v3445
      %v3510 = vmax.f32 %v3125, %v3446
      %v3511 = vmax.f32 %v3126, %v3447
      %v3512 = vmax.f32 %v3127, %v3448
      %v3513 = vmax.f32 %v3128, %v3449
      %v3514 = vmax.f32 %v3129, %v3450
      %v3515 = vmax.f32 %v3130, %v3451
      %v3516 = vmax.f32 %v3131, %v3452
      %v3517 = vmax.f32 %v3132, %v3453
      %v3518 = vmax.f32 %v3133, %v3454
      %v3519 = vmax.f32 %v3134, %v3455
      %v3520 = vmax.f32 %v3135, %v3456
      %v3521 = vmax.f32 %v3136, %v3457
      %v3522 = vmax.f32 %v3137, %v3458
      %v3523 = vmax.f32 %v3138, %v3459
      %v3524 = vmax.f32 %v3139, %v3460
      %v3525 = vmax.f32 %v3140, %v3461
      %v3526 = vmax.f32 %v3141, %v3462
      %v3527 = vmax.f32 %v3142, %v3463
      %v3528 = vmax.f32 %v3143, %v3464
      %v3529 = vmax.f32 %v3144, %v3465
      %v3530 = vmax.f32 %v3145, %v3466
      %v3531 = vmax.f32 %v3146, %v3467
      %v3532 = vmax.f32 %v3147, %v3468
      %v3533 = vmax.f32 %v3148, %v3469
      %v3534 = vmax.f32 %v3149, %v3470
      %v3535 = vmax.f32 %v3150, %v3471
      %v3536 = vmax.f32 %v3151, %v3472
      %v3537 = vmax.f32 %v3152, %v3473
      %v3538 = vmax.f32 %v3153, %v3474
      %v3539 = vmax.f32 %v3154, %v3475
      %v3540 = vmax.f32 %v3155, %v3476
      %v3541 = vmax.f32 %v3156, %v3477
      %v3542 = vmax.f32 %v3157, %v3478
      %vm3543 = vmand %vm2066, %vm1677
      %3544 = vrot.lane.b32.xlu0 %v2068, 124
      %v3545 = vpop.permute.xlu0 %3544
      %3546 = vrot.lane.b32.xlu0 %v2069, 124
      %v3547 = vpop.permute.xlu0 %3546
      %3548 = vrot.lane.b32.xlu0 %v2070, 124
      %v3549 = vpop.permute.xlu0 %3548
      %3550 = vrot.lane.b32.xlu0 %v2071, 124
      %v3551 = vpop.permute.xlu0 %3550
      %3552 = vrot.lane.b32.xlu0 %v2072, 124
      %v3553 = vpop.permute.xlu0 %3552
      %3554 = vrot.lane.b32.xlu0 %v2073, 124
      %v3555 = vpop.permute.xlu0 %3554
      %3556 = vrot.lane.b32.xlu0 %v2074, 124
      %v3557 = vpop.permute.xlu0 %3556
      %3558 = vrot.lane.b32.xlu0 %v2075, 124
      %v3559 = vpop.permute.xlu0 %3558
      %3560 = vrot.lane.b32.xlu0 %v2076, 124
      %v3561 = vpop.permute.xlu0 %3560
      %3562 = vrot.lane.b32.xlu0 %v2077, 124
      %v3563 = vpop.permute.xlu0 %3562
      %3564 = vrot.lane.b32.xlu0 %v2078, 124
      %v3565 = vpop.permute.xlu0 %3564
      %3566 = vrot.lane.b32.xlu0 %v2079, 124
      %v3567 = vpop.permute.xlu0 %3566
      %3568 = vrot.lane.b32.xlu0 %v2080, 124
      %v3569 = vpop.permute.xlu0 %3568
      %3570 = vrot.lane.b32.xlu0 %v2081, 124
      %v3571 = vpop.permute.xlu0 %3570
      %3572 = vrot.lane.b32.xlu0 %v2082, 124
      %v3573 = vpop.permute.xlu0 %3572
      %3574 = vrot.lane.b32.xlu0 %v2083, 124
      %v3575 = vpop.permute.xlu0 %3574
      %3576 = vrot.lane.b32.xlu0 %v2084, 124
      %v3577 = vpop.permute.xlu0 %3576
      %3578 = vrot.lane.b32.xlu0 %v2085, 124
      %v3579 = vpop.permute.xlu0 %3578
      %3580 = vrot.lane.b32.xlu0 %v2086, 124
      %v3581 = vpop.permute.xlu0 %3580
      %3582 = vrot.lane.b32.xlu0 %v2087, 124
      %v3583 = vpop.permute.xlu0 %3582
      %3584 = vrot.lane.b32.xlu0 %v2088, 124
      %v3585 = vpop.permute.xlu0 %3584
      %3586 = vrot.lane.b32.xlu0 %v2089, 124
      %v3587 = vpop.permute.xlu0 %3586
      %3588 = vrot.lane.b32.xlu0 %v2090, 124
      %v3589 = vpop.permute.xlu0 %3588
      %3590 = vrot.lane.b32.xlu0 %v2091, 124
      %v3591 = vpop.permute.xlu0 %3590
      %3592 = vrot.lane.b32.xlu0 %v2092, 124
      %v3593 = vpop.permute.xlu0 %3592
      %3594 = vrot.lane.b32.xlu0 %v2093, 124
      %v3595 = vpop.permute.xlu0 %3594
      %3596 = vrot.lane.b32.xlu0 %v2094, 124
      %v3597 = vpop.permute.xlu0 %3596
      %3598 = vrot.lane.b32.xlu0 %v2095, 124
      %v3599 = vpop.permute.xlu0 %3598
      %3600 = vrot.lane.b32.xlu0 %v2096, 124
      %v3601 = vpop.permute.xlu0 %3600
      %3602 = vrot.lane.b32.xlu0 %v2097, 124
      %v3603 = vpop.permute.xlu0 %3602
      %3604 = vrot.lane.b32.xlu0 %v2098, 124
      %v3605 = vpop.permute.xlu0 %3604
      %3606 = vrot.lane.b32.xlu0 %v2099, 124
      %v3607 = vpop.permute.xlu0 %3606
      %3608 = vrot.lane.b32.xlu0 %v2100, 124
      %v3609 = vpop.permute.xlu0 %3608
      %3610 = vrot.lane.b32.xlu0 %v2101, 124
      %v3611 = vpop.permute.xlu0 %3610
      %3612 = vrot.lane.b32.xlu0 %v2102, 124
      %v3613 = vpop.permute.xlu0 %3612
      %3614 = vrot.lane.b32.xlu0 %v2103, 124
      %v3615 = vpop.permute.xlu0 %3614
      %3616 = vrot.lane.b32.xlu0 %v2104, 124
      %v3617 = vpop.permute.xlu0 %3616
      %3618 = vrot.lane.b32.xlu0 %v2105, 124
      %v3619 = vpop.permute.xlu0 %3618
      %3620 = vrot.lane.b32.xlu0 %v2106, 124
      %v3621 = vpop.permute.xlu0 %3620
      %3622 = vrot.lane.b32.xlu0 %v2107, 124
      %v3623 = vpop.permute.xlu0 %3622
      %3624 = vrot.lane.b32.xlu0 %v2108, 124
      %v3625 = vpop.permute.xlu0 %3624
      %3626 = vrot.lane.b32.xlu0 %v2109, 124
      %v3627 = vpop.permute.xlu0 %3626
      %3628 = vrot.lane.b32.xlu0 %v2110, 124
      %v3629 = vpop.permute.xlu0 %3628
      %3630 = vrot.lane.b32.xlu0 %v2111, 124
      %v3631 = vpop.permute.xlu0 %3630
      %3632 = vrot.lane.b32.xlu0 %v2112, 124
      %v3633 = vpop.permute.xlu0 %3632
      %3634 = vrot.lane.b32.xlu0 %v2113, 124
      %v3635 = vpop.permute.xlu0 %3634
      %3636 = vrot.lane.b32.xlu0 %v2114, 124
      %v3637 = vpop.permute.xlu0 %3636
      %3638 = vrot.lane.b32.xlu0 %v2115, 124
      %v3639 = vpop.permute.xlu0 %3638
      %3640 = vrot.lane.b32.xlu0 %v2116, 124
      %v3641 = vpop.permute.xlu0 %3640
      %3642 = vrot.lane.b32.xlu0 %v2117, 124
      %v3643 = vpop.permute.xlu0 %3642
      %3644 = vrot.lane.b32.xlu0 %v2118, 124
      %v3645 = vpop.permute.xlu0 %3644
      %3646 = vrot.lane.b32.xlu0 %v2119, 124
      %v3647 = vpop.permute.xlu0 %3646
      %3648 = vrot.lane.b32.xlu0 %v2120, 124
      %v3649 = vpop.permute.xlu0 %3648
      %3650 = vrot.lane.b32.xlu0 %v2121, 124
      %v3651 = vpop.permute.xlu0 %3650
      %3652 = vrot.lane.b32.xlu0 %v2122, 124
      %v3653 = vpop.permute.xlu0 %3652
      %3654 = vrot.lane.b32.xlu0 %v2123, 124
      %v3655 = vpop.permute.xlu0 %3654
      %3656 = vrot.lane.b32.xlu0 %v2124, 124
      %v3657 = vpop.permute.xlu0 %3656
      %3658 = vrot.lane.b32.xlu0 %v2125, 124
      %v3659 = vpop.permute.xlu0 %3658
      %3660 = vrot.lane.b32.xlu0 %v2126, 124
      %v3661 = vpop.permute.xlu0 %3660
      %3662 = vrot.lane.b32.xlu0 %v2127, 124
      %v3663 = vpop.permute.xlu0 %3662
      %3664 = vrot.lane.b32.xlu0 %v2128, 124
      %v3665 = vpop.permute.xlu0 %3664
      %3666 = vrot.lane.b32.xlu0 %v2129, 124
      %v3667 = vpop.permute.xlu0 %3666
      %3668 = vrot.lane.b32.xlu0 %v2130, 124
      %v3669 = vpop.permute.xlu0 %3668
      %3670 = vrot.lane.b32.xlu0 %v2131, 124
      %v3671 = vpop.permute.xlu0 %3670
      %v3736 = vadd.f32 %v3351, %v3545
      %v3737 = vadd.f32 %v3352, %v3547
      %v3738 = vadd.f32 %v3353, %v3549
      %v3739 = vadd.f32 %v3354, %v3551
      %v3740 = vadd.f32 %v3355, %v3553
      %v3741 = vadd.f32 %v3356, %v3555
      %v3742 = vadd.f32 %v3357, %v3557
      %v3743 = vadd.f32 %v3358, %v3559
      %v3744 = vadd.f32 %v3359, %v3561
      %v3745 = vadd.f32 %v3360, %v3563
      %v3746 = vadd.f32 %v3361, %v3565
      %v3747 = vadd.f32 %v3362, %v3567
      %v3748 = vadd.f32 %v3363, %v3569
      %v3749 = vadd.f32 %v3364, %v3571
      %v3750 = vadd.f32 %v3365, %v3573
      %v3751 = vadd.f32 %v3366, %v3575
      %v3752 = vadd.f32 %v3367, %v3577
      %v3753 = vadd.f32 %v3368, %v3579
      %v3754 = vadd.f32 %v3369, %v3581
      %v3755 = vadd.f32 %v3370, %v3583
      %v3756 = vadd.f32 %v3371, %v3585
      %v3757 = vadd.f32 %v3372, %v3587
      %v3758 = vadd.f32 %v3373, %v3589
      %v3759 = vadd.f32 %v3374, %v3591
      %v3760 = vadd.f32 %v3375, %v3593
      %v3761 = vadd.f32 %v3376, %v3595
      %v3762 = vadd.f32 %v3377, %v3597
      %v3763 = vadd.f32 %v3378, %v3599
      %v3764 = vadd.f32 %v3379, %v3601
      %v3765 = vadd.f32 %v3380, %v3603
      %v3766 = vadd.f32 %v3381, %v3605
      %v3767 = vadd.f32 %v3382, %v3607
      %v3768 = vadd.f32 %v3383, %v3609
      %v3769 = vadd.f32 %v3384, %v3611
      %v3770 = vadd.f32 %v3385, %v3613
      %v3771 = vadd.f32 %v3386, %v3615
      %v3772 = vadd.f32 %v3387, %v3617
      %v3773 = vadd.f32 %v3388, %v3619
      %v3774 = vadd.f32 %v3389, %v3621
      %v3775 = vadd.f32 %v3390, %v3623
      %v3776 = vadd.f32 %v3391, %v3625
      %v3777 = vadd.f32 %v3392, %v3627
      %v3778 = vadd.f32 %v3393, %v3629
      %v3779 = vadd.f32 %v3394, %v3631
      %v3780 = vadd.f32 %v3395, %v3633
      %v3781 = vadd.f32 %v3396, %v3635
      %v3782 = vadd.f32 %v3397, %v3637
      %v3783 = vadd.f32 %v3398, %v3639
      %v3784 = vadd.f32 %v3399, %v3641
      %v3785 = vadd.f32 %v3400, %v3643
      %v3786 = vadd.f32 %v3401, %v3645
      %v3787 = vadd.f32 %v3402, %v3647
      %v3788 = vadd.f32 %v3403, %v3649
      %v3789 = vadd.f32 %v3404, %v3651
      %v3790 = vadd.f32 %v3405, %v3653
      %v3791 = vadd.f32 %v3406, %v3655
      %v3792 = vadd.f32 %v3407, %v3657
      %v3793 = vadd.f32 %v3408, %v3659
      %v3794 = vadd.f32 %v3409, %v3661
      %v3795 = vadd.f32 %v3410, %v3663
      %v3796 = vadd.f32 %v3411, %v3665
      %v3797 = vadd.f32 %v3412, %v3667
      %v3798 = vadd.f32 %v3413, %v3669
      %v3799 = vadd.f32 %v3414, %v3671
      %v3800 = vsel %vm3543, %v3545, -3e+38
      %v3801 = vsel %vm3543, %v3547, -3e+38
      %v3802 = vsel %vm3543, %v3549, -3e+38
      %v3803 = vsel %vm3543, %v3551, -3e+38
      %v3804 = vsel %vm3543, %v3553, -3e+38
      %v3805 = vsel %vm3543, %v3555, -3e+38
      %v3806 = vsel %vm3543, %v3557, -3e+38
      %v3807 = vsel %vm3543, %v3559, -3e+38
      %v3808 = vsel %vm3543, %v3561, -3e+38
      %v3809 = vsel %vm3543, %v3563, -3e+38
      %v3810 = vsel %vm3543, %v3565, -3e+38
      %v3811 = vsel %vm3543, %v3567, -3e+38
      %v3812 = vsel %vm3543, %v3569, -3e+38
      %v3813 = vsel %vm3543, %v3571, -3e+38
      %v3814 = vsel %vm3543, %v3573, -3e+38
      %v3815 = vsel %vm3543, %v3575, -3e+38
      %v3816 = vsel %vm3543, %v3577, -3e+38
      %v3817 = vsel %vm3543, %v3579, -3e+38
      %v3818 = vsel %vm3543, %v3581, -3e+38
      %v3819 = vsel %vm3543, %v3583, -3e+38
      %v3820 = vsel %vm3543, %v3585, -3e+38
      %v3821 = vsel %vm3543, %v3587, -3e+38
      %v3822 = vsel %vm3543, %v3589, -3e+38
      %v3823 = vsel %vm3543, %v3591, -3e+38
      %v3824 = vsel %vm3543, %v3593, -3e+38
      %v3825 = vsel %vm3543, %v3595, -3e+38
      %v3826 = vsel %vm3543, %v3597, -3e+38
      %v3827 = vsel %vm3543, %v3599, -3e+38
      %v3828 = vsel %vm3543, %v3601, -3e+38
      %v3829 = vsel %vm3543, %v3603, -3e+38
      %v3830 = vsel %vm3543, %v3605, -3e+38
      %v3831 = vsel %vm3543, %v3607, -3e+38
      %v3832 = vsel %vm3543, %v3609, -3e+38
      %v3833 = vsel %vm3543, %v3611, -3e+38
      %v3834 = vsel %vm3543, %v3613, -3e+38
      %v3835 = vsel %vm3543, %v3615, -3e+38
      %v3836 = vsel %vm3543, %v3617, -3e+38
      %v3837 = vsel %vm3543, %v3619, -3e+38
      %v3838 = vsel %vm3543, %v3621, -3e+38
      %v3839 = vsel %vm3543, %v3623, -3e+38
      %v3840 = vsel %vm3543, %v3625, -3e+38
      %v3841 = vsel %vm3543, %v3627, -3e+38
      %v3842 = vsel %vm3543, %v3629, -3e+38
      %v3843 = vsel %vm3543, %v3631, -3e+38
      %v3844 = vsel %vm3543, %v3633, -3e+38
      %v3845 = vsel %vm3543, %v3635, -3e+38
      %v3846 = vsel %vm3543, %v3637, -3e+38
      %v3847 = vsel %vm3543, %v3639, -3e+38
      %v3848 = vsel %vm3543, %v3641, -3e+38
      %v3849 = vsel %vm3543, %v3643, -3e+38
      %v3850 = vsel %vm3543, %v3645, -3e+38
      %v3851 = vsel %vm3543, %v3647, -3e+38
      %v3852 = vsel %vm3543, %v3649, -3e+38
      %v3853 = vsel %vm3543, %v3651, -3e+38
      %v3854 = vsel %vm3543, %v3653, -3e+38
      %v3855 = vsel %vm3543, %v3655, -3e+38
      %v3856 = vsel %vm3543, %v3657, -3e+38
      %v3857 = vsel %vm3543, %v3659, -3e+38
      %v3858 = vsel %vm3543, %v3661, -3e+38
      %v3859 = vsel %vm3543, %v3663, -3e+38
      %v3860 = vsel %vm3543, %v3665, -3e+38
      %v3861 = vsel %vm3543, %v3667, -3e+38
      %v3862 = vsel %vm3543, %v3669, -3e+38
      %v3863 = vsel %vm3543, %v3671, -3e+38
      %v3864 = vmax.f32 %v3479, %v3800
      %v3865 = vmax.f32 %v3480, %v3801
      %v3866 = vmax.f32 %v3481, %v3802
      %v3867 = vmax.f32 %v3482, %v3803
      %v3868 = vmax.f32 %v3483, %v3804
      %v3869 = vmax.f32 %v3484, %v3805
      %v3870 = vmax.f32 %v3485, %v3806
      %v3871 = vmax.f32 %v3486, %v3807
      %v3872 = vmax.f32 %v3487, %v3808
      %v3873 = vmax.f32 %v3488, %v3809
      %v3874 = vmax.f32 %v3489, %v3810
      %v3875 = vmax.f32 %v3490, %v3811
      %v3876 = vmax.f32 %v3491, %v3812
      %v3877 = vmax.f32 %v3492, %v3813
      %v3878 = vmax.f32 %v3493, %v3814
      %v3879 = vmax.f32 %v3494, %v3815
      %v3880 = vmax.f32 %v3495, %v3816
      %v3881 = vmax.f32 %v3496, %v3817
      %v3882 = vmax.f32 %v3497, %v3818
      %v3883 = vmax.f32 %v3498, %v3819
      %v3884 = vmax.f32 %v3499, %v3820
      %v3885 = vmax.f32 %v3500, %v3821
      %v3886 = vmax.f32 %v3501, %v3822
      %v3887 = vmax.f32 %v3502, %v3823
      %v3888 = vmax.f32 %v3503, %v3824
      %v3889 = vmax.f32 %v3504, %v3825
      %v3890 = vmax.f32 %v3505, %v3826
      %v3891 = vmax.f32 %v3506, %v3827
      %v3892 = vmax.f32 %v3507, %v3828
      %v3893 = vmax.f32 %v3508, %v3829
      %v3894 = vmax.f32 %v3509, %v3830
      %v3895 = vmax.f32 %v3510, %v3831
      %v3896 = vmax.f32 %v3511, %v3832
      %v3897 = vmax.f32 %v3512, %v3833
      %v3898 = vmax.f32 %v3513, %v3834
      %v3899 = vmax.f32 %v3514, %v3835
      %v3900 = vmax.f32 %v3515, %v3836
      %v3901 = vmax.f32 %v3516, %v3837
      %v3902 = vmax.f32 %v3517, %v3838
      %v3903 = vmax.f32 %v3518, %v3839
      %v3904 = vmax.f32 %v3519, %v3840
      %v3905 = vmax.f32 %v3520, %v3841
      %v3906 = vmax.f32 %v3521, %v3842
      %v3907 = vmax.f32 %v3522, %v3843
      %v3908 = vmax.f32 %v3523, %v3844
      %v3909 = vmax.f32 %v3524, %v3845
      %v3910 = vmax.f32 %v3525, %v3846
      %v3911 = vmax.f32 %v3526, %v3847
      %v3912 = vmax.f32 %v3527, %v3848
      %v3913 = vmax.f32 %v3528, %v3849
      %v3914 = vmax.f32 %v3529, %v3850
      %v3915 = vmax.f32 %v3530, %v3851
      %v3916 = vmax.f32 %v3531, %v3852
      %v3917 = vmax.f32 %v3532, %v3853
      %v3918 = vmax.f32 %v3533, %v3854
      %v3919 = vmax.f32 %v3534, %v3855
      %v3920 = vmax.f32 %v3535, %v3856
      %v3921 = vmax.f32 %v3536, %v3857
      %v3922 = vmax.f32 %v3537, %v3858
      %v3923 = vmax.f32 %v3538, %v3859
      %v3924 = vmax.f32 %v3539, %v3860
      %v3925 = vmax.f32 %v3540, %v3861
      %v3926 = vmax.f32 %v3541, %v3862
      %v3927 = vmax.f32 %v3542, %v3863
      %v3928 = vadd.s32 %v179, 2
      %vm3929 = vcmp.ge.s32.totalorder %v3928, 1
      %vm3930 = vcmp.lt.s32.totalorder %v3928, 17
      %vm3931 = vmand %vm3929, %vm3930
      %vm3932 = vmand %vm3931, %vm185
      %v3933 = vld [vmem:[%s160 + $0x1] sm:$0xff]
      %v3934 = vld [vmem:[%s160 + $0x11] sm:$0xff]
      %v3935 = vld [vmem:[%s160 + $0x21] sm:$0xff]
      %v3936 = vld [vmem:[%s160 + $0x31] sm:$0xff]
      %v3937 = vld [vmem:[%s160 + $0x41] sm:$0xff]
      %v3938 = vld [vmem:[%s160 + $0x51] sm:$0xff]
      %v3939 = vld [vmem:[%s160 + $0x61] sm:$0xff]
      %v3940 = vld [vmem:[%s160 + $0x71] sm:$0xff]
      %v3941 = vld [vmem:[%s160 + $0x81] sm:$0xff]
      %v3942 = vld [vmem:[%s160 + $0x91] sm:$0xff]
      %v3943 = vld [vmem:[%s160 + $0xa1] sm:$0xff]
      %v3944 = vld [vmem:[%s160 + $0xb1] sm:$0xff]
      %v3945 = vld [vmem:[%s160 + $0xc1] sm:$0xff]
      %v3946 = vld [vmem:[%s160 + $0xd1] sm:$0xff]
      %v3947 = vld [vmem:[%s160 + $0xe1] sm:$0xff]
      %v3948 = vld [vmem:[%s160 + $0xf1] sm:$0xff]
      %v3949 = vld [vmem:[%s160 + $0x101] sm:$0xff]
      %v3950 = vld [vmem:[%s160 + $0x111] sm:$0xff]
      %v3951 = vld [vmem:[%s160 + $0x121] sm:$0xff]
      %v3952 = vld [vmem:[%s160 + $0x131] sm:$0xff]
      %v3953 = vld [vmem:[%s160 + $0x141] sm:$0xff]
      %v3954 = vld [vmem:[%s160 + $0x151] sm:$0xff]
      %v3955 = vld [vmem:[%s160 + $0x161] sm:$0xff]
      %v3956 = vld [vmem:[%s160 + $0x171] sm:$0xff]
      %v3957 = vld [vmem:[%s160 + $0x181] sm:$0xff]
      %v3958 = vld [vmem:[%s160 + $0x191] sm:$0xff]
      %v3959 = vld [vmem:[%s160 + $0x1a1] sm:$0xff]
      %v3960 = vld [vmem:[%s160 + $0x1b1] sm:$0xff]
      %v3961 = vld [vmem:[%s160 + $0x1c1] sm:$0xff]
      %v3962 = vld [vmem:[%s160 + $0x1d1] sm:$0xff]
      %v3963 = vld [vmem:[%s160 + $0x1e1] sm:$0xff]
      %v3964 = vld [vmem:[%s160 + $0x1f1] sm:$0xff]
      %v3965 = vld [vmem:[%s160 + $0x201] sm:$0xff]
      %v3966 = vld [vmem:[%s160 + $0x211] sm:$0xff]
      %v3967 = vld [vmem:[%s160 + $0x221] sm:$0xff]
      %v3968 = vld [vmem:[%s160 + $0x231] sm:$0xff]
      %v3969 = vld [vmem:[%s160 + $0x241] sm:$0xff]
      %v3970 = vld [vmem:[%s160 + $0x251] sm:$0xff]
      %v3971 = vld [vmem:[%s160 + $0x261] sm:$0xff]
      %v3972 = vld [vmem:[%s160 + $0x271] sm:$0xff]
      %v3973 = vld [vmem:[%s160 + $0x281] sm:$0xff]
      %v3974 = vld [vmem:[%s160 + $0x291] sm:$0xff]
      %v3975 = vld [vmem:[%s160 + $0x2a1] sm:$0xff]
      %v3976 = vld [vmem:[%s160 + $0x2b1] sm:$0xff]
      %v3977 = vld [vmem:[%s160 + $0x2c1] sm:$0xff]
      %v3978 = vld [vmem:[%s160 + $0x2d1] sm:$0xff]
      %v3979 = vld [vmem:[%s160 + $0x2e1] sm:$0xff]
      %v3980 = vld [vmem:[%s160 + $0x2f1] sm:$0xff]
      %v3981 = vld [vmem:[%s160 + $0x301] sm:$0xff]
      %v3982 = vld [vmem:[%s160 + $0x311] sm:$0xff]
      %v3983 = vld [vmem:[%s160 + $0x321] sm:$0xff]
      %v3984 = vld [vmem:[%s160 + $0x331] sm:$0xff]
      %v3985 = vld [vmem:[%s160 + $0x341] sm:$0xff]
      %v3986 = vld [vmem:[%s160 + $0x351] sm:$0xff]
      %v3987 = vld [vmem:[%s160 + $0x361] sm:$0xff]
      %v3988 = vld [vmem:[%s160 + $0x371] sm:$0xff]
      %v3989 = vld [vmem:[%s160 + $0x381] sm:$0xff]
      %v3990 = vld [vmem:[%s160 + $0x391] sm:$0xff]
      %v3991 = vld [vmem:[%s160 + $0x3a1] sm:$0xff]
      %v3992 = vld [vmem:[%s160 + $0x3b1] sm:$0xff]
      %v3993 = vld [vmem:[%s160 + $0x3c1] sm:$0xff]
      %v3994 = vld [vmem:[%s160 + $0x3d1] sm:$0xff]
      %v3995 = vld [vmem:[%s160 + $0x3e1] sm:$0xff]
      %v3996 = vld [vmem:[%s160 + $0x3f1] sm:$0xff]
      %v3997 = vadd.f32 %v3736, %v3933
      %v3998 = vadd.f32 %v3737, %v3934
      %v3999 = vadd.f32 %v3738, %v3935
      %v4000 = vadd.f32 %v3739, %v3936
      %v4001 = vadd.f32 %v3740, %v3937
      %v4002 = vadd.f32 %v3741, %v3938
      %v4003 = vadd.f32 %v3742, %v3939
      %v4004 = vadd.f32 %v3743, %v3940
      %v4005 = vadd.f32 %v3744, %v3941
      %v4006 = vadd.f32 %v3745, %v3942
      %v4007 = vadd.f32 %v3746, %v3943
      %v4008 = vadd.f32 %v3747, %v3944
      %v4009 = vadd.f32 %v3748, %v3945
      %v4010 = vadd.f32 %v3749, %v3946
      %v4011 = vadd.f32 %v3750, %v3947
      %v4012 = vadd.f32 %v3751, %v3948
      %v4013 = vadd.f32 %v3752, %v3949
      %v4014 = vadd.f32 %v3753, %v3950
      %v4015 = vadd.f32 %v3754, %v3951
      %v4016 = vadd.f32 %v3755, %v3952
      %v4017 = vadd.f32 %v3756, %v3953
      %v4018 = vadd.f32 %v3757, %v3954
      %v4019 = vadd.f32 %v3758, %v3955
      %v4020 = vadd.f32 %v3759, %v3956
      %v4021 = vadd.f32 %v3760, %v3957
      %v4022 = vadd.f32 %v3761, %v3958
      %v4023 = vadd.f32 %v3762, %v3959
      %v4024 = vadd.f32 %v3763, %v3960
      %v4025 = vadd.f32 %v3764, %v3961
      %v4026 = vadd.f32 %v3765, %v3962
      %v4027 = vadd.f32 %v3766, %v3963
      %v4028 = vadd.f32 %v3767, %v3964
      %v4029 = vadd.f32 %v3768, %v3965
      %v4030 = vadd.f32 %v3769, %v3966
      %v4031 = vadd.f32 %v3770, %v3967
      %v4032 = vadd.f32 %v3771, %v3968
      %v4033 = vadd.f32 %v3772, %v3969
      %v4034 = vadd.f32 %v3773, %v3970
      %v4035 = vadd.f32 %v3774, %v3971
      %v4036 = vadd.f32 %v3775, %v3972
      %v4037 = vadd.f32 %v3776, %v3973
      %v4038 = vadd.f32 %v3777, %v3974
      %v4039 = vadd.f32 %v3778, %v3975
      %v4040 = vadd.f32 %v3779, %v3976
      %v4041 = vadd.f32 %v3780, %v3977
      %v4042 = vadd.f32 %v3781, %v3978
      %v4043 = vadd.f32 %v3782, %v3979
      %v4044 = vadd.f32 %v3783, %v3980
      %v4045 = vadd.f32 %v3784, %v3981
      %v4046 = vadd.f32 %v3785, %v3982
      %v4047 = vadd.f32 %v3786, %v3983
      %v4048 = vadd.f32 %v3787, %v3984
      %v4049 = vadd.f32 %v3788, %v3985
      %v4050 = vadd.f32 %v3789, %v3986
      %v4051 = vadd.f32 %v3790, %v3987
      %v4052 = vadd.f32 %v3791, %v3988
      %v4053 = vadd.f32 %v3792, %v3989
      %v4054 = vadd.f32 %v3793, %v3990
      %v4055 = vadd.f32 %v3794, %v3991
      %v4056 = vadd.f32 %v3795, %v3992
      %v4057 = vadd.f32 %v3796, %v3993
      %v4058 = vadd.f32 %v3797, %v3994
      %v4059 = vadd.f32 %v3798, %v3995
      %v4060 = vadd.f32 %v3799, %v3996
      %v4061 = vsel %vm3932, %v3933, -3e+38
      %v4062 = vsel %vm3932, %v3934, -3e+38
      %v4063 = vsel %vm3932, %v3935, -3e+38
      %v4064 = vsel %vm3932, %v3936, -3e+38
      %v4065 = vsel %vm3932, %v3937, -3e+38
      %v4066 = vsel %vm3932, %v3938, -3e+38
      %v4067 = vsel %vm3932, %v3939, -3e+38
      %v4068 = vsel %vm3932, %v3940, -3e+38
      %v4069 = vsel %vm3932, %v3941, -3e+38
      %v4070 = vsel %vm3932, %v3942, -3e+38
      %v4071 = vsel %vm3932, %v3943, -3e+38
      %v4072 = vsel %vm3932, %v3944, -3e+38
      %v4073 = vsel %vm3932, %v3945, -3e+38
      %v4074 = vsel %vm3932, %v3946, -3e+38
      %v4075 = vsel %vm3932, %v3947, -3e+38
      %v4076 = vsel %vm3932, %v3948, -3e+38
      %v4077 = vsel %vm3932, %v3949, -3e+38
      %v4078 = vsel %vm3932, %v3950, -3e+38
      %v4079 = vsel %vm3932, %v3951, -3e+38
      %v4080 = vsel %vm3932, %v3952, -3e+38
      %v4081 = vsel %vm3932, %v3953, -3e+38
      %v4082 = vsel %vm3932, %v3954, -3e+38
      %v4083 = vsel %vm3932, %v3955, -3e+38
      %v4084 = vsel %vm3932, %v3956, -3e+38
      %v4085 = vsel %vm3932, %v3957, -3e+38
      %v4086 = vsel %vm3932, %v3958, -3e+38
      %v4087 = vsel %vm3932, %v3959, -3e+38
      %v4088 = vsel %vm3932, %v3960, -3e+38
      %v4089 = vsel %vm3932, %v3961, -3e+38
      %v4090 = vsel %vm3932, %v3962, -3e+38
      %v4091 = vsel %vm3932, %v3963, -3e+38
      %v4092 = vsel %vm3932, %v3964, -3e+38
      %v4093 = vsel %vm3932, %v3965, -3e+38
      %v4094 = vsel %vm3932, %v3966, -3e+38
      %v4095 = vsel %vm3932, %v3967, -3e+38
      %v4096 = vsel %vm3932, %v3968, -3e+38
      %v4097 = vsel %vm3932, %v3969, -3e+38
      %v4098 = vsel %vm3932, %v3970, -3e+38
      %v4099 = vsel %vm3932, %v3971, -3e+38
      %v4100 = vsel %vm3932, %v3972, -3e+38
      %v4101 = vsel %vm3932, %v3973, -3e+38
      %v4102 = vsel %vm3932, %v3974, -3e+38
      %v4103 = vsel %vm3932, %v3975, -3e+38
      %v4104 = vsel %vm3932, %v3976, -3e+38
      %v4105 = vsel %vm3932, %v3977, -3e+38
      %v4106 = vsel %vm3932, %v3978, -3e+38
      %v4107 = vsel %vm3932, %v3979, -3e+38
      %v4108 = vsel %vm3932, %v3980, -3e+38
      %v4109 = vsel %vm3932, %v3981, -3e+38
      %v4110 = vsel %vm3932, %v3982, -3e+38
      %v4111 = vsel %vm3932, %v3983, -3e+38
      %v4112 = vsel %vm3932, %v3984, -3e+38
      %v4113 = vsel %vm3932, %v3985, -3e+38
      %v4114 = vsel %vm3932, %v3986, -3e+38
      %v4115 = vsel %vm3932, %v3987, -3e+38
      %v4116 = vsel %vm3932, %v3988, -3e+38
      %v4117 = vsel %vm3932, %v3989, -3e+38
      %v4118 = vsel %vm3932, %v3990, -3e+38
      %v4119 = vsel %vm3932, %v3991, -3e+38
      %v4120 = vsel %vm3932, %v3992, -3e+38
      %v4121 = vsel %vm3932, %v3993, -3e+38
      %v4122 = vsel %vm3932, %v3994, -3e+38
      %v4123 = vsel %vm3932, %v3995, -3e+38
      %v4124 = vsel %vm3932, %v3996, -3e+38
      %v4125 = vmax.f32 %v3864, %v4061
      %v4126 = vmax.f32 %v3865, %v4062
      %v4127 = vmax.f32 %v3866, %v4063
      %v4128 = vmax.f32 %v3867, %v4064
      %v4129 = vmax.f32 %v3868, %v4065
      %v4130 = vmax.f32 %v3869, %v4066
      %v4131 = vmax.f32 %v3870, %v4067
      %v4132 = vmax.f32 %v3871, %v4068
      %v4133 = vmax.f32 %v3872, %v4069
      %v4134 = vmax.f32 %v3873, %v4070
      %v4135 = vmax.f32 %v3874, %v4071
      %v4136 = vmax.f32 %v3875, %v4072
      %v4137 = vmax.f32 %v3876, %v4073
      %v4138 = vmax.f32 %v3877, %v4074
      %v4139 = vmax.f32 %v3878, %v4075
      %v4140 = vmax.f32 %v3879, %v4076
      %v4141 = vmax.f32 %v3880, %v4077
      %v4142 = vmax.f32 %v3881, %v4078
      %v4143 = vmax.f32 %v3882, %v4079
      %v4144 = vmax.f32 %v3883, %v4080
      %v4145 = vmax.f32 %v3884, %v4081
      %v4146 = vmax.f32 %v3885, %v4082
      %v4147 = vmax.f32 %v3886, %v4083
      %v4148 = vmax.f32 %v3887, %v4084
      %v4149 = vmax.f32 %v3888, %v4085
      %v4150 = vmax.f32 %v3889, %v4086
      %v4151 = vmax.f32 %v3890, %v4087
      %v4152 = vmax.f32 %v3891, %v4088
      %v4153 = vmax.f32 %v3892, %v4089
      %v4154 = vmax.f32 %v3893, %v4090
      %v4155 = vmax.f32 %v3894, %v4091
      %v4156 = vmax.f32 %v3895, %v4092
      %v4157 = vmax.f32 %v3896, %v4093
      %v4158 = vmax.f32 %v3897, %v4094
      %v4159 = vmax.f32 %v3898, %v4095
      %v4160 = vmax.f32 %v3899, %v4096
      %v4161 = vmax.f32 %v3900, %v4097
      %v4162 = vmax.f32 %v3901, %v4098
      %v4163 = vmax.f32 %v3902, %v4099
      %v4164 = vmax.f32 %v3903, %v4100
      %v4165 = vmax.f32 %v3904, %v4101
      %v4166 = vmax.f32 %v3905, %v4102
      %v4167 = vmax.f32 %v3906, %v4103
      %v4168 = vmax.f32 %v3907, %v4104
      %v4169 = vmax.f32 %v3908, %v4105
      %v4170 = vmax.f32 %v3909, %v4106
      %v4171 = vmax.f32 %v3910, %v4107
      %v4172 = vmax.f32 %v3911, %v4108
      %v4173 = vmax.f32 %v3912, %v4109
      %v4174 = vmax.f32 %v3913, %v4110
      %v4175 = vmax.f32 %v3914, %v4111
      %v4176 = vmax.f32 %v3915, %v4112
      %v4177 = vmax.f32 %v3916, %v4113
      %v4178 = vmax.f32 %v3917, %v4114
      %v4179 = vmax.f32 %v3918, %v4115
      %v4180 = vmax.f32 %v3919, %v4116
      %v4181 = vmax.f32 %v3920, %v4117
      %v4182 = vmax.f32 %v3921, %v4118
      %v4183 = vmax.f32 %v3922, %v4119
      %v4184 = vmax.f32 %v3923, %v4120
      %v4185 = vmax.f32 %v3924, %v4121
      %v4186 = vmax.f32 %v3925, %v4122
      %v4187 = vmax.f32 %v3926, %v4123
      %v4188 = vmax.f32 %v3927, %v4124
      %vm4189 = vmand %vm3931, %vm446
      %4254 = vrot.lane.b32.xlu0 %v3933, 127
      %v4255 = vpop.permute.xlu0 %4254
      %4256 = vrot.lane.b32.xlu0 %v3934, 127
      %v4257 = vpop.permute.xlu0 %4256
      %4258 = vrot.lane.b32.xlu0 %v3935, 127
      %v4259 = vpop.permute.xlu0 %4258
      %4260 = vrot.lane.b32.xlu0 %v3936, 127
      %v4261 = vpop.permute.xlu0 %4260
      %4262 = vrot.lane.b32.xlu0 %v3937, 127
      %v4263 = vpop.permute.xlu0 %4262
      %4264 = vrot.lane.b32.xlu0 %v3938, 127
      %v4265 = vpop.permute.xlu0 %4264
      %4266 = vrot.lane.b32.xlu0 %v3939, 127
      %v4267 = vpop.permute.xlu0 %4266
      %4268 = vrot.lane.b32.xlu0 %v3940, 127
      %v4269 = vpop.permute.xlu0 %4268
      %4270 = vrot.lane.b32.xlu0 %v3941, 127
      %v4271 = vpop.permute.xlu0 %4270
      %4272 = vrot.lane.b32.xlu0 %v3942, 127
      %v4273 = vpop.permute.xlu0 %4272
      %4274 = vrot.lane.b32.xlu0 %v3943, 127
      %v4275 = vpop.permute.xlu0 %4274
      %4276 = vrot.lane.b32.xlu0 %v3944, 127
      %v4277 = vpop.permute.xlu0 %4276
      %4278 = vrot.lane.b32.xlu0 %v3945, 127
      %v4279 = vpop.permute.xlu0 %4278
      %4280 = vrot.lane.b32.xlu0 %v3946, 127
      %v4281 = vpop.permute.xlu0 %4280
      %4282 = vrot.lane.b32.xlu0 %v3947, 127
      %v4283 = vpop.permute.xlu0 %4282
      %4284 = vrot.lane.b32.xlu0 %v3948, 127
      %v4285 = vpop.permute.xlu0 %4284
      %4286 = vrot.lane.b32.xlu0 %v3949, 127
      %v4287 = vpop.permute.xlu0 %4286
      %4288 = vrot.lane.b32.xlu0 %v3950, 127
      %v4289 = vpop.permute.xlu0 %4288
      %4290 = vrot.lane.b32.xlu0 %v3951, 127
      %v4291 = vpop.permute.xlu0 %4290
      %4292 = vrot.lane.b32.xlu0 %v3952, 127
      %v4293 = vpop.permute.xlu0 %4292
      %4294 = vrot.lane.b32.xlu0 %v3953, 127
      %v4295 = vpop.permute.xlu0 %4294
      %4296 = vrot.lane.b32.xlu0 %v3954, 127
      %v4297 = vpop.permute.xlu0 %4296
      %4298 = vrot.lane.b32.xlu0 %v3955, 127
      %v4299 = vpop.permute.xlu0 %4298
      %4300 = vrot.lane.b32.xlu0 %v3956, 127
      %v4301 = vpop.permute.xlu0 %4300
      %4302 = vrot.lane.b32.xlu0 %v3957, 127
      %v4303 = vpop.permute.xlu0 %4302
      %4304 = vrot.lane.b32.xlu0 %v3958, 127
      %v4305 = vpop.permute.xlu0 %4304
      %4306 = vrot.lane.b32.xlu0 %v3959, 127
      %v4307 = vpop.permute.xlu0 %4306
      %4308 = vrot.lane.b32.xlu0 %v3960, 127
      %v4309 = vpop.permute.xlu0 %4308
      %4310 = vrot.lane.b32.xlu0 %v3961, 127
      %v4311 = vpop.permute.xlu0 %4310
      %4312 = vrot.lane.b32.xlu0 %v3962, 127
      %v4313 = vpop.permute.xlu0 %4312
      %4314 = vrot.lane.b32.xlu0 %v3963, 127
      %v4315 = vpop.permute.xlu0 %4314
      %4316 = vrot.lane.b32.xlu0 %v3964, 127
      %v4317 = vpop.permute.xlu0 %4316
      %4318 = vrot.lane.b32.xlu0 %v3965, 127
      %v4319 = vpop.permute.xlu0 %4318
      %4320 = vrot.lane.b32.xlu0 %v3966, 127
      %v4321 = vpop.permute.xlu0 %4320
      %4322 = vrot.lane.b32.xlu0 %v3967, 127
      %v4323 = vpop.permute.xlu0 %4322
      %4324 = vrot.lane.b32.xlu0 %v3968, 127
      %v4325 = vpop.permute.xlu0 %4324
      %4326 = vrot.lane.b32.xlu0 %v3969, 127
      %v4327 = vpop.permute.xlu0 %4326
      %4328 = vrot.lane.b32.xlu0 %v3970, 127
      %v4329 = vpop.permute.xlu0 %4328
      %4330 = vrot.lane.b32.xlu0 %v3971, 127
      %v4331 = vpop.permute.xlu0 %4330
      %4332 = vrot.lane.b32.xlu0 %v3972, 127
      %v4333 = vpop.permute.xlu0 %4332
      %4334 = vrot.lane.b32.xlu0 %v3973, 127
      %v4335 = vpop.permute.xlu0 %4334
      %4336 = vrot.lane.b32.xlu0 %v3974, 127
      %v4337 = vpop.permute.xlu0 %4336
      %4338 = vrot.lane.b32.xlu0 %v3975, 127
      %v4339 = vpop.permute.xlu0 %4338
      %4340 = vrot.lane.b32.xlu0 %v3976, 127
      %v4341 = vpop.permute.xlu0 %4340
      %4342 = vrot.lane.b32.xlu0 %v3977, 127
      %v4343 = vpop.permute.xlu0 %4342
      %4344 = vrot.lane.b32.xlu0 %v3978, 127
      %v4345 = vpop.permute.xlu0 %4344
      %4346 = vrot.lane.b32.xlu0 %v3979, 127
      %v4347 = vpop.permute.xlu0 %4346
      %4348 = vrot.lane.b32.xlu0 %v3980, 127
      %v4349 = vpop.permute.xlu0 %4348
      %4350 = vrot.lane.b32.xlu0 %v3981, 127
      %v4351 = vpop.permute.xlu0 %4350
      %4352 = vrot.lane.b32.xlu0 %v3982, 127
      %v4353 = vpop.permute.xlu0 %4352
      %4354 = vrot.lane.b32.xlu0 %v3983, 127
      %v4355 = vpop.permute.xlu0 %4354
      %4356 = vrot.lane.b32.xlu0 %v3984, 127
      %v4357 = vpop.permute.xlu0 %4356
      %4358 = vrot.lane.b32.xlu0 %v3985, 127
      %v4359 = vpop.permute.xlu0 %4358
      %4360 = vrot.lane.b32.xlu0 %v3986, 127
      %v4361 = vpop.permute.xlu0 %4360
      %4362 = vrot.lane.b32.xlu0 %v3987, 127
      %v4363 = vpop.permute.xlu0 %4362
      %4364 = vrot.lane.b32.xlu0 %v3988, 127
      %v4365 = vpop.permute.xlu0 %4364
      %4366 = vrot.lane.b32.xlu0 %v3989, 127
      %v4367 = vpop.permute.xlu0 %4366
      %4368 = vrot.lane.b32.xlu0 %v3990, 127
      %v4369 = vpop.permute.xlu0 %4368
      %4370 = vrot.lane.b32.xlu0 %v3991, 127
      %v4371 = vpop.permute.xlu0 %4370
      %4372 = vrot.lane.b32.xlu0 %v3992, 127
      %v4373 = vpop.permute.xlu0 %4372
      %4374 = vrot.lane.b32.xlu0 %v3993, 127
      %v4375 = vpop.permute.xlu0 %4374
      %4376 = vrot.lane.b32.xlu0 %v3994, 127
      %v4377 = vpop.permute.xlu0 %4376
      %4378 = vrot.lane.b32.xlu0 %v3995, 127
      %v4379 = vpop.permute.xlu0 %4378
      %4380 = vrot.lane.b32.xlu0 %v3996, 127
      %v4381 = vpop.permute.xlu0 %4380
      %v4446 = vadd.f32 %v3997, %v4255
      %v4447 = vadd.f32 %v3998, %v4257
      %v4448 = vadd.f32 %v3999, %v4259
      %v4449 = vadd.f32 %v4000, %v4261
      %v4450 = vadd.f32 %v4001, %v4263
      %v4451 = vadd.f32 %v4002, %v4265
      %v4452 = vadd.f32 %v4003, %v4267
      %v4453 = vadd.f32 %v4004, %v4269
      %v4454 = vadd.f32 %v4005, %v4271
      %v4455 = vadd.f32 %v4006, %v4273
      %v4456 = vadd.f32 %v4007, %v4275
      %v4457 = vadd.f32 %v4008, %v4277
      %v4458 = vadd.f32 %v4009, %v4279
      %v4459 = vadd.f32 %v4010, %v4281
      %v4460 = vadd.f32 %v4011, %v4283
      %v4461 = vadd.f32 %v4012, %v4285
      %v4462 = vadd.f32 %v4013, %v4287
      %v4463 = vadd.f32 %v4014, %v4289
      %v4464 = vadd.f32 %v4015, %v4291
      %v4465 = vadd.f32 %v4016, %v4293
      %v4466 = vadd.f32 %v4017, %v4295
      %v4467 = vadd.f32 %v4018, %v4297
      %v4468 = vadd.f32 %v4019, %v4299
      %v4469 = vadd.f32 %v4020, %v4301
      %v4470 = vadd.f32 %v4021, %v4303
      %v4471 = vadd.f32 %v4022, %v4305
      %v4472 = vadd.f32 %v4023, %v4307
      %v4473 = vadd.f32 %v4024, %v4309
      %v4474 = vadd.f32 %v4025, %v4311
      %v4475 = vadd.f32 %v4026, %v4313
      %v4476 = vadd.f32 %v4027, %v4315
      %v4477 = vadd.f32 %v4028, %v4317
      %v4478 = vadd.f32 %v4029, %v4319
      %v4479 = vadd.f32 %v4030, %v4321
      %v4480 = vadd.f32 %v4031, %v4323
      %v4481 = vadd.f32 %v4032, %v4325
      %v4482 = vadd.f32 %v4033, %v4327
      %v4483 = vadd.f32 %v4034, %v4329
      %v4484 = vadd.f32 %v4035, %v4331
      %v4485 = vadd.f32 %v4036, %v4333
      %v4486 = vadd.f32 %v4037, %v4335
      %v4487 = vadd.f32 %v4038, %v4337
      %v4488 = vadd.f32 %v4039, %v4339
      %v4489 = vadd.f32 %v4040, %v4341
      %v4490 = vadd.f32 %v4041, %v4343
      %v4491 = vadd.f32 %v4042, %v4345
      %v4492 = vadd.f32 %v4043, %v4347
      %v4493 = vadd.f32 %v4044, %v4349
      %v4494 = vadd.f32 %v4045, %v4351
      %v4495 = vadd.f32 %v4046, %v4353
      %v4496 = vadd.f32 %v4047, %v4355
      %v4497 = vadd.f32 %v4048, %v4357
      %v4498 = vadd.f32 %v4049, %v4359
      %v4499 = vadd.f32 %v4050, %v4361
      %v4500 = vadd.f32 %v4051, %v4363
      %v4501 = vadd.f32 %v4052, %v4365
      %v4502 = vadd.f32 %v4053, %v4367
      %v4503 = vadd.f32 %v4054, %v4369
      %v4504 = vadd.f32 %v4055, %v4371
      %v4505 = vadd.f32 %v4056, %v4373
      %v4506 = vadd.f32 %v4057, %v4375
      %v4507 = vadd.f32 %v4058, %v4377
      %v4508 = vadd.f32 %v4059, %v4379
      %v4509 = vadd.f32 %v4060, %v4381
      %v4510 = vsel %vm4189, %v4255, -3e+38
      %v4511 = vsel %vm4189, %v4257, -3e+38
      %v4512 = vsel %vm4189, %v4259, -3e+38
      %v4513 = vsel %vm4189, %v4261, -3e+38
      %v4514 = vsel %vm4189, %v4263, -3e+38
      %v4515 = vsel %vm4189, %v4265, -3e+38
      %v4516 = vsel %vm4189, %v4267, -3e+38
      %v4517 = vsel %vm4189, %v4269, -3e+38
      %v4518 = vsel %vm4189, %v4271, -3e+38
      %v4519 = vsel %vm4189, %v4273, -3e+38
      %v4520 = vsel %vm4189, %v4275, -3e+38
      %v4521 = vsel %vm4189, %v4277, -3e+38
      %v4522 = vsel %vm4189, %v4279, -3e+38
      %v4523 = vsel %vm4189, %v4281, -3e+38
      %v4524 = vsel %vm4189, %v4283, -3e+38
      %v4525 = vsel %vm4189, %v4285, -3e+38
      %v4526 = vsel %vm4189, %v4287, -3e+38
      %v4527 = vsel %vm4189, %v4289, -3e+38
      %v4528 = vsel %vm4189, %v4291, -3e+38
      %v4529 = vsel %vm4189, %v4293, -3e+38
      %v4530 = vsel %vm4189, %v4295, -3e+38
      %v4531 = vsel %vm4189, %v4297, -3e+38
      %v4532 = vsel %vm4189, %v4299, -3e+38
      %v4533 = vsel %vm4189, %v4301, -3e+38
      %v4534 = vsel %vm4189, %v4303, -3e+38
      %v4535 = vsel %vm4189, %v4305, -3e+38
      %v4536 = vsel %vm4189, %v4307, -3e+38
      %v4537 = vsel %vm4189, %v4309, -3e+38
      %v4538 = vsel %vm4189, %v4311, -3e+38
      %v4539 = vsel %vm4189, %v4313, -3e+38
      %v4540 = vsel %vm4189, %v4315, -3e+38
      %v4541 = vsel %vm4189, %v4317, -3e+38
      %v4542 = vsel %vm4189, %v4319, -3e+38
      %v4543 = vsel %vm4189, %v4321, -3e+38
      %v4544 = vsel %vm4189, %v4323, -3e+38
      %v4545 = vsel %vm4189, %v4325, -3e+38
      %v4546 = vsel %vm4189, %v4327, -3e+38
      %v4547 = vsel %vm4189, %v4329, -3e+38
      %v4548 = vsel %vm4189, %v4331, -3e+38
      %v4549 = vsel %vm4189, %v4333, -3e+38
      %v4550 = vsel %vm4189, %v4335, -3e+38
      %v4551 = vsel %vm4189, %v4337, -3e+38
      %v4552 = vsel %vm4189, %v4339, -3e+38
      %v4553 = vsel %vm4189, %v4341, -3e+38
      %v4554 = vsel %vm4189, %v4343, -3e+38
      %v4555 = vsel %vm4189, %v4345, -3e+38
      %v4556 = vsel %vm4189, %v4347, -3e+38
      %v4557 = vsel %vm4189, %v4349, -3e+38
      %v4558 = vsel %vm4189, %v4351, -3e+38
      %v4559 = vsel %vm4189, %v4353, -3e+38
      %v4560 = vsel %vm4189, %v4355, -3e+38
      %v4561 = vsel %vm4189, %v4357, -3e+38
      %v4562 = vsel %vm4189, %v4359, -3e+38
      %v4563 = vsel %vm4189, %v4361, -3e+38
      %v4564 = vsel %vm4189, %v4363, -3e+38
      %v4565 = vsel %vm4189, %v4365, -3e+38
      %v4566 = vsel %vm4189, %v4367, -3e+38
      %v4567 = vsel %vm4189, %v4369, -3e+38
      %v4568 = vsel %vm4189, %v4371, -3e+38
      %v4569 = vsel %vm4189, %v4373, -3e+38
      %v4570 = vsel %vm4189, %v4375, -3e+38
      %v4571 = vsel %vm4189, %v4377, -3e+38
      %v4572 = vsel %vm4189, %v4379, -3e+38
      %v4573 = vsel %vm4189, %v4381, -3e+38
      %v4574 = vmax.f32 %v4125, %v4510
      %v4575 = vmax.f32 %v4126, %v4511
      %v4576 = vmax.f32 %v4127, %v4512
      %v4577 = vmax.f32 %v4128, %v4513
      %v4578 = vmax.f32 %v4129, %v4514
      %v4579 = vmax.f32 %v4130, %v4515
      %v4580 = vmax.f32 %v4131, %v4516
      %v4581 = vmax.f32 %v4132, %v4517
      %v4582 = vmax.f32 %v4133, %v4518
      %v4583 = vmax.f32 %v4134, %v4519
      %v4584 = vmax.f32 %v4135, %v4520
      %v4585 = vmax.f32 %v4136, %v4521
      %v4586 = vmax.f32 %v4137, %v4522
      %v4587 = vmax.f32 %v4138, %v4523
      %v4588 = vmax.f32 %v4139, %v4524
      %v4589 = vmax.f32 %v4140, %v4525
      %v4590 = vmax.f32 %v4141, %v4526
      %v4591 = vmax.f32 %v4142, %v4527
      %v4592 = vmax.f32 %v4143, %v4528
      %v4593 = vmax.f32 %v4144, %v4529
      %v4594 = vmax.f32 %v4145, %v4530
      %v4595 = vmax.f32 %v4146, %v4531
      %v4596 = vmax.f32 %v4147, %v4532
      %v4597 = vmax.f32 %v4148, %v4533
      %v4598 = vmax.f32 %v4149, %v4534
      %v4599 = vmax.f32 %v4150, %v4535
      %v4600 = vmax.f32 %v4151, %v4536
      %v4601 = vmax.f32 %v4152, %v4537
      %v4602 = vmax.f32 %v4153, %v4538
      %v4603 = vmax.f32 %v4154, %v4539
      %v4604 = vmax.f32 %v4155, %v4540
      %v4605 = vmax.f32 %v4156, %v4541
      %v4606 = vmax.f32 %v4157, %v4542
      %v4607 = vmax.f32 %v4158, %v4543
      %v4608 = vmax.f32 %v4159, %v4544
      %v4609 = vmax.f32 %v4160, %v4545
      %v4610 = vmax.f32 %v4161, %v4546
      %v4611 = vmax.f32 %v4162, %v4547
      %v4612 = vmax.f32 %v4163, %v4548
      %v4613 = vmax.f32 %v4164, %v4549
      %v4614 = vmax.f32 %v4165, %v4550
      %v4615 = vmax.f32 %v4166, %v4551
      %v4616 = vmax.f32 %v4167, %v4552
      %v4617 = vmax.f32 %v4168, %v4553
      %v4618 = vmax.f32 %v4169, %v4554
      %v4619 = vmax.f32 %v4170, %v4555
      %v4620 = vmax.f32 %v4171, %v4556
      %v4621 = vmax.f32 %v4172, %v4557
      %v4622 = vmax.f32 %v4173, %v4558
      %v4623 = vmax.f32 %v4174, %v4559
      %v4624 = vmax.f32 %v4175, %v4560
      %v4625 = vmax.f32 %v4176, %v4561
      %v4626 = vmax.f32 %v4177, %v4562
      %v4627 = vmax.f32 %v4178, %v4563
      %v4628 = vmax.f32 %v4179, %v4564
      %v4629 = vmax.f32 %v4180, %v4565
      %v4630 = vmax.f32 %v4181, %v4566
      %v4631 = vmax.f32 %v4182, %v4567
      %v4632 = vmax.f32 %v4183, %v4568
      %v4633 = vmax.f32 %v4184, %v4569
      %v4634 = vmax.f32 %v4185, %v4570
      %v4635 = vmax.f32 %v4186, %v4571
      %v4636 = vmax.f32 %v4187, %v4572
      %v4637 = vmax.f32 %v4188, %v4573
      %vm4638 = vmand %vm3931, %vm899
      %4639 = vrot.lane.b32.xlu0 %v3933, 126
      %v4640 = vpop.permute.xlu0 %4639
      %4641 = vrot.lane.b32.xlu0 %v3934, 126
      %v4642 = vpop.permute.xlu0 %4641
      %4643 = vrot.lane.b32.xlu0 %v3935, 126
      %v4644 = vpop.permute.xlu0 %4643
      %4645 = vrot.lane.b32.xlu0 %v3936, 126
      %v4646 = vpop.permute.xlu0 %4645
      %4647 = vrot.lane.b32.xlu0 %v3937, 126
      %v4648 = vpop.permute.xlu0 %4647
      %4649 = vrot.lane.b32.xlu0 %v3938, 126
      %v4650 = vpop.permute.xlu0 %4649
      %4651 = vrot.lane.b32.xlu0 %v3939, 126
      %v4652 = vpop.permute.xlu0 %4651
      %4653 = vrot.lane.b32.xlu0 %v3940, 126
      %v4654 = vpop.permute.xlu0 %4653
      %4655 = vrot.lane.b32.xlu0 %v3941, 126
      %v4656 = vpop.permute.xlu0 %4655
      %4657 = vrot.lane.b32.xlu0 %v3942, 126
      %v4658 = vpop.permute.xlu0 %4657
      %4659 = vrot.lane.b32.xlu0 %v3943, 126
      %v4660 = vpop.permute.xlu0 %4659
      %4661 = vrot.lane.b32.xlu0 %v3944, 126
      %v4662 = vpop.permute.xlu0 %4661
      %4663 = vrot.lane.b32.xlu0 %v3945, 126
      %v4664 = vpop.permute.xlu0 %4663
      %4665 = vrot.lane.b32.xlu0 %v3946, 126
      %v4666 = vpop.permute.xlu0 %4665
      %4667 = vrot.lane.b32.xlu0 %v3947, 126
      %v4668 = vpop.permute.xlu0 %4667
      %4669 = vrot.lane.b32.xlu0 %v3948, 126
      %v4670 = vpop.permute.xlu0 %4669
      %4671 = vrot.lane.b32.xlu0 %v3949, 126
      %v4672 = vpop.permute.xlu0 %4671
      %4673 = vrot.lane.b32.xlu0 %v3950, 126
      %v4674 = vpop.permute.xlu0 %4673
      %4675 = vrot.lane.b32.xlu0 %v3951, 126
      %v4676 = vpop.permute.xlu0 %4675
      %4677 = vrot.lane.b32.xlu0 %v3952, 126
      %v4678 = vpop.permute.xlu0 %4677
      %4679 = vrot.lane.b32.xlu0 %v3953, 126
      %v4680 = vpop.permute.xlu0 %4679
      %4681 = vrot.lane.b32.xlu0 %v3954, 126
      %v4682 = vpop.permute.xlu0 %4681
      %4683 = vrot.lane.b32.xlu0 %v3955, 126
      %v4684 = vpop.permute.xlu0 %4683
      %4685 = vrot.lane.b32.xlu0 %v3956, 126
      %v4686 = vpop.permute.xlu0 %4685
      %4687 = vrot.lane.b32.xlu0 %v3957, 126
      %v4688 = vpop.permute.xlu0 %4687
      %4689 = vrot.lane.b32.xlu0 %v3958, 126
      %v4690 = vpop.permute.xlu0 %4689
      %4691 = vrot.lane.b32.xlu0 %v3959, 126
      %v4692 = vpop.permute.xlu0 %4691
      %4693 = vrot.lane.b32.xlu0 %v3960, 126
      %v4694 = vpop.permute.xlu0 %4693
      %4695 = vrot.lane.b32.xlu0 %v3961, 126
      %v4696 = vpop.permute.xlu0 %4695
      %4697 = vrot.lane.b32.xlu0 %v3962, 126
      %v4698 = vpop.permute.xlu0 %4697
      %4699 = vrot.lane.b32.xlu0 %v3963, 126
      %v4700 = vpop.permute.xlu0 %4699
      %4701 = vrot.lane.b32.xlu0 %v3964, 126
      %v4702 = vpop.permute.xlu0 %4701
      %4703 = vrot.lane.b32.xlu0 %v3965, 126
      %v4704 = vpop.permute.xlu0 %4703
      %4705 = vrot.lane.b32.xlu0 %v3966, 126
      %v4706 = vpop.permute.xlu0 %4705
      %4707 = vrot.lane.b32.xlu0 %v3967, 126
      %v4708 = vpop.permute.xlu0 %4707
      %4709 = vrot.lane.b32.xlu0 %v3968, 126
      %v4710 = vpop.permute.xlu0 %4709
      %4711 = vrot.lane.b32.xlu0 %v3969, 126
      %v4712 = vpop.permute.xlu0 %4711
      %4713 = vrot.lane.b32.xlu0 %v3970, 126
      %v4714 = vpop.permute.xlu0 %4713
      %4715 = vrot.lane.b32.xlu0 %v3971, 126
      %v4716 = vpop.permute.xlu0 %4715
      %4717 = vrot.lane.b32.xlu0 %v3972, 126
      %v4718 = vpop.permute.xlu0 %4717
      %4719 = vrot.lane.b32.xlu0 %v3973, 126
      %v4720 = vpop.permute.xlu0 %4719
      %4721 = vrot.lane.b32.xlu0 %v3974, 126
      %v4722 = vpop.permute.xlu0 %4721
      %4723 = vrot.lane.b32.xlu0 %v3975, 126
      %v4724 = vpop.permute.xlu0 %4723
      %4725 = vrot.lane.b32.xlu0 %v3976, 126
      %v4726 = vpop.permute.xlu0 %4725
      %4727 = vrot.lane.b32.xlu0 %v3977, 126
      %v4728 = vpop.permute.xlu0 %4727
      %4729 = vrot.lane.b32.xlu0 %v3978, 126
      %v4730 = vpop.permute.xlu0 %4729
      %4731 = vrot.lane.b32.xlu0 %v3979, 126
      %v4732 = vpop.permute.xlu0 %4731
      %4733 = vrot.lane.b32.xlu0 %v3980, 126
      %v4734 = vpop.permute.xlu0 %4733
      %4735 = vrot.lane.b32.xlu0 %v3981, 126
      %v4736 = vpop.permute.xlu0 %4735
      %4737 = vrot.lane.b32.xlu0 %v3982, 126
      %v4738 = vpop.permute.xlu0 %4737
      %4739 = vrot.lane.b32.xlu0 %v3983, 126
      %v4740 = vpop.permute.xlu0 %4739
      %4741 = vrot.lane.b32.xlu0 %v3984, 126
      %v4742 = vpop.permute.xlu0 %4741
      %4743 = vrot.lane.b32.xlu0 %v3985, 126
      %v4744 = vpop.permute.xlu0 %4743
      %4745 = vrot.lane.b32.xlu0 %v3986, 126
      %v4746 = vpop.permute.xlu0 %4745
      %4747 = vrot.lane.b32.xlu0 %v3987, 126
      %v4748 = vpop.permute.xlu0 %4747
      %4749 = vrot.lane.b32.xlu0 %v3988, 126
      %v4750 = vpop.permute.xlu0 %4749
      %4751 = vrot.lane.b32.xlu0 %v3989, 126
      %v4752 = vpop.permute.xlu0 %4751
      %4753 = vrot.lane.b32.xlu0 %v3990, 126
      %v4754 = vpop.permute.xlu0 %4753
      %4755 = vrot.lane.b32.xlu0 %v3991, 126
      %v4756 = vpop.permute.xlu0 %4755
      %4757 = vrot.lane.b32.xlu0 %v3992, 126
      %v4758 = vpop.permute.xlu0 %4757
      %4759 = vrot.lane.b32.xlu0 %v3993, 126
      %v4760 = vpop.permute.xlu0 %4759
      %4761 = vrot.lane.b32.xlu0 %v3994, 126
      %v4762 = vpop.permute.xlu0 %4761
      %4763 = vrot.lane.b32.xlu0 %v3995, 126
      %v4764 = vpop.permute.xlu0 %4763
      %4765 = vrot.lane.b32.xlu0 %v3996, 126
      %v4766 = vpop.permute.xlu0 %4765
      %v4831 = vadd.f32 %v4446, %v4640
      %v4832 = vadd.f32 %v4447, %v4642
      %v4833 = vadd.f32 %v4448, %v4644
      %v4834 = vadd.f32 %v4449, %v4646
      %v4835 = vadd.f32 %v4450, %v4648
      %v4836 = vadd.f32 %v4451, %v4650
      %v4837 = vadd.f32 %v4452, %v4652
      %v4838 = vadd.f32 %v4453, %v4654
      %v4839 = vadd.f32 %v4454, %v4656
      %v4840 = vadd.f32 %v4455, %v4658
      %v4841 = vadd.f32 %v4456, %v4660
      %v4842 = vadd.f32 %v4457, %v4662
      %v4843 = vadd.f32 %v4458, %v4664
      %v4844 = vadd.f32 %v4459, %v4666
      %v4845 = vadd.f32 %v4460, %v4668
      %v4846 = vadd.f32 %v4461, %v4670
      %v4847 = vadd.f32 %v4462, %v4672
      %v4848 = vadd.f32 %v4463, %v4674
      %v4849 = vadd.f32 %v4464, %v4676
      %v4850 = vadd.f32 %v4465, %v4678
      %v4851 = vadd.f32 %v4466, %v4680
      %v4852 = vadd.f32 %v4467, %v4682
      %v4853 = vadd.f32 %v4468, %v4684
      %v4854 = vadd.f32 %v4469, %v4686
      %v4855 = vadd.f32 %v4470, %v4688
      %v4856 = vadd.f32 %v4471, %v4690
      %v4857 = vadd.f32 %v4472, %v4692
      %v4858 = vadd.f32 %v4473, %v4694
      %v4859 = vadd.f32 %v4474, %v4696
      %v4860 = vadd.f32 %v4475, %v4698
      %v4861 = vadd.f32 %v4476, %v4700
      %v4862 = vadd.f32 %v4477, %v4702
      %v4863 = vadd.f32 %v4478, %v4704
      %v4864 = vadd.f32 %v4479, %v4706
      %v4865 = vadd.f32 %v4480, %v4708
      %v4866 = vadd.f32 %v4481, %v4710
      %v4867 = vadd.f32 %v4482, %v4712
      %v4868 = vadd.f32 %v4483, %v4714
      %v4869 = vadd.f32 %v4484, %v4716
      %v4870 = vadd.f32 %v4485, %v4718
      %v4871 = vadd.f32 %v4486, %v4720
      %v4872 = vadd.f32 %v4487, %v4722
      %v4873 = vadd.f32 %v4488, %v4724
      %v4874 = vadd.f32 %v4489, %v4726
      %v4875 = vadd.f32 %v4490, %v4728
      %v4876 = vadd.f32 %v4491, %v4730
      %v4877 = vadd.f32 %v4492, %v4732
      %v4878 = vadd.f32 %v4493, %v4734
      %v4879 = vadd.f32 %v4494, %v4736
      %v4880 = vadd.f32 %v4495, %v4738
      %v4881 = vadd.f32 %v4496, %v4740
      %v4882 = vadd.f32 %v4497, %v4742
      %v4883 = vadd.f32 %v4498, %v4744
      %v4884 = vadd.f32 %v4499, %v4746
      %v4885 = vadd.f32 %v4500, %v4748
      %v4886 = vadd.f32 %v4501, %v4750
      %v4887 = vadd.f32 %v4502, %v4752
      %v4888 = vadd.f32 %v4503, %v4754
      %v4889 = vadd.f32 %v4504, %v4756
      %v4890 = vadd.f32 %v4505, %v4758
      %v4891 = vadd.f32 %v4506, %v4760
      %v4892 = vadd.f32 %v4507, %v4762
      %v4893 = vadd.f32 %v4508, %v4764
      %v4894 = vadd.f32 %v4509, %v4766
      %v4895 = vsel %vm4638, %v4640, -3e+38
      %v4896 = vsel %vm4638, %v4642, -3e+38
      %v4897 = vsel %vm4638, %v4644, -3e+38
      %v4898 = vsel %vm4638, %v4646, -3e+38
      %v4899 = vsel %vm4638, %v4648, -3e+38
      %v4900 = vsel %vm4638, %v4650, -3e+38
      %v4901 = vsel %vm4638, %v4652, -3e+38
      %v4902 = vsel %vm4638, %v4654, -3e+38
      %v4903 = vsel %vm4638, %v4656, -3e+38
      %v4904 = vsel %vm4638, %v4658, -3e+38
      %v4905 = vsel %vm4638, %v4660, -3e+38
      %v4906 = vsel %vm4638, %v4662, -3e+38
      %v4907 = vsel %vm4638, %v4664, -3e+38
      %v4908 = vsel %vm4638, %v4666, -3e+38
      %v4909 = vsel %vm4638, %v4668, -3e+38
      %v4910 = vsel %vm4638, %v4670, -3e+38
      %v4911 = vsel %vm4638, %v4672, -3e+38
      %v4912 = vsel %vm4638, %v4674, -3e+38
      %v4913 = vsel %vm4638, %v4676, -3e+38
      %v4914 = vsel %vm4638, %v4678, -3e+38
      %v4915 = vsel %vm4638, %v4680, -3e+38
      %v4916 = vsel %vm4638, %v4682, -3e+38
      %v4917 = vsel %vm4638, %v4684, -3e+38
      %v4918 = vsel %vm4638, %v4686, -3e+38
      %v4919 = vsel %vm4638, %v4688, -3e+38
      %v4920 = vsel %vm4638, %v4690, -3e+38
      %v4921 = vsel %vm4638, %v4692, -3e+38
      %v4922 = vsel %vm4638, %v4694, -3e+38
      %v4923 = vsel %vm4638, %v4696, -3e+38
      %v4924 = vsel %vm4638, %v4698, -3e+38
      %v4925 = vsel %vm4638, %v4700, -3e+38
      %v4926 = vsel %vm4638, %v4702, -3e+38
      %v4927 = vsel %vm4638, %v4704, -3e+38
      %v4928 = vsel %vm4638, %v4706, -3e+38
      %v4929 = vsel %vm4638, %v4708, -3e+38
      %v4930 = vsel %vm4638, %v4710, -3e+38
      %v4931 = vsel %vm4638, %v4712, -3e+38
      %v4932 = vsel %vm4638, %v4714, -3e+38
      %v4933 = vsel %vm4638, %v4716, -3e+38
      %v4934 = vsel %vm4638, %v4718, -3e+38
      %v4935 = vsel %vm4638, %v4720, -3e+38
      %v4936 = vsel %vm4638, %v4722, -3e+38
      %v4937 = vsel %vm4638, %v4724, -3e+38
      %v4938 = vsel %vm4638, %v4726, -3e+38
      %v4939 = vsel %vm4638, %v4728, -3e+38
      %v4940 = vsel %vm4638, %v4730, -3e+38
      %v4941 = vsel %vm4638, %v4732, -3e+38
      %v4942 = vsel %vm4638, %v4734, -3e+38
      %v4943 = vsel %vm4638, %v4736, -3e+38
      %v4944 = vsel %vm4638, %v4738, -3e+38
      %v4945 = vsel %vm4638, %v4740, -3e+38
      %v4946 = vsel %vm4638, %v4742, -3e+38
      %v4947 = vsel %vm4638, %v4744, -3e+38
      %v4948 = vsel %vm4638, %v4746, -3e+38
      %v4949 = vsel %vm4638, %v4748, -3e+38
      %v4950 = vsel %vm4638, %v4750, -3e+38
      %v4951 = vsel %vm4638, %v4752, -3e+38
      %v4952 = vsel %vm4638, %v4754, -3e+38
      %v4953 = vsel %vm4638, %v4756, -3e+38
      %v4954 = vsel %vm4638, %v4758, -3e+38
      %v4955 = vsel %vm4638, %v4760, -3e+38
      %v4956 = vsel %vm4638, %v4762, -3e+38
      %v4957 = vsel %vm4638, %v4764, -3e+38
      %v4958 = vsel %vm4638, %v4766, -3e+38
      %v4959 = vmax.f32 %v4574, %v4895
      %v4960 = vmax.f32 %v4575, %v4896
      %v4961 = vmax.f32 %v4576, %v4897
      %v4962 = vmax.f32 %v4577, %v4898
      %v4963 = vmax.f32 %v4578, %v4899
      %v4964 = vmax.f32 %v4579, %v4900
      %v4965 = vmax.f32 %v4580, %v4901
      %v4966 = vmax.f32 %v4581, %v4902
      %v4967 = vmax.f32 %v4582, %v4903
      %v4968 = vmax.f32 %v4583, %v4904
      %v4969 = vmax.f32 %v4584, %v4905
      %v4970 = vmax.f32 %v4585, %v4906
      %v4971 = vmax.f32 %v4586, %v4907
      %v4972 = vmax.f32 %v4587, %v4908
      %v4973 = vmax.f32 %v4588, %v4909
      %v4974 = vmax.f32 %v4589, %v4910
      %v4975 = vmax.f32 %v4590, %v4911
      %v4976 = vmax.f32 %v4591, %v4912
      %v4977 = vmax.f32 %v4592, %v4913
      %v4978 = vmax.f32 %v4593, %v4914
      %v4979 = vmax.f32 %v4594, %v4915
      %v4980 = vmax.f32 %v4595, %v4916
      %v4981 = vmax.f32 %v4596, %v4917
      %v4982 = vmax.f32 %v4597, %v4918
      %v4983 = vmax.f32 %v4598, %v4919
      %v4984 = vmax.f32 %v4599, %v4920
      %v4985 = vmax.f32 %v4600, %v4921
      %v4986 = vmax.f32 %v4601, %v4922
      %v4987 = vmax.f32 %v4602, %v4923
      %v4988 = vmax.f32 %v4603, %v4924
      %v4989 = vmax.f32 %v4604, %v4925
      %v4990 = vmax.f32 %v4605, %v4926
      %v4991 = vmax.f32 %v4606, %v4927
      %v4992 = vmax.f32 %v4607, %v4928
      %v4993 = vmax.f32 %v4608, %v4929
      %v4994 = vmax.f32 %v4609, %v4930
      %v4995 = vmax.f32 %v4610, %v4931
      %v4996 = vmax.f32 %v4611, %v4932
      %v4997 = vmax.f32 %v4612, %v4933
      %v4998 = vmax.f32 %v4613, %v4934
      %v4999 = vmax.f32 %v4614, %v4935
      %v5000 = vmax.f32 %v4615, %v4936
      %v5001 = vmax.f32 %v4616, %v4937
      %v5002 = vmax.f32 %v4617, %v4938
      %v5003 = vmax.f32 %v4618, %v4939
      %v5004 = vmax.f32 %v4619, %v4940
      %v5005 = vmax.f32 %v4620, %v4941
      %v5006 = vmax.f32 %v4621, %v4942
      %v5007 = vmax.f32 %v4622, %v4943
      %v5008 = vmax.f32 %v4623, %v4944
      %v5009 = vmax.f32 %v4624, %v4945
      %v5010 = vmax.f32 %v4625, %v4946
      %v5011 = vmax.f32 %v4626, %v4947
      %v5012 = vmax.f32 %v4627, %v4948
      %v5013 = vmax.f32 %v4628, %v4949
      %v5014 = vmax.f32 %v4629, %v4950
      %v5015 = vmax.f32 %v4630, %v4951
      %v5016 = vmax.f32 %v4631, %v4952
      %v5017 = vmax.f32 %v4632, %v4953
      %v5018 = vmax.f32 %v4633, %v4954
      %v5019 = vmax.f32 %v4634, %v4955
      %v5020 = vmax.f32 %v4635, %v4956
      %v5021 = vmax.f32 %v4636, %v4957
      %v5022 = vmax.f32 %v4637, %v4958
      %vm5023 = vmand %vm3931, %vm1288
      %5024 = vrot.lane.b32.xlu0 %v3933, 125
      %v5025 = vpop.permute.xlu0 %5024
      %5026 = vrot.lane.b32.xlu0 %v3934, 125
      %v5027 = vpop.permute.xlu0 %5026
      %5028 = vrot.lane.b32.xlu0 %v3935, 125
      %v5029 = vpop.permute.xlu0 %5028
      %5030 = vrot.lane.b32.xlu0 %v3936, 125
      %v5031 = vpop.permute.xlu0 %5030
      %5032 = vrot.lane.b32.xlu0 %v3937, 125
      %v5033 = vpop.permute.xlu0 %5032
      %5034 = vrot.lane.b32.xlu0 %v3938, 125
      %v5035 = vpop.permute.xlu0 %5034
      %5036 = vrot.lane.b32.xlu0 %v3939, 125
      %v5037 = vpop.permute.xlu0 %5036
      %5038 = vrot.lane.b32.xlu0 %v3940, 125
      %v5039 = vpop.permute.xlu0 %5038
      %5040 = vrot.lane.b32.xlu0 %v3941, 125
      %v5041 = vpop.permute.xlu0 %5040
      %5042 = vrot.lane.b32.xlu0 %v3942, 125
      %v5043 = vpop.permute.xlu0 %5042
      %5044 = vrot.lane.b32.xlu0 %v3943, 125
      %v5045 = vpop.permute.xlu0 %5044
      %5046 = vrot.lane.b32.xlu0 %v3944, 125
      %v5047 = vpop.permute.xlu0 %5046
      %5048 = vrot.lane.b32.xlu0 %v3945, 125
      %v5049 = vpop.permute.xlu0 %5048
      %5050 = vrot.lane.b32.xlu0 %v3946, 125
      %v5051 = vpop.permute.xlu0 %5050
      %5052 = vrot.lane.b32.xlu0 %v3947, 125
      %v5053 = vpop.permute.xlu0 %5052
      %5054 = vrot.lane.b32.xlu0 %v3948, 125
      %v5055 = vpop.permute.xlu0 %5054
      %5056 = vrot.lane.b32.xlu0 %v3949, 125
      %v5057 = vpop.permute.xlu0 %5056
      %5058 = vrot.lane.b32.xlu0 %v3950, 125
      %v5059 = vpop.permute.xlu0 %5058
      %5060 = vrot.lane.b32.xlu0 %v3951, 125
      %v5061 = vpop.permute.xlu0 %5060
      %5062 = vrot.lane.b32.xlu0 %v3952, 125
      %v5063 = vpop.permute.xlu0 %5062
      %5064 = vrot.lane.b32.xlu0 %v3953, 125
      %v5065 = vpop.permute.xlu0 %5064
      %5066 = vrot.lane.b32.xlu0 %v3954, 125
      %v5067 = vpop.permute.xlu0 %5066
      %5068 = vrot.lane.b32.xlu0 %v3955, 125
      %v5069 = vpop.permute.xlu0 %5068
      %5070 = vrot.lane.b32.xlu0 %v3956, 125
      %v5071 = vpop.permute.xlu0 %5070
      %5072 = vrot.lane.b32.xlu0 %v3957, 125
      %v5073 = vpop.permute.xlu0 %5072
      %5074 = vrot.lane.b32.xlu0 %v3958, 125
      %v5075 = vpop.permute.xlu0 %5074
      %5076 = vrot.lane.b32.xlu0 %v3959, 125
      %v5077 = vpop.permute.xlu0 %5076
      %5078 = vrot.lane.b32.xlu0 %v3960, 125
      %v5079 = vpop.permute.xlu0 %5078
      %5080 = vrot.lane.b32.xlu0 %v3961, 125
      %v5081 = vpop.permute.xlu0 %5080
      %5082 = vrot.lane.b32.xlu0 %v3962, 125
      %v5083 = vpop.permute.xlu0 %5082
      %5084 = vrot.lane.b32.xlu0 %v3963, 125
      %v5085 = vpop.permute.xlu0 %5084
      %5086 = vrot.lane.b32.xlu0 %v3964, 125
      %v5087 = vpop.permute.xlu0 %5086
      %5088 = vrot.lane.b32.xlu0 %v3965, 125
      %v5089 = vpop.permute.xlu0 %5088
      %5090 = vrot.lane.b32.xlu0 %v3966, 125
      %v5091 = vpop.permute.xlu0 %5090
      %5092 = vrot.lane.b32.xlu0 %v3967, 125
      %v5093 = vpop.permute.xlu0 %5092
      %5094 = vrot.lane.b32.xlu0 %v3968, 125
      %v5095 = vpop.permute.xlu0 %5094
      %5096 = vrot.lane.b32.xlu0 %v3969, 125
      %v5097 = vpop.permute.xlu0 %5096
      %5098 = vrot.lane.b32.xlu0 %v3970, 125
      %v5099 = vpop.permute.xlu0 %5098
      %5100 = vrot.lane.b32.xlu0 %v3971, 125
      %v5101 = vpop.permute.xlu0 %5100
      %5102 = vrot.lane.b32.xlu0 %v3972, 125
      %v5103 = vpop.permute.xlu0 %5102
      %5104 = vrot.lane.b32.xlu0 %v3973, 125
      %v5105 = vpop.permute.xlu0 %5104
      %5106 = vrot.lane.b32.xlu0 %v3974, 125
      %v5107 = vpop.permute.xlu0 %5106
      %5108 = vrot.lane.b32.xlu0 %v3975, 125
      %v5109 = vpop.permute.xlu0 %5108
      %5110 = vrot.lane.b32.xlu0 %v3976, 125
      %v5111 = vpop.permute.xlu0 %5110
      %5112 = vrot.lane.b32.xlu0 %v3977, 125
      %v5113 = vpop.permute.xlu0 %5112
      %5114 = vrot.lane.b32.xlu0 %v3978, 125
      %v5115 = vpop.permute.xlu0 %5114
      %5116 = vrot.lane.b32.xlu0 %v3979, 125
      %v5117 = vpop.permute.xlu0 %5116
      %5118 = vrot.lane.b32.xlu0 %v3980, 125
      %v5119 = vpop.permute.xlu0 %5118
      %5120 = vrot.lane.b32.xlu0 %v3981, 125
      %v5121 = vpop.permute.xlu0 %5120
      %5122 = vrot.lane.b32.xlu0 %v3982, 125
      %v5123 = vpop.permute.xlu0 %5122
      %5124 = vrot.lane.b32.xlu0 %v3983, 125
      %v5125 = vpop.permute.xlu0 %5124
      %5126 = vrot.lane.b32.xlu0 %v3984, 125
      %v5127 = vpop.permute.xlu0 %5126
      %5128 = vrot.lane.b32.xlu0 %v3985, 125
      %v5129 = vpop.permute.xlu0 %5128
      %5130 = vrot.lane.b32.xlu0 %v3986, 125
      %v5131 = vpop.permute.xlu0 %5130
      %5132 = vrot.lane.b32.xlu0 %v3987, 125
      %v5133 = vpop.permute.xlu0 %5132
      %5134 = vrot.lane.b32.xlu0 %v3988, 125
      %v5135 = vpop.permute.xlu0 %5134
      %5136 = vrot.lane.b32.xlu0 %v3989, 125
      %v5137 = vpop.permute.xlu0 %5136
      %5138 = vrot.lane.b32.xlu0 %v3990, 125
      %v5139 = vpop.permute.xlu0 %5138
      %5140 = vrot.lane.b32.xlu0 %v3991, 125
      %v5141 = vpop.permute.xlu0 %5140
      %5142 = vrot.lane.b32.xlu0 %v3992, 125
      %v5143 = vpop.permute.xlu0 %5142
      %5144 = vrot.lane.b32.xlu0 %v3993, 125
      %v5145 = vpop.permute.xlu0 %5144
      %5146 = vrot.lane.b32.xlu0 %v3994, 125
      %v5147 = vpop.permute.xlu0 %5146
      %5148 = vrot.lane.b32.xlu0 %v3995, 125
      %v5149 = vpop.permute.xlu0 %5148
      %5150 = vrot.lane.b32.xlu0 %v3996, 125
      %v5151 = vpop.permute.xlu0 %5150
      %v5216 = vadd.f32 %v4831, %v5025
      %v5217 = vadd.f32 %v4832, %v5027
      %v5218 = vadd.f32 %v4833, %v5029
      %v5219 = vadd.f32 %v4834, %v5031
      %v5220 = vadd.f32 %v4835, %v5033
      %v5221 = vadd.f32 %v4836, %v5035
      %v5222 = vadd.f32 %v4837, %v5037
      %v5223 = vadd.f32 %v4838, %v5039
      %v5224 = vadd.f32 %v4839, %v5041
      %v5225 = vadd.f32 %v4840, %v5043
      %v5226 = vadd.f32 %v4841, %v5045
      %v5227 = vadd.f32 %v4842, %v5047
      %v5228 = vadd.f32 %v4843, %v5049
      %v5229 = vadd.f32 %v4844, %v5051
      %v5230 = vadd.f32 %v4845, %v5053
      %v5231 = vadd.f32 %v4846, %v5055
      %v5232 = vadd.f32 %v4847, %v5057
      %v5233 = vadd.f32 %v4848, %v5059
      %v5234 = vadd.f32 %v4849, %v5061
      %v5235 = vadd.f32 %v4850, %v5063
      %v5236 = vadd.f32 %v4851, %v5065
      %v5237 = vadd.f32 %v4852, %v5067
      %v5238 = vadd.f32 %v4853, %v5069
      %v5239 = vadd.f32 %v4854, %v5071
      %v5240 = vadd.f32 %v4855, %v5073
      %v5241 = vadd.f32 %v4856, %v5075
      %v5242 = vadd.f32 %v4857, %v5077
      %v5243 = vadd.f32 %v4858, %v5079
      %v5244 = vadd.f32 %v4859, %v5081
      %v5245 = vadd.f32 %v4860, %v5083
      %v5246 = vadd.f32 %v4861, %v5085
      %v5247 = vadd.f32 %v4862, %v5087
      %v5248 = vadd.f32 %v4863, %v5089
      %v5249 = vadd.f32 %v4864, %v5091
      %v5250 = vadd.f32 %v4865, %v5093
      %v5251 = vadd.f32 %v4866, %v5095
      %v5252 = vadd.f32 %v4867, %v5097
      %v5253 = vadd.f32 %v4868, %v5099
      %v5254 = vadd.f32 %v4869, %v5101
      %v5255 = vadd.f32 %v4870, %v5103
      %v5256 = vadd.f32 %v4871, %v5105
      %v5257 = vadd.f32 %v4872, %v5107
      %v5258 = vadd.f32 %v4873, %v5109
      %v5259 = vadd.f32 %v4874, %v5111
      %v5260 = vadd.f32 %v4875, %v5113
      %v5261 = vadd.f32 %v4876, %v5115
      %v5262 = vadd.f32 %v4877, %v5117
      %v5263 = vadd.f32 %v4878, %v5119
      %v5264 = vadd.f32 %v4879, %v5121
      %v5265 = vadd.f32 %v4880, %v5123
      %v5266 = vadd.f32 %v4881, %v5125
      %v5267 = vadd.f32 %v4882, %v5127
      %v5268 = vadd.f32 %v4883, %v5129
      %v5269 = vadd.f32 %v4884, %v5131
      %v5270 = vadd.f32 %v4885, %v5133
      %v5271 = vadd.f32 %v4886, %v5135
      %v5272 = vadd.f32 %v4887, %v5137
      %v5273 = vadd.f32 %v4888, %v5139
      %v5274 = vadd.f32 %v4889, %v5141
      %v5275 = vadd.f32 %v4890, %v5143
      %v5276 = vadd.f32 %v4891, %v5145
      %v5277 = vadd.f32 %v4892, %v5147
      %v5278 = vadd.f32 %v4893, %v5149
      %v5279 = vadd.f32 %v4894, %v5151
      %v5280 = vsel %vm5023, %v5025, -3e+38
      %v5281 = vsel %vm5023, %v5027, -3e+38
      %v5282 = vsel %vm5023, %v5029, -3e+38
      %v5283 = vsel %vm5023, %v5031, -3e+38
      %v5284 = vsel %vm5023, %v5033, -3e+38
      %v5285 = vsel %vm5023, %v5035, -3e+38
      %v5286 = vsel %vm5023, %v5037, -3e+38
      %v5287 = vsel %vm5023, %v5039, -3e+38
      %v5288 = vsel %vm5023, %v5041, -3e+38
      %v5289 = vsel %vm5023, %v5043, -3e+38
      %v5290 = vsel %vm5023, %v5045, -3e+38
      %v5291 = vsel %vm5023, %v5047, -3e+38
      %v5292 = vsel %vm5023, %v5049, -3e+38
      %v5293 = vsel %vm5023, %v5051, -3e+38
      %v5294 = vsel %vm5023, %v5053, -3e+38
      %v5295 = vsel %vm5023, %v5055, -3e+38
      %v5296 = vsel %vm5023, %v5057, -3e+38
      %v5297 = vsel %vm5023, %v5059, -3e+38
      %v5298 = vsel %vm5023, %v5061, -3e+38
      %v5299 = vsel %vm5023, %v5063, -3e+38
      %v5300 = vsel %vm5023, %v5065, -3e+38
      %v5301 = vsel %vm5023, %v5067, -3e+38
      %v5302 = vsel %vm5023, %v5069, -3e+38
      %v5303 = vsel %vm5023, %v5071, -3e+38
      %v5304 = vsel %vm5023, %v5073, -3e+38
      %v5305 = vsel %vm5023, %v5075, -3e+38
      %v5306 = vsel %vm5023, %v5077, -3e+38
      %v5307 = vsel %vm5023, %v5079, -3e+38
      %v5308 = vsel %vm5023, %v5081, -3e+38
      %v5309 = vsel %vm5023, %v5083, -3e+38
      %v5310 = vsel %vm5023, %v5085, -3e+38
      %v5311 = vsel %vm5023, %v5087, -3e+38
      %v5312 = vsel %vm5023, %v5089, -3e+38
      %v5313 = vsel %vm5023, %v5091, -3e+38
      %v5314 = vsel %vm5023, %v5093, -3e+38
      %v5315 = vsel %vm5023, %v5095, -3e+38
      %v5316 = vsel %vm5023, %v5097, -3e+38
      %v5317 = vsel %vm5023, %v5099, -3e+38
      %v5318 = vsel %vm5023, %v5101, -3e+38
      %v5319 = vsel %vm5023, %v5103, -3e+38
      %v5320 = vsel %vm5023, %v5105, -3e+38
      %v5321 = vsel %vm5023, %v5107, -3e+38
      %v5322 = vsel %vm5023, %v5109, -3e+38
      %v5323 = vsel %vm5023, %v5111, -3e+38
      %v5324 = vsel %vm5023, %v5113, -3e+38
      %v5325 = vsel %vm5023, %v5115, -3e+38
      %v5326 = vsel %vm5023, %v5117, -3e+38
      %v5327 = vsel %vm5023, %v5119, -3e+38
      %v5328 = vsel %vm5023, %v5121, -3e+38
      %v5329 = vsel %vm5023, %v5123, -3e+38
      %v5330 = vsel %vm5023, %v5125, -3e+38
      %v5331 = vsel %vm5023, %v5127, -3e+38
      %v5332 = vsel %vm5023, %v5129, -3e+38
      %v5333 = vsel %vm5023, %v5131, -3e+38
      %v5334 = vsel %vm5023, %v5133, -3e+38
      %v5335 = vsel %vm5023, %v5135, -3e+38
      %v5336 = vsel %vm5023, %v5137, -3e+38
      %v5337 = vsel %vm5023, %v5139, -3e+38
      %v5338 = vsel %vm5023, %v5141, -3e+38
      %v5339 = vsel %vm5023, %v5143, -3e+38
      %v5340 = vsel %vm5023, %v5145, -3e+38
      %v5341 = vsel %vm5023, %v5147, -3e+38
      %v5342 = vsel %vm5023, %v5149, -3e+38
      %v5343 = vsel %vm5023, %v5151, -3e+38
      %v5344 = vmax.f32 %v4959, %v5280
      %v5345 = vmax.f32 %v4960, %v5281
      %v5346 = vmax.f32 %v4961, %v5282
      %v5347 = vmax.f32 %v4962, %v5283
      %v5348 = vmax.f32 %v4963, %v5284
      %v5349 = vmax.f32 %v4964, %v5285
      %v5350 = vmax.f32 %v4965, %v5286
      %v5351 = vmax.f32 %v4966, %v5287
      %v5352 = vmax.f32 %v4967, %v5288
      %v5353 = vmax.f32 %v4968, %v5289
      %v5354 = vmax.f32 %v4969, %v5290
      %v5355 = vmax.f32 %v4970, %v5291
      %v5356 = vmax.f32 %v4971, %v5292
      %v5357 = vmax.f32 %v4972, %v5293
      %v5358 = vmax.f32 %v4973, %v5294
      %v5359 = vmax.f32 %v4974, %v5295
      %v5360 = vmax.f32 %v4975, %v5296
      %v5361 = vmax.f32 %v4976, %v5297
      %v5362 = vmax.f32 %v4977, %v5298
      %v5363 = vmax.f32 %v4978, %v5299
      %v5364 = vmax.f32 %v4979, %v5300
      %v5365 = vmax.f32 %v4980, %v5301
      %v5366 = vmax.f32 %v4981, %v5302
      %v5367 = vmax.f32 %v4982, %v5303
      %v5368 = vmax.f32 %v4983, %v5304
      %v5369 = vmax.f32 %v4984, %v5305
      %v5370 = vmax.f32 %v4985, %v5306
      %v5371 = vmax.f32 %v4986, %v5307
      %v5372 = vmax.f32 %v4987, %v5308
      %v5373 = vmax.f32 %v4988, %v5309
      %v5374 = vmax.f32 %v4989, %v5310
      %v5375 = vmax.f32 %v4990, %v5311
      %v5376 = vmax.f32 %v4991, %v5312
      %v5377 = vmax.f32 %v4992, %v5313
      %v5378 = vmax.f32 %v4993, %v5314
      %v5379 = vmax.f32 %v4994, %v5315
      %v5380 = vmax.f32 %v4995, %v5316
      %v5381 = vmax.f32 %v4996, %v5317
      %v5382 = vmax.f32 %v4997, %v5318
      %v5383 = vmax.f32 %v4998, %v5319
      %v5384 = vmax.f32 %v4999, %v5320
      %v5385 = vmax.f32 %v5000, %v5321
      %v5386 = vmax.f32 %v5001, %v5322
      %v5387 = vmax.f32 %v5002, %v5323
      %v5388 = vmax.f32 %v5003, %v5324
      %v5389 = vmax.f32 %v5004, %v5325
      %v5390 = vmax.f32 %v5005, %v5326
      %v5391 = vmax.f32 %v5006, %v5327
      %v5392 = vmax.f32 %v5007, %v5328
      %v5393 = vmax.f32 %v5008, %v5329
      %v5394 = vmax.f32 %v5009, %v5330
      %v5395 = vmax.f32 %v5010, %v5331
      %v5396 = vmax.f32 %v5011, %v5332
      %v5397 = vmax.f32 %v5012, %v5333
      %v5398 = vmax.f32 %v5013, %v5334
      %v5399 = vmax.f32 %v5014, %v5335
      %v5400 = vmax.f32 %v5015, %v5336
      %v5401 = vmax.f32 %v5016, %v5337
      %v5402 = vmax.f32 %v5017, %v5338
      %v5403 = vmax.f32 %v5018, %v5339
      %v5404 = vmax.f32 %v5019, %v5340
      %v5405 = vmax.f32 %v5020, %v5341
      %v5406 = vmax.f32 %v5021, %v5342
      %v5407 = vmax.f32 %v5022, %v5343
      %vm5408 = vmand %vm3931, %vm1677
      %5409 = vrot.lane.b32.xlu0 %v3933, 124
      %v5410 = vpop.permute.xlu0 %5409
      %5411 = vrot.lane.b32.xlu0 %v3934, 124
      %v5412 = vpop.permute.xlu0 %5411
      %5413 = vrot.lane.b32.xlu0 %v3935, 124
      %v5414 = vpop.permute.xlu0 %5413
      %5415 = vrot.lane.b32.xlu0 %v3936, 124
      %v5416 = vpop.permute.xlu0 %5415
      %5417 = vrot.lane.b32.xlu0 %v3937, 124
      %v5418 = vpop.permute.xlu0 %5417
      %5419 = vrot.lane.b32.xlu0 %v3938, 124
      %v5420 = vpop.permute.xlu0 %5419
      %5421 = vrot.lane.b32.xlu0 %v3939, 124
      %v5422 = vpop.permute.xlu0 %5421
      %5423 = vrot.lane.b32.xlu0 %v3940, 124
      %v5424 = vpop.permute.xlu0 %5423
      %5425 = vrot.lane.b32.xlu0 %v3941, 124
      %v5426 = vpop.permute.xlu0 %5425
      %5427 = vrot.lane.b32.xlu0 %v3942, 124
      %v5428 = vpop.permute.xlu0 %5427
      %5429 = vrot.lane.b32.xlu0 %v3943, 124
      %v5430 = vpop.permute.xlu0 %5429
      %5431 = vrot.lane.b32.xlu0 %v3944, 124
      %v5432 = vpop.permute.xlu0 %5431
      %5433 = vrot.lane.b32.xlu0 %v3945, 124
      %v5434 = vpop.permute.xlu0 %5433
      %5435 = vrot.lane.b32.xlu0 %v3946, 124
      %v5436 = vpop.permute.xlu0 %5435
      %5437 = vrot.lane.b32.xlu0 %v3947, 124
      %v5438 = vpop.permute.xlu0 %5437
      %5439 = vrot.lane.b32.xlu0 %v3948, 124
      %v5440 = vpop.permute.xlu0 %5439
      %5441 = vrot.lane.b32.xlu0 %v3949, 124
      %v5442 = vpop.permute.xlu0 %5441
      %5443 = vrot.lane.b32.xlu0 %v3950, 124
      %v5444 = vpop.permute.xlu0 %5443
      %5445 = vrot.lane.b32.xlu0 %v3951, 124
      %v5446 = vpop.permute.xlu0 %5445
      %5447 = vrot.lane.b32.xlu0 %v3952, 124
      %v5448 = vpop.permute.xlu0 %5447
      %5449 = vrot.lane.b32.xlu0 %v3953, 124
      %v5450 = vpop.permute.xlu0 %5449
      %5451 = vrot.lane.b32.xlu0 %v3954, 124
      %v5452 = vpop.permute.xlu0 %5451
      %5453 = vrot.lane.b32.xlu0 %v3955, 124
      %v5454 = vpop.permute.xlu0 %5453
      %5455 = vrot.lane.b32.xlu0 %v3956, 124
      %v5456 = vpop.permute.xlu0 %5455
      %5457 = vrot.lane.b32.xlu0 %v3957, 124
      %v5458 = vpop.permute.xlu0 %5457
      %5459 = vrot.lane.b32.xlu0 %v3958, 124
      %v5460 = vpop.permute.xlu0 %5459
      %5461 = vrot.lane.b32.xlu0 %v3959, 124
      %v5462 = vpop.permute.xlu0 %5461
      %5463 = vrot.lane.b32.xlu0 %v3960, 124
      %v5464 = vpop.permute.xlu0 %5463
      %5465 = vrot.lane.b32.xlu0 %v3961, 124
      %v5466 = vpop.permute.xlu0 %5465
      %5467 = vrot.lane.b32.xlu0 %v3962, 124
      %v5468 = vpop.permute.xlu0 %5467
      %5469 = vrot.lane.b32.xlu0 %v3963, 124
      %v5470 = vpop.permute.xlu0 %5469
      %5471 = vrot.lane.b32.xlu0 %v3964, 124
      %v5472 = vpop.permute.xlu0 %5471
      %5473 = vrot.lane.b32.xlu0 %v3965, 124
      %v5474 = vpop.permute.xlu0 %5473
      %5475 = vrot.lane.b32.xlu0 %v3966, 124
      %v5476 = vpop.permute.xlu0 %5475
      %5477 = vrot.lane.b32.xlu0 %v3967, 124
      %v5478 = vpop.permute.xlu0 %5477
      %5479 = vrot.lane.b32.xlu0 %v3968, 124
      %v5480 = vpop.permute.xlu0 %5479
      %5481 = vrot.lane.b32.xlu0 %v3969, 124
      %v5482 = vpop.permute.xlu0 %5481
      %5483 = vrot.lane.b32.xlu0 %v3970, 124
      %v5484 = vpop.permute.xlu0 %5483
      %5485 = vrot.lane.b32.xlu0 %v3971, 124
      %v5486 = vpop.permute.xlu0 %5485
      %5487 = vrot.lane.b32.xlu0 %v3972, 124
      %v5488 = vpop.permute.xlu0 %5487
      %5489 = vrot.lane.b32.xlu0 %v3973, 124
      %v5490 = vpop.permute.xlu0 %5489
      %5491 = vrot.lane.b32.xlu0 %v3974, 124
      %v5492 = vpop.permute.xlu0 %5491
      %5493 = vrot.lane.b32.xlu0 %v3975, 124
      %v5494 = vpop.permute.xlu0 %5493
      %5495 = vrot.lane.b32.xlu0 %v3976, 124
      %v5496 = vpop.permute.xlu0 %5495
      %5497 = vrot.lane.b32.xlu0 %v3977, 124
      %v5498 = vpop.permute.xlu0 %5497
      %5499 = vrot.lane.b32.xlu0 %v3978, 124
      %v5500 = vpop.permute.xlu0 %5499
      %5501 = vrot.lane.b32.xlu0 %v3979, 124
      %v5502 = vpop.permute.xlu0 %5501
      %5503 = vrot.lane.b32.xlu0 %v3980, 124
      %v5504 = vpop.permute.xlu0 %5503
      %5505 = vrot.lane.b32.xlu0 %v3981, 124
      %v5506 = vpop.permute.xlu0 %5505
      %5507 = vrot.lane.b32.xlu0 %v3982, 124
      %v5508 = vpop.permute.xlu0 %5507
      %5509 = vrot.lane.b32.xlu0 %v3983, 124
      %v5510 = vpop.permute.xlu0 %5509
      %5511 = vrot.lane.b32.xlu0 %v3984, 124
      %v5512 = vpop.permute.xlu0 %5511
      %5513 = vrot.lane.b32.xlu0 %v3985, 124
      %v5514 = vpop.permute.xlu0 %5513
      %5515 = vrot.lane.b32.xlu0 %v3986, 124
      %v5516 = vpop.permute.xlu0 %5515
      %5517 = vrot.lane.b32.xlu0 %v3987, 124
      %v5518 = vpop.permute.xlu0 %5517
      %5519 = vrot.lane.b32.xlu0 %v3988, 124
      %v5520 = vpop.permute.xlu0 %5519
      %5521 = vrot.lane.b32.xlu0 %v3989, 124
      %v5522 = vpop.permute.xlu0 %5521
      %5523 = vrot.lane.b32.xlu0 %v3990, 124
      %v5524 = vpop.permute.xlu0 %5523
      %5525 = vrot.lane.b32.xlu0 %v3991, 124
      %v5526 = vpop.permute.xlu0 %5525
      %5527 = vrot.lane.b32.xlu0 %v3992, 124
      %v5528 = vpop.permute.xlu0 %5527
      %5529 = vrot.lane.b32.xlu0 %v3993, 124
      %v5530 = vpop.permute.xlu0 %5529
      %5531 = vrot.lane.b32.xlu0 %v3994, 124
      %v5532 = vpop.permute.xlu0 %5531
      %5533 = vrot.lane.b32.xlu0 %v3995, 124
      %v5534 = vpop.permute.xlu0 %5533
      %5535 = vrot.lane.b32.xlu0 %v3996, 124
      %v5536 = vpop.permute.xlu0 %5535
      %v5601 = vadd.f32 %v5216, %v5410
      %v5602 = vadd.f32 %v5217, %v5412
      %v5603 = vadd.f32 %v5218, %v5414
      %v5604 = vadd.f32 %v5219, %v5416
      %v5605 = vadd.f32 %v5220, %v5418
      %v5606 = vadd.f32 %v5221, %v5420
      %v5607 = vadd.f32 %v5222, %v5422
      %v5608 = vadd.f32 %v5223, %v5424
      %v5609 = vadd.f32 %v5224, %v5426
      %v5610 = vadd.f32 %v5225, %v5428
      %v5611 = vadd.f32 %v5226, %v5430
      %v5612 = vadd.f32 %v5227, %v5432
      %v5613 = vadd.f32 %v5228, %v5434
      %v5614 = vadd.f32 %v5229, %v5436
      %v5615 = vadd.f32 %v5230, %v5438
      %v5616 = vadd.f32 %v5231, %v5440
      %v5617 = vadd.f32 %v5232, %v5442
      %v5618 = vadd.f32 %v5233, %v5444
      %v5619 = vadd.f32 %v5234, %v5446
      %v5620 = vadd.f32 %v5235, %v5448
      %v5621 = vadd.f32 %v5236, %v5450
      %v5622 = vadd.f32 %v5237, %v5452
      %v5623 = vadd.f32 %v5238, %v5454
      %v5624 = vadd.f32 %v5239, %v5456
      %v5625 = vadd.f32 %v5240, %v5458
      %v5626 = vadd.f32 %v5241, %v5460
      %v5627 = vadd.f32 %v5242, %v5462
      %v5628 = vadd.f32 %v5243, %v5464
      %v5629 = vadd.f32 %v5244, %v5466
      %v5630 = vadd.f32 %v5245, %v5468
      %v5631 = vadd.f32 %v5246, %v5470
      %v5632 = vadd.f32 %v5247, %v5472
      %v5633 = vadd.f32 %v5248, %v5474
      %v5634 = vadd.f32 %v5249, %v5476
      %v5635 = vadd.f32 %v5250, %v5478
      %v5636 = vadd.f32 %v5251, %v5480
      %v5637 = vadd.f32 %v5252, %v5482
      %v5638 = vadd.f32 %v5253, %v5484
      %v5639 = vadd.f32 %v5254, %v5486
      %v5640 = vadd.f32 %v5255, %v5488
      %v5641 = vadd.f32 %v5256, %v5490
      %v5642 = vadd.f32 %v5257, %v5492
      %v5643 = vadd.f32 %v5258, %v5494
      %v5644 = vadd.f32 %v5259, %v5496
      %v5645 = vadd.f32 %v5260, %v5498
      %v5646 = vadd.f32 %v5261, %v5500
      %v5647 = vadd.f32 %v5262, %v5502
      %v5648 = vadd.f32 %v5263, %v5504
      %v5649 = vadd.f32 %v5264, %v5506
      %v5650 = vadd.f32 %v5265, %v5508
      %v5651 = vadd.f32 %v5266, %v5510
      %v5652 = vadd.f32 %v5267, %v5512
      %v5653 = vadd.f32 %v5268, %v5514
      %v5654 = vadd.f32 %v5269, %v5516
      %v5655 = vadd.f32 %v5270, %v5518
      %v5656 = vadd.f32 %v5271, %v5520
      %v5657 = vadd.f32 %v5272, %v5522
      %v5658 = vadd.f32 %v5273, %v5524
      %v5659 = vadd.f32 %v5274, %v5526
      %v5660 = vadd.f32 %v5275, %v5528
      %v5661 = vadd.f32 %v5276, %v5530
      %v5662 = vadd.f32 %v5277, %v5532
      %v5663 = vadd.f32 %v5278, %v5534
      %v5664 = vadd.f32 %v5279, %v5536
      %v5665 = vsel %vm5408, %v5410, -3e+38
      %v5666 = vsel %vm5408, %v5412, -3e+38
      %v5667 = vsel %vm5408, %v5414, -3e+38
      %v5668 = vsel %vm5408, %v5416, -3e+38
      %v5669 = vsel %vm5408, %v5418, -3e+38
      %v5670 = vsel %vm5408, %v5420, -3e+38
      %v5671 = vsel %vm5408, %v5422, -3e+38
      %v5672 = vsel %vm5408, %v5424, -3e+38
      %v5673 = vsel %vm5408, %v5426, -3e+38
      %v5674 = vsel %vm5408, %v5428, -3e+38
      %v5675 = vsel %vm5408, %v5430, -3e+38
      %v5676 = vsel %vm5408, %v5432, -3e+38
      %v5677 = vsel %vm5408, %v5434, -3e+38
      %v5678 = vsel %vm5408, %v5436, -3e+38
      %v5679 = vsel %vm5408, %v5438, -3e+38
      %v5680 = vsel %vm5408, %v5440, -3e+38
      %v5681 = vsel %vm5408, %v5442, -3e+38
      %v5682 = vsel %vm5408, %v5444, -3e+38
      %v5683 = vsel %vm5408, %v5446, -3e+38
      %v5684 = vsel %vm5408, %v5448, -3e+38
      %v5685 = vsel %vm5408, %v5450, -3e+38
      %v5686 = vsel %vm5408, %v5452, -3e+38
      %v5687 = vsel %vm5408, %v5454, -3e+38
      %v5688 = vsel %vm5408, %v5456, -3e+38
      %v5689 = vsel %vm5408, %v5458, -3e+38
      %v5690 = vsel %vm5408, %v5460, -3e+38
      %v5691 = vsel %vm5408, %v5462, -3e+38
      %v5692 = vsel %vm5408, %v5464, -3e+38
      %v5693 = vsel %vm5408, %v5466, -3e+38
      %v5694 = vsel %vm5408, %v5468, -3e+38
      %v5695 = vsel %vm5408, %v5470, -3e+38
      %v5696 = vsel %vm5408, %v5472, -3e+38
      %v5697 = vsel %vm5408, %v5474, -3e+38
      %v5698 = vsel %vm5408, %v5476, -3e+38
      %v5699 = vsel %vm5408, %v5478, -3e+38
      %v5700 = vsel %vm5408, %v5480, -3e+38
      %v5701 = vsel %vm5408, %v5482, -3e+38
      %v5702 = vsel %vm5408, %v5484, -3e+38
      %v5703 = vsel %vm5408, %v5486, -3e+38
      %v5704 = vsel %vm5408, %v5488, -3e+38
      %v5705 = vsel %vm5408, %v5490, -3e+38
      %v5706 = vsel %vm5408, %v5492, -3e+38
      %v5707 = vsel %vm5408, %v5494, -3e+38
      %v5708 = vsel %vm5408, %v5496, -3e+38
      %v5709 = vsel %vm5408, %v5498, -3e+38
      %v5710 = vsel %vm5408, %v5500, -3e+38
      %v5711 = vsel %vm5408, %v5502, -3e+38
      %v5712 = vsel %vm5408, %v5504, -3e+38
      %v5713 = vsel %vm5408, %v5506, -3e+38
      %v5714 = vsel %vm5408, %v5508, -3e+38
      %v5715 = vsel %vm5408, %v5510, -3e+38
      %v5716 = vsel %vm5408, %v5512, -3e+38
      %v5717 = vsel %vm5408, %v5514, -3e+38
      %v5718 = vsel %vm5408, %v5516, -3e+38
      %v5719 = vsel %vm5408, %v5518, -3e+38
      %v5720 = vsel %vm5408, %v5520, -3e+38
      %v5721 = vsel %vm5408, %v5522, -3e+38
      %v5722 = vsel %vm5408, %v5524, -3e+38
      %v5723 = vsel %vm5408, %v5526, -3e+38
      %v5724 = vsel %vm5408, %v5528, -3e+38
      %v5725 = vsel %vm5408, %v5530, -3e+38
      %v5726 = vsel %vm5408, %v5532, -3e+38
      %v5727 = vsel %vm5408, %v5534, -3e+38
      %v5728 = vsel %vm5408, %v5536, -3e+38
      %v5729 = vmax.f32 %v5344, %v5665
      %v5730 = vmax.f32 %v5345, %v5666
      %v5731 = vmax.f32 %v5346, %v5667
      %v5732 = vmax.f32 %v5347, %v5668
      %v5733 = vmax.f32 %v5348, %v5669
      %v5734 = vmax.f32 %v5349, %v5670
      %v5735 = vmax.f32 %v5350, %v5671
      %v5736 = vmax.f32 %v5351, %v5672
      %v5737 = vmax.f32 %v5352, %v5673
      %v5738 = vmax.f32 %v5353, %v5674
      %v5739 = vmax.f32 %v5354, %v5675
      %v5740 = vmax.f32 %v5355, %v5676
      %v5741 = vmax.f32 %v5356, %v5677
      %v5742 = vmax.f32 %v5357, %v5678
      %v5743 = vmax.f32 %v5358, %v5679
      %v5744 = vmax.f32 %v5359, %v5680
      %v5745 = vmax.f32 %v5360, %v5681
      %v5746 = vmax.f32 %v5361, %v5682
      %v5747 = vmax.f32 %v5362, %v5683
      %v5748 = vmax.f32 %v5363, %v5684
      %v5749 = vmax.f32 %v5364, %v5685
      %v5750 = vmax.f32 %v5365, %v5686
      %v5751 = vmax.f32 %v5366, %v5687
      %v5752 = vmax.f32 %v5367, %v5688
      %v5753 = vmax.f32 %v5368, %v5689
      %v5754 = vmax.f32 %v5369, %v5690
      %v5755 = vmax.f32 %v5370, %v5691
      %v5756 = vmax.f32 %v5371, %v5692
      %v5757 = vmax.f32 %v5372, %v5693
      %v5758 = vmax.f32 %v5373, %v5694
      %v5759 = vmax.f32 %v5374, %v5695
      %v5760 = vmax.f32 %v5375, %v5696
      %v5761 = vmax.f32 %v5376, %v5697
      %v5762 = vmax.f32 %v5377, %v5698
      %v5763 = vmax.f32 %v5378, %v5699
      %v5764 = vmax.f32 %v5379, %v5700
      %v5765 = vmax.f32 %v5380, %v5701
      %v5766 = vmax.f32 %v5381, %v5702
      %v5767 = vmax.f32 %v5382, %v5703
      %v5768 = vmax.f32 %v5383, %v5704
      %v5769 = vmax.f32 %v5384, %v5705
      %v5770 = vmax.f32 %v5385, %v5706
      %v5771 = vmax.f32 %v5386, %v5707
      %v5772 = vmax.f32 %v5387, %v5708
      %v5773 = vmax.f32 %v5388, %v5709
      %v5774 = vmax.f32 %v5389, %v5710
      %v5775 = vmax.f32 %v5390, %v5711
      %v5776 = vmax.f32 %v5391, %v5712
      %v5777 = vmax.f32 %v5392, %v5713
      %v5778 = vmax.f32 %v5393, %v5714
      %v5779 = vmax.f32 %v5394, %v5715
      %v5780 = vmax.f32 %v5395, %v5716
      %v5781 = vmax.f32 %v5396, %v5717
      %v5782 = vmax.f32 %v5397, %v5718
      %v5783 = vmax.f32 %v5398, %v5719
      %v5784 = vmax.f32 %v5399, %v5720
      %v5785 = vmax.f32 %v5400, %v5721
      %v5786 = vmax.f32 %v5401, %v5722
      %v5787 = vmax.f32 %v5402, %v5723
      %v5788 = vmax.f32 %v5403, %v5724
      %v5789 = vmax.f32 %v5404, %v5725
      %v5790 = vmax.f32 %v5405, %v5726
      %v5791 = vmax.f32 %v5406, %v5727
      %v5792 = vmax.f32 %v5407, %v5728
      %v5793 = vmul.f32 %v5601, 0.06666667
      %v5794 = vmul.f32 %v5602, 0.06666667
      %v5795 = vmul.f32 %v5603, 0.06666667
      %v5796 = vmul.f32 %v5604, 0.06666667
      %v5797 = vmul.f32 %v5605, 0.06666667
      %v5798 = vmul.f32 %v5606, 0.06666667
      %v5799 = vmul.f32 %v5607, 0.06666667
      %v5800 = vmul.f32 %v5608, 0.06666667
      %v5801 = vmul.f32 %v5609, 0.06666667
      %v5802 = vmul.f32 %v5610, 0.06666667
      %v5803 = vmul.f32 %v5611, 0.06666667
      %v5804 = vmul.f32 %v5612, 0.06666667
      %v5805 = vmul.f32 %v5613, 0.06666667
      %v5806 = vmul.f32 %v5614, 0.06666667
      %v5807 = vmul.f32 %v5615, 0.06666667
      %v5808 = vmul.f32 %v5616, 0.06666667
      %v5809 = vmul.f32 %v5617, 0.06666667
      %v5810 = vmul.f32 %v5618, 0.06666667
      %v5811 = vmul.f32 %v5619, 0.06666667
      %v5812 = vmul.f32 %v5620, 0.06666667
      %v5813 = vmul.f32 %v5621, 0.06666667
      %v5814 = vmul.f32 %v5622, 0.06666667
      %v5815 = vmul.f32 %v5623, 0.06666667
      %v5816 = vmul.f32 %v5624, 0.06666667
      %v5817 = vmul.f32 %v5625, 0.06666667
      %v5818 = vmul.f32 %v5626, 0.06666667
      %v5819 = vmul.f32 %v5627, 0.06666667
      %v5820 = vmul.f32 %v5628, 0.06666667
      %v5821 = vmul.f32 %v5629, 0.06666667
      %v5822 = vmul.f32 %v5630, 0.06666667
      %v5823 = vmul.f32 %v5631, 0.06666667
      %v5824 = vmul.f32 %v5632, 0.06666667
      %v5825 = vmul.f32 %v5633, 0.06666667
      %v5826 = vmul.f32 %v5634, 0.06666667
      %v5827 = vmul.f32 %v5635, 0.06666667
      %v5828 = vmul.f32 %v5636, 0.06666667
      %v5829 = vmul.f32 %v5637, 0.06666667
      %v5830 = vmul.f32 %v5638, 0.06666667
      %v5831 = vmul.f32 %v5639, 0.06666667
      %v5832 = vmul.f32 %v5640, 0.06666667
      %v5833 = vmul.f32 %v5641, 0.06666667
      %v5834 = vmul.f32 %v5642, 0.06666667
      %v5835 = vmul.f32 %v5643, 0.06666667
      %v5836 = vmul.f32 %v5644, 0.06666667
      %v5837 = vmul.f32 %v5645, 0.06666667
      %v5838 = vmul.f32 %v5646, 0.06666667
      %v5839 = vmul.f32 %v5647, 0.06666667
      %v5840 = vmul.f32 %v5648, 0.06666667
      %v5841 = vmul.f32 %v5649, 0.06666667
      %v5842 = vmul.f32 %v5650, 0.06666667
      %v5843 = vmul.f32 %v5651, 0.06666667
      %v5844 = vmul.f32 %v5652, 0.06666667
      %v5845 = vmul.f32 %v5653, 0.06666667
      %v5846 = vmul.f32 %v5654, 0.06666667
      %v5847 = vmul.f32 %v5655, 0.06666667
      %v5848 = vmul.f32 %v5656, 0.06666667
      %v5849 = vmul.f32 %v5657, 0.06666667
      %v5850 = vmul.f32 %v5658, 0.06666667
      %v5851 = vmul.f32 %v5659, 0.06666667
      %v5852 = vmul.f32 %v5660, 0.06666667
      %v5853 = vmul.f32 %v5661, 0.06666667
      %v5854 = vmul.f32 %v5662, 0.06666667
      %v5855 = vmul.f32 %v5663, 0.06666667
      %v5856 = vmul.f32 %v5664, 0.06666667
      %v5857 = vadd.f32 %v5793, %v5729
      %v5858 = vadd.f32 %v5794, %v5730
      %v5859 = vadd.f32 %v5795, %v5731
      %v5860 = vadd.f32 %v5796, %v5732
      %v5861 = vadd.f32 %v5797, %v5733
      %v5862 = vadd.f32 %v5798, %v5734
      %v5863 = vadd.f32 %v5799, %v5735
      %v5864 = vadd.f32 %v5800, %v5736
      %v5865 = vadd.f32 %v5801, %v5737
      %v5866 = vadd.f32 %v5802, %v5738
      %v5867 = vadd.f32 %v5803, %v5739
      %v5868 = vadd.f32 %v5804, %v5740
      %v5869 = vadd.f32 %v5805, %v5741
      %v5870 = vadd.f32 %v5806, %v5742
      %v5871 = vadd.f32 %v5807, %v5743
      %v5872 = vadd.f32 %v5808, %v5744
      %v5873 = vadd.f32 %v5809, %v5745
      %v5874 = vadd.f32 %v5810, %v5746
      %v5875 = vadd.f32 %v5811, %v5747
      %v5876 = vadd.f32 %v5812, %v5748
      %v5877 = vadd.f32 %v5813, %v5749
      %v5878 = vadd.f32 %v5814, %v5750
      %v5879 = vadd.f32 %v5815, %v5751
      %v5880 = vadd.f32 %v5816, %v5752
      %v5881 = vadd.f32 %v5817, %v5753
      %v5882 = vadd.f32 %v5818, %v5754
      %v5883 = vadd.f32 %v5819, %v5755
      %v5884 = vadd.f32 %v5820, %v5756
      %v5885 = vadd.f32 %v5821, %v5757
      %v5886 = vadd.f32 %v5822, %v5758
      %v5887 = vadd.f32 %v5823, %v5759
      %v5888 = vadd.f32 %v5824, %v5760
      %v5889 = vadd.f32 %v5825, %v5761
      %v5890 = vadd.f32 %v5826, %v5762
      %v5891 = vadd.f32 %v5827, %v5763
      %v5892 = vadd.f32 %v5828, %v5764
      %v5893 = vadd.f32 %v5829, %v5765
      %v5894 = vadd.f32 %v5830, %v5766
      %v5895 = vadd.f32 %v5831, %v5767
      %v5896 = vadd.f32 %v5832, %v5768
      %v5897 = vadd.f32 %v5833, %v5769
      %v5898 = vadd.f32 %v5834, %v5770
      %v5899 = vadd.f32 %v5835, %v5771
      %v5900 = vadd.f32 %v5836, %v5772
      %v5901 = vadd.f32 %v5837, %v5773
      %v5902 = vadd.f32 %v5838, %v5774
      %v5903 = vadd.f32 %v5839, %v5775
      %v5904 = vadd.f32 %v5840, %v5776
      %v5905 = vadd.f32 %v5841, %v5777
      %v5906 = vadd.f32 %v5842, %v5778
      %v5907 = vadd.f32 %v5843, %v5779
      %v5908 = vadd.f32 %v5844, %v5780
      %v5909 = vadd.f32 %v5845, %v5781
      %v5910 = vadd.f32 %v5846, %v5782
      %v5911 = vadd.f32 %v5847, %v5783
      %v5912 = vadd.f32 %v5848, %v5784
      %v5913 = vadd.f32 %v5849, %v5785
      %v5914 = vadd.f32 %v5850, %v5786
      %v5915 = vadd.f32 %v5851, %v5787
      %v5916 = vadd.f32 %v5852, %v5788
      %v5917 = vadd.f32 %v5853, %v5789
      %v5918 = vadd.f32 %v5854, %v5790
      %v5919 = vadd.f32 %v5855, %v5791
      %v5920 = vadd.f32 %v5856, %v5792
      %v5921 = vmul.f32 %v5857, 0.5
      %v5922 = vmul.f32 %v5858, 0.5
      %v5923 = vmul.f32 %v5859, 0.5
      %v5924 = vmul.f32 %v5860, 0.5
      %v5925 = vmul.f32 %v5861, 0.5
      %v5926 = vmul.f32 %v5862, 0.5
      %v5927 = vmul.f32 %v5863, 0.5
      %v5928 = vmul.f32 %v5864, 0.5
      %v5929 = vmul.f32 %v5865, 0.5
      %v5930 = vmul.f32 %v5866, 0.5
      %v5931 = vmul.f32 %v5867, 0.5
      %v5932 = vmul.f32 %v5868, 0.5
      %v5933 = vmul.f32 %v5869, 0.5
      %v5934 = vmul.f32 %v5870, 0.5
      %v5935 = vmul.f32 %v5871, 0.5
      %v5936 = vmul.f32 %v5872, 0.5
      %v5937 = vmul.f32 %v5873, 0.5
      %v5938 = vmul.f32 %v5874, 0.5
      %v5939 = vmul.f32 %v5875, 0.5
      %v5940 = vmul.f32 %v5876, 0.5
      %v5941 = vmul.f32 %v5877, 0.5
      %v5942 = vmul.f32 %v5878, 0.5
      %v5943 = vmul.f32 %v5879, 0.5
      %v5944 = vmul.f32 %v5880, 0.5
      %v5945 = vmul.f32 %v5881, 0.5
      %v5946 = vmul.f32 %v5882, 0.5
      %v5947 = vmul.f32 %v5883, 0.5
      %v5948 = vmul.f32 %v5884, 0.5
      %v5949 = vmul.f32 %v5885, 0.5
      %v5950 = vmul.f32 %v5886, 0.5
      %v5951 = vmul.f32 %v5887, 0.5
      %v5952 = vmul.f32 %v5888, 0.5
      %v5953 = vmul.f32 %v5889, 0.5
      %v5954 = vmul.f32 %v5890, 0.5
      %v5955 = vmul.f32 %v5891, 0.5
      %v5956 = vmul.f32 %v5892, 0.5
      %v5957 = vmul.f32 %v5893, 0.5
      %v5958 = vmul.f32 %v5894, 0.5
      %v5959 = vmul.f32 %v5895, 0.5
      %v5960 = vmul.f32 %v5896, 0.5
      %v5961 = vmul.f32 %v5897, 0.5
      %v5962 = vmul.f32 %v5898, 0.5
      %v5963 = vmul.f32 %v5899, 0.5
      %v5964 = vmul.f32 %v5900, 0.5
      %v5965 = vmul.f32 %v5901, 0.5
      %v5966 = vmul.f32 %v5902, 0.5
      %v5967 = vmul.f32 %v5903, 0.5
      %v5968 = vmul.f32 %v5904, 0.5
      %v5969 = vmul.f32 %v5905, 0.5
      %v5970 = vmul.f32 %v5906, 0.5
      %v5971 = vmul.f32 %v5907, 0.5
      %v5972 = vmul.f32 %v5908, 0.5
      %v5973 = vmul.f32 %v5909, 0.5
      %v5974 = vmul.f32 %v5910, 0.5
      %v5975 = vmul.f32 %v5911, 0.5
      %v5976 = vmul.f32 %v5912, 0.5
      %v5977 = vmul.f32 %v5913, 0.5
      %v5978 = vmul.f32 %v5914, 0.5
      %v5979 = vmul.f32 %v5915, 0.5
      %v5980 = vmul.f32 %v5916, 0.5
      %v5981 = vmul.f32 %v5917, 0.5
      %v5982 = vmul.f32 %v5918, 0.5
      %v5983 = vmul.f32 %v5919, 0.5
      %v5984 = vmul.f32 %v5920, 0.5
      %vm5985 = vcmask 261120
      %5986 = vst.msk [vmem:[%s173] sm:$0xff] %vm5985, %v5921
      %5987 = vst.msk [vmem:[%s173 + $0x8] sm:$0xff] %vm5985, %v5922
      %5988 = vst.msk [vmem:[%s173 + $0x10] sm:$0xff] %vm5985, %v5923
      %5989 = vst.msk [vmem:[%s173 + $0x18] sm:$0xff] %vm5985, %v5924
      %5990 = vst.msk [vmem:[%s173 + $0x20] sm:$0xff] %vm5985, %v5925
      %5991 = vst.msk [vmem:[%s173 + $0x28] sm:$0xff] %vm5985, %v5926
      %5992 = vst.msk [vmem:[%s173 + $0x30] sm:$0xff] %vm5985, %v5927
      %5993 = vst.msk [vmem:[%s173 + $0x38] sm:$0xff] %vm5985, %v5928
      %5994 = vst.msk [vmem:[%s173 + $0x40] sm:$0xff] %vm5985, %v5929
      %5995 = vst.msk [vmem:[%s173 + $0x48] sm:$0xff] %vm5985, %v5930
      %5996 = vst.msk [vmem:[%s173 + $0x50] sm:$0xff] %vm5985, %v5931
      %5997 = vst.msk [vmem:[%s173 + $0x58] sm:$0xff] %vm5985, %v5932
      %5998 = vst.msk [vmem:[%s173 + $0x60] sm:$0xff] %vm5985, %v5933
      %5999 = vst.msk [vmem:[%s173 + $0x68] sm:$0xff] %vm5985, %v5934
      %6000 = vst.msk [vmem:[%s173 + $0x70] sm:$0xff] %vm5985, %v5935
      %6001 = vst.msk [vmem:[%s173 + $0x78] sm:$0xff] %vm5985, %v5936
      %6002 = vst.msk [vmem:[%s173 + $0x80] sm:$0xff] %vm5985, %v5937
      %6003 = vst.msk [vmem:[%s173 + $0x88] sm:$0xff] %vm5985, %v5938
      %6004 = vst.msk [vmem:[%s173 + $0x90] sm:$0xff] %vm5985, %v5939
      %6005 = vst.msk [vmem:[%s173 + $0x98] sm:$0xff] %vm5985, %v5940
      %6006 = vst.msk [vmem:[%s173 + $0xa0] sm:$0xff] %vm5985, %v5941
      %6007 = vst.msk [vmem:[%s173 + $0xa8] sm:$0xff] %vm5985, %v5942
      %6008 = vst.msk [vmem:[%s173 + $0xb0] sm:$0xff] %vm5985, %v5943
      %6009 = vst.msk [vmem:[%s173 + $0xb8] sm:$0xff] %vm5985, %v5944
      %6010 = vst.msk [vmem:[%s173 + $0xc0] sm:$0xff] %vm5985, %v5945
      %6011 = vst.msk [vmem:[%s173 + $0xc8] sm:$0xff] %vm5985, %v5946
      %6012 = vst.msk [vmem:[%s173 + $0xd0] sm:$0xff] %vm5985, %v5947
      %6013 = vst.msk [vmem:[%s173 + $0xd8] sm:$0xff] %vm5985, %v5948
      %6014 = vst.msk [vmem:[%s173 + $0xe0] sm:$0xff] %vm5985, %v5949
      %6015 = vst.msk [vmem:[%s173 + $0xe8] sm:$0xff] %vm5985, %v5950
      %6016 = vst.msk [vmem:[%s173 + $0xf0] sm:$0xff] %vm5985, %v5951
      %6017 = vst.msk [vmem:[%s173 + $0xf8] sm:$0xff] %vm5985, %v5952
      %6018 = vst.msk [vmem:[%s173 + $0x100] sm:$0xff] %vm5985, %v5953
      %6019 = vst.msk [vmem:[%s173 + $0x108] sm:$0xff] %vm5985, %v5954
      %6020 = vst.msk [vmem:[%s173 + $0x110] sm:$0xff] %vm5985, %v5955
      %6021 = vst.msk [vmem:[%s173 + $0x118] sm:$0xff] %vm5985, %v5956
      %6022 = vst.msk [vmem:[%s173 + $0x120] sm:$0xff] %vm5985, %v5957
      %6023 = vst.msk [vmem:[%s173 + $0x128] sm:$0xff] %vm5985, %v5958
      %6024 = vst.msk [vmem:[%s173 + $0x130] sm:$0xff] %vm5985, %v5959
      %6025 = vst.msk [vmem:[%s173 + $0x138] sm:$0xff] %vm5985, %v5960
      %6026 = vst.msk [vmem:[%s173 + $0x140] sm:$0xff] %vm5985, %v5961
      %6027 = vst.msk [vmem:[%s173 + $0x148] sm:$0xff] %vm5985, %v5962
      %6028 = vst.msk [vmem:[%s173 + $0x150] sm:$0xff] %vm5985, %v5963
      %6029 = vst.msk [vmem:[%s173 + $0x158] sm:$0xff] %vm5985, %v5964
      %6030 = vst.msk [vmem:[%s173 + $0x160] sm:$0xff] %vm5985, %v5965
      %6031 = vst.msk [vmem:[%s173 + $0x168] sm:$0xff] %vm5985, %v5966
      %6032 = vst.msk [vmem:[%s173 + $0x170] sm:$0xff] %vm5985, %v5967
      %6033 = vst.msk [vmem:[%s173 + $0x178] sm:$0xff] %vm5985, %v5968
      %6034 = vst.msk [vmem:[%s173 + $0x180] sm:$0xff] %vm5985, %v5969
      %6035 = vst.msk [vmem:[%s173 + $0x188] sm:$0xff] %vm5985, %v5970
      %6036 = vst.msk [vmem:[%s173 + $0x190] sm:$0xff] %vm5985, %v5971
      %6037 = vst.msk [vmem:[%s173 + $0x198] sm:$0xff] %vm5985, %v5972
      %6038 = vst.msk [vmem:[%s173 + $0x1a0] sm:$0xff] %vm5985, %v5973
      %6039 = vst.msk [vmem:[%s173 + $0x1a8] sm:$0xff] %vm5985, %v5974
      %6040 = vst.msk [vmem:[%s173 + $0x1b0] sm:$0xff] %vm5985, %v5975
      %6041 = vst.msk [vmem:[%s173 + $0x1b8] sm:$0xff] %vm5985, %v5976
      %6042 = vst.msk [vmem:[%s173 + $0x1c0] sm:$0xff] %vm5985, %v5977
      %6043 = vst.msk [vmem:[%s173 + $0x1c8] sm:$0xff] %vm5985, %v5978
      %6044 = vst.msk [vmem:[%s173 + $0x1d0] sm:$0xff] %vm5985, %v5979
      %6045 = vst.msk [vmem:[%s173 + $0x1d8] sm:$0xff] %vm5985, %v5980
      %6046 = vst.msk [vmem:[%s173 + $0x1e0] sm:$0xff] %vm5985, %v5981
      %6047 = vst.msk [vmem:[%s173 + $0x1e8] sm:$0xff] %vm5985, %v5982
      %6048 = vst.msk [vmem:[%s173 + $0x1f0] sm:$0xff] %vm5985, %v5983
      %6049 = vst.msk [vmem:[%s173 + $0x1f8] sm:$0xff] %vm5985, %v5984
      %s6050 = smul.u32 64, %s13
      %p6051 = scmp.lt.s32.totalorder %s6050, 127
      %s6052 = scalar_select %p6051, %s6050, 127
      %s6053 = smul.addr %s6052, 8
      %s6054 = scalar_lea.vmem %s2, %s6053
      // Predicated region
      $region29: #{subsample_forward.2} parent=27 // pred_check
        %p6055 = pneg %p83
      $region30: #{subsample_forward.2} parent=27 // pred_check_branch
        %6057 = sbr.rel (%p6055) target = $region32
      $region31: #{subsample_forward.2} parent=27 // pred_region
        %s6058 = smul.u32 64, %s13
      $region32: #{subsample_forward.2} parent=27 // pred_fallthru
        _
    $region28: #{subsample_forward.2} parent=5 // pred_fallthru
      _
    %p6059 = scmp.le.s32.totalorder 2, %s8
    // Predicated region
    $region33: #{subsample_forward.2} parent=5 // pred_check
      %p6060 = pneg %p6059
    $region34: #{subsample_forward.2} parent=5 // pred_check_branch
      %6062 = sbr.rel (%p6060) target = $region36
    $region35: #{subsample_forward.2} parent=5 // pred_region
      %s6063 = ssub.s32 %s8, 2
      // Predicated region
      $region37: #{subsample_forward.2} parent=35 // pred_check
        %p6064 = pneg %p89
      $region38: #{subsample_forward.2} parent=35 // pred_check_branch
        %6066 = sbr.rel (%p6064) target = $region40
      $region39: #{subsample_forward.2} parent=35 // pred_region
        %s6067 = smul.u32 64, %s14
        %p6068 = scmp.lt.s32.totalorder %s6067, 127
        %s6069 = scalar_select %p6068, %s6067, 127
        %s6070 = smul.addr %s6069, 8
        %s6071 = scalar_lea.vmem %s2, %s6070
      $region40: #{subsample_forward.2} parent=35 // pred_fallthru
        _
    $region36: #{subsample_forward.2} parent=5 // pred_fallthru
      _
  $region6: #{subsample_forward.2} parent=0 // loop_footer
    %s12 = sadd.s32 1, %s8
  $region7: #{subsample_forward.2} parent=0 // loop_footer_branch
    %7 = sbr.rel target = $region3
  $region8: #{subsample_forward.2} parent=0 // loop_exit
    _

</llo_original>
